<compile_context>
chip_gen: v6e
topology: v6e:2x2x1
jax: 0.10.0
libtpu: 0.0.40
codegen_flags: <defaults>
</compile_context>

<pallas_src>
import math

import jax
import jax.numpy as jnp
from jax.experimental import pallas as pl
from jax.experimental.pallas import tpu as pltpu

D_MODEL = 64
NHEAD = 4
DH = D_MODEL // NHEAD          # 16
NUM_LAYERS = 3
DFF = 2 * D_MODEL              # 128
VOCAB = 25
VPAD = 128                     # decoder output padded to one full lane width
EPS = 1e-5
MAX_LEN = 2500

# Flip to jnp.bfloat16 for ~2-4x MXU throughput (all three generations accept
# bf16 matmul operands with f32 accumulation); weights are pre-cast once in
# prepare_kernel_params, never astype'd per matmul inside the kernel.
COMPUTE_DTYPE = jnp.float32


def _layer_norm(x, w, b):
    mu = jnp.mean(x, axis=-1, keepdims=True)
    var = jnp.mean((x - mu) ** 2, axis=-1, keepdims=True)
    return (x - mu) * jax.lax.rsqrt(var + EPS) * w + b


# ----------------------------------------------------------------------------
# Fused Pallas kernel: 3 encoder layers + decoder projection (one batch / step)
# ----------------------------------------------------------------------------
def _fused_kernel(x_ref,
                  wq_ref, bq_ref, wk_ref, bk_ref, wv_ref, bv_ref,
                  wo_ref, bo_ref,
                  ln1w_ref, ln1b_ref, ln2w_ref, ln2b_ref,
                  w1_ref, b1_ref, w2_ref, b2_ref,
                  dec_w_ref, dec_b_ref,
                  o_ref):
    S, D = x_ref.shape
    scale = 1.0 / math.sqrt(DH)

    def mm(a, b):  # 2-D matmul, f32 accumulation
        return jnp.dot(a.astype(b.dtype), b, preferred_element_type=jnp.float32)

    def bmm(a, b):  # (H,m,k) @ (H,k,n) -> (H,m,n), f32 accumulation
        return jax.lax.dot_general(
            a.astype(b.dtype), b,
            dimension_numbers=(((2,), (1,)), ((0,), (0,))),
            preferred_element_type=jnp.float32)

    x = x_ref[...].astype(jnp.float32)                          # (S, D)

    for l in range(NUM_LAYERS):      # static unroll; weights are VMEM-resident
        # ---- multi-head self-attention: all heads in one batched dot ------
        xb = jnp.broadcast_to(x.astype(COMPUTE_DTYPE), (NHEAD, S, D))
        qh = bmm(xb, wq_ref[l]) + bq_ref[l]                     # (H, S, dh)
        kh = bmm(xb, wk_ref[l]) + bk_ref[l]                     # (H, S, dh)
        vh = bmm(xb, wv_ref[l]) + bv_ref[l]                     # (H, S, dh)

        sc = jax.lax.dot_general(                               # (H, S, S)
            qh.astype(COMPUTE_DTYPE), kh.astype(COMPUTE_DTYPE),
            dimension_numbers=(((2,), (2,)), ((0,), (0,))),
            preferred_element_type=jnp.float32) * scale
        sc = sc - jnp.max(sc, axis=-1, keepdims=True)
        p = jnp.exp(sc)
        # exact EUP reciprocal (off the VALU, no approx error)
        p = p * pl.reciprocal(jnp.sum(p, axis=-1, keepdims=True))

        pv = bmm(p, vh.astype(COMPUTE_DTYPE))                   # (H, S, dh)
        # per-head output projection, then reduce heads -> one dense (S, D)
        attn = jnp.sum(bmm(pv, wo_ref[l]), axis=0) + bo_ref[l]  # (S, D)

        # ---- residual + LayerNorm 1 (f32) ----------------------------------
        y = _layer_norm(x + attn, ln1w_ref[l], ln1b_ref[l])

        # ---- feed-forward ---------------------------------------------------
        h = jnp.maximum(mm(y, w1_ref[l]) + b1_ref[l], 0.0)      # (S, DFF)
        z = y + mm(h, w2_ref[l]) + b2_ref[l]                    # (S, D)

        # ---- residual + LayerNorm 2 (f32) ----------------------------------
        x = _layer_norm(z, ln2w_ref[l], ln2b_ref[l])

    # ---- decoder projection: lane-dense (S, 128) store ----------------------
    o_ref[...] = mm(x, dec_w_ref[...]) + dec_b_ref[...]


# ----------------------------------------------------------------------------
# Wrapper
# ----------------------------------------------------------------------------
_WEIGHT_NAMES = ("wq_h", "bq_h", "wk_h", "bk_h", "wv_h", "bv_h",
                 "wo_h", "bo", "ln1w", "ln1b", "ln2w", "ln2b",
                 "w1_t", "b1", "w2_t", "b2", "dec_w_pad", "dec_b_pad")


def fused_forward(kparams, x):
    """x: (B, S, D) f32 activations (embedding * sqrt(d) + positional add)."""
    B, S, D = x.shape
    weights = tuple(kparams[n] for n in _WEIGHT_NAMES)

    def resident(w):  # constant block index -> weight stays VMEM-resident
        return pl.BlockSpec(w.shape, lambda b, _n=w.ndim: (0,) * _n)

    M = B * S
    flops = (NUM_LAYERS * (8 * M * D * D + 4 * M * S * D + 4 * M * D * DFF)
             + 2 * M * D * VPAD)
    transcendentals = NUM_LAYERS * (M * S + 4 * M)
    bytes_accessed = (int(x.size) * x.dtype.itemsize
                      + sum(int(w.size) * w.dtype.itemsize for w in weights)
                      + M * VPAD * 4)

    return pl.pallas_call(
        _fused_kernel,
        out_shape=jax.ShapeDtypeStruct((B, S, VPAD), jnp.float32),
        grid=(B,),
        in_specs=[pl.BlockSpec((pl.Squeezed(), S, D), lambda b: (b, 0, 0))]
                 + [resident(w) for w in weights],
        out_specs=pl.BlockSpec((pl.Squeezed(), S, VPAD), lambda b: (b, 0, 0)),
        compiler_params=pltpu.CompilerParams(
            dimension_semantics=("parallel",)),       # shards across v7x cores
        cost_estimate=pl.CostEstimate(flops=int(flops),
                                      transcendentals=int(transcendentals),
                                      bytes_accessed=int(bytes_accessed)),
    )(x, *weights)


def forward(kparams, src):
    B, S = src.shape
    # Embedding gather (data-dependent) + scale + positional add: XLA glue,
    # fused by XLA; drops the second (M, D) activation DMA into the kernel.
    x = (kparams["emb"][src] * math.sqrt(D_MODEL)
         + kparams["pe"][:B][:, None, :])                       # (B, S, D)
    logits_pad = fused_forward(kparams, x)                      # (B, S, 128)
    return logits_pad[..., :VOCAB]


# ----------------------------------------------------------------------------
# Parameter construction (deterministic, synthetic)
# ----------------------------------------------------------------------------
def make_positional_encoding(max_len, d_model):
    position = jnp.arange(max_len, dtype=jnp.float32)[:, None]
    div_term = jnp.exp(jnp.arange(0, d_model, 2, dtype=jnp.float32)
                       * (-math.log(10000.0) / d_model))
    pe = jnp.zeros((max_len, d_model), dtype=jnp.float32)
    pe = pe.at[:, 0::2].set(jnp.sin(position * div_term))
    pe = pe.at[:, 1::2].set(jnp.cos(position * div_term))
    return pe


def init_params(key, vocab_size=VOCAB, d_model=D_MODEL):
    keys = iter(jax.random.split(key, 2 + 12 * NUM_LAYERS))
    u = lambda k, shape, s=0.1: jax.random.uniform(k, shape, jnp.float32, -s, s)

    raw = {
        "emb": u(next(keys), (vocab_size, d_model)),
        "pe": make_positional_encoding(MAX_LEN, d_model),
        "dec_w_t": u(next(keys), (vocab_size, d_model)).T,      # (D, vocab)
        "dec_b": jnp.zeros((vocab_size,), jnp.float32),
    }
    per_layer = {n: [] for n in ("wq_t", "wk_t", "wv_t", "bq", "bk", "bv",
                                 "wo_t", "bo", "ln1w", "ln1b", "ln2w", "ln2b",
                                 "w1_t", "b1", "w2_t", "b2")}
    for _ in range(NUM_LAYERS):
        per_layer["wq_t"].append(u(next(keys), (d_model, d_model)).T)
        per_layer["wk_t"].append(u(next(keys), (d_model, d_model)).T)
        per_layer["wv_t"].append(u(next(keys), (d_model, d_model)).T)
        per_layer["bq"].append(u(next(keys), (d_model,), 0.05))
        per_layer["bk"].append(u(next(keys), (d_model,), 0.05))
        per_layer["bv"].append(u(next(keys), (d_model,), 0.05))
        per_layer["wo_t"].append(u(next(keys), (d_model, d_model)).T)
        per_layer["bo"].append(u(next(keys), (d_model,), 0.05))
        per_layer["ln1w"].append(jnp.ones((d_model,), jnp.float32))
        per_layer["ln1b"].append(jnp.zeros((d_model,), jnp.float32))
        per_layer["ln2w"].append(jnp.ones((d_model,), jnp.float32))
        per_layer["ln2b"].append(jnp.zeros((d_model,), jnp.float32))
        per_layer["w1_t"].append(u(next(keys), (DFF, d_model)).T)
        per_layer["b1"].append(u(next(keys), (DFF,), 0.05))
        per_layer["w2_t"].append(u(next(keys), (d_model, DFF)).T)
        per_layer["b2"].append(u(next(keys), (d_model,), 0.05))
    for n, xs in per_layer.items():
        raw[n] = jnp.stack(xs, axis=0)
    return raw


def prepare_kernel_params(raw, dtype=COMPUTE_DTYPE):
    """Pre-split per head, pre-pad decoder to 128 lanes, pre-cast matmul weights."""
    D = D_MODEL
    split_cols = lambda w: w.reshape(NUM_LAYERS, D, NHEAD, DH).transpose(0, 2, 1, 3)
    split_rows = lambda w: w.reshape(NUM_LAYERS, NHEAD, DH, D)
    split_bias = lambda b: b.reshape(NUM_LAYERS, NHEAD, 1, DH)
    row = lambda b: b.reshape(NUM_LAYERS, 1, -1)
    kp = {
        "emb": raw["emb"], "pe": raw["pe"],
        "wq_h": split_cols(raw["wq_t"]).astype(dtype),   # (L, H, D, dh)
        "wk_h": split_cols(raw["wk_t"]).astype(dtype),
        "wv_h": split_cols(raw["wv_t"]).astype(dtype),
        "bq_h": split_bias(raw["bq"]), "bk_h": split_bias(raw["bk"]),
        "bv_h": split_bias(raw["bv"]),
        "wo_h": split_rows(raw["wo_t"]).astype(dtype),   # (L, H, dh, D)
        "bo": row(raw["bo"]),
        "ln1w": row(raw["ln1w"]), "ln1b": row(raw["ln1b"]),
        "ln2w": row(raw["ln2w"]), "ln2b": row(raw["ln2b"]),
        "w1_t": raw["w1_t"].astype(dtype), "b1": row(raw["b1"]),
        "w2_t": raw["w2_t"].astype(dtype), "b2": row(raw["b2"]),
        "dec_w_pad": jnp.pad(raw["dec_w_t"],
                             ((0, 0), (0, VPAD - VOCAB))).astype(dtype),
        "dec_b_pad": jnp.pad(raw["dec_b"], (0, VPAD - VOCAB)).reshape(1, VPAD),
    }
    return kp


# ----------------------------------------------------------------------------
# Pure-JAX reference for a sanity check
# ----------------------------------------------------------------------------
def ref_forward(raw, src):
    B, S = src.shape
    x = raw["emb"][src] * math.sqrt(D_MODEL) + raw["pe"][:B][:, None, :]
    for l in range(NUM_LAYERS):
        q = x @ raw["wq_t"][l] + raw["bq"][l]
        k = x @ raw["wk_t"][l] + raw["bk"][l]
        v = x @ raw["wv_t"][l] + raw["bv"][l]
        qh = q.reshape(B, S, NHEAD, DH).transpose(0, 2, 1, 3)
        kh = k.reshape(B, S, NHEAD, DH).transpose(0, 2, 1, 3)
        vh = v.reshape(B, S, NHEAD, DH).transpose(0, 2, 1, 3)
        s = jnp.einsum('bhqd,bhkd->bhqk', qh, kh) / math.sqrt(DH)
        p = jax.nn.softmax(s, axis=-1)
        a = (jnp.einsum('bhqk,bhkd->bhqd', p, vh)
             .transpose(0, 2, 1, 3).reshape(B, S, D_MODEL))
        a = a @ raw["wo_t"][l] + raw["bo"][l]
        y = _layer_norm(x + a, raw["ln1w"][l], raw["ln1b"][l])
        h = jnp.maximum(y @ raw["w1_t"][l] + raw["b1"][l], 0.0)
        x = _layer_norm(y + h @ raw["w2_t"][l] + raw["b2"][l],
                        raw["ln2w"][l], raw["ln2b"][l])
    return x @ raw["dec_w_t"] + raw["dec_b"]


# ----------------------------------------------------------------------------
if __name__ == "__main__":
    key = jax.random.PRNGKey(0)
    pkey, skey = jax.random.split(key)

    raw = init_params(pkey)
    kparams = prepare_kernel_params(raw)

    B, S = 2, 8
    src = jax.random.randint(skey, (B, S), 0, VOCAB, dtype=jnp.int32)

    out = jax.block_until_ready(forward(kparams, src))
    ref = jax.block_until_ready(ref_forward(raw, src))

    assert out.shape == (B, S, VOCAB), out.shape
    assert bool(jnp.all(jnp.isfinite(out)))
    max_err = float(jnp.max(jnp.abs(out - ref)))
    assert bool(jnp.allclose(out, ref, atol=1e-3, rtol=1e-3)), max_err

    print("KERNEL_OK")
</pallas_src>

<mosaic_0001>
module attributes {stable_mosaic.version = 11 : i64} {
  func.func @_fused_kernel(%arg0: i32, %arg1: memref<1x8x64xf32, #tpu.memory_space<vmem>>, %arg2: memref<3x4x64x16xf32, #tpu.memory_space<vmem>>, %arg3: memref<3x4x1x16xf32, #tpu.memory_space<vmem>>, %arg4: memref<3x4x64x16xf32, #tpu.memory_space<vmem>>, %arg5: memref<3x4x1x16xf32, #tpu.memory_space<vmem>>, %arg6: memref<3x4x64x16xf32, #tpu.memory_space<vmem>>, %arg7: memref<3x4x1x16xf32, #tpu.memory_space<vmem>>, %arg8: memref<3x4x16x64xf32, #tpu.memory_space<vmem>>, %arg9: memref<3x1x64xf32, #tpu.memory_space<vmem>>, %arg10: memref<3x1x64xf32, #tpu.memory_space<vmem>>, %arg11: memref<3x1x64xf32, #tpu.memory_space<vmem>>, %arg12: memref<3x1x64xf32, #tpu.memory_space<vmem>>, %arg13: memref<3x1x64xf32, #tpu.memory_space<vmem>>, %arg14: memref<3x64x128xf32, #tpu.memory_space<vmem>>, %arg15: memref<3x1x128xf32, #tpu.memory_space<vmem>>, %arg16: memref<3x128x64xf32, #tpu.memory_space<vmem>>, %arg17: memref<3x1x64xf32, #tpu.memory_space<vmem>>, %arg18: memref<64x128xf32, #tpu.memory_space<vmem>>, %arg19: memref<1x128xf32, #tpu.memory_space<vmem>>, %arg20: memref<1x8x128xf32, #tpu.memory_space<vmem>>) attributes {dimension_semantics = [#tpu.dimension_semantics<parallel>], iteration_bounds = array<i64: 2>, scalar_prefetch = 0 : i64, scratch_operands = 0 : i64, tpu.core_type = #tpu.core_type<tc>, window_params = [{transform_indices = @transform_0, window_bounds = array<i64: 1, 8, 64>}, {pipeline_mode = #tpu.pipeline_mode<synchronous>, transform_indices = @transform_1, window_bounds = array<i64: 3, 4, 64, 16>}, {pipeline_mode = #tpu.pipeline_mode<synchronous>, transform_indices = @transform_2, window_bounds = array<i64: 3, 4, 1, 16>}, {pipeline_mode = #tpu.pipeline_mode<synchronous>, transform_indices = @transform_3, window_bounds = array<i64: 3, 4, 64, 16>}, {pipeline_mode = #tpu.pipeline_mode<synchronous>, transform_indices = @transform_4, window_bounds = array<i64: 3, 4, 1, 16>}, {pipeline_mode = #tpu.pipeline_mode<synchronous>, transform_indices = @transform_5, window_bounds = array<i64: 3, 4, 64, 16>}, {pipeline_mode = #tpu.pipeline_mode<synchronous>, transform_indices = @transform_6, window_bounds = array<i64: 3, 4, 1, 16>}, {pipeline_mode = #tpu.pipeline_mode<synchronous>, transform_indices = @transform_7, window_bounds = array<i64: 3, 4, 16, 64>}, {pipeline_mode = #tpu.pipeline_mode<synchronous>, transform_indices = @transform_8, window_bounds = array<i64: 3, 1, 64>}, {pipeline_mode = #tpu.pipeline_mode<synchronous>, transform_indices = @transform_9, window_bounds = array<i64: 3, 1, 64>}, {pipeline_mode = #tpu.pipeline_mode<synchronous>, transform_indices = @transform_10, window_bounds = array<i64: 3, 1, 64>}, {pipeline_mode = #tpu.pipeline_mode<synchronous>, transform_indices = @transform_11, window_bounds = array<i64: 3, 1, 64>}, {pipeline_mode = #tpu.pipeline_mode<synchronous>, transform_indices = @transform_12, window_bounds = array<i64: 3, 1, 64>}, {pipeline_mode = #tpu.pipeline_mode<synchronous>, transform_indices = @transform_13, window_bounds = array<i64: 3, 64, 128>}, {pipeline_mode = #tpu.pipeline_mode<synchronous>, transform_indices = @transform_14, window_bounds = array<i64: 3, 1, 128>}, {pipeline_mode = #tpu.pipeline_mode<synchronous>, transform_indices = @transform_15, window_bounds = array<i64: 3, 128, 64>}, {pipeline_mode = #tpu.pipeline_mode<synchronous>, transform_indices = @transform_16, window_bounds = array<i64: 3, 1, 64>}, {pipeline_mode = #tpu.pipeline_mode<synchronous>, transform_indices = @transform_17, window_bounds = array<i64: 64, 128>}, {pipeline_mode = #tpu.pipeline_mode<synchronous>, transform_indices = @transform_18, window_bounds = array<i64: 1, 128>}, {transform_indices = @transform_19, window_bounds = array<i64: 1, 8, 128>}]} {
    %c0 = arith.constant 0 : index
    %c0_0 = arith.constant 0 : index
    %c0_1 = arith.constant 0 : index
    %0 = vector.load %arg1[%c0, %c0_0, %c0_1] : memref<1x8x64xf32, #tpu.memory_space<vmem>>, vector<1x8x64xf32>
    %1 = vector.shape_cast %0 : vector<1x8x64xf32> to vector<8x64xf32>
    %2 = vector.shape_cast %1 : vector<8x64xf32> to vector<1x8x64xf32>
    %3 = vector.broadcast %2 : vector<1x8x64xf32> to vector<4x8x64xf32>
    %c0_2 = arith.constant 0 : index
    %c0_3 = arith.constant 0 : index
    %c0_4 = arith.constant 0 : index
    %c0_5 = arith.constant 0 : index
    %4 = vector.load %arg2[%c0_2, %c0_3, %c0_4, %c0_5] : memref<3x4x64x16xf32, #tpu.memory_space<vmem>>, vector<1x4x64x16xf32>
    %5 = vector.shape_cast %4 : vector<1x4x64x16xf32> to vector<4x64x16xf32>
    %cst = arith.constant dense<0.000000e+00> : vector<4x8x16xf32>
    %6 = tpu.matmul %3, %5, %cst {dimension_numbers = #tpu.dot_dimension_numbers<[2], [1], [1], [2], [0, 0, 0, 1, 1, 2], [0], [0]>} : vector<4x8x64xf32>, vector<4x64x16xf32>, vector<4x8x16xf32> -> vector<4x8x16xf32>
    %c0_6 = arith.constant 0 : index
    %c0_7 = arith.constant 0 : index
    %c0_8 = arith.constant 0 : index
    %c0_9 = arith.constant 0 : index
    %7 = vector.load %arg3[%c0_6, %c0_7, %c0_8, %c0_9] : memref<3x4x1x16xf32, #tpu.memory_space<vmem>>, vector<1x4x1x16xf32>
    %8 = vector.shape_cast %7 : vector<1x4x1x16xf32> to vector<4x1x16xf32>
    %9 = vector.broadcast %8 : vector<4x1x16xf32> to vector<4x8x16xf32>
    %10 = arith.addf %6, %9 : vector<4x8x16xf32>
    %c0_10 = arith.constant 0 : index
    %c0_11 = arith.constant 0 : index
    %c0_12 = arith.constant 0 : index
    %c0_13 = arith.constant 0 : index
    %11 = vector.load %arg4[%c0_10, %c0_11, %c0_12, %c0_13] : memref<3x4x64x16xf32, #tpu.memory_space<vmem>>, vector<1x4x64x16xf32>
    %12 = vector.shape_cast %11 : vector<1x4x64x16xf32> to vector<4x64x16xf32>
    %cst_14 = arith.constant dense<0.000000e+00> : vector<4x8x16xf32>
    %13 = tpu.matmul %3, %12, %cst_14 {dimension_numbers = #tpu.dot_dimension_numbers<[2], [1], [1], [2], [0, 0, 0, 1, 1, 2], [0], [0]>} : vector<4x8x64xf32>, vector<4x64x16xf32>, vector<4x8x16xf32> -> vector<4x8x16xf32>
    %c0_15 = arith.constant 0 : index
    %c0_16 = arith.constant 0 : index
    %c0_17 = arith.constant 0 : index
    %c0_18 = arith.constant 0 : index
    %14 = vector.load %arg5[%c0_15, %c0_16, %c0_17, %c0_18] : memref<3x4x1x16xf32, #tpu.memory_space<vmem>>, vector<1x4x1x16xf32>
    %15 = vector.shape_cast %14 : vector<1x4x1x16xf32> to vector<4x1x16xf32>
    %16 = vector.broadcast %15 : vector<4x1x16xf32> to vector<4x8x16xf32>
    %17 = arith.addf %13, %16 : vector<4x8x16xf32>
    %c0_19 = arith.constant 0 : index
    %c0_20 = arith.constant 0 : index
    %c0_21 = arith.constant 0 : index
    %c0_22 = arith.constant 0 : index
    %18 = vector.load %arg6[%c0_19, %c0_20, %c0_21, %c0_22] : memref<3x4x64x16xf32, #tpu.memory_space<vmem>>, vector<1x4x64x16xf32>
    %19 = vector.shape_cast %18 : vector<1x4x64x16xf32> to vector<4x64x16xf32>
    %cst_23 = arith.constant dense<0.000000e+00> : vector<4x8x16xf32>
    %20 = tpu.matmul %3, %19, %cst_23 {dimension_numbers = #tpu.dot_dimension_numbers<[2], [1], [1], [2], [0, 0, 0, 1, 1, 2], [0], [0]>} : vector<4x8x64xf32>, vector<4x64x16xf32>, vector<4x8x16xf32> -> vector<4x8x16xf32>
    %c0_24 = arith.constant 0 : index
    %c0_25 = arith.constant 0 : index
    %c0_26 = arith.constant 0 : index
    %c0_27 = arith.constant 0 : index
    %21 = vector.load %arg7[%c0_24, %c0_25, %c0_26, %c0_27] : memref<3x4x1x16xf32, #tpu.memory_space<vmem>>, vector<1x4x1x16xf32>
    %22 = vector.shape_cast %21 : vector<1x4x1x16xf32> to vector<4x1x16xf32>
    %23 = vector.broadcast %22 : vector<4x1x16xf32> to vector<4x8x16xf32>
    %24 = arith.addf %20, %23 : vector<4x8x16xf32>
    %cst_28 = arith.constant dense<0.000000e+00> : vector<4x8x8xf32>
    %25 = tpu.matmul %10, %17, %cst_28 {dimension_numbers = #tpu.dot_dimension_numbers<[2], [2], [1], [1], [0, 0, 0, 1, 1, 1], [0], [0]>} : vector<4x8x16xf32>, vector<4x8x16xf32>, vector<4x8x8xf32> -> vector<4x8x8xf32>
    %cst_29 = arith.constant 2.500000e-01 : f32
    %26 = vector.broadcast %cst_29 : f32 to vector<4x8x8xf32>
    %27 = arith.mulf %25, %26 : vector<4x8x8xf32>
    %cst_30 = arith.constant dense<0xFF800000> : vector<4x8xf32>
    %28 = vector.multi_reduction <maximumf>, %27, %cst_30 [2] : vector<4x8x8xf32> to vector<4x8xf32>
    %29 = vector.shape_cast %28 : vector<4x8xf32> to vector<4x8x1xf32>
    %30 = vector.broadcast %29 : vector<4x8x1xf32> to vector<4x8x8xf32>
    %31 = arith.subf %27, %30 : vector<4x8x8xf32>
    %32 = math.exp %31 : vector<4x8x8xf32>
    %cst_31 = arith.constant dense<0.000000e+00> : vector<4x8xf32>
    %33 = vector.multi_reduction <add>, %32, %cst_31 [2] : vector<4x8x8xf32> to vector<4x8xf32>
    %34 = vector.shape_cast %33 : vector<4x8xf32> to vector<4x8x1xf32>
    %35 = tpu.reciprocal %34 : vector<4x8x1xf32> -> vector<4x8x1xf32>
    %36 = vector.broadcast %35 : vector<4x8x1xf32> to vector<4x8x8xf32>
    %37 = arith.mulf %32, %36 : vector<4x8x8xf32>
    %cst_32 = arith.constant dense<0.000000e+00> : vector<4x8x16xf32>
    %38 = tpu.matmul %37, %24, %cst_32 {dimension_numbers = #tpu.dot_dimension_numbers<[2], [1], [1], [2], [0, 0, 0, 1, 1, 2], [0], [0]>} : vector<4x8x8xf32>, vector<4x8x16xf32>, vector<4x8x16xf32> -> vector<4x8x16xf32>
    %c0_33 = arith.constant 0 : index
    %c0_34 = arith.constant 0 : index
    %c0_35 = arith.constant 0 : index
    %c0_36 = arith.constant 0 : index
    %39 = vector.load %arg8[%c0_33, %c0_34, %c0_35, %c0_36] : memref<3x4x16x64xf32, #tpu.memory_space<vmem>>, vector<1x4x16x64xf32>
    %40 = vector.shape_cast %39 : vector<1x4x16x64xf32> to vector<4x16x64xf32>
    %cst_37 = arith.constant dense<0.000000e+00> : vector<4x8x64xf32>
    %41 = tpu.matmul %38, %40, %cst_37 {dimension_numbers = #tpu.dot_dimension_numbers<[2], [1], [1], [2], [0, 0, 0, 1, 1, 2], [0], [0]>} : vector<4x8x16xf32>, vector<4x16x64xf32>, vector<4x8x64xf32> -> vector<4x8x64xf32>
    %cst_38 = arith.constant dense<0.000000e+00> : vector<8x64xf32>
    %42 = vector.multi_reduction <add>, %41, %cst_38 [0] : vector<4x8x64xf32> to vector<8x64xf32>
    %c0_39 = arith.constant 0 : index
    %c0_40 = arith.constant 0 : index
    %c0_41 = arith.constant 0 : index
    %43 = vector.load %arg9[%c0_39, %c0_40, %c0_41] : memref<3x1x64xf32, #tpu.memory_space<vmem>>, vector<1x1x64xf32>
    %44 = vector.shape_cast %43 : vector<1x1x64xf32> to vector<1x64xf32>
    %45 = vector.broadcast %44 : vector<1x64xf32> to vector<8x64xf32>
    %46 = arith.addf %42, %45 : vector<8x64xf32>
    %47 = arith.addf %1, %46 : vector<8x64xf32>
    %c0_42 = arith.constant 0 : index
    %c0_43 = arith.constant 0 : index
    %c0_44 = arith.constant 0 : index
    %48 = vector.load %arg10[%c0_42, %c0_43, %c0_44] : memref<3x1x64xf32, #tpu.memory_space<vmem>>, vector<1x1x64xf32>
    %49 = vector.shape_cast %48 : vector<1x1x64xf32> to vector<1x64xf32>
    %c0_45 = arith.constant 0 : index
    %c0_46 = arith.constant 0 : index
    %c0_47 = arith.constant 0 : index
    %50 = vector.load %arg11[%c0_45, %c0_46, %c0_47] : memref<3x1x64xf32, #tpu.memory_space<vmem>>, vector<1x1x64xf32>
    %51 = vector.shape_cast %50 : vector<1x1x64xf32> to vector<1x64xf32>
    %cst_48 = arith.constant dense<0.000000e+00> : vector<8xf32>
    %52 = vector.multi_reduction <add>, %47, %cst_48 [1] : vector<8x64xf32> to vector<8xf32>
    %53 = vector.shape_cast %52 : vector<8xf32> to vector<8x1xf32>
    %cst_49 = arith.constant 6.400000e+01 : f32
    %54 = vector.broadcast %cst_49 : f32 to vector<8x1xf32>
    %55 = arith.divf %53, %54 : vector<8x1xf32>
    %56 = vector.broadcast %55 : vector<8x1xf32> to vector<8x64xf32>
    %57 = arith.subf %47, %56 : vector<8x64xf32>
    %58 = arith.mulf %57, %57 : vector<8x64xf32>
    %cst_50 = arith.constant dense<0.000000e+00> : vector<8xf32>
    %59 = vector.multi_reduction <add>, %58, %cst_50 [1] : vector<8x64xf32> to vector<8xf32>
    %60 = vector.shape_cast %59 : vector<8xf32> to vector<8x1xf32>
    %cst_51 = arith.constant 6.400000e+01 : f32
    %61 = vector.broadcast %cst_51 : f32 to vector<8x1xf32>
    %62 = arith.divf %60, %61 : vector<8x1xf32>
    %63 = vector.broadcast %55 : vector<8x1xf32> to vector<8x64xf32>
    %64 = arith.subf %47, %63 : vector<8x64xf32>
    %cst_52 = arith.constant 9.99999974E-6 : f32
    %65 = vector.broadcast %cst_52 : f32 to vector<8x1xf32>
    %66 = arith.addf %62, %65 : vector<8x1xf32>
    %67 = math.rsqrt %66 : vector<8x1xf32>
    %68 = vector.broadcast %67 : vector<8x1xf32> to vector<8x64xf32>
    %69 = arith.mulf %64, %68 : vector<8x64xf32>
    %70 = vector.broadcast %49 : vector<1x64xf32> to vector<8x64xf32>
    %71 = arith.mulf %69, %70 : vector<8x64xf32>
    %72 = vector.broadcast %51 : vector<1x64xf32> to vector<8x64xf32>
    %73 = arith.addf %71, %72 : vector<8x64xf32>
    %c0_53 = arith.constant 0 : index
    %c0_54 = arith.constant 0 : index
    %c0_55 = arith.constant 0 : index
    %74 = vector.load %arg14[%c0_53, %c0_54, %c0_55] : memref<3x64x128xf32, #tpu.memory_space<vmem>>, vector<1x64x128xf32>
    %75 = vector.shape_cast %74 : vector<1x64x128xf32> to vector<64x128xf32>
    %cst_56 = arith.constant dense<0.000000e+00> : vector<8x128xf32>
    %76 = tpu.matmul %73, %75, %cst_56 {dimension_numbers = #tpu.dot_dimension_numbers<[1], [0], [0], [1], [0, 0, 1, 1], [], []>} : vector<8x64xf32>, vector<64x128xf32>, vector<8x128xf32> -> vector<8x128xf32>
    %c0_57 = arith.constant 0 : index
    %c0_58 = arith.constant 0 : index
    %c0_59 = arith.constant 0 : index
    %77 = vector.load %arg15[%c0_57, %c0_58, %c0_59] : memref<3x1x128xf32, #tpu.memory_space<vmem>>, vector<1x1x128xf32>
    %78 = vector.shape_cast %77 : vector<1x1x128xf32> to vector<1x128xf32>
    %79 = vector.broadcast %78 : vector<1x128xf32> to vector<8x128xf32>
    %80 = arith.addf %76, %79 : vector<8x128xf32>
    %cst_60 = arith.constant 0.000000e+00 : f32
    %81 = vector.broadcast %cst_60 : f32 to vector<8x128xf32>
    %82 = arith.maximumf %80, %81 : vector<8x128xf32>
    %c0_61 = arith.constant 0 : index
    %c0_62 = arith.constant 0 : index
    %c0_63 = arith.constant 0 : index
    %83 = vector.load %arg16[%c0_61, %c0_62, %c0_63] : memref<3x128x64xf32, #tpu.memory_space<vmem>>, vector<1x128x64xf32>
    %84 = vector.shape_cast %83 : vector<1x128x64xf32> to vector<128x64xf32>
    %cst_64 = arith.constant dense<0.000000e+00> : vector<8x64xf32>
    %85 = tpu.matmul %82, %84, %cst_64 {dimension_numbers = #tpu.dot_dimension_numbers<[1], [0], [0], [1], [0, 0, 1, 1], [], []>} : vector<8x128xf32>, vector<128x64xf32>, vector<8x64xf32> -> vector<8x64xf32>
    %86 = arith.addf %73, %85 : vector<8x64xf32>
    %c0_65 = arith.constant 0 : index
    %c0_66 = arith.constant 0 : index
    %c0_67 = arith.constant 0 : index
    %87 = vector.load %arg17[%c0_65, %c0_66, %c0_67] : memref<3x1x64xf32, #tpu.memory_space<vmem>>, vector<1x1x64xf32>
    %88 = vector.shape_cast %87 : vector<1x1x64xf32> to vector<1x64xf32>
    %89 = vector.broadcast %88 : vector<1x64xf32> to vector<8x64xf32>
    %90 = arith.addf %86, %89 : vector<8x64xf32>
    %c0_68 = arith.constant 0 : index
    %c0_69 = arith.constant 0 : index
    %c0_70 = arith.constant 0 : index
    %91 = vector.load %arg12[%c0_68, %c0_69, %c0_70] : memref<3x1x64xf32, #tpu.memory_space<vmem>>, vector<1x1x64xf32>
    %92 = vector.shape_cast %91 : vector<1x1x64xf32> to vector<1x64xf32>
    %c0_71 = arith.constant 0 : index
    %c0_72 = arith.constant 0 : index
    %c0_73 = arith.constant 0 : index
    %93 = vector.load %arg13[%c0_71, %c0_72, %c0_73] : memref<3x1x64xf32, #tpu.memory_space<vmem>>, vector<1x1x64xf32>
    %94 = vector.shape_cast %93 : vector<1x1x64xf32> to vector<1x64xf32>
    %cst_74 = arith.constant dense<0.000000e+00> : vector<8xf32>
    %95 = vector.multi_reduction <add>, %90, %cst_74 [1] : vector<8x64xf32> to vector<8xf32>
    %96 = vector.shape_cast %95 : vector<8xf32> to vector<8x1xf32>
    %cst_75 = arith.constant 6.400000e+01 : f32
    %97 = vector.broadcast %cst_75 : f32 to vector<8x1xf32>
    %98 = arith.divf %96, %97 : vector<8x1xf32>
    %99 = vector.broadcast %98 : vector<8x1xf32> to vector<8x64xf32>
    %100 = arith.subf %90, %99 : vector<8x64xf32>
    %101 = arith.mulf %100, %100 : vector<8x64xf32>
    %cst_76 = arith.constant dense<0.000000e+00> : vector<8xf32>
    %102 = vector.multi_reduction <add>, %101, %cst_76 [1] : vector<8x64xf32> to vector<8xf32>
    %103 = vector.shape_cast %102 : vector<8xf32> to vector<8x1xf32>
    %cst_77 = arith.constant 6.400000e+01 : f32
    %104 = vector.broadcast %cst_77 : f32 to vector<8x1xf32>
    %105 = arith.divf %103, %104 : vector<8x1xf32>
    %106 = vector.broadcast %98 : vector<8x1xf32> to vector<8x64xf32>
    %107 = arith.subf %90, %106 : vector<8x64xf32>
    %cst_78 = arith.constant 9.99999974E-6 : f32
    %108 = vector.broadcast %cst_78 : f32 to vector<8x1xf32>
    %109 = arith.addf %105, %108 : vector<8x1xf32>
    %110 = math.rsqrt %109 : vector<8x1xf32>
    %111 = vector.broadcast %110 : vector<8x1xf32> to vector<8x64xf32>
    %112 = arith.mulf %107, %111 : vector<8x64xf32>
    %113 = vector.broadcast %92 : vector<1x64xf32> to vector<8x64xf32>
    %114 = arith.mulf %112, %113 : vector<8x64xf32>
    %115 = vector.broadcast %94 : vector<1x64xf32> to vector<8x64xf32>
    %116 = arith.addf %114, %115 : vector<8x64xf32>
    %117 = vector.shape_cast %116 : vector<8x64xf32> to vector<1x8x64xf32>
    %118 = vector.broadcast %117 : vector<1x8x64xf32> to vector<4x8x64xf32>
    %c1 = arith.constant 1 : index
    %c0_79 = arith.constant 0 : index
    %c0_80 = arith.constant 0 : index
    %c0_81 = arith.constant 0 : index
    %119 = vector.load %arg2[%c1, %c0_79, %c0_80, %c0_81] : memref<3x4x64x16xf32, #tpu.memory_space<vmem>>, vector<1x4x64x16xf32>
    %120 = vector.shape_cast %119 : vector<1x4x64x16xf32> to vector<4x64x16xf32>
    %cst_82 = arith.constant dense<0.000000e+00> : vector<4x8x16xf32>
    %121 = tpu.matmul %118, %120, %cst_82 {dimension_numbers = #tpu.dot_dimension_numbers<[2], [1], [1], [2], [0, 0, 0, 1, 1, 2], [0], [0]>} : vector<4x8x64xf32>, vector<4x64x16xf32>, vector<4x8x16xf32> -> vector<4x8x16xf32>
    %c1_83 = arith.constant 1 : index
    %c0_84 = arith.constant 0 : index
    %c0_85 = arith.constant 0 : index
    %c0_86 = arith.constant 0 : index
    %122 = vector.load %arg3[%c1_83, %c0_84, %c0_85, %c0_86] : memref<3x4x1x16xf32, #tpu.memory_space<vmem>>, vector<1x4x1x16xf32>
    %123 = vector.shape_cast %122 : vector<1x4x1x16xf32> to vector<4x1x16xf32>
    %124 = vector.broadcast %123 : vector<4x1x16xf32> to vector<4x8x16xf32>
    %125 = arith.addf %121, %124 : vector<4x8x16xf32>
    %c1_87 = arith.constant 1 : index
    %c0_88 = arith.constant 0 : index
    %c0_89 = arith.constant 0 : index
    %c0_90 = arith.constant 0 : index
    %126 = vector.load %arg4[%c1_87, %c0_88, %c0_89, %c0_90] : memref<3x4x64x16xf32, #tpu.memory_space<vmem>>, vector<1x4x64x16xf32>
    %127 = vector.shape_cast %126 : vector<1x4x64x16xf32> to vector<4x64x16xf32>
    %cst_91 = arith.constant dense<0.000000e+00> : vector<4x8x16xf32>
    %128 = tpu.matmul %118, %127, %cst_91 {dimension_numbers = #tpu.dot_dimension_numbers<[2], [1], [1], [2], [0, 0, 0, 1, 1, 2], [0], [0]>} : vector<4x8x64xf32>, vector<4x64x16xf32>, vector<4x8x16xf32> -> vector<4x8x16xf32>
    %c1_92 = arith.constant 1 : index
    %c0_93 = arith.constant 0 : index
    %c0_94 = arith.constant 0 : index
    %c0_95 = arith.constant 0 : index
    %129 = vector.load %arg5[%c1_92, %c0_93, %c0_94, %c0_95] : memref<3x4x1x16xf32, #tpu.memory_space<vmem>>, vector<1x4x1x16xf32>
    %130 = vector.shape_cast %129 : vector<1x4x1x16xf32> to vector<4x1x16xf32>
    %131 = vector.broadcast %130 : vector<4x1x16xf32> to vector<4x8x16xf32>
    %132 = arith.addf %128, %131 : vector<4x8x16xf32>
    %c1_96 = arith.constant 1 : index
    %c0_97 = arith.constant 0 : index
    %c0_98 = arith.constant 0 : index
    %c0_99 = arith.constant 0 : index
    %133 = vector.load %arg6[%c1_96, %c0_97, %c0_98, %c0_99] : memref<3x4x64x16xf32, #tpu.memory_space<vmem>>, vector<1x4x64x16xf32>
    %134 = vector.shape_cast %133 : vector<1x4x64x16xf32> to vector<4x64x16xf32>
    %cst_100 = arith.constant dense<0.000000e+00> : vector<4x8x16xf32>
    %135 = tpu.matmul %118, %134, %cst_100 {dimension_numbers = #tpu.dot_dimension_numbers<[2], [1], [1], [2], [0, 0, 0, 1, 1, 2], [0], [0]>} : vector<4x8x64xf32>, vector<4x64x16xf32>, vector<4x8x16xf32> -> vector<4x8x16xf32>
    %c1_101 = arith.constant 1 : index
    %c0_102 = arith.constant 0 : index
    %c0_103 = arith.constant 0 : index
    %c0_104 = arith.constant 0 : index
    %136 = vector.load %arg7[%c1_101, %c0_102, %c0_103, %c0_104] : memref<3x4x1x16xf32, #tpu.memory_space<vmem>>, vector<1x4x1x16xf32>
    %137 = vector.shape_cast %136 : vector<1x4x1x16xf32> to vector<4x1x16xf32>
    %138 = vector.broadcast %137 : vector<4x1x16xf32> to vector<4x8x16xf32>
    %139 = arith.addf %135, %138 : vector<4x8x16xf32>
    %cst_105 = arith.constant dense<0.000000e+00> : vector<4x8x8xf32>
    %140 = tpu.matmul %125, %132, %cst_105 {dimension_numbers = #tpu.dot_dimension_numbers<[2], [2], [1], [1], [0, 0, 0, 1, 1, 1], [0], [0]>} : vector<4x8x16xf32>, vector<4x8x16xf32>, vector<4x8x8xf32> -> vector<4x8x8xf32>
    %cst_106 = arith.constant 2.500000e-01 : f32
    %141 = vector.broadcast %cst_106 : f32 to vector<4x8x8xf32>
    %142 = arith.mulf %140, %141 : vector<4x8x8xf32>
    %cst_107 = arith.constant dense<0xFF800000> : vector<4x8xf32>
    %143 = vector.multi_reduction <maximumf>, %142, %cst_107 [2] : vector<4x8x8xf32> to vector<4x8xf32>
    %144 = vector.shape_cast %143 : vector<4x8xf32> to vector<4x8x1xf32>
    %145 = vector.broadcast %144 : vector<4x8x1xf32> to vector<4x8x8xf32>
    %146 = arith.subf %142, %145 : vector<4x8x8xf32>
    %147 = math.exp %146 : vector<4x8x8xf32>
    %cst_108 = arith.constant dense<0.000000e+00> : vector<4x8xf32>
    %148 = vector.multi_reduction <add>, %147, %cst_108 [2] : vector<4x8x8xf32> to vector<4x8xf32>
    %149 = vector.shape_cast %148 : vector<4x8xf32> to vector<4x8x1xf32>
    %150 = tpu.reciprocal %149 : vector<4x8x1xf32> -> vector<4x8x1xf32>
    %151 = vector.broadcast %150 : vector<4x8x1xf32> to vector<4x8x8xf32>
    %152 = arith.mulf %147, %151 : vector<4x8x8xf32>
    %cst_109 = arith.constant dense<0.000000e+00> : vector<4x8x16xf32>
    %153 = tpu.matmul %152, %139, %cst_109 {dimension_numbers = #tpu.dot_dimension_numbers<[2], [1], [1], [2], [0, 0, 0, 1, 1, 2], [0], [0]>} : vector<4x8x8xf32>, vector<4x8x16xf32>, vector<4x8x16xf32> -> vector<4x8x16xf32>
    %c1_110 = arith.constant 1 : index
    %c0_111 = arith.constant 0 : index
    %c0_112 = arith.constant 0 : index
    %c0_113 = arith.constant 0 : index
    %154 = vector.load %arg8[%c1_110, %c0_111, %c0_112, %c0_113] : memref<3x4x16x64xf32, #tpu.memory_space<vmem>>, vector<1x4x16x64xf32>
    %155 = vector.shape_cast %154 : vector<1x4x16x64xf32> to vector<4x16x64xf32>
    %cst_114 = arith.constant dense<0.000000e+00> : vector<4x8x64xf32>
    %156 = tpu.matmul %153, %155, %cst_114 {dimension_numbers = #tpu.dot_dimension_numbers<[2], [1], [1], [2], [0, 0, 0, 1, 1, 2], [0], [0]>} : vector<4x8x16xf32>, vector<4x16x64xf32>, vector<4x8x64xf32> -> vector<4x8x64xf32>
    %cst_115 = arith.constant dense<0.000000e+00> : vector<8x64xf32>
    %157 = vector.multi_reduction <add>, %156, %cst_115 [0] : vector<4x8x64xf32> to vector<8x64xf32>
    %c1_116 = arith.constant 1 : index
    %c0_117 = arith.constant 0 : index
    %c0_118 = arith.constant 0 : index
    %158 = vector.load %arg9[%c1_116, %c0_117, %c0_118] : memref<3x1x64xf32, #tpu.memory_space<vmem>>, vector<1x1x64xf32>
    %159 = vector.shape_cast %158 : vector<1x1x64xf32> to vector<1x64xf32>
    %160 = vector.broadcast %159 : vector<1x64xf32> to vector<8x64xf32>
    %161 = arith.addf %157, %160 : vector<8x64xf32>
    %162 = arith.addf %116, %161 : vector<8x64xf32>
    %c1_119 = arith.constant 1 : index
    %c0_120 = arith.constant 0 : index
    %c0_121 = arith.constant 0 : index
    %163 = vector.load %arg10[%c1_119, %c0_120, %c0_121] : memref<3x1x64xf32, #tpu.memory_space<vmem>>, vector<1x1x64xf32>
    %164 = vector.shape_cast %163 : vector<1x1x64xf32> to vector<1x64xf32>
    %c1_122 = arith.constant 1 : index
    %c0_123 = arith.constant 0 : index
    %c0_124 = arith.constant 0 : index
    %165 = vector.load %arg11[%c1_122, %c0_123, %c0_124] : memref<3x1x64xf32, #tpu.memory_space<vmem>>, vector<1x1x64xf32>
    %166 = vector.shape_cast %165 : vector<1x1x64xf32> to vector<1x64xf32>
    %cst_125 = arith.constant dense<0.000000e+00> : vector<8xf32>
    %167 = vector.multi_reduction <add>, %162, %cst_125 [1] : vector<8x64xf32> to vector<8xf32>
    %168 = vector.shape_cast %167 : vector<8xf32> to vector<8x1xf32>
    %cst_126 = arith.constant 6.400000e+01 : f32
    %169 = vector.broadcast %cst_126 : f32 to vector<8x1xf32>
    %170 = arith.divf %168, %169 : vector<8x1xf32>
    %171 = vector.broadcast %170 : vector<8x1xf32> to vector<8x64xf32>
    %172 = arith.subf %162, %171 : vector<8x64xf32>
    %173 = arith.mulf %172, %172 : vector<8x64xf32>
    %cst_127 = arith.constant dense<0.000000e+00> : vector<8xf32>
    %174 = vector.multi_reduction <add>, %173, %cst_127 [1] : vector<8x64xf32> to vector<8xf32>
    %175 = vector.shape_cast %174 : vector<8xf32> to vector<8x1xf32>
    %cst_128 = arith.constant 6.400000e+01 : f32
    %176 = vector.broadcast %cst_128 : f32 to vector<8x1xf32>
    %177 = arith.divf %175, %176 : vector<8x1xf32>
    %178 = vector.broadcast %170 : vector<8x1xf32> to vector<8x64xf32>
    %179 = arith.subf %162, %178 : vector<8x64xf32>
    %cst_129 = arith.constant 9.99999974E-6 : f32
    %180 = vector.broadcast %cst_129 : f32 to vector<8x1xf32>
    %181 = arith.addf %177, %180 : vector<8x1xf32>
    %182 = math.rsqrt %181 : vector<8x1xf32>
    %183 = vector.broadcast %182 : vector<8x1xf32> to vector<8x64xf32>
    %184 = arith.mulf %179, %183 : vector<8x64xf32>
    %185 = vector.broadcast %164 : vector<1x64xf32> to vector<8x64xf32>
    %186 = arith.mulf %184, %185 : vector<8x64xf32>
    %187 = vector.broadcast %166 : vector<1x64xf32> to vector<8x64xf32>
    %188 = arith.addf %186, %187 : vector<8x64xf32>
    %c1_130 = arith.constant 1 : index
    %c0_131 = arith.constant 0 : index
    %c0_132 = arith.constant 0 : index
    %189 = vector.load %arg14[%c1_130, %c0_131, %c0_132] : memref<3x64x128xf32, #tpu.memory_space<vmem>>, vector<1x64x128xf32>
    %190 = vector.shape_cast %189 : vector<1x64x128xf32> to vector<64x128xf32>
    %cst_133 = arith.constant dense<0.000000e+00> : vector<8x128xf32>
    %191 = tpu.matmul %188, %190, %cst_133 {dimension_numbers = #tpu.dot_dimension_numbers<[1], [0], [0], [1], [0, 0, 1, 1], [], []>} : vector<8x64xf32>, vector<64x128xf32>, vector<8x128xf32> -> vector<8x128xf32>
    %c1_134 = arith.constant 1 : index
    %c0_135 = arith.constant 0 : index
    %c0_136 = arith.constant 0 : index
    %192 = vector.load %arg15[%c1_134, %c0_135, %c0_136] : memref<3x1x128xf32, #tpu.memory_space<vmem>>, vector<1x1x128xf32>
    %193 = vector.shape_cast %192 : vector<1x1x128xf32> to vector<1x128xf32>
    %194 = vector.broadcast %193 : vector<1x128xf32> to vector<8x128xf32>
    %195 = arith.addf %191, %194 : vector<8x128xf32>
    %cst_137 = arith.constant 0.000000e+00 : f32
    %196 = vector.broadcast %cst_137 : f32 to vector<8x128xf32>
    %197 = arith.maximumf %195, %196 : vector<8x128xf32>
    %c1_138 = arith.constant 1 : index
    %c0_139 = arith.constant 0 : index
    %c0_140 = arith.constant 0 : index
    %198 = vector.load %arg16[%c1_138, %c0_139, %c0_140] : memref<3x128x64xf32, #tpu.memory_space<vmem>>, vector<1x128x64xf32>
    %199 = vector.shape_cast %198 : vector<1x128x64xf32> to vector<128x64xf32>
    %cst_141 = arith.constant dense<0.000000e+00> : vector<8x64xf32>
    %200 = tpu.matmul %197, %199, %cst_141 {dimension_numbers = #tpu.dot_dimension_numbers<[1], [0], [0], [1], [0, 0, 1, 1], [], []>} : vector<8x128xf32>, vector<128x64xf32>, vector<8x64xf32> -> vector<8x64xf32>
    %201 = arith.addf %188, %200 : vector<8x64xf32>
    %c1_142 = arith.constant 1 : index
    %c0_143 = arith.constant 0 : index
    %c0_144 = arith.constant 0 : index
    %202 = vector.load %arg17[%c1_142, %c0_143, %c0_144] : memref<3x1x64xf32, #tpu.memory_space<vmem>>, vector<1x1x64xf32>
    %203 = vector.shape_cast %202 : vector<1x1x64xf32> to vector<1x64xf32>
    %204 = vector.broadcast %203 : vector<1x64xf32> to vector<8x64xf32>
    %205 = arith.addf %201, %204 : vector<8x64xf32>
    %c1_145 = arith.constant 1 : index
    %c0_146 = arith.constant 0 : index
    %c0_147 = arith.constant 0 : index
    %206 = vector.load %arg12[%c1_145, %c0_146, %c0_147] : memref<3x1x64xf32, #tpu.memory_space<vmem>>, vector<1x1x64xf32>
    %207 = vector.shape_cast %206 : vector<1x1x64xf32> to vector<1x64xf32>
    %c1_148 = arith.constant 1 : index
    %c0_149 = arith.constant 0 : index
    %c0_150 = arith.constant 0 : index
    %208 = vector.load %arg13[%c1_148, %c0_149, %c0_150] : memref<3x1x64xf32, #tpu.memory_space<vmem>>, vector<1x1x64xf32>
    %209 = vector.shape_cast %208 : vector<1x1x64xf32> to vector<1x64xf32>
    %cst_151 = arith.constant dense<0.000000e+00> : vector<8xf32>
    %210 = vector.multi_reduction <add>, %205, %cst_151 [1] : vector<8x64xf32> to vector<8xf32>
    %211 = vector.shape_cast %210 : vector<8xf32> to vector<8x1xf32>
    %cst_152 = arith.constant 6.400000e+01 : f32
    %212 = vector.broadcast %cst_152 : f32 to vector<8x1xf32>
    %213 = arith.divf %211, %212 : vector<8x1xf32>
    %214 = vector.broadcast %213 : vector<8x1xf32> to vector<8x64xf32>
    %215 = arith.subf %205, %214 : vector<8x64xf32>
    %216 = arith.mulf %215, %215 : vector<8x64xf32>
    %cst_153 = arith.constant dense<0.000000e+00> : vector<8xf32>
    %217 = vector.multi_reduction <add>, %216, %cst_153 [1] : vector<8x64xf32> to vector<8xf32>
    %218 = vector.shape_cast %217 : vector<8xf32> to vector<8x1xf32>
    %cst_154 = arith.constant 6.400000e+01 : f32
    %219 = vector.broadcast %cst_154 : f32 to vector<8x1xf32>
    %220 = arith.divf %218, %219 : vector<8x1xf32>
    %221 = vector.broadcast %213 : vector<8x1xf32> to vector<8x64xf32>
    %222 = arith.subf %205, %221 : vector<8x64xf32>
    %cst_155 = arith.constant 9.99999974E-6 : f32
    %223 = vector.broadcast %cst_155 : f32 to vector<8x1xf32>
    %224 = arith.addf %220, %223 : vector<8x1xf32>
    %225 = math.rsqrt %224 : vector<8x1xf32>
    %226 = vector.broadcast %225 : vector<8x1xf32> to vector<8x64xf32>
    %227 = arith.mulf %222, %226 : vector<8x64xf32>
    %228 = vector.broadcast %207 : vector<1x64xf32> to vector<8x64xf32>
    %229 = arith.mulf %227, %228 : vector<8x64xf32>
    %230 = vector.broadcast %209 : vector<1x64xf32> to vector<8x64xf32>
    %231 = arith.addf %229, %230 : vector<8x64xf32>
    %232 = vector.shape_cast %231 : vector<8x64xf32> to vector<1x8x64xf32>
    %233 = vector.broadcast %232 : vector<1x8x64xf32> to vector<4x8x64xf32>
    %c2 = arith.constant 2 : index
    %c0_156 = arith.constant 0 : index
    %c0_157 = arith.constant 0 : index
    %c0_158 = arith.constant 0 : index
    %234 = vector.load %arg2[%c2, %c0_156, %c0_157, %c0_158] : memref<3x4x64x16xf32, #tpu.memory_space<vmem>>, vector<1x4x64x16xf32>
    %235 = vector.shape_cast %234 : vector<1x4x64x16xf32> to vector<4x64x16xf32>
    %cst_159 = arith.constant dense<0.000000e+00> : vector<4x8x16xf32>
    %236 = tpu.matmul %233, %235, %cst_159 {dimension_numbers = #tpu.dot_dimension_numbers<[2], [1], [1], [2], [0, 0, 0, 1, 1, 2], [0], [0]>} : vector<4x8x64xf32>, vector<4x64x16xf32>, vector<4x8x16xf32> -> vector<4x8x16xf32>
    %c2_160 = arith.constant 2 : index
    %c0_161 = arith.constant 0 : index
    %c0_162 = arith.constant 0 : index
    %c0_163 = arith.constant 0 : index
    %237 = vector.load %arg3[%c2_160, %c0_161, %c0_162, %c0_163] : memref<3x4x1x16xf32, #tpu.memory_space<vmem>>, vector<1x4x1x16xf32>
    %238 = vector.shape_cast %237 : vector<1x4x1x16xf32> to vector<4x1x16xf32>
    %239 = vector.broadcast %238 : vector<4x1x16xf32> to vector<4x8x16xf32>
    %240 = arith.addf %236, %239 : vector<4x8x16xf32>
    %c2_164 = arith.constant 2 : index
    %c0_165 = arith.constant 0 : index
    %c0_166 = arith.constant 0 : index
    %c0_167 = arith.constant 0 : index
    %241 = vector.load %arg4[%c2_164, %c0_165, %c0_166, %c0_167] : memref<3x4x64x16xf32, #tpu.memory_space<vmem>>, vector<1x4x64x16xf32>
    %242 = vector.shape_cast %241 : vector<1x4x64x16xf32> to vector<4x64x16xf32>
    %cst_168 = arith.constant dense<0.000000e+00> : vector<4x8x16xf32>
    %243 = tpu.matmul %233, %242, %cst_168 {dimension_numbers = #tpu.dot_dimension_numbers<[2], [1], [1], [2], [0, 0, 0, 1, 1, 2], [0], [0]>} : vector<4x8x64xf32>, vector<4x64x16xf32>, vector<4x8x16xf32> -> vector<4x8x16xf32>
    %c2_169 = arith.constant 2 : index
    %c0_170 = arith.constant 0 : index
    %c0_171 = arith.constant 0 : index
    %c0_172 = arith.constant 0 : index
    %244 = vector.load %arg5[%c2_169, %c0_170, %c0_171, %c0_172] : memref<3x4x1x16xf32, #tpu.memory_space<vmem>>, vector<1x4x1x16xf32>
    %245 = vector.shape_cast %244 : vector<1x4x1x16xf32> to vector<4x1x16xf32>
    %246 = vector.broadcast %245 : vector<4x1x16xf32> to vector<4x8x16xf32>
    %247 = arith.addf %243, %246 : vector<4x8x16xf32>
    %c2_173 = arith.constant 2 : index
    %c0_174 = arith.constant 0 : index
    %c0_175 = arith.constant 0 : index
    %c0_176 = arith.constant 0 : index
    %248 = vector.load %arg6[%c2_173, %c0_174, %c0_175, %c0_176] : memref<3x4x64x16xf32, #tpu.memory_space<vmem>>, vector<1x4x64x16xf32>
    %249 = vector.shape_cast %248 : vector<1x4x64x16xf32> to vector<4x64x16xf32>
    %cst_177 = arith.constant dense<0.000000e+00> : vector<4x8x16xf32>
    %250 = tpu.matmul %233, %249, %cst_177 {dimension_numbers = #tpu.dot_dimension_numbers<[2], [1], [1], [2], [0, 0, 0, 1, 1, 2], [0], [0]>} : vector<4x8x64xf32>, vector<4x64x16xf32>, vector<4x8x16xf32> -> vector<4x8x16xf32>
    %c2_178 = arith.constant 2 : index
    %c0_179 = arith.constant 0 : index
    %c0_180 = arith.constant 0 : index
    %c0_181 = arith.constant 0 : index
    %251 = vector.load %arg7[%c2_178, %c0_179, %c0_180, %c0_181] : memref<3x4x1x16xf32, #tpu.memory_space<vmem>>, vector<1x4x1x16xf32>
    %252 = vector.shape_cast %251 : vector<1x4x1x16xf32> to vector<4x1x16xf32>
    %253 = vector.broadcast %252 : vector<4x1x16xf32> to vector<4x8x16xf32>
    %254 = arith.addf %250, %253 : vector<4x8x16xf32>
    %cst_182 = arith.constant dense<0.000000e+00> : vector<4x8x8xf32>
    %255 = tpu.matmul %240, %247, %cst_182 {dimension_numbers = #tpu.dot_dimension_numbers<[2], [2], [1], [1], [0, 0, 0, 1, 1, 1], [0], [0]>} : vector<4x8x16xf32>, vector<4x8x16xf32>, vector<4x8x8xf32> -> vector<4x8x8xf32>
    %cst_183 = arith.constant 2.500000e-01 : f32
    %256 = vector.broadcast %cst_183 : f32 to vector<4x8x8xf32>
    %257 = arith.mulf %255, %256 : vector<4x8x8xf32>
    %cst_184 = arith.constant dense<0xFF800000> : vector<4x8xf32>
    %258 = vector.multi_reduction <maximumf>, %257, %cst_184 [2] : vector<4x8x8xf32> to vector<4x8xf32>
    %259 = vector.shape_cast %258 : vector<4x8xf32> to vector<4x8x1xf32>
    %260 = vector.broadcast %259 : vector<4x8x1xf32> to vector<4x8x8xf32>
    %261 = arith.subf %257, %260 : vector<4x8x8xf32>
    %262 = math.exp %261 : vector<4x8x8xf32>
    %cst_185 = arith.constant dense<0.000000e+00> : vector<4x8xf32>
    %263 = vector.multi_reduction <add>, %262, %cst_185 [2] : vector<4x8x8xf32> to vector<4x8xf32>
    %264 = vector.shape_cast %263 : vector<4x8xf32> to vector<4x8x1xf32>
    %265 = tpu.reciprocal %264 : vector<4x8x1xf32> -> vector<4x8x1xf32>
    %266 = vector.broadcast %265 : vector<4x8x1xf32> to vector<4x8x8xf32>
    %267 = arith.mulf %262, %266 : vector<4x8x8xf32>
    %cst_186 = arith.constant dense<0.000000e+00> : vector<4x8x16xf32>
    %268 = tpu.matmul %267, %254, %cst_186 {dimension_numbers = #tpu.dot_dimension_numbers<[2], [1], [1], [2], [0, 0, 0, 1, 1, 2], [0], [0]>} : vector<4x8x8xf32>, vector<4x8x16xf32>, vector<4x8x16xf32> -> vector<4x8x16xf32>
    %c2_187 = arith.constant 2 : index
    %c0_188 = arith.constant 0 : index
    %c0_189 = arith.constant 0 : index
    %c0_190 = arith.constant 0 : index
    %269 = vector.load %arg8[%c2_187, %c0_188, %c0_189, %c0_190] : memref<3x4x16x64xf32, #tpu.memory_space<vmem>>, vector<1x4x16x64xf32>
    %270 = vector.shape_cast %269 : vector<1x4x16x64xf32> to vector<4x16x64xf32>
    %cst_191 = arith.constant dense<0.000000e+00> : vector<4x8x64xf32>
    %271 = tpu.matmul %268, %270, %cst_191 {dimension_numbers = #tpu.dot_dimension_numbers<[2], [1], [1], [2], [0, 0, 0, 1, 1, 2], [0], [0]>} : vector<4x8x16xf32>, vector<4x16x64xf32>, vector<4x8x64xf32> -> vector<4x8x64xf32>
    %cst_192 = arith.constant dense<0.000000e+00> : vector<8x64xf32>
    %272 = vector.multi_reduction <add>, %271, %cst_192 [0] : vector<4x8x64xf32> to vector<8x64xf32>
    %c2_193 = arith.constant 2 : index
    %c0_194 = arith.constant 0 : index
    %c0_195 = arith.constant 0 : index
    %273 = vector.load %arg9[%c2_193, %c0_194, %c0_195] : memref<3x1x64xf32, #tpu.memory_space<vmem>>, vector<1x1x64xf32>
    %274 = vector.shape_cast %273 : vector<1x1x64xf32> to vector<1x64xf32>
    %275 = vector.broadcast %274 : vector<1x64xf32> to vector<8x64xf32>
    %276 = arith.addf %272, %275 : vector<8x64xf32>
    %277 = arith.addf %231, %276 : vector<8x64xf32>
    %c2_196 = arith.constant 2 : index
    %c0_197 = arith.constant 0 : index
    %c0_198 = arith.constant 0 : index
    %278 = vector.load %arg10[%c2_196, %c0_197, %c0_198] : memref<3x1x64xf32, #tpu.memory_space<vmem>>, vector<1x1x64xf32>
    %279 = vector.shape_cast %278 : vector<1x1x64xf32> to vector<1x64xf32>
    %c2_199 = arith.constant 2 : index
    %c0_200 = arith.constant 0 : index
    %c0_201 = arith.constant 0 : index
    %280 = vector.load %arg11[%c2_199, %c0_200, %c0_201] : memref<3x1x64xf32, #tpu.memory_space<vmem>>, vector<1x1x64xf32>
    %281 = vector.shape_cast %280 : vector<1x1x64xf32> to vector<1x64xf32>
    %cst_202 = arith.constant dense<0.000000e+00> : vector<8xf32>
    %282 = vector.multi_reduction <add>, %277, %cst_202 [1] : vector<8x64xf32> to vector<8xf32>
    %283 = vector.shape_cast %282 : vector<8xf32> to vector<8x1xf32>
    %cst_203 = arith.constant 6.400000e+01 : f32
    %284 = vector.broadcast %cst_203 : f32 to vector<8x1xf32>
    %285 = arith.divf %283, %284 : vector<8x1xf32>
    %286 = vector.broadcast %285 : vector<8x1xf32> to vector<8x64xf32>
    %287 = arith.subf %277, %286 : vector<8x64xf32>
    %288 = arith.mulf %287, %287 : vector<8x64xf32>
    %cst_204 = arith.constant dense<0.000000e+00> : vector<8xf32>
    %289 = vector.multi_reduction <add>, %288, %cst_204 [1] : vector<8x64xf32> to vector<8xf32>
    %290 = vector.shape_cast %289 : vector<8xf32> to vector<8x1xf32>
    %cst_205 = arith.constant 6.400000e+01 : f32
    %291 = vector.broadcast %cst_205 : f32 to vector<8x1xf32>
    %292 = arith.divf %290, %291 : vector<8x1xf32>
    %293 = vector.broadcast %285 : vector<8x1xf32> to vector<8x64xf32>
    %294 = arith.subf %277, %293 : vector<8x64xf32>
    %cst_206 = arith.constant 9.99999974E-6 : f32
    %295 = vector.broadcast %cst_206 : f32 to vector<8x1xf32>
    %296 = arith.addf %292, %295 : vector<8x1xf32>
    %297 = math.rsqrt %296 : vector<8x1xf32>
    %298 = vector.broadcast %297 : vector<8x1xf32> to vector<8x64xf32>
    %299 = arith.mulf %294, %298 : vector<8x64xf32>
    %300 = vector.broadcast %279 : vector<1x64xf32> to vector<8x64xf32>
    %301 = arith.mulf %299, %300 : vector<8x64xf32>
    %302 = vector.broadcast %281 : vector<1x64xf32> to vector<8x64xf32>
    %303 = arith.addf %301, %302 : vector<8x64xf32>
    %c2_207 = arith.constant 2 : index
    %c0_208 = arith.constant 0 : index
    %c0_209 = arith.constant 0 : index
    %304 = vector.load %arg14[%c2_207, %c0_208, %c0_209] : memref<3x64x128xf32, #tpu.memory_space<vmem>>, vector<1x64x128xf32>
    %305 = vector.shape_cast %304 : vector<1x64x128xf32> to vector<64x128xf32>
    %cst_210 = arith.constant dense<0.000000e+00> : vector<8x128xf32>
    %306 = tpu.matmul %303, %305, %cst_210 {dimension_numbers = #tpu.dot_dimension_numbers<[1], [0], [0], [1], [0, 0, 1, 1], [], []>} : vector<8x64xf32>, vector<64x128xf32>, vector<8x128xf32> -> vector<8x128xf32>
    %c2_211 = arith.constant 2 : index
    %c0_212 = arith.constant 0 : index
    %c0_213 = arith.constant 0 : index
    %307 = vector.load %arg15[%c2_211, %c0_212, %c0_213] : memref<3x1x128xf32, #tpu.memory_space<vmem>>, vector<1x1x128xf32>
    %308 = vector.shape_cast %307 : vector<1x1x128xf32> to vector<1x128xf32>
    %309 = vector.broadcast %308 : vector<1x128xf32> to vector<8x128xf32>
    %310 = arith.addf %306, %309 : vector<8x128xf32>
    %cst_214 = arith.constant 0.000000e+00 : f32
    %311 = vector.broadcast %cst_214 : f32 to vector<8x128xf32>
    %312 = arith.maximumf %310, %311 : vector<8x128xf32>
    %c2_215 = arith.constant 2 : index
    %c0_216 = arith.constant 0 : index
    %c0_217 = arith.constant 0 : index
    %313 = vector.load %arg16[%c2_215, %c0_216, %c0_217] : memref<3x128x64xf32, #tpu.memory_space<vmem>>, vector<1x128x64xf32>
    %314 = vector.shape_cast %313 : vector<1x128x64xf32> to vector<128x64xf32>
    %cst_218 = arith.constant dense<0.000000e+00> : vector<8x64xf32>
    %315 = tpu.matmul %312, %314, %cst_218 {dimension_numbers = #tpu.dot_dimension_numbers<[1], [0], [0], [1], [0, 0, 1, 1], [], []>} : vector<8x128xf32>, vector<128x64xf32>, vector<8x64xf32> -> vector<8x64xf32>
    %316 = arith.addf %303, %315 : vector<8x64xf32>
    %c2_219 = arith.constant 2 : index
    %c0_220 = arith.constant 0 : index
    %c0_221 = arith.constant 0 : index
    %317 = vector.load %arg17[%c2_219, %c0_220, %c0_221] : memref<3x1x64xf32, #tpu.memory_space<vmem>>, vector<1x1x64xf32>
    %318 = vector.shape_cast %317 : vector<1x1x64xf32> to vector<1x64xf32>
    %319 = vector.broadcast %318 : vector<1x64xf32> to vector<8x64xf32>
    %320 = arith.addf %316, %319 : vector<8x64xf32>
    %c2_222 = arith.constant 2 : index
    %c0_223 = arith.constant 0 : index
    %c0_224 = arith.constant 0 : index
    %321 = vector.load %arg12[%c2_222, %c0_223, %c0_224] : memref<3x1x64xf32, #tpu.memory_space<vmem>>, vector<1x1x64xf32>
    %322 = vector.shape_cast %321 : vector<1x1x64xf32> to vector<1x64xf32>
    %c2_225 = arith.constant 2 : index
    %c0_226 = arith.constant 0 : index
    %c0_227 = arith.constant 0 : index
    %323 = vector.load %arg13[%c2_225, %c0_226, %c0_227] : memref<3x1x64xf32, #tpu.memory_space<vmem>>, vector<1x1x64xf32>
    %324 = vector.shape_cast %323 : vector<1x1x64xf32> to vector<1x64xf32>
    %cst_228 = arith.constant dense<0.000000e+00> : vector<8xf32>
    %325 = vector.multi_reduction <add>, %320, %cst_228 [1] : vector<8x64xf32> to vector<8xf32>
    %326 = vector.shape_cast %325 : vector<8xf32> to vector<8x1xf32>
    %cst_229 = arith.constant 6.400000e+01 : f32
    %327 = vector.broadcast %cst_229 : f32 to vector<8x1xf32>
    %328 = arith.divf %326, %327 : vector<8x1xf32>
    %329 = vector.broadcast %328 : vector<8x1xf32> to vector<8x64xf32>
    %330 = arith.subf %320, %329 : vector<8x64xf32>
    %331 = arith.mulf %330, %330 : vector<8x64xf32>
    %cst_230 = arith.constant dense<0.000000e+00> : vector<8xf32>
    %332 = vector.multi_reduction <add>, %331, %cst_230 [1] : vector<8x64xf32> to vector<8xf32>
    %333 = vector.shape_cast %332 : vector<8xf32> to vector<8x1xf32>
    %cst_231 = arith.constant 6.400000e+01 : f32
    %334 = vector.broadcast %cst_231 : f32 to vector<8x1xf32>
    %335 = arith.divf %333, %334 : vector<8x1xf32>
    %336 = vector.broadcast %328 : vector<8x1xf32> to vector<8x64xf32>
    %337 = arith.subf %320, %336 : vector<8x64xf32>
    %cst_232 = arith.constant 9.99999974E-6 : f32
    %338 = vector.broadcast %cst_232 : f32 to vector<8x1xf32>
    %339 = arith.addf %335, %338 : vector<8x1xf32>
    %340 = math.rsqrt %339 : vector<8x1xf32>
    %341 = vector.broadcast %340 : vector<8x1xf32> to vector<8x64xf32>
    %342 = arith.mulf %337, %341 : vector<8x64xf32>
    %343 = vector.broadcast %322 : vector<1x64xf32> to vector<8x64xf32>
    %344 = arith.mulf %342, %343 : vector<8x64xf32>
    %345 = vector.broadcast %324 : vector<1x64xf32> to vector<8x64xf32>
    %346 = arith.addf %344, %345 : vector<8x64xf32>
    %c0_233 = arith.constant 0 : index
    %c0_234 = arith.constant 0 : index
    %347 = vector.load %arg18[%c0_233, %c0_234] : memref<64x128xf32, #tpu.memory_space<vmem>>, vector<64x128xf32>
    %cst_235 = arith.constant dense<0.000000e+00> : vector<8x128xf32>
    %348 = tpu.matmul %346, %347, %cst_235 {dimension_numbers = #tpu.dot_dimension_numbers<[1], [0], [0], [1], [0, 0, 1, 1], [], []>} : vector<8x64xf32>, vector<64x128xf32>, vector<8x128xf32> -> vector<8x128xf32>
    %c0_236 = arith.constant 0 : index
    %c0_237 = arith.constant 0 : index
    %349 = vector.load %arg19[%c0_236, %c0_237] : memref<1x128xf32, #tpu.memory_space<vmem>>, vector<1x128xf32>
    %350 = vector.broadcast %349 : vector<1x128xf32> to vector<8x128xf32>
    %351 = arith.addf %348, %350 : vector<8x128xf32>
    %c0_238 = arith.constant 0 : index
    %c0_239 = arith.constant 0 : index
    %c0_240 = arith.constant 0 : index
    %352 = vector.load %arg20[%c0_238, %c0_239, %c0_240] : memref<1x8x128xf32, #tpu.memory_space<vmem>>, vector<1x8x128xf32>
    %353 = vector.shape_cast %352 : vector<1x8x128xf32> to vector<8x128xf32>
    %354 = vector.shape_cast %351 : vector<8x128xf32> to vector<1x8x128xf32>
    tpu.vector_store %arg20[%c0_238, %c0_239, %c0_240], %354 {strides = array<i32>} : memref<1x8x128xf32, #tpu.memory_space<vmem>>, vector<1x8x128xf32>,
    return
  }
  func.func @transform_0(%arg0: i32) -> (i32, i32, i32) {
    %c0_i32 = arith.constant 0 : i32
    %c0_i32_0 = arith.constant 0 : i32
    %c0_i32_1 = arith.constant 0 : i32
    return %arg0, %c0_i32, %c0_i32_0 : i32, i32, i32
  }
  func.func @transform_1(%arg0: i32) -> (i32, i32, i32, i32) {
    %c0_i32 = arith.constant 0 : i32
    %c0_i32_0 = arith.constant 0 : i32
    %c0_i32_1 = arith.constant 0 : i32
    %c0_i32_2 = arith.constant 0 : i32
    %c0_i32_3 = arith.constant 0 : i32
    return %c0_i32, %c0_i32_0, %c0_i32_1, %c0_i32_2 : i32, i32, i32, i32
  }
  func.func @transform_2(%arg0: i32) -> (i32, i32, i32, i32) {
    %c0_i32 = arith.constant 0 : i32
    %c0_i32_0 = arith.constant 0 : i32
    %c0_i32_1 = arith.constant 0 : i32
    %c0_i32_2 = arith.constant 0 : i32
    %c0_i32_3 = arith.constant 0 : i32
    return %c0_i32, %c0_i32_0, %c0_i32_1, %c0_i32_2 : i32, i32, i32, i32
  }
  func.func @transform_3(%arg0: i32) -> (i32, i32, i32, i32) {
    %c0_i32 = arith.constant 0 : i32
    %c0_i32_0 = arith.constant 0 : i32
    %c0_i32_1 = arith.constant 0 : i32
    %c0_i32_2 = arith.constant 0 : i32
    %c0_i32_3 = arith.constant 0 : i32
    return %c0_i32, %c0_i32_0, %c0_i32_1, %c0_i32_2 : i32, i32, i32, i32
  }
  func.func @transform_4(%arg0: i32) -> (i32, i32, i32, i32) {
    %c0_i32 = arith.constant 0 : i32
    %c0_i32_0 = arith.constant 0 : i32
    %c0_i32_1 = arith.constant 0 : i32
    %c0_i32_2 = arith.constant 0 : i32
    %c0_i32_3 = arith.constant 0 : i32
    return %c0_i32, %c0_i32_0, %c0_i32_1, %c0_i32_2 : i32, i32, i32, i32
  }
  func.func @transform_5(%arg0: i32) -> (i32, i32, i32, i32) {
    %c0_i32 = arith.constant 0 : i32
    %c0_i32_0 = arith.constant 0 : i32
    %c0_i32_1 = arith.constant 0 : i32
    %c0_i32_2 = arith.constant 0 : i32
    %c0_i32_3 = arith.constant 0 : i32
    return %c0_i32, %c0_i32_0, %c0_i32_1, %c0_i32_2 : i32, i32, i32, i32
  }
  func.func @transform_6(%arg0: i32) -> (i32, i32, i32, i32) {
    %c0_i32 = arith.constant 0 : i32
    %c0_i32_0 = arith.constant 0 : i32
    %c0_i32_1 = arith.constant 0 : i32
    %c0_i32_2 = arith.constant 0 : i32
    %c0_i32_3 = arith.constant 0 : i32
    return %c0_i32, %c0_i32_0, %c0_i32_1, %c0_i32_2 : i32, i32, i32, i32
  }
  func.func @transform_7(%arg0: i32) -> (i32, i32, i32, i32) {
    %c0_i32 = arith.constant 0 : i32
    %c0_i32_0 = arith.constant 0 : i32
    %c0_i32_1 = arith.constant 0 : i32
    %c0_i32_2 = arith.constant 0 : i32
    %c0_i32_3 = arith.constant 0 : i32
    return %c0_i32, %c0_i32_0, %c0_i32_1, %c0_i32_2 : i32, i32, i32, i32
  }
  func.func @transform_8(%arg0: i32) -> (i32, i32, i32) {
    %c0_i32 = arith.constant 0 : i32
    %c0_i32_0 = arith.constant 0 : i32
    %c0_i32_1 = arith.constant 0 : i32
    %c0_i32_2 = arith.constant 0 : i32
    return %c0_i32, %c0_i32_0, %c0_i32_1 : i32, i32, i32
  }
  func.func @transform_9(%arg0: i32) -> (i32, i32, i32) {
    %c0_i32 = arith.constant 0 : i32
    %c0_i32_0 = arith.constant 0 : i32
    %c0_i32_1 = arith.constant 0 : i32
    %c0_i32_2 = arith.constant 0 : i32
    return %c0_i32, %c0_i32_0, %c0_i32_1 : i32, i32, i32
  }
  func.func @transform_10(%arg0: i32) -> (i32, i32, i32) {
    %c0_i32 = arith.constant 0 : i32
    %c0_i32_0 = arith.constant 0 : i32
    %c0_i32_1 = arith.constant 0 : i32
    %c0_i32_2 = arith.constant 0 : i32
    return %c0_i32, %c0_i32_0, %c0_i32_1 : i32, i32, i32
  }
  func.func @transform_11(%arg0: i32) -> (i32, i32, i32) {
    %c0_i32 = arith.constant 0 : i32
    %c0_i32_0 = arith.constant 0 : i32
    %c0_i32_1 = arith.constant 0 : i32
    %c0_i32_2 = arith.constant 0 : i32
    return %c0_i32, %c0_i32_0, %c0_i32_1 : i32, i32, i32
  }
  func.func @transform_12(%arg0: i32) -> (i32, i32, i32) {
    %c0_i32 = arith.constant 0 : i32
    %c0_i32_0 = arith.constant 0 : i32
    %c0_i32_1 = arith.constant 0 : i32
    %c0_i32_2 = arith.constant 0 : i32
    return %c0_i32, %c0_i32_0, %c0_i32_1 : i32, i32, i32
  }
  func.func @transform_13(%arg0: i32) -> (i32, i32, i32) {
    %c0_i32 = arith.constant 0 : i32
    %c0_i32_0 = arith.constant 0 : i32
    %c0_i32_1 = arith.constant 0 : i32
    %c0_i32_2 = arith.constant 0 : i32
    return %c0_i32, %c0_i32_0, %c0_i32_1 : i32, i32, i32
  }
  func.func @transform_14(%arg0: i32) -> (i32, i32, i32) {
    %c0_i32 = arith.constant 0 : i32
    %c0_i32_0 = arith.constant 0 : i32
    %c0_i32_1 = arith.constant 0 : i32
    %c0_i32_2 = arith.constant 0 : i32
    return %c0_i32, %c0_i32_0, %c0_i32_1 : i32, i32, i32
  }
  func.func @transform_15(%arg0: i32) -> (i32, i32, i32) {
    %c0_i32 = arith.constant 0 : i32
    %c0_i32_0 = arith.constant 0 : i32
    %c0_i32_1 = arith.constant 0 : i32
    %c0_i32_2 = arith.constant 0 : i32
    return %c0_i32, %c0_i32_0, %c0_i32_1 : i32, i32, i32
  }
  func.func @transform_16(%arg0: i32) -> (i32, i32, i32) {
    %c0_i32 = arith.constant 0 : i32
    %c0_i32_0 = arith.constant 0 : i32
    %c0_i32_1 = arith.constant 0 : i32
    %c0_i32_2 = arith.constant 0 : i32
    return %c0_i32, %c0_i32_0, %c0_i32_1 : i32, i32, i32
  }
  func.func @transform_17(%arg0: i32) -> (i32, i32) {
    %c0_i32 = arith.constant 0 : i32
    %c0_i32_0 = arith.constant 0 : i32
    %c0_i32_1 = arith.constant 0 : i32
    return %c0_i32, %c0_i32_0 : i32, i32
  }
  func.func @transform_18(%arg0: i32) -> (i32, i32) {
    %c0_i32 = arith.constant 0 : i32
    %c0_i32_0 = arith.constant 0 : i32
    %c0_i32_1 = arith.constant 0 : i32
    return %c0_i32, %c0_i32_0 : i32, i32
  }
  func.func @transform_19(%arg0: i32) -> (i32, i32, i32) {
    %c0_i32 = arith.constant 0 : i32
    %c0_i32_0 = arith.constant 0 : i32
    %c0_i32_1 = arith.constant 0 : i32
    return %arg0, %c0_i32, %c0_i32_0 : i32, i32, i32
  }
}

</mosaic_0001>

<llo_original>
// kernel: tpu_custom_call.1
$region0: #{tpu_custom_call.1}
  #allocation0 [shape = 'u32[]', space=smem, size = 0x4, offset = 0x4, fixed_abs, tag = 'smem constant byte address 0x4 - core index']
  #allocation1 [shape = 'u32[144,128]{1,0:T(1,128)}', space=vmem, size = 0x12000, scoped, tag = 'internal scratch']
  %s0 = inlined_call_operand.vmem [shape: f32[2,8,64], index: 0, kind: input, shape index: {}]
  %s1 = inlined_call_operand.vmem [shape: f32[3,4,64,16], index: 1, kind: input, shape index: {}]
  %s2 = inlined_call_operand.vmem [shape: f32[3,4,1,16], index: 2, kind: input, shape index: {}]
  %s3 = inlined_call_operand.vmem [shape: f32[3,4,64,16], index: 3, kind: input, shape index: {}]
  %s4 = inlined_call_operand.vmem [shape: f32[3,4,1,16], index: 4, kind: input, shape index: {}]
  %s5 = inlined_call_operand.vmem [shape: f32[3,4,64,16], index: 5, kind: input, shape index: {}]
  %s6 = inlined_call_operand.vmem [shape: f32[3,4,1,16], index: 6, kind: input, shape index: {}]
  %s7 = inlined_call_operand.vmem [shape: f32[3,4,16,64], index: 7, kind: input, shape index: {}]
  %s8 = inlined_call_operand.vmem [shape: f32[3,1,64], index: 8, kind: input, shape index: {}]
  %s9 = inlined_call_operand.vmem [shape: f32[3,1,64], index: 9, kind: input, shape index: {}]
  %s10 = inlined_call_operand.vmem [shape: f32[3,1,64], index: 10, kind: input, shape index: {}]
  %s11 = inlined_call_operand.vmem [shape: f32[3,1,64], index: 11, kind: input, shape index: {}]
  %s12 = inlined_call_operand.vmem [shape: f32[3,1,64], index: 12, kind: input, shape index: {}]
  %s13 = inlined_call_operand.vmem [shape: f32[3,64,128], index: 13, kind: input, shape index: {}]
  %s14 = inlined_call_operand.vmem [shape: f32[3,1,128], index: 14, kind: input, shape index: {}]
  %s15 = inlined_call_operand.vmem [shape: f32[3,128,64], index: 15, kind: input, shape index: {}]
  %s16 = inlined_call_operand.vmem [shape: f32[3,1,64], index: 16, kind: input, shape index: {}]
  %s17 = inlined_call_operand.vmem [shape: f32[64,128], index: 17, kind: input, shape index: {}]
  %s18 = inlined_call_operand.vmem [shape: f32[1,128], index: 18, kind: input, shape index: {}]
  %s19 = inlined_call_operand.hbm [shape: f32[2,8,128], index: 19, kind: output, shape index: {}]
  %s20 = sld [smem:[#allocation0]]
  $region109: #{tpu_custom_call.1} parent=0
    _
  %s22 = ssub.s32 1, %s20
  %s23 = scalar_select 0, %s22, %s20
  $region1: #{tpu_custom_call.1} parent=0
    #allocation2 [shape = 'u8[8192]{0}', space=vmem, size = 0x2000, scoped, tag = 'output window, operand 0']
    #allocation3 [shape = 's32[2]{0}', space=sflag, size = 0x8, scoped, tag = 'scoped memory for tpu_custom_call.1']
    %24 = vsyncpa [#allocation3], 0
    %s25 = scalar_lea.sflag [#allocation3], 1
    %26 = vsyncpa %s25, 0
    loop: start=0, step=1, limit=4
    $region2: #{tpu_custom_call.1} parent=1 // loop_pre_header
      _
    $region3: #{tpu_custom_call.1} parent=1 // loop_header
      %s28 = sphi 0, %s32
      %p29 = scmp.ge.s32.totalorder %s28, 4
      %s38 = sphi 0, %s40
      %s41 = sphi 0, %s38
      %s42 = sphi 0, %s41
      %s58 = sphi 0, %s42
      %s62 = sphi 0, %s62
      %s64 = sphi 0, %s62
      %s65 = sphi 0, %s64
      %s79 = sphi 0, %s65
      %s83 = sphi 0, %s83
      %s85 = sphi 0, %s83
      %s86 = sphi 0, %s85
      %s100 = sphi 0, %s86
      %s104 = sphi 0, %s104
      %s106 = sphi 0, %s104
      %s107 = sphi 0, %s106
      %s121 = sphi 0, %s107
      %s125 = sphi 0, %s125
      %s127 = sphi 0, %s125
      %s128 = sphi 0, %s127
      %s142 = sphi 0, %s128
      %s146 = sphi 0, %s146
      %s148 = sphi 0, %s146
      %s149 = sphi 0, %s148
      %s163 = sphi 0, %s149
      %s167 = sphi 0, %s167
      %s169 = sphi 0, %s167
      %s170 = sphi 0, %s169
      %s184 = sphi 0, %s170
      %s188 = sphi 0, %s188
      %s190 = sphi 0, %s188
      %s191 = sphi 0, %s190
      %s205 = sphi 0, %s191
      %s209 = sphi 0, %s209
      %s211 = sphi 0, %s209
      %s212 = sphi 0, %s211
      %s226 = sphi 0, %s212
      %s230 = sphi 0, %s230
      %s232 = sphi 0, %s230
      %s233 = sphi 0, %s232
      %s247 = sphi 0, %s233
      %s251 = sphi 0, %s251
      %s253 = sphi 0, %s251
      %s254 = sphi 0, %s253
      %s268 = sphi 0, %s254
      %s272 = sphi 0, %s272
      %s274 = sphi 0, %s272
      %s275 = sphi 0, %s274
      %s289 = sphi 0, %s275
      %s293 = sphi 0, %s293
      %s295 = sphi 0, %s293
      %s296 = sphi 0, %s295
      %s310 = sphi 0, %s296
      %s314 = sphi 0, %s314
      %s316 = sphi 0, %s314
      %s317 = sphi 0, %s316
      %s331 = sphi 0, %s317
      %s335 = sphi 0, %s335
      %s337 = sphi 0, %s335
      %s338 = sphi 0, %s337
      %s352 = sphi 0, %s338
      %s356 = sphi 0, %s356
      %s358 = sphi 0, %s356
      %s359 = sphi 0, %s358
      %s373 = sphi 0, %s359
      %s377 = sphi 0, %s377
      %s379 = sphi 0, %s377
      %s380 = sphi 0, %s379
      %s394 = sphi 0, %s380
      %s398 = sphi 0, %s398
      %s400 = sphi 0, %s398
      %s401 = sphi 0, %s400
      %s415 = sphi 0, %s401
      %s419 = sphi 0, %s419
      %s421 = sphi 0, %s419
      %s422 = sphi 0, %s421
      %s436 = sphi 0, %s422
      %s442 = sphi 0, %s444
      %s445 = sphi 0, %s442
      %s446 = sphi 0, %s445
      %s462 = sphi 0, %s446
    $region4: #{tpu_custom_call.1} parent=1 // loop_header_branch
      %31 = sbr.rel (%p29) target = $region8
    $region5: #{tpu_custom_call.1} parent=1 // loop_body
      %s33 = ssub.s32 %s28, 1
      %s34 = ssub.s32 %s28, 2
      %s35 = sadd.s32 %s28, 1
      %s36 = ssub.s32 %s28, %s35
      %p37 = scmp.eq.s32.totalorder %s36, 0
      %s39 = sadd.s32 %s38, 1
      %s40 = scalar_select %p37, %s38, %s39
      %p43 = pneg %p37
      %p44 = scmp.eq.s32.totalorder %s28, 1
      %p45 = por %p43, %p44
      %p46 = scmp.ne.s32.totalorder %s38, %s41
      %p47 = scmp.eq.s32.totalorder %s28, 0
      %p48 = por %p46, %p47
      %p49 = scmp.ne.s32.totalorder %s38, %s41
      %p50 = scmp.eq.s32.totalorder %s33, 1
      %p51 = por %p49, %p50
      %p52 = scmp.ne.s32.totalorder %s41, %s42
      %p53 = scmp.eq.s32.totalorder %s33, 0
      %p54 = por %p52, %p53
      %p55 = scmp.ne.s32.totalorder %s41, %s42
      %p56 = scmp.eq.s32.totalorder %s34, 1
      %p57 = por %p55, %p56
      %p59 = scmp.ne.s32.totalorder %s42, %s58
      %p60 = scmp.eq.s32.totalorder %s34, 0
      %p61 = por %p59, %p60
      %s63 = sadd.s32 %s62, 1
      %p66 = scmp.eq.s32.totalorder %s28, 1
      %p67 = scmp.ne.s32.totalorder %s62, %s64
      %p68 = scmp.eq.s32.totalorder %s28, 0
      %p69 = por %p67, %p68
      %p70 = scmp.ne.s32.totalorder %s62, %s64
      %p71 = scmp.eq.s32.totalorder %s33, 1
      %p72 = por %p70, %p71
      %p73 = scmp.ne.s32.totalorder %s64, %s65
      %p74 = scmp.eq.s32.totalorder %s33, 0
      %p75 = por %p73, %p74
      %p76 = scmp.ne.s32.totalorder %s64, %s65
      %p77 = scmp.eq.s32.totalorder %s34, 1
      %p78 = por %p76, %p77
      %p80 = scmp.ne.s32.totalorder %s65, %s79
      %p81 = scmp.eq.s32.totalorder %s34, 0
      %p82 = por %p80, %p81
      %s84 = sadd.s32 %s83, 1
      %p87 = scmp.eq.s32.totalorder %s28, 1
      %p88 = scmp.ne.s32.totalorder %s83, %s85
      %p89 = scmp.eq.s32.totalorder %s28, 0
      %p90 = por %p88, %p89
      %p91 = scmp.ne.s32.totalorder %s83, %s85
      %p92 = scmp.eq.s32.totalorder %s33, 1
      %p93 = por %p91, %p92
      %p94 = scmp.ne.s32.totalorder %s85, %s86
      %p95 = scmp.eq.s32.totalorder %s33, 0
      %p96 = por %p94, %p95
      %p97 = scmp.ne.s32.totalorder %s85, %s86
      %p98 = scmp.eq.s32.totalorder %s34, 1
      %p99 = por %p97, %p98
      %p101 = scmp.ne.s32.totalorder %s86, %s100
      %p102 = scmp.eq.s32.totalorder %s34, 0
      %p103 = por %p101, %p102
      %s105 = sadd.s32 %s104, 1
      %p108 = scmp.eq.s32.totalorder %s28, 1
      %p109 = scmp.ne.s32.totalorder %s104, %s106
      %p110 = scmp.eq.s32.totalorder %s28, 0
      %p111 = por %p109, %p110
      %p112 = scmp.ne.s32.totalorder %s104, %s106
      %p113 = scmp.eq.s32.totalorder %s33, 1
      %p114 = por %p112, %p113
      %p115 = scmp.ne.s32.totalorder %s106, %s107
      %p116 = scmp.eq.s32.totalorder %s33, 0
      %p117 = por %p115, %p116
      %p118 = scmp.ne.s32.totalorder %s106, %s107
      %p119 = scmp.eq.s32.totalorder %s34, 1
      %p120 = por %p118, %p119
      %p122 = scmp.ne.s32.totalorder %s107, %s121
      %p123 = scmp.eq.s32.totalorder %s34, 0
      %p124 = por %p122, %p123
      %s126 = sadd.s32 %s125, 1
      %p129 = scmp.eq.s32.totalorder %s28, 1
      %p130 = scmp.ne.s32.totalorder %s125, %s127
      %p131 = scmp.eq.s32.totalorder %s28, 0
      %p132 = por %p130, %p131
      %p133 = scmp.ne.s32.totalorder %s125, %s127
      %p134 = scmp.eq.s32.totalorder %s33, 1
      %p135 = por %p133, %p134
      %p136 = scmp.ne.s32.totalorder %s127, %s128
      %p137 = scmp.eq.s32.totalorder %s33, 0
      %p138 = por %p136, %p137
      %p139 = scmp.ne.s32.totalorder %s127, %s128
      %p140 = scmp.eq.s32.totalorder %s34, 1
      %p141 = por %p139, %p140
      %p143 = scmp.ne.s32.totalorder %s128, %s142
      %p144 = scmp.eq.s32.totalorder %s34, 0
      %p145 = por %p143, %p144
      %s147 = sadd.s32 %s146, 1
      %p150 = scmp.eq.s32.totalorder %s28, 1
      %p151 = scmp.ne.s32.totalorder %s146, %s148
      %p152 = scmp.eq.s32.totalorder %s28, 0
      %p153 = por %p151, %p152
      %p154 = scmp.ne.s32.totalorder %s146, %s148
      %p155 = scmp.eq.s32.totalorder %s33, 1
      %p156 = por %p154, %p155
      %p157 = scmp.ne.s32.totalorder %s148, %s149
      %p158 = scmp.eq.s32.totalorder %s33, 0
      %p159 = por %p157, %p158
      %p160 = scmp.ne.s32.totalorder %s148, %s149
      %p161 = scmp.eq.s32.totalorder %s34, 1
      %p162 = por %p160, %p161
      %p164 = scmp.ne.s32.totalorder %s149, %s163
      %p165 = scmp.eq.s32.totalorder %s34, 0
      %p166 = por %p164, %p165
      %s168 = sadd.s32 %s167, 1
      %p171 = scmp.eq.s32.totalorder %s28, 1
      %p172 = scmp.ne.s32.totalorder %s167, %s169
      %p173 = scmp.eq.s32.totalorder %s28, 0
      %p174 = por %p172, %p173
      %p175 = scmp.ne.s32.totalorder %s167, %s169
      %p176 = scmp.eq.s32.totalorder %s33, 1
      %p177 = por %p175, %p176
      %p178 = scmp.ne.s32.totalorder %s169, %s170
      %p179 = scmp.eq.s32.totalorder %s33, 0
      %p180 = por %p178, %p179
      %p181 = scmp.ne.s32.totalorder %s169, %s170
      %p182 = scmp.eq.s32.totalorder %s34, 1
      %p183 = por %p181, %p182
      %p185 = scmp.ne.s32.totalorder %s170, %s184
      %p186 = scmp.eq.s32.totalorder %s34, 0
      %p187 = por %p185, %p186
      %s189 = sadd.s32 %s188, 1
      %p192 = scmp.eq.s32.totalorder %s28, 1
      %p193 = scmp.ne.s32.totalorder %s188, %s190
      %p194 = scmp.eq.s32.totalorder %s28, 0
      %p195 = por %p193, %p194
      %p196 = scmp.ne.s32.totalorder %s188, %s190
      %p197 = scmp.eq.s32.totalorder %s33, 1
      %p198 = por %p196, %p197
      %p199 = scmp.ne.s32.totalorder %s190, %s191
      %p200 = scmp.eq.s32.totalorder %s33, 0
      %p201 = por %p199, %p200
      %p202 = scmp.ne.s32.totalorder %s190, %s191
      %p203 = scmp.eq.s32.totalorder %s34, 1
      %p204 = por %p202, %p203
      %p206 = scmp.ne.s32.totalorder %s191, %s205
      %p207 = scmp.eq.s32.totalorder %s34, 0
      %p208 = por %p206, %p207
      %s210 = sadd.s32 %s209, 1
      %p213 = scmp.eq.s32.totalorder %s28, 1
      %p214 = scmp.ne.s32.totalorder %s209, %s211
      %p215 = scmp.eq.s32.totalorder %s28, 0
      %p216 = por %p214, %p215
      %p217 = scmp.ne.s32.totalorder %s209, %s211
      %p218 = scmp.eq.s32.totalorder %s33, 1
      %p219 = por %p217, %p218
      %p220 = scmp.ne.s32.totalorder %s211, %s212
      %p221 = scmp.eq.s32.totalorder %s33, 0
      %p222 = por %p220, %p221
      %p223 = scmp.ne.s32.totalorder %s211, %s212
      %p224 = scmp.eq.s32.totalorder %s34, 1
      %p225 = por %p223, %p224
      %p227 = scmp.ne.s32.totalorder %s212, %s226
      %p228 = scmp.eq.s32.totalorder %s34, 0
      %p229 = por %p227, %p228
      %s231 = sadd.s32 %s230, 1
      %p234 = scmp.eq.s32.totalorder %s28, 1
      %p235 = scmp.ne.s32.totalorder %s230, %s232
      %p236 = scmp.eq.s32.totalorder %s28, 0
      %p237 = por %p235, %p236
      %p238 = scmp.ne.s32.totalorder %s230, %s232
      %p239 = scmp.eq.s32.totalorder %s33, 1
      %p240 = por %p238, %p239
      %p241 = scmp.ne.s32.totalorder %s232, %s233
      %p242 = scmp.eq.s32.totalorder %s33, 0
      %p243 = por %p241, %p242
      %p244 = scmp.ne.s32.totalorder %s232, %s233
      %p245 = scmp.eq.s32.totalorder %s34, 1
      %p246 = por %p244, %p245
      %p248 = scmp.ne.s32.totalorder %s233, %s247
      %p249 = scmp.eq.s32.totalorder %s34, 0
      %p250 = por %p248, %p249
      %s252 = sadd.s32 %s251, 1
      %p255 = scmp.eq.s32.totalorder %s28, 1
      %p256 = scmp.ne.s32.totalorder %s251, %s253
      %p257 = scmp.eq.s32.totalorder %s28, 0
      %p258 = por %p256, %p257
      %p259 = scmp.ne.s32.totalorder %s251, %s253
      %p260 = scmp.eq.s32.totalorder %s33, 1
      %p261 = por %p259, %p260
      %p262 = scmp.ne.s32.totalorder %s253, %s254
      %p263 = scmp.eq.s32.totalorder %s33, 0
      %p264 = por %p262, %p263
      %p265 = scmp.ne.s32.totalorder %s253, %s254
      %p266 = scmp.eq.s32.totalorder %s34, 1
      %p267 = por %p265, %p266
      %p269 = scmp.ne.s32.totalorder %s254, %s268
      %p270 = scmp.eq.s32.totalorder %s34, 0
      %p271 = por %p269, %p270
      %s273 = sadd.s32 %s272, 1
      %p276 = scmp.eq.s32.totalorder %s28, 1
      %p277 = scmp.ne.s32.totalorder %s272, %s274
      %p278 = scmp.eq.s32.totalorder %s28, 0
      %p279 = por %p277, %p278
      %p280 = scmp.ne.s32.totalorder %s272, %s274
      %p281 = scmp.eq.s32.totalorder %s33, 1
      %p282 = por %p280, %p281
      %p283 = scmp.ne.s32.totalorder %s274, %s275
      %p284 = scmp.eq.s32.totalorder %s33, 0
      %p285 = por %p283, %p284
      %p286 = scmp.ne.s32.totalorder %s274, %s275
      %p287 = scmp.eq.s32.totalorder %s34, 1
      %p288 = por %p286, %p287
      %p290 = scmp.ne.s32.totalorder %s275, %s289
      %p291 = scmp.eq.s32.totalorder %s34, 0
      %p292 = por %p290, %p291
      %s294 = sadd.s32 %s293, 1
      %p297 = scmp.eq.s32.totalorder %s28, 1
      %p298 = scmp.ne.s32.totalorder %s293, %s295
      %p299 = scmp.eq.s32.totalorder %s28, 0
      %p300 = por %p298, %p299
      %p301 = scmp.ne.s32.totalorder %s293, %s295
      %p302 = scmp.eq.s32.totalorder %s33, 1
      %p303 = por %p301, %p302
      %p304 = scmp.ne.s32.totalorder %s295, %s296
      %p305 = scmp.eq.s32.totalorder %s33, 0
      %p306 = por %p304, %p305
      %p307 = scmp.ne.s32.totalorder %s295, %s296
      %p308 = scmp.eq.s32.totalorder %s34, 1
      %p309 = por %p307, %p308
      %p311 = scmp.ne.s32.totalorder %s296, %s310
      %p312 = scmp.eq.s32.totalorder %s34, 0
      %p313 = por %p311, %p312
      %s315 = sadd.s32 %s314, 1
      %p318 = scmp.eq.s32.totalorder %s28, 1
      %p319 = scmp.ne.s32.totalorder %s314, %s316
      %p320 = scmp.eq.s32.totalorder %s28, 0
      %p321 = por %p319, %p320
      %p322 = scmp.ne.s32.totalorder %s314, %s316
      %p323 = scmp.eq.s32.totalorder %s33, 1
      %p324 = por %p322, %p323
      %p325 = scmp.ne.s32.totalorder %s316, %s317
      %p326 = scmp.eq.s32.totalorder %s33, 0
      %p327 = por %p325, %p326
      %p328 = scmp.ne.s32.totalorder %s316, %s317
      %p329 = scmp.eq.s32.totalorder %s34, 1
      %p330 = por %p328, %p329
      %p332 = scmp.ne.s32.totalorder %s317, %s331
      %p333 = scmp.eq.s32.totalorder %s34, 0
      %p334 = por %p332, %p333
      %s336 = sadd.s32 %s335, 1
      %p339 = scmp.eq.s32.totalorder %s28, 1
      %p340 = scmp.ne.s32.totalorder %s335, %s337
      %p341 = scmp.eq.s32.totalorder %s28, 0
      %p342 = por %p340, %p341
      %p343 = scmp.ne.s32.totalorder %s335, %s337
      %p344 = scmp.eq.s32.totalorder %s33, 1
      %p345 = por %p343, %p344
      %p346 = scmp.ne.s32.totalorder %s337, %s338
      %p347 = scmp.eq.s32.totalorder %s33, 0
      %p348 = por %p346, %p347
      %p349 = scmp.ne.s32.totalorder %s337, %s338
      %p350 = scmp.eq.s32.totalorder %s34, 1
      %p351 = por %p349, %p350
      %p353 = scmp.ne.s32.totalorder %s338, %s352
      %p354 = scmp.eq.s32.totalorder %s34, 0
      %p355 = por %p353, %p354
      %s357 = sadd.s32 %s356, 1
      %p360 = scmp.eq.s32.totalorder %s28, 1
      %p361 = scmp.ne.s32.totalorder %s356, %s358
      %p362 = scmp.eq.s32.totalorder %s28, 0
      %p363 = por %p361, %p362
      %p364 = scmp.ne.s32.totalorder %s356, %s358
      %p365 = scmp.eq.s32.totalorder %s33, 1
      %p366 = por %p364, %p365
      %p367 = scmp.ne.s32.totalorder %s358, %s359
      %p368 = scmp.eq.s32.totalorder %s33, 0
      %p369 = por %p367, %p368
      %p370 = scmp.ne.s32.totalorder %s358, %s359
      %p371 = scmp.eq.s32.totalorder %s34, 1
      %p372 = por %p370, %p371
      %p374 = scmp.ne.s32.totalorder %s359, %s373
      %p375 = scmp.eq.s32.totalorder %s34, 0
      %p376 = por %p374, %p375
      %s378 = sadd.s32 %s377, 1
      %p381 = scmp.eq.s32.totalorder %s28, 1
      %p382 = scmp.ne.s32.totalorder %s377, %s379
      %p383 = scmp.eq.s32.totalorder %s28, 0
      %p384 = por %p382, %p383
      %p385 = scmp.ne.s32.totalorder %s377, %s379
      %p386 = scmp.eq.s32.totalorder %s33, 1
      %p387 = por %p385, %p386
      %p388 = scmp.ne.s32.totalorder %s379, %s380
      %p389 = scmp.eq.s32.totalorder %s33, 0
      %p390 = por %p388, %p389
      %p391 = scmp.ne.s32.totalorder %s379, %s380
      %p392 = scmp.eq.s32.totalorder %s34, 1
      %p393 = por %p391, %p392
      %p395 = scmp.ne.s32.totalorder %s380, %s394
      %p396 = scmp.eq.s32.totalorder %s34, 0
      %p397 = por %p395, %p396
      %s399 = sadd.s32 %s398, 1
      %p402 = scmp.eq.s32.totalorder %s28, 1
      %p403 = scmp.ne.s32.totalorder %s398, %s400
      %p404 = scmp.eq.s32.totalorder %s28, 0
      %p405 = por %p403, %p404
      %p406 = scmp.ne.s32.totalorder %s398, %s400
      %p407 = scmp.eq.s32.totalorder %s33, 1
      %p408 = por %p406, %p407
      %p409 = scmp.ne.s32.totalorder %s400, %s401
      %p410 = scmp.eq.s32.totalorder %s33, 0
      %p411 = por %p409, %p410
      %p412 = scmp.ne.s32.totalorder %s400, %s401
      %p413 = scmp.eq.s32.totalorder %s34, 1
      %p414 = por %p412, %p413
      %p416 = scmp.ne.s32.totalorder %s401, %s415
      %p417 = scmp.eq.s32.totalorder %s34, 0
      %p418 = por %p416, %p417
      %s420 = sadd.s32 %s419, 1
      %p423 = scmp.eq.s32.totalorder %s28, 1
      %p424 = scmp.ne.s32.totalorder %s419, %s421
      %p425 = scmp.eq.s32.totalorder %s28, 0
      %p426 = por %p424, %p425
      %p427 = scmp.ne.s32.totalorder %s419, %s421
      %p428 = scmp.eq.s32.totalorder %s33, 1
      %p429 = por %p427, %p428
      %p430 = scmp.ne.s32.totalorder %s421, %s422
      %p431 = scmp.eq.s32.totalorder %s33, 0
      %p432 = por %p430, %p431
      %p433 = scmp.ne.s32.totalorder %s421, %s422
      %p434 = scmp.eq.s32.totalorder %s34, 1
      %p435 = por %p433, %p434
      %p437 = scmp.ne.s32.totalorder %s422, %s436
      %p438 = scmp.eq.s32.totalorder %s34, 0
      %p439 = por %p437, %p438
      %s440 = ssub.s32 %s28, %s35
      %p441 = scmp.eq.s32.totalorder %s440, 0
      %s443 = sadd.s32 %s442, 1
      %s444 = scalar_select %p441, %s442, %s443
      %p447 = pneg %p441
      %p448 = scmp.eq.s32.totalorder %s28, 1
      %p449 = por %p447, %p448
      %p450 = scmp.ne.s32.totalorder %s442, %s445
      %p451 = scmp.eq.s32.totalorder %s28, 0
      %p452 = por %p450, %p451
      %p453 = scmp.ne.s32.totalorder %s442, %s445
      %p454 = scmp.eq.s32.totalorder %s33, 1
      %p455 = por %p453, %p454
      %p456 = scmp.ne.s32.totalorder %s445, %s446
      %p457 = scmp.eq.s32.totalorder %s33, 0
      %p458 = por %p456, %p457
      %p459 = scmp.ne.s32.totalorder %s445, %s446
      %p460 = scmp.eq.s32.totalorder %s34, 1
      %p461 = por %p459, %p460
      %p463 = scmp.ne.s32.totalorder %s446, %s462
      %p464 = scmp.eq.s32.totalorder %s34, 0
      %p465 = por %p463, %p464
      %p466 = scmp.le.s32.totalorder 1, %s28
      %p467 = scmp.lt.s32.totalorder %s28, 3
      %p468 = pnand %p466, %p467
      %p469 = pneg %p468
      // Predicated region
      $region9: #{tpu_custom_call.1} parent=5 // pred_check
        _
      $region10: #{tpu_custom_call.1} parent=5 // pred_check_branch
        %471 = sbr.rel (%p468) target = $region12
      $region11: #{tpu_custom_call.1} parent=5 // pred_region
        %s472 = ssub.s32 %s28, 1
        // Predicated region
        $region13: #{tpu_custom_call.1} parent=11 // pred_check
          %p473 = pneg %p75
        $region14: #{tpu_custom_call.1} parent=11 // pred_check_branch
          %475 = sbr.rel (%p473) target = $region16
        $region15: #{tpu_custom_call.1} parent=11 // pred_region
          _
        $region16: #{tpu_custom_call.1} parent=11 // pred_fallthru
          _
        // Predicated region
        $region17: #{tpu_custom_call.1} parent=11 // pred_check
          %p476 = pneg %p96
        $region18: #{tpu_custom_call.1} parent=11 // pred_check_branch
          %478 = sbr.rel (%p476) target = $region20
        $region19: #{tpu_custom_call.1} parent=11 // pred_region
          _
        $region20: #{tpu_custom_call.1} parent=11 // pred_fallthru
          _
        // Predicated region
        $region21: #{tpu_custom_call.1} parent=11 // pred_check
          %p479 = pneg %p117
        $region22: #{tpu_custom_call.1} parent=11 // pred_check_branch
          %481 = sbr.rel (%p479) target = $region24
        $region23: #{tpu_custom_call.1} parent=11 // pred_region
          _
        $region24: #{tpu_custom_call.1} parent=11 // pred_fallthru
          _
        // Predicated region
        $region25: #{tpu_custom_call.1} parent=11 // pred_check
          %p482 = pneg %p138
        $region26: #{tpu_custom_call.1} parent=11 // pred_check_branch
          %484 = sbr.rel (%p482) target = $region28
        $region27: #{tpu_custom_call.1} parent=11 // pred_region
          _
        $region28: #{tpu_custom_call.1} parent=11 // pred_fallthru
          _
        // Predicated region
        $region29: #{tpu_custom_call.1} parent=11 // pred_check
          %p485 = pneg %p159
        $region30: #{tpu_custom_call.1} parent=11 // pred_check_branch
          %487 = sbr.rel (%p485) target = $region32
        $region31: #{tpu_custom_call.1} parent=11 // pred_region
          _
        $region32: #{tpu_custom_call.1} parent=11 // pred_fallthru
          _
        // Predicated region
        $region33: #{tpu_custom_call.1} parent=11 // pred_check
          %p488 = pneg %p180
        $region34: #{tpu_custom_call.1} parent=11 // pred_check_branch
          %490 = sbr.rel (%p488) target = $region36
        $region35: #{tpu_custom_call.1} parent=11 // pred_region
          _
        $region36: #{tpu_custom_call.1} parent=11 // pred_fallthru
          _
        // Predicated region
        $region37: #{tpu_custom_call.1} parent=11 // pred_check
          %p491 = pneg %p201
        $region38: #{tpu_custom_call.1} parent=11 // pred_check_branch
          %493 = sbr.rel (%p491) target = $region40
        $region39: #{tpu_custom_call.1} parent=11 // pred_region
          _
        $region40: #{tpu_custom_call.1} parent=11 // pred_fallthru
          _
        // Predicated region
        $region41: #{tpu_custom_call.1} parent=11 // pred_check
          %p494 = pneg %p222
        $region42: #{tpu_custom_call.1} parent=11 // pred_check_branch
          %496 = sbr.rel (%p494) target = $region44
        $region43: #{tpu_custom_call.1} parent=11 // pred_region
          _
        $region44: #{tpu_custom_call.1} parent=11 // pred_fallthru
          _
        // Predicated region
        $region45: #{tpu_custom_call.1} parent=11 // pred_check
          %p497 = pneg %p243
        $region46: #{tpu_custom_call.1} parent=11 // pred_check_branch
          %499 = sbr.rel (%p497) target = $region48
        $region47: #{tpu_custom_call.1} parent=11 // pred_region
          _
        $region48: #{tpu_custom_call.1} parent=11 // pred_fallthru
          _
        // Predicated region
        $region49: #{tpu_custom_call.1} parent=11 // pred_check
          %p500 = pneg %p264
        $region50: #{tpu_custom_call.1} parent=11 // pred_check_branch
          %502 = sbr.rel (%p500) target = $region52
        $region51: #{tpu_custom_call.1} parent=11 // pred_region
          _
        $region52: #{tpu_custom_call.1} parent=11 // pred_fallthru
          _
        // Predicated region
        $region53: #{tpu_custom_call.1} parent=11 // pred_check
          %p503 = pneg %p285
        $region54: #{tpu_custom_call.1} parent=11 // pred_check_branch
          %505 = sbr.rel (%p503) target = $region56
        $region55: #{tpu_custom_call.1} parent=11 // pred_region
          _
        $region56: #{tpu_custom_call.1} parent=11 // pred_fallthru
          _
        // Predicated region
        $region57: #{tpu_custom_call.1} parent=11 // pred_check
          %p506 = pneg %p306
        $region58: #{tpu_custom_call.1} parent=11 // pred_check_branch
          %508 = sbr.rel (%p506) target = $region60
        $region59: #{tpu_custom_call.1} parent=11 // pred_region
          _
        $region60: #{tpu_custom_call.1} parent=11 // pred_fallthru
          _
        // Predicated region
        $region61: #{tpu_custom_call.1} parent=11 // pred_check
          %p509 = pneg %p327
        $region62: #{tpu_custom_call.1} parent=11 // pred_check_branch
          %511 = sbr.rel (%p509) target = $region64
        $region63: #{tpu_custom_call.1} parent=11 // pred_region
          _
        $region64: #{tpu_custom_call.1} parent=11 // pred_fallthru
          _
        // Predicated region
        $region65: #{tpu_custom_call.1} parent=11 // pred_check
          %p512 = pneg %p348
        $region66: #{tpu_custom_call.1} parent=11 // pred_check_branch
          %514 = sbr.rel (%p512) target = $region68
        $region67: #{tpu_custom_call.1} parent=11 // pred_region
          _
        $region68: #{tpu_custom_call.1} parent=11 // pred_fallthru
          _
        // Predicated region
        $region69: #{tpu_custom_call.1} parent=11 // pred_check
          %p515 = pneg %p369
        $region70: #{tpu_custom_call.1} parent=11 // pred_check_branch
          %517 = sbr.rel (%p515) target = $region72
        $region71: #{tpu_custom_call.1} parent=11 // pred_region
          _
        $region72: #{tpu_custom_call.1} parent=11 // pred_fallthru
          _
        // Predicated region
        $region73: #{tpu_custom_call.1} parent=11 // pred_check
          %p518 = pneg %p390
        $region74: #{tpu_custom_call.1} parent=11 // pred_check_branch
          %520 = sbr.rel (%p518) target = $region76
        $region75: #{tpu_custom_call.1} parent=11 // pred_region
          _
        $region76: #{tpu_custom_call.1} parent=11 // pred_fallthru
          _
        // Predicated region
        $region77: #{tpu_custom_call.1} parent=11 // pred_check
          %p521 = pneg %p411
        $region78: #{tpu_custom_call.1} parent=11 // pred_check_branch
          %523 = sbr.rel (%p521) target = $region80
        $region79: #{tpu_custom_call.1} parent=11 // pred_region
          _
        $region80: #{tpu_custom_call.1} parent=11 // pred_fallthru
          _
        // Predicated region
        $region81: #{tpu_custom_call.1} parent=11 // pred_check
          %p524 = pneg %p432
        $region82: #{tpu_custom_call.1} parent=11 // pred_check_branch
          %526 = sbr.rel (%p524) target = $region84
        $region83: #{tpu_custom_call.1} parent=11 // pred_region
          _
        $region84: #{tpu_custom_call.1} parent=11 // pred_fallthru
          _
      $region12: #{tpu_custom_call.1} parent=5 // pred_fallthru
        _
      %p527 = scmp.lt.s32.totalorder %s28, 2
      // Predicated region
      $region85: #{tpu_custom_call.1} parent=5 // pred_check
        %p528 = pneg %p527
      $region86: #{tpu_custom_call.1} parent=5 // pred_check_branch
        %530 = sbr.rel (%p528) target = $region88
      $region87: #{tpu_custom_call.1} parent=5 // pred_region
        // Predicated region
        $region89: #{tpu_custom_call.1} parent=87 // pred_check
          %p531 = pneg %p48
        $region90: #{tpu_custom_call.1} parent=87 // pred_check_branch
          %533 = sbr.rel (%p531) target = $region92
        $region91: #{tpu_custom_call.1} parent=87 // pred_region
          %p534 = scmp.lt.s32.totalorder %s28, 1
          %s535 = scalar_select %p534, %s28, 1
          %s536 = smul.addr %s535, 8
          %s537 = scalar_lea.vmem %s0, %s536
        $region92: #{tpu_custom_call.1} parent=87 // pred_fallthru
          _
      $region88: #{tpu_custom_call.1} parent=5 // pred_fallthru
        _
      %p538 = scmp.le.s32.totalorder 1, %s28
      %p539 = scmp.lt.s32.totalorder %s28, 3
      %p540 = pnand %p538, %p539
      %p541 = pneg %p540
      // Predicated region
      $region93: #{tpu_custom_call.1} parent=5 // pred_check
        _
      $region94: #{tpu_custom_call.1} parent=5 // pred_check_branch
        %543 = sbr.rel (%p540) target = $region96
      $region95: #{tpu_custom_call.1} parent=5 // pred_region
        %s544 = ssub.s32 %s28, 1
        %p545 = scmp.lt.s32.totalorder %s33, 1
        %s546 = scalar_select %p545, %s33, 1
        %s547 = smul.addr %s546, 8
        %s548 = scalar_lea.vmem %s0, %s547
        %p549 = pneg %p54
        %p550 = pneg %p51
        %p551 = pneg %p75
        %p552 = pneg %p72
        %p553 = pneg %p96
        %p554 = pneg %p93
        %p555 = pneg %p117
        %p556 = pneg %p114
        %p557 = pneg %p138
        %p558 = pneg %p135
        %p559 = pneg %p159
        %p560 = pneg %p156
        %p561 = pneg %p180
        %p562 = pneg %p177
        %p563 = pneg %p201
        %p564 = pneg %p198
        %p565 = pneg %p222
        %p566 = pneg %p219
        %p567 = pneg %p243
        %p568 = pneg %p240
        %p569 = pneg %p264
        %p570 = pneg %p261
        %p571 = pneg %p285
        %p572 = pneg %p282
        %p573 = pneg %p306
        %p574 = pneg %p303
        %p575 = pneg %p327
        %p576 = pneg %p324
        %p577 = pneg %p348
        %p578 = pneg %p345
        %p579 = pneg %p369
        %p580 = pneg %p366
        %p581 = pneg %p390
        %p582 = pneg %p387
        %p583 = pneg %p411
        %p584 = pneg %p408
        %p585 = pneg %p432
        %p586 = pneg %p429
        %p587 = pneg %p458
        %p588 = pneg %p455
        %s589 = sand.u32 %s445, 1
        %s590 = scalar_lea.sflag [#allocation3], %s589
        %s591 = sand.u32 %s445, 1
        %s592 = smul.addr %s591, 8
        %s593 = scalar_lea.vmem [#allocation2], %s592
        %p594 = scmp.lt.s32.totalorder %s33, 1
        %s595 = scalar_select %p594, %s33, 1
        %s596 = smul.addr %s595, 8
        %s597 = scalar_lea.vmem %s0, %s596
        %v598 = vld [vmem:[%s597] sm:$0xff]
        %v599 = vld [vmem:[%s1] sm:$0xff]
        %v600 = vld [vmem:[%s1 + $0x8] sm:$0xff]
        %v601 = vld [vmem:[%s1 + $0x10] sm:$0xff]
        %v602 = vld [vmem:[%s1 + $0x18] sm:$0xff]
        %v603 = vld [vmem:[%s1 + $0x20] sm:$0xff]
        %v604 = vld [vmem:[%s1 + $0x28] sm:$0xff]
        %v605 = vld [vmem:[%s1 + $0x30] sm:$0xff]
        %v606 = vld [vmem:[%s1 + $0x38] sm:$0xff]
        %v607 = vld [vmem:[%s1 + $0x40] sm:$0xff]
        %v608 = vld [vmem:[%s1 + $0x48] sm:$0xff]
        %v609 = vld [vmem:[%s1 + $0x50] sm:$0xff]
        %v610 = vld [vmem:[%s1 + $0x58] sm:$0xff]
        %v611 = vld [vmem:[%s1 + $0x60] sm:$0xff]
        %v612 = vld [vmem:[%s1 + $0x68] sm:$0xff]
        %v613 = vld [vmem:[%s1 + $0x70] sm:$0xff]
        %v614 = vld [vmem:[%s1 + $0x78] sm:$0xff]
        %v615 = vld [vmem:[%s1 + $0x80] sm:$0xff]
        %v616 = vld [vmem:[%s1 + $0x88] sm:$0xff]
        %v617 = vld [vmem:[%s1 + $0x90] sm:$0xff]
        %v618 = vld [vmem:[%s1 + $0x98] sm:$0xff]
        %v619 = vld [vmem:[%s1 + $0xa0] sm:$0xff]
        %v620 = vld [vmem:[%s1 + $0xa8] sm:$0xff]
        %v621 = vld [vmem:[%s1 + $0xb0] sm:$0xff]
        %v622 = vld [vmem:[%s1 + $0xb8] sm:$0xff]
        %v623 = vld [vmem:[%s1 + $0xc0] sm:$0xff]
        %v624 = vld [vmem:[%s1 + $0xc8] sm:$0xff]
        %v625 = vld [vmem:[%s1 + $0xd0] sm:$0xff]
        %v626 = vld [vmem:[%s1 + $0xd8] sm:$0xff]
        %v627 = vld [vmem:[%s1 + $0xe0] sm:$0xff]
        %v628 = vld [vmem:[%s1 + $0xe8] sm:$0xff]
        %v629 = vld [vmem:[%s1 + $0xf0] sm:$0xff]
        %v630 = vld [vmem:[%s1 + $0xf8] sm:$0xff]
        %v631 = vld [vmem:[%s2] sm:$0x1]
        %v632 = vld [vmem:[%s2 + $0x1] sm:$0x1]
        %v633 = vld [vmem:[%s2 + $0x2] sm:$0x1]
        %v634 = vld [vmem:[%s2 + $0x3] sm:$0x1]
        %v639 = vlaneseq
        %v640 = vshrl.u32 %v639, 7
        %v641 = vsub.s32 0, %v640
        %v642 = vrot.slane %v631, %v641
        %v643 = vlaneseq
        %v644 = vshrl.u32 %v643, 7
        %v645 = vsub.s32 0, %v644
        %v646 = vrot.slane %v632, %v645
        %v647 = vlaneseq
        %v648 = vshrl.u32 %v647, 7
        %v649 = vsub.s32 0, %v648
        %v650 = vrot.slane %v633, %v649
        %v651 = vlaneseq
        %v652 = vshrl.u32 %v651, 7
        %v653 = vsub.s32 0, %v652
        %v654 = vrot.slane %v634, %v653
        %vm659 = vcmask 523264
        %v661 = vsel %vm659, %v598, 0
        %663 = vmatprep.subr.mxu0 0.0
        %664 = vmatpush1.msra.mxu0 0.0
        %665 = vmatprep.subr.mxu0 0.0
        %666 = vmatpush1.msra.mxu0 0.0
        %667 = vmatprep.subr.mxu0 0.0
        %668 = vmatpush1.msra.mxu0 0.0
        %669 = vmatprep.subr.mxu0 0.0
        %670 = vmatpush1.msra.mxu0 0.0
        %671 = vmatprep.subr.mxu0 0.0
        %672 = vmatpush1.msra.mxu0 0.0
        %673 = vmatprep.subr.mxu0 0.0
        %674 = vmatpush1.msra.mxu0 0.0
        %675 = vmatprep.subr.mxu0 0.0
        %676 = vmatpush1.msra.mxu0 0.0
        %677 = vmatprep.subr.mxu0 0.0
        %678 = vmatpush1.msra.mxu0 0.0
        %679 = vmatprep.subr.mxu0 0.0
        %680 = vmatpush1.msra.mxu0 %v606
        %681 = vmatprep.subr.mxu0 0.0
        %682 = vmatpush1.msra.mxu0 %v605
        %683 = vmatprep.subr.mxu0 0.0
        %684 = vmatpush1.msra.mxu0 %v604
        %685 = vmatprep.subr.mxu0 0.0
        %686 = vmatpush1.msra.mxu0 %v603
        %687 = vmatprep.subr.mxu0 0.0
        %688 = vmatpush1.msra.mxu0 %v602
        %689 = vmatprep.subr.mxu0 0.0
        %690 = vmatpush1.msra.mxu0 %v601
        %691 = vmatprep.subr.mxu0 0.0
        %692 = vmatpush1.msra.mxu0 %v600
        %693 = vmatprep.subr.mxu0 0.0
        %694 = vmatpush1.msra.mxu0 %v599
        %695 = vmatprep.subr.mxu0 0.0
        %696 = vmatpush2.msra.mxu0 0.0
        %697 = vmatprep.subr.mxu0 0.0
        %698 = vmatpush2.msra.mxu0 0.0
        %699 = vmatprep.subr.mxu0 0.0
        %700 = vmatpush2.msra.mxu0 0.0
        %701 = vmatprep.subr.mxu0 0.0
        %702 = vmatpush2.msra.mxu0 0.0
        %703 = vmatprep.subr.mxu0 0.0
        %704 = vmatpush2.msra.mxu0 0.0
        %705 = vmatprep.subr.mxu0 0.0
        %706 = vmatpush2.msra.mxu0 0.0
        %707 = vmatprep.subr.mxu0 0.0
        %708 = vmatpush2.msra.mxu0 0.0
        %709 = vmatprep.subr.mxu0 0.0
        %710 = vmatpush2.msra.mxu0 0.0
        %711 = vmatprep.subr.mxu0 0.0
        %712 = vmatpush2.msra.mxu0 0.0
        %713 = vmatprep.subr.mxu0 0.0
        %714 = vmatpush2.msra.mxu0 0.0
        %715 = vmatprep.subr.mxu0 0.0
        %716 = vmatpush2.msra.mxu0 0.0
        %717 = vmatprep.subr.mxu0 0.0
        %718 = vmatpush2.msra.mxu0 0.0
        %719 = vmatprep.subr.mxu0 0.0
        %720 = vmatpush2.msra.mxu0 0.0
        %721 = vmatprep.subr.mxu0 0.0
        %722 = vmatpush2.msra.mxu0 0.0
        %723 = vmatprep.subr.mxu0 0.0
        %724 = vmatpush2.msra.mxu0 0.0
        %725 = vmatprep.subr.mxu0 0.0
        %726 = vmatpush2.msra.mxu0 0.0
        %727 = vmatprep.mubr.f32.mxu0 0.0
        %728 = vmatmul.mubr.f32.gmra.mxu0 %v661
        %v729 = vpop.f32.mrf.mxu0
        %v730 = vadd.f32 %v642, %v729
        %v731 = vpop.f32.mrf.mxu0
        %732 = vdwg.mxu0
        %733 = vmatprep.subr.mxu0 0.0
        %734 = vmatpush1.msra.mxu0 0.0
        %735 = vmatprep.subr.mxu0 0.0
        %736 = vmatpush1.msra.mxu0 0.0
        %737 = vmatprep.subr.mxu0 0.0
        %738 = vmatpush1.msra.mxu0 0.0
        %739 = vmatprep.subr.mxu0 0.0
        %740 = vmatpush1.msra.mxu0 0.0
        %741 = vmatprep.subr.mxu0 0.0
        %742 = vmatpush1.msra.mxu0 0.0
        %743 = vmatprep.subr.mxu0 0.0
        %744 = vmatpush1.msra.mxu0 0.0
        %745 = vmatprep.subr.mxu0 0.0
        %746 = vmatpush1.msra.mxu0 0.0
        %747 = vmatprep.subr.mxu0 0.0
        %748 = vmatpush1.msra.mxu0 0.0
        %749 = vmatprep.subr.mxu0 0.0
        %750 = vmatpush1.msra.mxu0 %v614
        %751 = vmatprep.subr.mxu0 0.0
        %752 = vmatpush1.msra.mxu0 %v613
        %753 = vmatprep.subr.mxu0 0.0
        %754 = vmatpush1.msra.mxu0 %v612
        %755 = vmatprep.subr.mxu0 0.0
        %756 = vmatpush1.msra.mxu0 %v611
        %757 = vmatprep.subr.mxu0 0.0
        %758 = vmatpush1.msra.mxu0 %v610
        %759 = vmatprep.subr.mxu0 0.0
        %760 = vmatpush1.msra.mxu0 %v609
        %761 = vmatprep.subr.mxu0 0.0
        %762 = vmatpush1.msra.mxu0 %v608
        %763 = vmatprep.subr.mxu0 0.0
        %764 = vmatpush1.msra.mxu0 %v607
        %765 = vmatprep.subr.mxu0 0.0
        %766 = vmatpush2.msra.mxu0 0.0
        %767 = vmatprep.subr.mxu0 0.0
        %768 = vmatpush2.msra.mxu0 0.0
        %769 = vmatprep.subr.mxu0 0.0
        %770 = vmatpush2.msra.mxu0 0.0
        %771 = vmatprep.subr.mxu0 0.0
        %772 = vmatpush2.msra.mxu0 0.0
        %773 = vmatprep.subr.mxu0 0.0
        %774 = vmatpush2.msra.mxu0 0.0
        %775 = vmatprep.subr.mxu0 0.0
        %776 = vmatpush2.msra.mxu0 0.0
        %777 = vmatprep.subr.mxu0 0.0
        %778 = vmatpush2.msra.mxu0 0.0
        %779 = vmatprep.subr.mxu0 0.0
        %780 = vmatpush2.msra.mxu0 0.0
        %781 = vmatprep.subr.mxu0 0.0
        %782 = vmatpush2.msra.mxu0 0.0
        %783 = vmatprep.subr.mxu0 0.0
        %784 = vmatpush2.msra.mxu0 0.0
        %785 = vmatprep.subr.mxu0 0.0
        %786 = vmatpush2.msra.mxu0 0.0
        %787 = vmatprep.subr.mxu0 0.0
        %788 = vmatpush2.msra.mxu0 0.0
        %789 = vmatprep.subr.mxu0 0.0
        %790 = vmatpush2.msra.mxu0 0.0
        %791 = vmatprep.subr.mxu0 0.0
        %792 = vmatpush2.msra.mxu0 0.0
        %793 = vmatprep.subr.mxu0 0.0
        %794 = vmatpush2.msra.mxu0 0.0
        %795 = vmatprep.subr.mxu0 0.0
        %796 = vmatpush2.msra.mxu0 0.0
        %797 = vmatprep.mubr.f32.mxu0 0.0
        %798 = vmatmul.mubr.f32.gmra.mxu0 %v661
        %v799 = vpop.f32.mrf.mxu0
        %v800 = vadd.f32 %v646, %v799
        %v801 = vpop.f32.mrf.mxu0
        %802 = vdwg.mxu0
        %803 = vmatprep.subr.mxu0 0.0
        %804 = vmatpush1.msra.mxu0 0.0
        %805 = vmatprep.subr.mxu0 0.0
        %806 = vmatpush1.msra.mxu0 0.0
        %807 = vmatprep.subr.mxu0 0.0
        %808 = vmatpush1.msra.mxu0 0.0
        %809 = vmatprep.subr.mxu0 0.0
        %810 = vmatpush1.msra.mxu0 0.0
        %811 = vmatprep.subr.mxu0 0.0
        %812 = vmatpush1.msra.mxu0 0.0
        %813 = vmatprep.subr.mxu0 0.0
        %814 = vmatpush1.msra.mxu0 0.0
        %815 = vmatprep.subr.mxu0 0.0
        %816 = vmatpush1.msra.mxu0 0.0
        %817 = vmatprep.subr.mxu0 0.0
        %818 = vmatpush1.msra.mxu0 0.0
        %819 = vmatprep.subr.mxu0 0.0
        %820 = vmatpush1.msra.mxu0 %v622
        %821 = vmatprep.subr.mxu0 0.0
        %822 = vmatpush1.msra.mxu0 %v621
        %823 = vmatprep.subr.mxu0 0.0
        %824 = vmatpush1.msra.mxu0 %v620
        %825 = vmatprep.subr.mxu0 0.0
        %826 = vmatpush1.msra.mxu0 %v619
        %827 = vmatprep.subr.mxu0 0.0
        %828 = vmatpush1.msra.mxu0 %v618
        %829 = vmatprep.subr.mxu0 0.0
        %830 = vmatpush1.msra.mxu0 %v617
        %831 = vmatprep.subr.mxu0 0.0
        %832 = vmatpush1.msra.mxu0 %v616
        %833 = vmatprep.subr.mxu0 0.0
        %834 = vmatpush1.msra.mxu0 %v615
        %835 = vmatprep.subr.mxu0 0.0
        %836 = vmatpush2.msra.mxu0 0.0
        %837 = vmatprep.subr.mxu0 0.0
        %838 = vmatpush2.msra.mxu0 0.0
        %839 = vmatprep.subr.mxu0 0.0
        %840 = vmatpush2.msra.mxu0 0.0
        %841 = vmatprep.subr.mxu0 0.0
        %842 = vmatpush2.msra.mxu0 0.0
        %843 = vmatprep.subr.mxu0 0.0
        %844 = vmatpush2.msra.mxu0 0.0
        %845 = vmatprep.subr.mxu0 0.0
        %846 = vmatpush2.msra.mxu0 0.0
        %847 = vmatprep.subr.mxu0 0.0
        %848 = vmatpush2.msra.mxu0 0.0
        %849 = vmatprep.subr.mxu0 0.0
        %850 = vmatpush2.msra.mxu0 0.0
        %851 = vmatprep.subr.mxu0 0.0
        %852 = vmatpush2.msra.mxu0 0.0
        %853 = vmatprep.subr.mxu0 0.0
        %854 = vmatpush2.msra.mxu0 0.0
        %855 = vmatprep.subr.mxu0 0.0
        %856 = vmatpush2.msra.mxu0 0.0
        %857 = vmatprep.subr.mxu0 0.0
        %858 = vmatpush2.msra.mxu0 0.0
        %859 = vmatprep.subr.mxu0 0.0
        %860 = vmatpush2.msra.mxu0 0.0
        %861 = vmatprep.subr.mxu0 0.0
        %862 = vmatpush2.msra.mxu0 0.0
        %863 = vmatprep.subr.mxu0 0.0
        %864 = vmatpush2.msra.mxu0 0.0
        %865 = vmatprep.subr.mxu0 0.0
        %866 = vmatpush2.msra.mxu0 0.0
        %867 = vmatprep.mubr.f32.mxu0 0.0
        %868 = vmatmul.mubr.f32.gmra.mxu0 %v661
        %v869 = vpop.f32.mrf.mxu0
        %v870 = vadd.f32 %v650, %v869
        %v871 = vpop.f32.mrf.mxu0
        %872 = vdwg.mxu0
        %873 = vmatprep.subr.mxu0 0.0
        %874 = vmatpush1.msra.mxu0 0.0
        %875 = vmatprep.subr.mxu0 0.0
        %876 = vmatpush1.msra.mxu0 0.0
        %877 = vmatprep.subr.mxu0 0.0
        %878 = vmatpush1.msra.mxu0 0.0
        %879 = vmatprep.subr.mxu0 0.0
        %880 = vmatpush1.msra.mxu0 0.0
        %881 = vmatprep.subr.mxu0 0.0
        %882 = vmatpush1.msra.mxu0 0.0
        %883 = vmatprep.subr.mxu0 0.0
        %884 = vmatpush1.msra.mxu0 0.0
        %885 = vmatprep.subr.mxu0 0.0
        %886 = vmatpush1.msra.mxu0 0.0
        %887 = vmatprep.subr.mxu0 0.0
        %888 = vmatpush1.msra.mxu0 0.0
        %889 = vmatprep.subr.mxu0 0.0
        %890 = vmatpush1.msra.mxu0 %v630
        %891 = vmatprep.subr.mxu0 0.0
        %892 = vmatpush1.msra.mxu0 %v629
        %893 = vmatprep.subr.mxu0 0.0
        %894 = vmatpush1.msra.mxu0 %v628
        %895 = vmatprep.subr.mxu0 0.0
        %896 = vmatpush1.msra.mxu0 %v627
        %897 = vmatprep.subr.mxu0 0.0
        %898 = vmatpush1.msra.mxu0 %v626
        %899 = vmatprep.subr.mxu0 0.0
        %900 = vmatpush1.msra.mxu0 %v625
        %901 = vmatprep.subr.mxu0 0.0
        %902 = vmatpush1.msra.mxu0 %v624
        %903 = vmatprep.subr.mxu0 0.0
        %904 = vmatpush1.msra.mxu0 %v623
        %905 = vmatprep.subr.mxu0 0.0
        %906 = vmatpush2.msra.mxu0 0.0
        %907 = vmatprep.subr.mxu0 0.0
        %908 = vmatpush2.msra.mxu0 0.0
        %909 = vmatprep.subr.mxu0 0.0
        %910 = vmatpush2.msra.mxu0 0.0
        %911 = vmatprep.subr.mxu0 0.0
        %912 = vmatpush2.msra.mxu0 0.0
        %913 = vmatprep.subr.mxu0 0.0
        %914 = vmatpush2.msra.mxu0 0.0
        %915 = vmatprep.subr.mxu0 0.0
        %916 = vmatpush2.msra.mxu0 0.0
        %917 = vmatprep.subr.mxu0 0.0
        %918 = vmatpush2.msra.mxu0 0.0
        %919 = vmatprep.subr.mxu0 0.0
        %920 = vmatpush2.msra.mxu0 0.0
        %921 = vmatprep.subr.mxu0 0.0
        %922 = vmatpush2.msra.mxu0 0.0
        %923 = vmatprep.subr.mxu0 0.0
        %924 = vmatpush2.msra.mxu0 0.0
        %925 = vmatprep.subr.mxu0 0.0
        %926 = vmatpush2.msra.mxu0 0.0
        %927 = vmatprep.subr.mxu0 0.0
        %928 = vmatpush2.msra.mxu0 0.0
        %929 = vmatprep.subr.mxu0 0.0
        %930 = vmatpush2.msra.mxu0 0.0
        %931 = vmatprep.subr.mxu0 0.0
        %932 = vmatpush2.msra.mxu0 0.0
        %933 = vmatprep.subr.mxu0 0.0
        %934 = vmatpush2.msra.mxu0 0.0
        %935 = vmatprep.subr.mxu0 0.0
        %936 = vmatpush2.msra.mxu0 0.0
        %937 = vmatprep.mubr.f32.mxu0 0.0
        %938 = vmatmul.mubr.f32.gmra.mxu0 %v661
        %v939 = vpop.f32.mrf.mxu0
        %v940 = vadd.f32 %v654, %v939
        %v941 = vpop.f32.mrf.mxu0
        %942 = vdwg.mxu0
        %v943 = vld [vmem:[%s3] sm:$0xff]
        %v944 = vld [vmem:[%s3 + $0x8] sm:$0xff]
        %v945 = vld [vmem:[%s3 + $0x10] sm:$0xff]
        %v946 = vld [vmem:[%s3 + $0x18] sm:$0xff]
        %v947 = vld [vmem:[%s3 + $0x20] sm:$0xff]
        %v948 = vld [vmem:[%s3 + $0x28] sm:$0xff]
        %v949 = vld [vmem:[%s3 + $0x30] sm:$0xff]
        %v950 = vld [vmem:[%s3 + $0x38] sm:$0xff]
        %v951 = vld [vmem:[%s3 + $0x40] sm:$0xff]
        %v952 = vld [vmem:[%s3 + $0x48] sm:$0xff]
        %v953 = vld [vmem:[%s3 + $0x50] sm:$0xff]
        %v954 = vld [vmem:[%s3 + $0x58] sm:$0xff]
        %v955 = vld [vmem:[%s3 + $0x60] sm:$0xff]
        %v956 = vld [vmem:[%s3 + $0x68] sm:$0xff]
        %v957 = vld [vmem:[%s3 + $0x70] sm:$0xff]
        %v958 = vld [vmem:[%s3 + $0x78] sm:$0xff]
        %v959 = vld [vmem:[%s3 + $0x80] sm:$0xff]
        %v960 = vld [vmem:[%s3 + $0x88] sm:$0xff]
        %v961 = vld [vmem:[%s3 + $0x90] sm:$0xff]
        %v962 = vld [vmem:[%s3 + $0x98] sm:$0xff]
        %v963 = vld [vmem:[%s3 + $0xa0] sm:$0xff]
        %v964 = vld [vmem:[%s3 + $0xa8] sm:$0xff]
        %v965 = vld [vmem:[%s3 + $0xb0] sm:$0xff]
        %v966 = vld [vmem:[%s3 + $0xb8] sm:$0xff]
        %v967 = vld [vmem:[%s3 + $0xc0] sm:$0xff]
        %v968 = vld [vmem:[%s3 + $0xc8] sm:$0xff]
        %v969 = vld [vmem:[%s3 + $0xd0] sm:$0xff]
        %v970 = vld [vmem:[%s3 + $0xd8] sm:$0xff]
        %v971 = vld [vmem:[%s3 + $0xe0] sm:$0xff]
        %v972 = vld [vmem:[%s3 + $0xe8] sm:$0xff]
        %v973 = vld [vmem:[%s3 + $0xf0] sm:$0xff]
        %v974 = vld [vmem:[%s3 + $0xf8] sm:$0xff]
        %v975 = vld [vmem:[%s4] sm:$0x1]
        %v976 = vld [vmem:[%s4 + $0x1] sm:$0x1]
        %v977 = vld [vmem:[%s4 + $0x2] sm:$0x1]
        %v978 = vld [vmem:[%s4 + $0x3] sm:$0x1]
        %v983 = vlaneseq
        %v984 = vshrl.u32 %v983, 7
        %v985 = vsub.s32 0, %v984
        %v986 = vrot.slane %v975, %v985
        %v987 = vlaneseq
        %v988 = vshrl.u32 %v987, 7
        %v989 = vsub.s32 0, %v988
        %v990 = vrot.slane %v976, %v989
        %v991 = vlaneseq
        %v992 = vshrl.u32 %v991, 7
        %v993 = vsub.s32 0, %v992
        %v994 = vrot.slane %v977, %v993
        %v995 = vlaneseq
        %v996 = vshrl.u32 %v995, 7
        %v997 = vsub.s32 0, %v996
        %v998 = vrot.slane %v978, %v997
        %1003 = vmatprep.subr.mxu0 0.0
        %1004 = vmatpush1.msra.mxu0 0.0
        %1005 = vmatprep.subr.mxu0 0.0
        %1006 = vmatpush1.msra.mxu0 0.0
        %1007 = vmatprep.subr.mxu0 0.0
        %1008 = vmatpush1.msra.mxu0 0.0
        %1009 = vmatprep.subr.mxu0 0.0
        %1010 = vmatpush1.msra.mxu0 0.0
        %1011 = vmatprep.subr.mxu0 0.0
        %1012 = vmatpush1.msra.mxu0 0.0
        %1013 = vmatprep.subr.mxu0 0.0
        %1014 = vmatpush1.msra.mxu0 0.0
        %1015 = vmatprep.subr.mxu0 0.0
        %1016 = vmatpush1.msra.mxu0 0.0
        %1017 = vmatprep.subr.mxu0 0.0
        %1018 = vmatpush1.msra.mxu0 0.0
        %1019 = vmatprep.subr.mxu0 0.0
        %1020 = vmatpush1.msra.mxu0 %v950
        %1021 = vmatprep.subr.mxu0 0.0
        %1022 = vmatpush1.msra.mxu0 %v949
        %1023 = vmatprep.subr.mxu0 0.0
        %1024 = vmatpush1.msra.mxu0 %v948
        %1025 = vmatprep.subr.mxu0 0.0
        %1026 = vmatpush1.msra.mxu0 %v947
        %1027 = vmatprep.subr.mxu0 0.0
        %1028 = vmatpush1.msra.mxu0 %v946
        %1029 = vmatprep.subr.mxu0 0.0
        %1030 = vmatpush1.msra.mxu0 %v945
        %1031 = vmatprep.subr.mxu0 0.0
        %1032 = vmatpush1.msra.mxu0 %v944
        %1033 = vmatprep.subr.mxu0 0.0
        %1034 = vmatpush1.msra.mxu0 %v943
        %1035 = vmatprep.subr.mxu0 0.0
        %1036 = vmatpush2.msra.mxu0 0.0
        %1037 = vmatprep.subr.mxu0 0.0
        %1038 = vmatpush2.msra.mxu0 0.0
        %1039 = vmatprep.subr.mxu0 0.0
        %1040 = vmatpush2.msra.mxu0 0.0
        %1041 = vmatprep.subr.mxu0 0.0
        %1042 = vmatpush2.msra.mxu0 0.0
        %1043 = vmatprep.subr.mxu0 0.0
        %1044 = vmatpush2.msra.mxu0 0.0
        %1045 = vmatprep.subr.mxu0 0.0
        %1046 = vmatpush2.msra.mxu0 0.0
        %1047 = vmatprep.subr.mxu0 0.0
        %1048 = vmatpush2.msra.mxu0 0.0
        %1049 = vmatprep.subr.mxu0 0.0
        %1050 = vmatpush2.msra.mxu0 0.0
        %1051 = vmatprep.subr.mxu0 0.0
        %1052 = vmatpush2.msra.mxu0 0.0
        %1053 = vmatprep.subr.mxu0 0.0
        %1054 = vmatpush2.msra.mxu0 0.0
        %1055 = vmatprep.subr.mxu0 0.0
        %1056 = vmatpush2.msra.mxu0 0.0
        %1057 = vmatprep.subr.mxu0 0.0
        %1058 = vmatpush2.msra.mxu0 0.0
        %1059 = vmatprep.subr.mxu0 0.0
        %1060 = vmatpush2.msra.mxu0 0.0
        %1061 = vmatprep.subr.mxu0 0.0
        %1062 = vmatpush2.msra.mxu0 0.0
        %1063 = vmatprep.subr.mxu0 0.0
        %1064 = vmatpush2.msra.mxu0 0.0
        %1065 = vmatprep.subr.mxu0 0.0
        %1066 = vmatpush2.msra.mxu0 0.0
        %1067 = vmatprep.mubr.f32.mxu0 0.0
        %1068 = vmatmul.mubr.f32.gmra.mxu0 %v661
        %v1069 = vpop.f32.mrf.mxu0
        %v1070 = vadd.f32 %v986, %v1069
        %v1071 = vpop.f32.mrf.mxu0
        %1072 = vdwg.mxu0
        %1073 = vmatprep.subr.mxu0 0.0
        %1074 = vmatpush1.msra.mxu0 0.0
        %1075 = vmatprep.subr.mxu0 0.0
        %1076 = vmatpush1.msra.mxu0 0.0
        %1077 = vmatprep.subr.mxu0 0.0
        %1078 = vmatpush1.msra.mxu0 0.0
        %1079 = vmatprep.subr.mxu0 0.0
        %1080 = vmatpush1.msra.mxu0 0.0
        %1081 = vmatprep.subr.mxu0 0.0
        %1082 = vmatpush1.msra.mxu0 0.0
        %1083 = vmatprep.subr.mxu0 0.0
        %1084 = vmatpush1.msra.mxu0 0.0
        %1085 = vmatprep.subr.mxu0 0.0
        %1086 = vmatpush1.msra.mxu0 0.0
        %1087 = vmatprep.subr.mxu0 0.0
        %1088 = vmatpush1.msra.mxu0 0.0
        %1089 = vmatprep.subr.mxu0 0.0
        %1090 = vmatpush1.msra.mxu0 %v958
        %1091 = vmatprep.subr.mxu0 0.0
        %1092 = vmatpush1.msra.mxu0 %v957
        %1093 = vmatprep.subr.mxu0 0.0
        %1094 = vmatpush1.msra.mxu0 %v956
        %1095 = vmatprep.subr.mxu0 0.0
        %1096 = vmatpush1.msra.mxu0 %v955
        %1097 = vmatprep.subr.mxu0 0.0
        %1098 = vmatpush1.msra.mxu0 %v954
        %1099 = vmatprep.subr.mxu0 0.0
        %1100 = vmatpush1.msra.mxu0 %v953
        %1101 = vmatprep.subr.mxu0 0.0
        %1102 = vmatpush1.msra.mxu0 %v952
        %1103 = vmatprep.subr.mxu0 0.0
        %1104 = vmatpush1.msra.mxu0 %v951
        %1105 = vmatprep.subr.mxu0 0.0
        %1106 = vmatpush2.msra.mxu0 0.0
        %1107 = vmatprep.subr.mxu0 0.0
        %1108 = vmatpush2.msra.mxu0 0.0
        %1109 = vmatprep.subr.mxu0 0.0
        %1110 = vmatpush2.msra.mxu0 0.0
        %1111 = vmatprep.subr.mxu0 0.0
        %1112 = vmatpush2.msra.mxu0 0.0
        %1113 = vmatprep.subr.mxu0 0.0
        %1114 = vmatpush2.msra.mxu0 0.0
        %1115 = vmatprep.subr.mxu0 0.0
        %1116 = vmatpush2.msra.mxu0 0.0
        %1117 = vmatprep.subr.mxu0 0.0
        %1118 = vmatpush2.msra.mxu0 0.0
        %1119 = vmatprep.subr.mxu0 0.0
        %1120 = vmatpush2.msra.mxu0 0.0
        %1121 = vmatprep.subr.mxu0 0.0
        %1122 = vmatpush2.msra.mxu0 0.0
        %1123 = vmatprep.subr.mxu0 0.0
        %1124 = vmatpush2.msra.mxu0 0.0
        %1125 = vmatprep.subr.mxu0 0.0
        %1126 = vmatpush2.msra.mxu0 0.0
        %1127 = vmatprep.subr.mxu0 0.0
        %1128 = vmatpush2.msra.mxu0 0.0
        %1129 = vmatprep.subr.mxu0 0.0
        %1130 = vmatpush2.msra.mxu0 0.0
        %1131 = vmatprep.subr.mxu0 0.0
        %1132 = vmatpush2.msra.mxu0 0.0
        %1133 = vmatprep.subr.mxu0 0.0
        %1134 = vmatpush2.msra.mxu0 0.0
        %1135 = vmatprep.subr.mxu0 0.0
        %1136 = vmatpush2.msra.mxu0 0.0
        %1137 = vmatprep.mubr.f32.mxu0 0.0
        %1138 = vmatmul.mubr.f32.gmra.mxu0 %v661
        %v1139 = vpop.f32.mrf.mxu0
        %v1140 = vadd.f32 %v990, %v1139
        %v1141 = vpop.f32.mrf.mxu0
        %1142 = vdwg.mxu0
        %1143 = vmatprep.subr.mxu0 0.0
        %1144 = vmatpush1.msra.mxu0 0.0
        %1145 = vmatprep.subr.mxu0 0.0
        %1146 = vmatpush1.msra.mxu0 0.0
        %1147 = vmatprep.subr.mxu0 0.0
        %1148 = vmatpush1.msra.mxu0 0.0
        %1149 = vmatprep.subr.mxu0 0.0
        %1150 = vmatpush1.msra.mxu0 0.0
        %1151 = vmatprep.subr.mxu0 0.0
        %1152 = vmatpush1.msra.mxu0 0.0
        %1153 = vmatprep.subr.mxu0 0.0
        %1154 = vmatpush1.msra.mxu0 0.0
        %1155 = vmatprep.subr.mxu0 0.0
        %1156 = vmatpush1.msra.mxu0 0.0
        %1157 = vmatprep.subr.mxu0 0.0
        %1158 = vmatpush1.msra.mxu0 0.0
        %1159 = vmatprep.subr.mxu0 0.0
        %1160 = vmatpush1.msra.mxu0 %v966
        %1161 = vmatprep.subr.mxu0 0.0
        %1162 = vmatpush1.msra.mxu0 %v965
        %1163 = vmatprep.subr.mxu0 0.0
        %1164 = vmatpush1.msra.mxu0 %v964
        %1165 = vmatprep.subr.mxu0 0.0
        %1166 = vmatpush1.msra.mxu0 %v963
        %1167 = vmatprep.subr.mxu0 0.0
        %1168 = vmatpush1.msra.mxu0 %v962
        %1169 = vmatprep.subr.mxu0 0.0
        %1170 = vmatpush1.msra.mxu0 %v961
        %1171 = vmatprep.subr.mxu0 0.0
        %1172 = vmatpush1.msra.mxu0 %v960
        %1173 = vmatprep.subr.mxu0 0.0
        %1174 = vmatpush1.msra.mxu0 %v959
        %1175 = vmatprep.subr.mxu0 0.0
        %1176 = vmatpush2.msra.mxu0 0.0
        %1177 = vmatprep.subr.mxu0 0.0
        %1178 = vmatpush2.msra.mxu0 0.0
        %1179 = vmatprep.subr.mxu0 0.0
        %1180 = vmatpush2.msra.mxu0 0.0
        %1181 = vmatprep.subr.mxu0 0.0
        %1182 = vmatpush2.msra.mxu0 0.0
        %1183 = vmatprep.subr.mxu0 0.0
        %1184 = vmatpush2.msra.mxu0 0.0
        %1185 = vmatprep.subr.mxu0 0.0
        %1186 = vmatpush2.msra.mxu0 0.0
        %1187 = vmatprep.subr.mxu0 0.0
        %1188 = vmatpush2.msra.mxu0 0.0
        %1189 = vmatprep.subr.mxu0 0.0
        %1190 = vmatpush2.msra.mxu0 0.0
        %1191 = vmatprep.subr.mxu0 0.0
        %1192 = vmatpush2.msra.mxu0 0.0
        %1193 = vmatprep.subr.mxu0 0.0
        %1194 = vmatpush2.msra.mxu0 0.0
        %1195 = vmatprep.subr.mxu0 0.0
        %1196 = vmatpush2.msra.mxu0 0.0
        %1197 = vmatprep.subr.mxu0 0.0
        %1198 = vmatpush2.msra.mxu0 0.0
        %1199 = vmatprep.subr.mxu0 0.0
        %1200 = vmatpush2.msra.mxu0 0.0
        %1201 = vmatprep.subr.mxu0 0.0
        %1202 = vmatpush2.msra.mxu0 0.0
        %1203 = vmatprep.subr.mxu0 0.0
        %1204 = vmatpush2.msra.mxu0 0.0
        %1205 = vmatprep.subr.mxu0 0.0
        %1206 = vmatpush2.msra.mxu0 0.0
        %1207 = vmatprep.mubr.f32.mxu0 0.0
        %1208 = vmatmul.mubr.f32.gmra.mxu0 %v661
        %v1209 = vpop.f32.mrf.mxu0
        %v1210 = vadd.f32 %v994, %v1209
        %v1211 = vpop.f32.mrf.mxu0
        %1212 = vdwg.mxu0
        %1213 = vmatprep.subr.mxu0 0.0
        %1214 = vmatpush1.msra.mxu0 0.0
        %1215 = vmatprep.subr.mxu0 0.0
        %1216 = vmatpush1.msra.mxu0 0.0
        %1217 = vmatprep.subr.mxu0 0.0
        %1218 = vmatpush1.msra.mxu0 0.0
        %1219 = vmatprep.subr.mxu0 0.0
        %1220 = vmatpush1.msra.mxu0 0.0
        %1221 = vmatprep.subr.mxu0 0.0
        %1222 = vmatpush1.msra.mxu0 0.0
        %1223 = vmatprep.subr.mxu0 0.0
        %1224 = vmatpush1.msra.mxu0 0.0
        %1225 = vmatprep.subr.mxu0 0.0
        %1226 = vmatpush1.msra.mxu0 0.0
        %1227 = vmatprep.subr.mxu0 0.0
        %1228 = vmatpush1.msra.mxu0 0.0
        %1229 = vmatprep.subr.mxu0 0.0
        %1230 = vmatpush1.msra.mxu0 %v974
        %1231 = vmatprep.subr.mxu0 0.0
        %1232 = vmatpush1.msra.mxu0 %v973
        %1233 = vmatprep.subr.mxu0 0.0
        %1234 = vmatpush1.msra.mxu0 %v972
        %1235 = vmatprep.subr.mxu0 0.0
        %1236 = vmatpush1.msra.mxu0 %v971
        %1237 = vmatprep.subr.mxu0 0.0
        %1238 = vmatpush1.msra.mxu0 %v970
        %1239 = vmatprep.subr.mxu0 0.0
        %1240 = vmatpush1.msra.mxu0 %v969
        %1241 = vmatprep.subr.mxu0 0.0
        %1242 = vmatpush1.msra.mxu0 %v968
        %1243 = vmatprep.subr.mxu0 0.0
        %1244 = vmatpush1.msra.mxu0 %v967
        %1245 = vmatprep.subr.mxu0 0.0
        %1246 = vmatpush2.msra.mxu0 0.0
        %1247 = vmatprep.subr.mxu0 0.0
        %1248 = vmatpush2.msra.mxu0 0.0
        %1249 = vmatprep.subr.mxu0 0.0
        %1250 = vmatpush2.msra.mxu0 0.0
        %1251 = vmatprep.subr.mxu0 0.0
        %1252 = vmatpush2.msra.mxu0 0.0
        %1253 = vmatprep.subr.mxu0 0.0
        %1254 = vmatpush2.msra.mxu0 0.0
        %1255 = vmatprep.subr.mxu0 0.0
        %1256 = vmatpush2.msra.mxu0 0.0
        %1257 = vmatprep.subr.mxu0 0.0
        %1258 = vmatpush2.msra.mxu0 0.0
        %1259 = vmatprep.subr.mxu0 0.0
        %1260 = vmatpush2.msra.mxu0 0.0
        %1261 = vmatprep.subr.mxu0 0.0
        %1262 = vmatpush2.msra.mxu0 0.0
        %1263 = vmatprep.subr.mxu0 0.0
        %1264 = vmatpush2.msra.mxu0 0.0
        %1265 = vmatprep.subr.mxu0 0.0
        %1266 = vmatpush2.msra.mxu0 0.0
        %1267 = vmatprep.subr.mxu0 0.0
        %1268 = vmatpush2.msra.mxu0 0.0
        %1269 = vmatprep.subr.mxu0 0.0
        %1270 = vmatpush2.msra.mxu0 0.0
        %1271 = vmatprep.subr.mxu0 0.0
        %1272 = vmatpush2.msra.mxu0 0.0
        %1273 = vmatprep.subr.mxu0 0.0
        %1274 = vmatpush2.msra.mxu0 0.0
        %1275 = vmatprep.subr.mxu0 0.0
        %1276 = vmatpush2.msra.mxu0 0.0
        %1277 = vmatprep.mubr.f32.mxu0 0.0
        %1278 = vmatmul.mubr.f32.gmra.mxu0 %v661
        %v1279 = vpop.f32.mrf.mxu0
        %v1280 = vadd.f32 %v998, %v1279
        %v1281 = vpop.f32.mrf.mxu0
        %1282 = vdwg.mxu0
        %v1283 = vld [vmem:[%s5] sm:$0xff]
        %v1284 = vld [vmem:[%s5 + $0x8] sm:$0xff]
        %v1285 = vld [vmem:[%s5 + $0x10] sm:$0xff]
        %v1286 = vld [vmem:[%s5 + $0x18] sm:$0xff]
        %v1287 = vld [vmem:[%s5 + $0x20] sm:$0xff]
        %v1288 = vld [vmem:[%s5 + $0x28] sm:$0xff]
        %v1289 = vld [vmem:[%s5 + $0x30] sm:$0xff]
        %v1290 = vld [vmem:[%s5 + $0x38] sm:$0xff]
        %v1291 = vld [vmem:[%s5 + $0x40] sm:$0xff]
        %v1292 = vld [vmem:[%s5 + $0x48] sm:$0xff]
        %v1293 = vld [vmem:[%s5 + $0x50] sm:$0xff]
        %v1294 = vld [vmem:[%s5 + $0x58] sm:$0xff]
        %v1295 = vld [vmem:[%s5 + $0x60] sm:$0xff]
        %v1296 = vld [vmem:[%s5 + $0x68] sm:$0xff]
        %v1297 = vld [vmem:[%s5 + $0x70] sm:$0xff]
        %v1298 = vld [vmem:[%s5 + $0x78] sm:$0xff]
        %v1299 = vld [vmem:[%s5 + $0x80] sm:$0xff]
        %v1300 = vld [vmem:[%s5 + $0x88] sm:$0xff]
        %v1301 = vld [vmem:[%s5 + $0x90] sm:$0xff]
        %v1302 = vld [vmem:[%s5 + $0x98] sm:$0xff]
        %v1303 = vld [vmem:[%s5 + $0xa0] sm:$0xff]
        %v1304 = vld [vmem:[%s5 + $0xa8] sm:$0xff]
        %v1305 = vld [vmem:[%s5 + $0xb0] sm:$0xff]
        %v1306 = vld [vmem:[%s5 + $0xb8] sm:$0xff]
        %v1307 = vld [vmem:[%s5 + $0xc0] sm:$0xff]
        %v1308 = vld [vmem:[%s5 + $0xc8] sm:$0xff]
        %v1309 = vld [vmem:[%s5 + $0xd0] sm:$0xff]
        %v1310 = vld [vmem:[%s5 + $0xd8] sm:$0xff]
        %v1311 = vld [vmem:[%s5 + $0xe0] sm:$0xff]
        %v1312 = vld [vmem:[%s5 + $0xe8] sm:$0xff]
        %v1313 = vld [vmem:[%s5 + $0xf0] sm:$0xff]
        %v1314 = vld [vmem:[%s5 + $0xf8] sm:$0xff]
        %v1315 = vld [vmem:[%s6] sm:$0x1]
        %v1316 = vld [vmem:[%s6 + $0x1] sm:$0x1]
        %v1317 = vld [vmem:[%s6 + $0x2] sm:$0x1]
        %v1318 = vld [vmem:[%s6 + $0x3] sm:$0x1]
        %v1323 = vlaneseq
        %v1324 = vshrl.u32 %v1323, 7
        %v1325 = vsub.s32 0, %v1324
        %v1326 = vrot.slane %v1315, %v1325
        %v1327 = vlaneseq
        %v1328 = vshrl.u32 %v1327, 7
        %v1329 = vsub.s32 0, %v1328
        %v1330 = vrot.slane %v1316, %v1329
        %v1331 = vlaneseq
        %v1332 = vshrl.u32 %v1331, 7
        %v1333 = vsub.s32 0, %v1332
        %v1334 = vrot.slane %v1317, %v1333
        %v1335 = vlaneseq
        %v1336 = vshrl.u32 %v1335, 7
        %v1337 = vsub.s32 0, %v1336
        %v1338 = vrot.slane %v1318, %v1337
        %1343 = vmatprep.subr.mxu0 0.0
        %1344 = vmatpush1.msra.mxu0 0.0
        %1345 = vmatprep.subr.mxu0 0.0
        %1346 = vmatpush1.msra.mxu0 0.0
        %1347 = vmatprep.subr.mxu0 0.0
        %1348 = vmatpush1.msra.mxu0 0.0
        %1349 = vmatprep.subr.mxu0 0.0
        %1350 = vmatpush1.msra.mxu0 0.0
        %1351 = vmatprep.subr.mxu0 0.0
        %1352 = vmatpush1.msra.mxu0 0.0
        %1353 = vmatprep.subr.mxu0 0.0
        %1354 = vmatpush1.msra.mxu0 0.0
        %1355 = vmatprep.subr.mxu0 0.0
        %1356 = vmatpush1.msra.mxu0 0.0
        %1357 = vmatprep.subr.mxu0 0.0
        %1358 = vmatpush1.msra.mxu0 0.0
        %1359 = vmatprep.subr.mxu0 0.0
        %1360 = vmatpush1.msra.mxu0 %v1290
        %1361 = vmatprep.subr.mxu0 0.0
        %1362 = vmatpush1.msra.mxu0 %v1289
        %1363 = vmatprep.subr.mxu0 0.0
        %1364 = vmatpush1.msra.mxu0 %v1288
        %1365 = vmatprep.subr.mxu0 0.0
        %1366 = vmatpush1.msra.mxu0 %v1287
        %1367 = vmatprep.subr.mxu0 0.0
        %1368 = vmatpush1.msra.mxu0 %v1286
        %1369 = vmatprep.subr.mxu0 0.0
        %1370 = vmatpush1.msra.mxu0 %v1285
        %1371 = vmatprep.subr.mxu0 0.0
        %1372 = vmatpush1.msra.mxu0 %v1284
        %1373 = vmatprep.subr.mxu0 0.0
        %1374 = vmatpush1.msra.mxu0 %v1283
        %1375 = vmatprep.subr.mxu0 0.0
        %1376 = vmatpush2.msra.mxu0 0.0
        %1377 = vmatprep.subr.mxu0 0.0
        %1378 = vmatpush2.msra.mxu0 0.0
        %1379 = vmatprep.subr.mxu0 0.0
        %1380 = vmatpush2.msra.mxu0 0.0
        %1381 = vmatprep.subr.mxu0 0.0
        %1382 = vmatpush2.msra.mxu0 0.0
        %1383 = vmatprep.subr.mxu0 0.0
        %1384 = vmatpush2.msra.mxu0 0.0
        %1385 = vmatprep.subr.mxu0 0.0
        %1386 = vmatpush2.msra.mxu0 0.0
        %1387 = vmatprep.subr.mxu0 0.0
        %1388 = vmatpush2.msra.mxu0 0.0
        %1389 = vmatprep.subr.mxu0 0.0
        %1390 = vmatpush2.msra.mxu0 0.0
        %1391 = vmatprep.subr.mxu0 0.0
        %1392 = vmatpush2.msra.mxu0 0.0
        %1393 = vmatprep.subr.mxu0 0.0
        %1394 = vmatpush2.msra.mxu0 0.0
        %1395 = vmatprep.subr.mxu0 0.0
        %1396 = vmatpush2.msra.mxu0 0.0
        %1397 = vmatprep.subr.mxu0 0.0
        %1398 = vmatpush2.msra.mxu0 0.0
        %1399 = vmatprep.subr.mxu0 0.0
        %1400 = vmatpush2.msra.mxu0 0.0
        %1401 = vmatprep.subr.mxu0 0.0
        %1402 = vmatpush2.msra.mxu0 0.0
        %1403 = vmatprep.subr.mxu0 0.0
        %1404 = vmatpush2.msra.mxu0 0.0
        %1405 = vmatprep.subr.mxu0 0.0
        %1406 = vmatpush2.msra.mxu0 0.0
        %1407 = vmatprep.mubr.f32.mxu0 0.0
        %1408 = vmatmul.mubr.f32.gmra.mxu0 %v661
        %v1409 = vpop.f32.mrf.mxu0
        %v1410 = vadd.f32 %v1326, %v1409
        %v1411 = vpop.f32.mrf.mxu0
        %1412 = vdwg.mxu0
        %1413 = vmatprep.subr.mxu0 0.0
        %1414 = vmatpush1.msra.mxu0 0.0
        %1415 = vmatprep.subr.mxu0 0.0
        %1416 = vmatpush1.msra.mxu0 0.0
        %1417 = vmatprep.subr.mxu0 0.0
        %1418 = vmatpush1.msra.mxu0 0.0
        %1419 = vmatprep.subr.mxu0 0.0
        %1420 = vmatpush1.msra.mxu0 0.0
        %1421 = vmatprep.subr.mxu0 0.0
        %1422 = vmatpush1.msra.mxu0 0.0
        %1423 = vmatprep.subr.mxu0 0.0
        %1424 = vmatpush1.msra.mxu0 0.0
        %1425 = vmatprep.subr.mxu0 0.0
        %1426 = vmatpush1.msra.mxu0 0.0
        %1427 = vmatprep.subr.mxu0 0.0
        %1428 = vmatpush1.msra.mxu0 0.0
        %1429 = vmatprep.subr.mxu0 0.0
        %1430 = vmatpush1.msra.mxu0 %v1298
        %1431 = vmatprep.subr.mxu0 0.0
        %1432 = vmatpush1.msra.mxu0 %v1297
        %1433 = vmatprep.subr.mxu0 0.0
        %1434 = vmatpush1.msra.mxu0 %v1296
        %1435 = vmatprep.subr.mxu0 0.0
        %1436 = vmatpush1.msra.mxu0 %v1295
        %1437 = vmatprep.subr.mxu0 0.0
        %1438 = vmatpush1.msra.mxu0 %v1294
        %1439 = vmatprep.subr.mxu0 0.0
        %1440 = vmatpush1.msra.mxu0 %v1293
        %1441 = vmatprep.subr.mxu0 0.0
        %1442 = vmatpush1.msra.mxu0 %v1292
        %1443 = vmatprep.subr.mxu0 0.0
        %1444 = vmatpush1.msra.mxu0 %v1291
        %1445 = vmatprep.subr.mxu0 0.0
        %1446 = vmatpush2.msra.mxu0 0.0
        %1447 = vmatprep.subr.mxu0 0.0
        %1448 = vmatpush2.msra.mxu0 0.0
        %1449 = vmatprep.subr.mxu0 0.0
        %1450 = vmatpush2.msra.mxu0 0.0
        %1451 = vmatprep.subr.mxu0 0.0
        %1452 = vmatpush2.msra.mxu0 0.0
        %1453 = vmatprep.subr.mxu0 0.0
        %1454 = vmatpush2.msra.mxu0 0.0
        %1455 = vmatprep.subr.mxu0 0.0
        %1456 = vmatpush2.msra.mxu0 0.0
        %1457 = vmatprep.subr.mxu0 0.0
        %1458 = vmatpush2.msra.mxu0 0.0
        %1459 = vmatprep.subr.mxu0 0.0
        %1460 = vmatpush2.msra.mxu0 0.0
        %1461 = vmatprep.subr.mxu0 0.0
        %1462 = vmatpush2.msra.mxu0 0.0
        %1463 = vmatprep.subr.mxu0 0.0
        %1464 = vmatpush2.msra.mxu0 0.0
        %1465 = vmatprep.subr.mxu0 0.0
        %1466 = vmatpush2.msra.mxu0 0.0
        %1467 = vmatprep.subr.mxu0 0.0
        %1468 = vmatpush2.msra.mxu0 0.0
        %1469 = vmatprep.subr.mxu0 0.0
        %1470 = vmatpush2.msra.mxu0 0.0
        %1471 = vmatprep.subr.mxu0 0.0
        %1472 = vmatpush2.msra.mxu0 0.0
        %1473 = vmatprep.subr.mxu0 0.0
        %1474 = vmatpush2.msra.mxu0 0.0
        %1475 = vmatprep.subr.mxu0 0.0
        %1476 = vmatpush2.msra.mxu0 0.0
        %1477 = vmatprep.mubr.f32.mxu0 0.0
        %1478 = vmatmul.mubr.f32.gmra.mxu0 %v661
        %v1479 = vpop.f32.mrf.mxu0
        %v1480 = vadd.f32 %v1330, %v1479
        %v1481 = vpop.f32.mrf.mxu0
        %1482 = vdwg.mxu0
        %1483 = vmatprep.subr.mxu0 0.0
        %1484 = vmatpush1.msra.mxu0 0.0
        %1485 = vmatprep.subr.mxu0 0.0
        %1486 = vmatpush1.msra.mxu0 0.0
        %1487 = vmatprep.subr.mxu0 0.0
        %1488 = vmatpush1.msra.mxu0 0.0
        %1489 = vmatprep.subr.mxu0 0.0
        %1490 = vmatpush1.msra.mxu0 0.0
        %1491 = vmatprep.subr.mxu0 0.0
        %1492 = vmatpush1.msra.mxu0 0.0
        %1493 = vmatprep.subr.mxu0 0.0
        %1494 = vmatpush1.msra.mxu0 0.0
        %1495 = vmatprep.subr.mxu0 0.0
        %1496 = vmatpush1.msra.mxu0 0.0
        %1497 = vmatprep.subr.mxu0 0.0
        %1498 = vmatpush1.msra.mxu0 0.0
        %1499 = vmatprep.subr.mxu0 0.0
        %1500 = vmatpush1.msra.mxu0 %v1306
        %1501 = vmatprep.subr.mxu0 0.0
        %1502 = vmatpush1.msra.mxu0 %v1305
        %1503 = vmatprep.subr.mxu0 0.0
        %1504 = vmatpush1.msra.mxu0 %v1304
        %1505 = vmatprep.subr.mxu0 0.0
        %1506 = vmatpush1.msra.mxu0 %v1303
        %1507 = vmatprep.subr.mxu0 0.0
        %1508 = vmatpush1.msra.mxu0 %v1302
        %1509 = vmatprep.subr.mxu0 0.0
        %1510 = vmatpush1.msra.mxu0 %v1301
        %1511 = vmatprep.subr.mxu0 0.0
        %1512 = vmatpush1.msra.mxu0 %v1300
        %1513 = vmatprep.subr.mxu0 0.0
        %1514 = vmatpush1.msra.mxu0 %v1299
        %1515 = vmatprep.subr.mxu0 0.0
        %1516 = vmatpush2.msra.mxu0 0.0
        %1517 = vmatprep.subr.mxu0 0.0
        %1518 = vmatpush2.msra.mxu0 0.0
        %1519 = vmatprep.subr.mxu0 0.0
        %1520 = vmatpush2.msra.mxu0 0.0
        %1521 = vmatprep.subr.mxu0 0.0
        %1522 = vmatpush2.msra.mxu0 0.0
        %1523 = vmatprep.subr.mxu0 0.0
        %1524 = vmatpush2.msra.mxu0 0.0
        %1525 = vmatprep.subr.mxu0 0.0
        %1526 = vmatpush2.msra.mxu0 0.0
        %1527 = vmatprep.subr.mxu0 0.0
        %1528 = vmatpush2.msra.mxu0 0.0
        %1529 = vmatprep.subr.mxu0 0.0
        %1530 = vmatpush2.msra.mxu0 0.0
        %1531 = vmatprep.subr.mxu0 0.0
        %1532 = vmatpush2.msra.mxu0 0.0
        %1533 = vmatprep.subr.mxu0 0.0
        %1534 = vmatpush2.msra.mxu0 0.0
        %1535 = vmatprep.subr.mxu0 0.0
        %1536 = vmatpush2.msra.mxu0 0.0
        %1537 = vmatprep.subr.mxu0 0.0
        %1538 = vmatpush2.msra.mxu0 0.0
        %1539 = vmatprep.subr.mxu0 0.0
        %1540 = vmatpush2.msra.mxu0 0.0
        %1541 = vmatprep.subr.mxu0 0.0
        %1542 = vmatpush2.msra.mxu0 0.0
        %1543 = vmatprep.subr.mxu0 0.0
        %1544 = vmatpush2.msra.mxu0 0.0
        %1545 = vmatprep.subr.mxu0 0.0
        %1546 = vmatpush2.msra.mxu0 0.0
        %1547 = vmatprep.mubr.f32.mxu0 0.0
        %1548 = vmatmul.mubr.f32.gmra.mxu0 %v661
        %v1549 = vpop.f32.mrf.mxu0
        %v1550 = vadd.f32 %v1334, %v1549
        %v1551 = vpop.f32.mrf.mxu0
        %1552 = vdwg.mxu0
        %1553 = vmatprep.subr.mxu0 0.0
        %1554 = vmatpush1.msra.mxu0 0.0
        %1555 = vmatprep.subr.mxu0 0.0
        %1556 = vmatpush1.msra.mxu0 0.0
        %1557 = vmatprep.subr.mxu0 0.0
        %1558 = vmatpush1.msra.mxu0 0.0
        %1559 = vmatprep.subr.mxu0 0.0
        %1560 = vmatpush1.msra.mxu0 0.0
        %1561 = vmatprep.subr.mxu0 0.0
        %1562 = vmatpush1.msra.mxu0 0.0
        %1563 = vmatprep.subr.mxu0 0.0
        %1564 = vmatpush1.msra.mxu0 0.0
        %1565 = vmatprep.subr.mxu0 0.0
        %1566 = vmatpush1.msra.mxu0 0.0
        %1567 = vmatprep.subr.mxu0 0.0
        %1568 = vmatpush1.msra.mxu0 0.0
        %1569 = vmatprep.subr.mxu0 0.0
        %1570 = vmatpush1.msra.mxu0 %v1314
        %1571 = vmatprep.subr.mxu0 0.0
        %1572 = vmatpush1.msra.mxu0 %v1313
        %1573 = vmatprep.subr.mxu0 0.0
        %1574 = vmatpush1.msra.mxu0 %v1312
        %1575 = vmatprep.subr.mxu0 0.0
        %1576 = vmatpush1.msra.mxu0 %v1311
        %1577 = vmatprep.subr.mxu0 0.0
        %1578 = vmatpush1.msra.mxu0 %v1310
        %1579 = vmatprep.subr.mxu0 0.0
        %1580 = vmatpush1.msra.mxu0 %v1309
        %1581 = vmatprep.subr.mxu0 0.0
        %1582 = vmatpush1.msra.mxu0 %v1308
        %1583 = vmatprep.subr.mxu0 0.0
        %1584 = vmatpush1.msra.mxu0 %v1307
        %1585 = vmatprep.subr.mxu0 0.0
        %1586 = vmatpush2.msra.mxu0 0.0
        %1587 = vmatprep.subr.mxu0 0.0
        %1588 = vmatpush2.msra.mxu0 0.0
        %1589 = vmatprep.subr.mxu0 0.0
        %1590 = vmatpush2.msra.mxu0 0.0
        %1591 = vmatprep.subr.mxu0 0.0
        %1592 = vmatpush2.msra.mxu0 0.0
        %1593 = vmatprep.subr.mxu0 0.0
        %1594 = vmatpush2.msra.mxu0 0.0
        %1595 = vmatprep.subr.mxu0 0.0
        %1596 = vmatpush2.msra.mxu0 0.0
        %1597 = vmatprep.subr.mxu0 0.0
        %1598 = vmatpush2.msra.mxu0 0.0
        %1599 = vmatprep.subr.mxu0 0.0
        %1600 = vmatpush2.msra.mxu0 0.0
        %1601 = vmatprep.subr.mxu0 0.0
        %1602 = vmatpush2.msra.mxu0 0.0
        %1603 = vmatprep.subr.mxu0 0.0
        %1604 = vmatpush2.msra.mxu0 0.0
        %1605 = vmatprep.subr.mxu0 0.0
        %1606 = vmatpush2.msra.mxu0 0.0
        %1607 = vmatprep.subr.mxu0 0.0
        %1608 = vmatpush2.msra.mxu0 0.0
        %1609 = vmatprep.subr.mxu0 0.0
        %1610 = vmatpush2.msra.mxu0 0.0
        %1611 = vmatprep.subr.mxu0 0.0
        %1612 = vmatpush2.msra.mxu0 0.0
        %1613 = vmatprep.subr.mxu0 0.0
        %1614 = vmatpush2.msra.mxu0 0.0
        %1615 = vmatprep.subr.mxu0 0.0
        %1616 = vmatpush2.msra.mxu0 0.0
        %1617 = vmatprep.mubr.f32.mxu0 0.0
        %1618 = vmatmul.mubr.f32.gmra.mxu0 %v661
        %v1619 = vpop.f32.mrf.mxu0
        %v1620 = vadd.f32 %v1338, %v1619
        %v1621 = vpop.f32.mrf.mxu0
        %1622 = vdwg.mxu0
        %vm1623 = vcmask 130048
        %v1625 = vsel %vm1623, %v730, 0
        %v1628 = vsel %vm1623, %v1070, 0
        %1630 = vmatprep.subr.mxu0 0.0
        %1631 = vmatpush1.xpose.msra.mxu0 0.0
        %1632 = vmatprep.subr.mxu0 0.0
        %1633 = vmatpush1.xpose.msra.mxu0 0.0
        %1634 = vmatprep.subr.mxu0 0.0
        %1635 = vmatpush1.xpose.msra.mxu0 0.0
        %1636 = vmatprep.subr.mxu0 0.0
        %1637 = vmatpush1.xpose.msra.mxu0 0.0
        %1638 = vmatprep.subr.mxu0 0.0
        %1639 = vmatpush1.xpose.msra.mxu0 0.0
        %1640 = vmatprep.subr.mxu0 0.0
        %1641 = vmatpush1.xpose.msra.mxu0 0.0
        %1642 = vmatprep.subr.mxu0 0.0
        %1643 = vmatpush1.xpose.msra.mxu0 0.0
        %1644 = vmatprep.subr.mxu0 0.0
        %1645 = vmatpush1.xpose.msra.mxu0 0.0
        %1646 = vmatprep.subr.mxu0 0.0
        %1647 = vmatpush1.xpose.msra.mxu0 0.0
        %1648 = vmatprep.subr.mxu0 0.0
        %1649 = vmatpush1.xpose.msra.mxu0 0.0
        %1650 = vmatprep.subr.mxu0 0.0
        %1651 = vmatpush1.xpose.msra.mxu0 0.0
        %1652 = vmatprep.subr.mxu0 0.0
        %1653 = vmatpush1.xpose.msra.mxu0 0.0
        %1654 = vmatprep.subr.mxu0 0.0
        %1655 = vmatpush1.xpose.msra.mxu0 0.0
        %1656 = vmatprep.subr.mxu0 0.0
        %1657 = vmatpush1.xpose.msra.mxu0 0.0
        %1658 = vmatprep.subr.mxu0 0.0
        %1659 = vmatpush1.xpose.msra.mxu0 0.0
        %1660 = vmatprep.subr.mxu0 0.0
        %1661 = vmatpush1.xpose.msra.mxu0 %v1628
        %1662 = vmatprep.subr.mxu0 0.0
        %1663 = vmatpush2.xpose.msra.mxu0 0.0
        %1664 = vmatprep.subr.mxu0 0.0
        %1665 = vmatpush2.xpose.msra.mxu0 0.0
        %1666 = vmatprep.subr.mxu0 0.0
        %1667 = vmatpush2.xpose.msra.mxu0 0.0
        %1668 = vmatprep.subr.mxu0 0.0
        %1669 = vmatpush2.xpose.msra.mxu0 0.0
        %1670 = vmatprep.subr.mxu0 0.0
        %1671 = vmatpush2.xpose.msra.mxu0 0.0
        %1672 = vmatprep.subr.mxu0 0.0
        %1673 = vmatpush2.xpose.msra.mxu0 0.0
        %1674 = vmatprep.subr.mxu0 0.0
        %1675 = vmatpush2.xpose.msra.mxu0 0.0
        %1676 = vmatprep.subr.mxu0 0.0
        %1677 = vmatpush2.xpose.msra.mxu0 0.0
        %1678 = vmatprep.subr.mxu0 0.0
        %1679 = vmatpush2.xpose.msra.mxu0 0.0
        %1680 = vmatprep.subr.mxu0 0.0
        %1681 = vmatpush2.xpose.msra.mxu0 0.0
        %1682 = vmatprep.subr.mxu0 0.0
        %1683 = vmatpush2.xpose.msra.mxu0 0.0
        %1684 = vmatprep.subr.mxu0 0.0
        %1685 = vmatpush2.xpose.msra.mxu0 0.0
        %1686 = vmatprep.subr.mxu0 0.0
        %1687 = vmatpush2.xpose.msra.mxu0 0.0
        %1688 = vmatprep.subr.mxu0 0.0
        %1689 = vmatpush2.xpose.msra.mxu0 0.0
        %1690 = vmatprep.subr.mxu0 0.0
        %1691 = vmatpush2.xpose.msra.mxu0 0.0
        %1692 = vmatprep.subr.mxu0 0.0
        %1693 = vmatpush2.xpose.msra.mxu0 0.0
        %1694 = vmatprep.mubr.f32.mxu0 0.0
        %1695 = vmatmul.mubr.f32.gmra.mxu0 %v1625
        %v1696 = vpop.f32.mrf.mxu0
        %v1697 = vadd.f32 0.0, %v1696
        %v1698 = vpop.f32.mrf.mxu0
        %1699 = vdwg.mxu0
        %v1701 = vsel %vm1623, %v800, 0
        %v1704 = vsel %vm1623, %v1140, 0
        %1706 = vmatprep.subr.mxu0 0.0
        %1707 = vmatpush1.xpose.msra.mxu0 0.0
        %1708 = vmatprep.subr.mxu0 0.0
        %1709 = vmatpush1.xpose.msra.mxu0 0.0
        %1710 = vmatprep.subr.mxu0 0.0
        %1711 = vmatpush1.xpose.msra.mxu0 0.0
        %1712 = vmatprep.subr.mxu0 0.0
        %1713 = vmatpush1.xpose.msra.mxu0 0.0
        %1714 = vmatprep.subr.mxu0 0.0
        %1715 = vmatpush1.xpose.msra.mxu0 0.0
        %1716 = vmatprep.subr.mxu0 0.0
        %1717 = vmatpush1.xpose.msra.mxu0 0.0
        %1718 = vmatprep.subr.mxu0 0.0
        %1719 = vmatpush1.xpose.msra.mxu0 0.0
        %1720 = vmatprep.subr.mxu0 0.0
        %1721 = vmatpush1.xpose.msra.mxu0 0.0
        %1722 = vmatprep.subr.mxu0 0.0
        %1723 = vmatpush1.xpose.msra.mxu0 0.0
        %1724 = vmatprep.subr.mxu0 0.0
        %1725 = vmatpush1.xpose.msra.mxu0 0.0
        %1726 = vmatprep.subr.mxu0 0.0
        %1727 = vmatpush1.xpose.msra.mxu0 0.0
        %1728 = vmatprep.subr.mxu0 0.0
        %1729 = vmatpush1.xpose.msra.mxu0 0.0
        %1730 = vmatprep.subr.mxu0 0.0
        %1731 = vmatpush1.xpose.msra.mxu0 0.0
        %1732 = vmatprep.subr.mxu0 0.0
        %1733 = vmatpush1.xpose.msra.mxu0 0.0
        %1734 = vmatprep.subr.mxu0 0.0
        %1735 = vmatpush1.xpose.msra.mxu0 0.0
        %1736 = vmatprep.subr.mxu0 0.0
        %1737 = vmatpush1.xpose.msra.mxu0 %v1704
        %1738 = vmatprep.subr.mxu0 0.0
        %1739 = vmatpush2.xpose.msra.mxu0 0.0
        %1740 = vmatprep.subr.mxu0 0.0
        %1741 = vmatpush2.xpose.msra.mxu0 0.0
        %1742 = vmatprep.subr.mxu0 0.0
        %1743 = vmatpush2.xpose.msra.mxu0 0.0
        %1744 = vmatprep.subr.mxu0 0.0
        %1745 = vmatpush2.xpose.msra.mxu0 0.0
        %1746 = vmatprep.subr.mxu0 0.0
        %1747 = vmatpush2.xpose.msra.mxu0 0.0
        %1748 = vmatprep.subr.mxu0 0.0
        %1749 = vmatpush2.xpose.msra.mxu0 0.0
        %1750 = vmatprep.subr.mxu0 0.0
        %1751 = vmatpush2.xpose.msra.mxu0 0.0
        %1752 = vmatprep.subr.mxu0 0.0
        %1753 = vmatpush2.xpose.msra.mxu0 0.0
        %1754 = vmatprep.subr.mxu0 0.0
        %1755 = vmatpush2.xpose.msra.mxu0 0.0
        %1756 = vmatprep.subr.mxu0 0.0
        %1757 = vmatpush2.xpose.msra.mxu0 0.0
        %1758 = vmatprep.subr.mxu0 0.0
        %1759 = vmatpush2.xpose.msra.mxu0 0.0
        %1760 = vmatprep.subr.mxu0 0.0
        %1761 = vmatpush2.xpose.msra.mxu0 0.0
        %1762 = vmatprep.subr.mxu0 0.0
        %1763 = vmatpush2.xpose.msra.mxu0 0.0
        %1764 = vmatprep.subr.mxu0 0.0
        %1765 = vmatpush2.xpose.msra.mxu0 0.0
        %1766 = vmatprep.subr.mxu0 0.0
        %1767 = vmatpush2.xpose.msra.mxu0 0.0
        %1768 = vmatprep.subr.mxu0 0.0
        %1769 = vmatpush2.xpose.msra.mxu0 0.0
        %1770 = vmatprep.mubr.f32.mxu0 0.0
        %1771 = vmatmul.mubr.f32.gmra.mxu0 %v1701
        %v1772 = vpop.f32.mrf.mxu0
        %v1773 = vadd.f32 0.0, %v1772
        %v1774 = vpop.f32.mrf.mxu0
        %1775 = vdwg.mxu0
        %v1777 = vsel %vm1623, %v870, 0
        %v1780 = vsel %vm1623, %v1210, 0
        %1782 = vmatprep.subr.mxu0 0.0
        %1783 = vmatpush1.xpose.msra.mxu0 0.0
        %1784 = vmatprep.subr.mxu0 0.0
        %1785 = vmatpush1.xpose.msra.mxu0 0.0
        %1786 = vmatprep.subr.mxu0 0.0
        %1787 = vmatpush1.xpose.msra.mxu0 0.0
        %1788 = vmatprep.subr.mxu0 0.0
        %1789 = vmatpush1.xpose.msra.mxu0 0.0
        %1790 = vmatprep.subr.mxu0 0.0
        %1791 = vmatpush1.xpose.msra.mxu0 0.0
        %1792 = vmatprep.subr.mxu0 0.0
        %1793 = vmatpush1.xpose.msra.mxu0 0.0
        %1794 = vmatprep.subr.mxu0 0.0
        %1795 = vmatpush1.xpose.msra.mxu0 0.0
        %1796 = vmatprep.subr.mxu0 0.0
        %1797 = vmatpush1.xpose.msra.mxu0 0.0
        %1798 = vmatprep.subr.mxu0 0.0
        %1799 = vmatpush1.xpose.msra.mxu0 0.0
        %1800 = vmatprep.subr.mxu0 0.0
        %1801 = vmatpush1.xpose.msra.mxu0 0.0
        %1802 = vmatprep.subr.mxu0 0.0
        %1803 = vmatpush1.xpose.msra.mxu0 0.0
        %1804 = vmatprep.subr.mxu0 0.0
        %1805 = vmatpush1.xpose.msra.mxu0 0.0
        %1806 = vmatprep.subr.mxu0 0.0
        %1807 = vmatpush1.xpose.msra.mxu0 0.0
        %1808 = vmatprep.subr.mxu0 0.0
        %1809 = vmatpush1.xpose.msra.mxu0 0.0
        %1810 = vmatprep.subr.mxu0 0.0
        %1811 = vmatpush1.xpose.msra.mxu0 0.0
        %1812 = vmatprep.subr.mxu0 0.0
        %1813 = vmatpush1.xpose.msra.mxu0 %v1780
        %1814 = vmatprep.subr.mxu0 0.0
        %1815 = vmatpush2.xpose.msra.mxu0 0.0
        %1816 = vmatprep.subr.mxu0 0.0
        %1817 = vmatpush2.xpose.msra.mxu0 0.0
        %1818 = vmatprep.subr.mxu0 0.0
        %1819 = vmatpush2.xpose.msra.mxu0 0.0
        %1820 = vmatprep.subr.mxu0 0.0
        %1821 = vmatpush2.xpose.msra.mxu0 0.0
        %1822 = vmatprep.subr.mxu0 0.0
        %1823 = vmatpush2.xpose.msra.mxu0 0.0
        %1824 = vmatprep.subr.mxu0 0.0
        %1825 = vmatpush2.xpose.msra.mxu0 0.0
        %1826 = vmatprep.subr.mxu0 0.0
        %1827 = vmatpush2.xpose.msra.mxu0 0.0
        %1828 = vmatprep.subr.mxu0 0.0
        %1829 = vmatpush2.xpose.msra.mxu0 0.0
        %1830 = vmatprep.subr.mxu0 0.0
        %1831 = vmatpush2.xpose.msra.mxu0 0.0
        %1832 = vmatprep.subr.mxu0 0.0
        %1833 = vmatpush2.xpose.msra.mxu0 0.0
        %1834 = vmatprep.subr.mxu0 0.0
        %1835 = vmatpush2.xpose.msra.mxu0 0.0
        %1836 = vmatprep.subr.mxu0 0.0
        %1837 = vmatpush2.xpose.msra.mxu0 0.0
        %1838 = vmatprep.subr.mxu0 0.0
        %1839 = vmatpush2.xpose.msra.mxu0 0.0
        %1840 = vmatprep.subr.mxu0 0.0
        %1841 = vmatpush2.xpose.msra.mxu0 0.0
        %1842 = vmatprep.subr.mxu0 0.0
        %1843 = vmatpush2.xpose.msra.mxu0 0.0
        %1844 = vmatprep.subr.mxu0 0.0
        %1845 = vmatpush2.xpose.msra.mxu0 0.0
        %1846 = vmatprep.mubr.f32.mxu0 0.0
        %1847 = vmatmul.mubr.f32.gmra.mxu0 %v1777
        %v1848 = vpop.f32.mrf.mxu0
        %v1849 = vadd.f32 0.0, %v1848
        %v1850 = vpop.f32.mrf.mxu0
        %1851 = vdwg.mxu0
        %v1853 = vsel %vm1623, %v940, 0
        %v1856 = vsel %vm1623, %v1280, 0
        %1858 = vmatprep.subr.mxu0 0.0
        %1859 = vmatpush1.xpose.msra.mxu0 0.0
        %1860 = vmatprep.subr.mxu0 0.0
        %1861 = vmatpush1.xpose.msra.mxu0 0.0
        %1862 = vmatprep.subr.mxu0 0.0
        %1863 = vmatpush1.xpose.msra.mxu0 0.0
        %1864 = vmatprep.subr.mxu0 0.0
        %1865 = vmatpush1.xpose.msra.mxu0 0.0
        %1866 = vmatprep.subr.mxu0 0.0
        %1867 = vmatpush1.xpose.msra.mxu0 0.0
        %1868 = vmatprep.subr.mxu0 0.0
        %1869 = vmatpush1.xpose.msra.mxu0 0.0
        %1870 = vmatprep.subr.mxu0 0.0
        %1871 = vmatpush1.xpose.msra.mxu0 0.0
        %1872 = vmatprep.subr.mxu0 0.0
        %1873 = vmatpush1.xpose.msra.mxu0 0.0
        %1874 = vmatprep.subr.mxu0 0.0
        %1875 = vmatpush1.xpose.msra.mxu0 0.0
        %1876 = vmatprep.subr.mxu0 0.0
        %1877 = vmatpush1.xpose.msra.mxu0 0.0
        %1878 = vmatprep.subr.mxu0 0.0
        %1879 = vmatpush1.xpose.msra.mxu0 0.0
        %1880 = vmatprep.subr.mxu0 0.0
        %1881 = vmatpush1.xpose.msra.mxu0 0.0
        %1882 = vmatprep.subr.mxu0 0.0
        %1883 = vmatpush1.xpose.msra.mxu0 0.0
        %1884 = vmatprep.subr.mxu0 0.0
        %1885 = vmatpush1.xpose.msra.mxu0 0.0
        %1886 = vmatprep.subr.mxu0 0.0
        %1887 = vmatpush1.xpose.msra.mxu0 0.0
        %1888 = vmatprep.subr.mxu0 0.0
        %1889 = vmatpush1.xpose.msra.mxu0 %v1856
        %1890 = vmatprep.subr.mxu0 0.0
        %1891 = vmatpush2.xpose.msra.mxu0 0.0
        %1892 = vmatprep.subr.mxu0 0.0
        %1893 = vmatpush2.xpose.msra.mxu0 0.0
        %1894 = vmatprep.subr.mxu0 0.0
        %1895 = vmatpush2.xpose.msra.mxu0 0.0
        %1896 = vmatprep.subr.mxu0 0.0
        %1897 = vmatpush2.xpose.msra.mxu0 0.0
        %1898 = vmatprep.subr.mxu0 0.0
        %1899 = vmatpush2.xpose.msra.mxu0 0.0
        %1900 = vmatprep.subr.mxu0 0.0
        %1901 = vmatpush2.xpose.msra.mxu0 0.0
        %1902 = vmatprep.subr.mxu0 0.0
        %1903 = vmatpush2.xpose.msra.mxu0 0.0
        %1904 = vmatprep.subr.mxu0 0.0
        %1905 = vmatpush2.xpose.msra.mxu0 0.0
        %1906 = vmatprep.subr.mxu0 0.0
        %1907 = vmatpush2.xpose.msra.mxu0 0.0
        %1908 = vmatprep.subr.mxu0 0.0
        %1909 = vmatpush2.xpose.msra.mxu0 0.0
        %1910 = vmatprep.subr.mxu0 0.0
        %1911 = vmatpush2.xpose.msra.mxu0 0.0
        %1912 = vmatprep.subr.mxu0 0.0
        %1913 = vmatpush2.xpose.msra.mxu0 0.0
        %1914 = vmatprep.subr.mxu0 0.0
        %1915 = vmatpush2.xpose.msra.mxu0 0.0
        %1916 = vmatprep.subr.mxu0 0.0
        %1917 = vmatpush2.xpose.msra.mxu0 0.0
        %1918 = vmatprep.subr.mxu0 0.0
        %1919 = vmatpush2.xpose.msra.mxu0 0.0
        %1920 = vmatprep.subr.mxu0 0.0
        %1921 = vmatpush2.xpose.msra.mxu0 0.0
        %1922 = vmatprep.mubr.f32.mxu0 0.0
        %1923 = vmatmul.mubr.f32.gmra.mxu0 %v1853
        %v1924 = vpop.f32.mrf.mxu0
        %v1925 = vadd.f32 0.0, %v1924
        %v1926 = vpop.f32.mrf.mxu0
        %1927 = vdwg.mxu0
        %v1928 = vmul.f32 %v1697, 0.25
        %v1929 = vmul.f32 %v1773, 0.25
        %v1930 = vmul.f32 %v1849, 0.25
        %v1931 = vmul.f32 %v1925, 0.25
        %vm1932 = vcmask 64512
        %v1933 = vsel %vm1932, %v1928, -inf
        %1934 = vmax.xlane.f32.xlu0 %v1933
        %v1935 = vpop.xlane.xlu0 %1934
        %v1936 = vsel %vm1932, %v1929, -inf
        %1937 = vmax.xlane.f32.xlu0 %v1936
        %v1938 = vpop.xlane.xlu0 %1937
        %v1939 = vsel %vm1932, %v1930, -inf
        %1940 = vmax.xlane.f32.xlu0 %v1939
        %v1941 = vpop.xlane.xlu0 %1940
        %v1942 = vsel %vm1932, %v1931, -inf
        %1943 = vmax.xlane.f32.xlu0 %v1942
        %v1944 = vpop.xlane.xlu0 %1943
        %v1945 = vsub.f32 %v1928, %v1935
        %v1946 = vsub.f32 %v1929, %v1938
        %v1947 = vsub.f32 %v1930, %v1941
        %v1948 = vsub.f32 %v1931, %v1944
        %v1949 = vmul.f32 %v1945, 1.442695
        %v1950 = vpow.pop %v1949
        %v1951 = vmul.f32 %v1946, 1.442695
        %v1952 = vpow.pop %v1951
        %v1953 = vmul.f32 %v1947, 1.442695
        %v1954 = vpow.pop %v1953
        %v1955 = vmul.f32 %v1948, 1.442695
        %v1956 = vpow.pop %v1955
        %v1957 = vsel %vm1932, %v1950, 0.0
        %1958 = vadd.xlane.f32.xlu0 %v1957
        %v1959 = vpop.xlane.xlu0 %1958
        %v1960 = vsel %vm1932, %v1952, 0.0
        %1961 = vadd.xlane.f32.xlu0 %v1960
        %v1962 = vpop.xlane.xlu0 %1961
        %v1963 = vsel %vm1932, %v1954, 0.0
        %1964 = vadd.xlane.f32.xlu0 %v1963
        %v1965 = vpop.xlane.xlu0 %1964
        %v1966 = vsel %vm1932, %v1956, 0.0
        %1967 = vadd.xlane.f32.xlu0 %v1966
        %v1968 = vpop.xlane.xlu0 %1967
        %v1969 = vrcp.pop %v1959
        %v1970 = vrcp.pop %v1962
        %v1971 = vrcp.pop %v1965
        %v1972 = vrcp.pop %v1968
        %v1973 = vmul.f32 %v1950, %v1969
        %v1974 = vmul.f32 %v1952, %v1970
        %v1975 = vmul.f32 %v1954, %v1971
        %v1976 = vmul.f32 %v1956, %v1972
        %v1978 = vsel %vm1932, %v1973, 0
        %1980 = vmatprep.subr.mxu0 0.0
        %1981 = vmatpush1.msra.mxu0 0.0
        %1982 = vmatprep.subr.mxu0 0.0
        %1983 = vmatpush1.msra.mxu0 0.0
        %1984 = vmatprep.subr.mxu0 0.0
        %1985 = vmatpush1.msra.mxu0 0.0
        %1986 = vmatprep.subr.mxu0 0.0
        %1987 = vmatpush1.msra.mxu0 0.0
        %1988 = vmatprep.subr.mxu0 0.0
        %1989 = vmatpush1.msra.mxu0 0.0
        %1990 = vmatprep.subr.mxu0 0.0
        %1991 = vmatpush1.msra.mxu0 0.0
        %1992 = vmatprep.subr.mxu0 0.0
        %1993 = vmatpush1.msra.mxu0 0.0
        %1994 = vmatprep.subr.mxu0 0.0
        %1995 = vmatpush1.msra.mxu0 0.0
        %1996 = vmatprep.subr.mxu0 0.0
        %1997 = vmatpush1.msra.mxu0 0.0
        %1998 = vmatprep.subr.mxu0 0.0
        %1999 = vmatpush1.msra.mxu0 0.0
        %2000 = vmatprep.subr.mxu0 0.0
        %2001 = vmatpush1.msra.mxu0 0.0
        %2002 = vmatprep.subr.mxu0 0.0
        %2003 = vmatpush1.msra.mxu0 0.0
        %2004 = vmatprep.subr.mxu0 0.0
        %2005 = vmatpush1.msra.mxu0 0.0
        %2006 = vmatprep.subr.mxu0 0.0
        %2007 = vmatpush1.msra.mxu0 0.0
        %2008 = vmatprep.subr.mxu0 0.0
        %2009 = vmatpush1.msra.mxu0 0.0
        %2010 = vmatprep.subr.mxu0 0.0
        %2011 = vmatpush1.msra.mxu0 %v1410
        %2012 = vmatprep.subr.mxu0 0.0
        %2013 = vmatpush2.msra.mxu0 0.0
        %2014 = vmatprep.subr.mxu0 0.0
        %2015 = vmatpush2.msra.mxu0 0.0
        %2016 = vmatprep.subr.mxu0 0.0
        %2017 = vmatpush2.msra.mxu0 0.0
        %2018 = vmatprep.subr.mxu0 0.0
        %2019 = vmatpush2.msra.mxu0 0.0
        %2020 = vmatprep.subr.mxu0 0.0
        %2021 = vmatpush2.msra.mxu0 0.0
        %2022 = vmatprep.subr.mxu0 0.0
        %2023 = vmatpush2.msra.mxu0 0.0
        %2024 = vmatprep.subr.mxu0 0.0
        %2025 = vmatpush2.msra.mxu0 0.0
        %2026 = vmatprep.subr.mxu0 0.0
        %2027 = vmatpush2.msra.mxu0 0.0
        %2028 = vmatprep.subr.mxu0 0.0
        %2029 = vmatpush2.msra.mxu0 0.0
        %2030 = vmatprep.subr.mxu0 0.0
        %2031 = vmatpush2.msra.mxu0 0.0
        %2032 = vmatprep.subr.mxu0 0.0
        %2033 = vmatpush2.msra.mxu0 0.0
        %2034 = vmatprep.subr.mxu0 0.0
        %2035 = vmatpush2.msra.mxu0 0.0
        %2036 = vmatprep.subr.mxu0 0.0
        %2037 = vmatpush2.msra.mxu0 0.0
        %2038 = vmatprep.subr.mxu0 0.0
        %2039 = vmatpush2.msra.mxu0 0.0
        %2040 = vmatprep.subr.mxu0 0.0
        %2041 = vmatpush2.msra.mxu0 0.0
        %2042 = vmatprep.subr.mxu0 0.0
        %2043 = vmatpush2.msra.mxu0 0.0
        %2044 = vmatprep.mubr.f32.mxu0 0.0
        %2045 = vmatmul.mubr.f32.gmra.mxu0 %v1978
        %v2046 = vpop.f32.mrf.mxu0
        %v2047 = vadd.f32 0.0, %v2046
        %v2048 = vpop.f32.mrf.mxu0
        %2049 = vdwg.mxu0
        %v2051 = vsel %vm1932, %v1974, 0
        %2053 = vmatprep.subr.mxu0 0.0
        %2054 = vmatpush1.msra.mxu0 0.0
        %2055 = vmatprep.subr.mxu0 0.0
        %2056 = vmatpush1.msra.mxu0 0.0
        %2057 = vmatprep.subr.mxu0 0.0
        %2058 = vmatpush1.msra.mxu0 0.0
        %2059 = vmatprep.subr.mxu0 0.0
        %2060 = vmatpush1.msra.mxu0 0.0
        %2061 = vmatprep.subr.mxu0 0.0
        %2062 = vmatpush1.msra.mxu0 0.0
        %2063 = vmatprep.subr.mxu0 0.0
        %2064 = vmatpush1.msra.mxu0 0.0
        %2065 = vmatprep.subr.mxu0 0.0
        %2066 = vmatpush1.msra.mxu0 0.0
        %2067 = vmatprep.subr.mxu0 0.0
        %2068 = vmatpush1.msra.mxu0 0.0
        %2069 = vmatprep.subr.mxu0 0.0
        %2070 = vmatpush1.msra.mxu0 0.0
        %2071 = vmatprep.subr.mxu0 0.0
        %2072 = vmatpush1.msra.mxu0 0.0
        %2073 = vmatprep.subr.mxu0 0.0
        %2074 = vmatpush1.msra.mxu0 0.0
        %2075 = vmatprep.subr.mxu0 0.0
        %2076 = vmatpush1.msra.mxu0 0.0
        %2077 = vmatprep.subr.mxu0 0.0
        %2078 = vmatpush1.msra.mxu0 0.0
        %2079 = vmatprep.subr.mxu0 0.0
        %2080 = vmatpush1.msra.mxu0 0.0
        %2081 = vmatprep.subr.mxu0 0.0
        %2082 = vmatpush1.msra.mxu0 0.0
        %2083 = vmatprep.subr.mxu0 0.0
        %2084 = vmatpush1.msra.mxu0 %v1480
        %2085 = vmatprep.subr.mxu0 0.0
        %2086 = vmatpush2.msra.mxu0 0.0
        %2087 = vmatprep.subr.mxu0 0.0
        %2088 = vmatpush2.msra.mxu0 0.0
        %2089 = vmatprep.subr.mxu0 0.0
        %2090 = vmatpush2.msra.mxu0 0.0
        %2091 = vmatprep.subr.mxu0 0.0
        %2092 = vmatpush2.msra.mxu0 0.0
        %2093 = vmatprep.subr.mxu0 0.0
        %2094 = vmatpush2.msra.mxu0 0.0
        %2095 = vmatprep.subr.mxu0 0.0
        %2096 = vmatpush2.msra.mxu0 0.0
        %2097 = vmatprep.subr.mxu0 0.0
        %2098 = vmatpush2.msra.mxu0 0.0
        %2099 = vmatprep.subr.mxu0 0.0
        %2100 = vmatpush2.msra.mxu0 0.0
        %2101 = vmatprep.subr.mxu0 0.0
        %2102 = vmatpush2.msra.mxu0 0.0
        %2103 = vmatprep.subr.mxu0 0.0
        %2104 = vmatpush2.msra.mxu0 0.0
        %2105 = vmatprep.subr.mxu0 0.0
        %2106 = vmatpush2.msra.mxu0 0.0
        %2107 = vmatprep.subr.mxu0 0.0
        %2108 = vmatpush2.msra.mxu0 0.0
        %2109 = vmatprep.subr.mxu0 0.0
        %2110 = vmatpush2.msra.mxu0 0.0
        %2111 = vmatprep.subr.mxu0 0.0
        %2112 = vmatpush2.msra.mxu0 0.0
        %2113 = vmatprep.subr.mxu0 0.0
        %2114 = vmatpush2.msra.mxu0 0.0
        %2115 = vmatprep.subr.mxu0 0.0
        %2116 = vmatpush2.msra.mxu0 0.0
        %2117 = vmatprep.mubr.f32.mxu0 0.0
        %2118 = vmatmul.mubr.f32.gmra.mxu0 %v2051
        %v2119 = vpop.f32.mrf.mxu0
        %v2120 = vadd.f32 0.0, %v2119
        %v2121 = vpop.f32.mrf.mxu0
        %2122 = vdwg.mxu0
        %v2124 = vsel %vm1932, %v1975, 0
        %2126 = vmatprep.subr.mxu0 0.0
        %2127 = vmatpush1.msra.mxu0 0.0
        %2128 = vmatprep.subr.mxu0 0.0
        %2129 = vmatpush1.msra.mxu0 0.0
        %2130 = vmatprep.subr.mxu0 0.0
        %2131 = vmatpush1.msra.mxu0 0.0
        %2132 = vmatprep.subr.mxu0 0.0
        %2133 = vmatpush1.msra.mxu0 0.0
        %2134 = vmatprep.subr.mxu0 0.0
        %2135 = vmatpush1.msra.mxu0 0.0
        %2136 = vmatprep.subr.mxu0 0.0
        %2137 = vmatpush1.msra.mxu0 0.0
        %2138 = vmatprep.subr.mxu0 0.0
        %2139 = vmatpush1.msra.mxu0 0.0
        %2140 = vmatprep.subr.mxu0 0.0
        %2141 = vmatpush1.msra.mxu0 0.0
        %2142 = vmatprep.subr.mxu0 0.0
        %2143 = vmatpush1.msra.mxu0 0.0
        %2144 = vmatprep.subr.mxu0 0.0
        %2145 = vmatpush1.msra.mxu0 0.0
        %2146 = vmatprep.subr.mxu0 0.0
        %2147 = vmatpush1.msra.mxu0 0.0
        %2148 = vmatprep.subr.mxu0 0.0
        %2149 = vmatpush1.msra.mxu0 0.0
        %2150 = vmatprep.subr.mxu0 0.0
        %2151 = vmatpush1.msra.mxu0 0.0
        %2152 = vmatprep.subr.mxu0 0.0
        %2153 = vmatpush1.msra.mxu0 0.0
        %2154 = vmatprep.subr.mxu0 0.0
        %2155 = vmatpush1.msra.mxu0 0.0
        %2156 = vmatprep.subr.mxu0 0.0
        %2157 = vmatpush1.msra.mxu0 %v1550
        %2158 = vmatprep.subr.mxu0 0.0
        %2159 = vmatpush2.msra.mxu0 0.0
        %2160 = vmatprep.subr.mxu0 0.0
        %2161 = vmatpush2.msra.mxu0 0.0
        %2162 = vmatprep.subr.mxu0 0.0
        %2163 = vmatpush2.msra.mxu0 0.0
        %2164 = vmatprep.subr.mxu0 0.0
        %2165 = vmatpush2.msra.mxu0 0.0
        %2166 = vmatprep.subr.mxu0 0.0
        %2167 = vmatpush2.msra.mxu0 0.0
        %2168 = vmatprep.subr.mxu0 0.0
        %2169 = vmatpush2.msra.mxu0 0.0
        %2170 = vmatprep.subr.mxu0 0.0
        %2171 = vmatpush2.msra.mxu0 0.0
        %2172 = vmatprep.subr.mxu0 0.0
        %2173 = vmatpush2.msra.mxu0 0.0
        %2174 = vmatprep.subr.mxu0 0.0
        %2175 = vmatpush2.msra.mxu0 0.0
        %2176 = vmatprep.subr.mxu0 0.0
        %2177 = vmatpush2.msra.mxu0 0.0
        %2178 = vmatprep.subr.mxu0 0.0
        %2179 = vmatpush2.msra.mxu0 0.0
        %2180 = vmatprep.subr.mxu0 0.0
        %2181 = vmatpush2.msra.mxu0 0.0
        %2182 = vmatprep.subr.mxu0 0.0
        %2183 = vmatpush2.msra.mxu0 0.0
        %2184 = vmatprep.subr.mxu0 0.0
        %2185 = vmatpush2.msra.mxu0 0.0
        %2186 = vmatprep.subr.mxu0 0.0
        %2187 = vmatpush2.msra.mxu0 0.0
        %2188 = vmatprep.subr.mxu0 0.0
        %2189 = vmatpush2.msra.mxu0 0.0
        %2190 = vmatprep.mubr.f32.mxu0 0.0
        %2191 = vmatmul.mubr.f32.gmra.mxu0 %v2124
        %v2192 = vpop.f32.mrf.mxu0
        %v2193 = vadd.f32 0.0, %v2192
        %v2194 = vpop.f32.mrf.mxu0
        %2195 = vdwg.mxu0
        %v2197 = vsel %vm1932, %v1976, 0
        %2199 = vmatprep.subr.mxu0 0.0
        %2200 = vmatpush1.msra.mxu0 0.0
        %2201 = vmatprep.subr.mxu0 0.0
        %2202 = vmatpush1.msra.mxu0 0.0
        %2203 = vmatprep.subr.mxu0 0.0
        %2204 = vmatpush1.msra.mxu0 0.0
        %2205 = vmatprep.subr.mxu0 0.0
        %2206 = vmatpush1.msra.mxu0 0.0
        %2207 = vmatprep.subr.mxu0 0.0
        %2208 = vmatpush1.msra.mxu0 0.0
        %2209 = vmatprep.subr.mxu0 0.0
        %2210 = vmatpush1.msra.mxu0 0.0
        %2211 = vmatprep.subr.mxu0 0.0
        %2212 = vmatpush1.msra.mxu0 0.0
        %2213 = vmatprep.subr.mxu0 0.0
        %2214 = vmatpush1.msra.mxu0 0.0
        %2215 = vmatprep.subr.mxu0 0.0
        %2216 = vmatpush1.msra.mxu0 0.0
        %2217 = vmatprep.subr.mxu0 0.0
        %2218 = vmatpush1.msra.mxu0 0.0
        %2219 = vmatprep.subr.mxu0 0.0
        %2220 = vmatpush1.msra.mxu0 0.0
        %2221 = vmatprep.subr.mxu0 0.0
        %2222 = vmatpush1.msra.mxu0 0.0
        %2223 = vmatprep.subr.mxu0 0.0
        %2224 = vmatpush1.msra.mxu0 0.0
        %2225 = vmatprep.subr.mxu0 0.0
        %2226 = vmatpush1.msra.mxu0 0.0
        %2227 = vmatprep.subr.mxu0 0.0
        %2228 = vmatpush1.msra.mxu0 0.0
        %2229 = vmatprep.subr.mxu0 0.0
        %2230 = vmatpush1.msra.mxu0 %v1620
        %2231 = vmatprep.subr.mxu0 0.0
        %2232 = vmatpush2.msra.mxu0 0.0
        %2233 = vmatprep.subr.mxu0 0.0
        %2234 = vmatpush2.msra.mxu0 0.0
        %2235 = vmatprep.subr.mxu0 0.0
        %2236 = vmatpush2.msra.mxu0 0.0
        %2237 = vmatprep.subr.mxu0 0.0
        %2238 = vmatpush2.msra.mxu0 0.0
        %2239 = vmatprep.subr.mxu0 0.0
        %2240 = vmatpush2.msra.mxu0 0.0
        %2241 = vmatprep.subr.mxu0 0.0
        %2242 = vmatpush2.msra.mxu0 0.0
        %2243 = vmatprep.subr.mxu0 0.0
        %2244 = vmatpush2.msra.mxu0 0.0
        %2245 = vmatprep.subr.mxu0 0.0
        %2246 = vmatpush2.msra.mxu0 0.0
        %2247 = vmatprep.subr.mxu0 0.0
        %2248 = vmatpush2.msra.mxu0 0.0
        %2249 = vmatprep.subr.mxu0 0.0
        %2250 = vmatpush2.msra.mxu0 0.0
        %2251 = vmatprep.subr.mxu0 0.0
        %2252 = vmatpush2.msra.mxu0 0.0
        %2253 = vmatprep.subr.mxu0 0.0
        %2254 = vmatpush2.msra.mxu0 0.0
        %2255 = vmatprep.subr.mxu0 0.0
        %2256 = vmatpush2.msra.mxu0 0.0
        %2257 = vmatprep.subr.mxu0 0.0
        %2258 = vmatpush2.msra.mxu0 0.0
        %2259 = vmatprep.subr.mxu0 0.0
        %2260 = vmatpush2.msra.mxu0 0.0
        %2261 = vmatprep.subr.mxu0 0.0
        %2262 = vmatpush2.msra.mxu0 0.0
        %2263 = vmatprep.mubr.f32.mxu0 0.0
        %2264 = vmatmul.mubr.f32.gmra.mxu0 %v2197
        %v2265 = vpop.f32.mrf.mxu0
        %v2266 = vadd.f32 0.0, %v2265
        %v2267 = vpop.f32.mrf.mxu0
        %2268 = vdwg.mxu0
        %v2269 = vld [vmem:[%s7] sm:$0xff]
        %v2270 = vld [vmem:[%s7 + $0x8] sm:$0xff]
        %v2271 = vld [vmem:[%s7 + $0x10] sm:$0xff]
        %v2272 = vld [vmem:[%s7 + $0x18] sm:$0xff]
        %v2273 = vld [vmem:[%s7 + $0x20] sm:$0xff]
        %v2274 = vld [vmem:[%s7 + $0x28] sm:$0xff]
        %v2275 = vld [vmem:[%s7 + $0x30] sm:$0xff]
        %v2276 = vld [vmem:[%s7 + $0x38] sm:$0xff]
        %v2278 = vsel %vm1623, %v2047, 0
        %2280 = vmatprep.subr.mxu0 0.0
        %2281 = vmatpush1.msra.mxu0 0.0
        %2282 = vmatprep.subr.mxu0 0.0
        %2283 = vmatpush1.msra.mxu0 0.0
        %2284 = vmatprep.subr.mxu0 0.0
        %2285 = vmatpush1.msra.mxu0 0.0
        %2286 = vmatprep.subr.mxu0 0.0
        %2287 = vmatpush1.msra.mxu0 0.0
        %2288 = vmatprep.subr.mxu0 0.0
        %2289 = vmatpush1.msra.mxu0 0.0
        %2290 = vmatprep.subr.mxu0 0.0
        %2291 = vmatpush1.msra.mxu0 0.0
        %2292 = vmatprep.subr.mxu0 0.0
        %2293 = vmatpush1.msra.mxu0 0.0
        %2294 = vmatprep.subr.mxu0 0.0
        %2295 = vmatpush1.msra.mxu0 0.0
        %2296 = vmatprep.subr.mxu0 0.0
        %2297 = vmatpush1.msra.mxu0 0.0
        %2298 = vmatprep.subr.mxu0 0.0
        %2299 = vmatpush1.msra.mxu0 0.0
        %2300 = vmatprep.subr.mxu0 0.0
        %2301 = vmatpush1.msra.mxu0 0.0
        %2302 = vmatprep.subr.mxu0 0.0
        %2303 = vmatpush1.msra.mxu0 0.0
        %2304 = vmatprep.subr.mxu0 0.0
        %2305 = vmatpush1.msra.mxu0 0.0
        %2306 = vmatprep.subr.mxu0 0.0
        %2307 = vmatpush1.msra.mxu0 0.0
        %2308 = vmatprep.subr.mxu0 0.0
        %2309 = vmatpush1.msra.mxu0 %v2270
        %2310 = vmatprep.subr.mxu0 0.0
        %2311 = vmatpush1.msra.mxu0 %v2269
        %2312 = vmatprep.subr.mxu0 0.0
        %2313 = vmatpush2.msra.mxu0 0.0
        %2314 = vmatprep.subr.mxu0 0.0
        %2315 = vmatpush2.msra.mxu0 0.0
        %2316 = vmatprep.subr.mxu0 0.0
        %2317 = vmatpush2.msra.mxu0 0.0
        %2318 = vmatprep.subr.mxu0 0.0
        %2319 = vmatpush2.msra.mxu0 0.0
        %2320 = vmatprep.subr.mxu0 0.0
        %2321 = vmatpush2.msra.mxu0 0.0
        %2322 = vmatprep.subr.mxu0 0.0
        %2323 = vmatpush2.msra.mxu0 0.0
        %2324 = vmatprep.subr.mxu0 0.0
        %2325 = vmatpush2.msra.mxu0 0.0
        %2326 = vmatprep.subr.mxu0 0.0
        %2327 = vmatpush2.msra.mxu0 0.0
        %2328 = vmatprep.subr.mxu0 0.0
        %2329 = vmatpush2.msra.mxu0 0.0
        %2330 = vmatprep.subr.mxu0 0.0
        %2331 = vmatpush2.msra.mxu0 0.0
        %2332 = vmatprep.subr.mxu0 0.0
        %2333 = vmatpush2.msra.mxu0 0.0
        %2334 = vmatprep.subr.mxu0 0.0
        %2335 = vmatpush2.msra.mxu0 0.0
        %2336 = vmatprep.subr.mxu0 0.0
        %2337 = vmatpush2.msra.mxu0 0.0
        %2338 = vmatprep.subr.mxu0 0.0
        %2339 = vmatpush2.msra.mxu0 0.0
        %2340 = vmatprep.subr.mxu0 0.0
        %2341 = vmatpush2.msra.mxu0 0.0
        %2342 = vmatprep.subr.mxu0 0.0
        %2343 = vmatpush2.msra.mxu0 0.0
        %2344 = vmatprep.mubr.f32.mxu0 0.0
        %2345 = vmatmul.mubr.f32.gmra.mxu0 %v2278
        %v2346 = vpop.f32.mrf.mxu0
        %v2347 = vadd.f32 0.0, %v2346
        %v2348 = vpop.f32.mrf.mxu0
        %2349 = vdwg.mxu0
        %v2351 = vsel %vm1623, %v2120, 0
        %2353 = vmatprep.subr.mxu0 0.0
        %2354 = vmatpush1.msra.mxu0 0.0
        %2355 = vmatprep.subr.mxu0 0.0
        %2356 = vmatpush1.msra.mxu0 0.0
        %2357 = vmatprep.subr.mxu0 0.0
        %2358 = vmatpush1.msra.mxu0 0.0
        %2359 = vmatprep.subr.mxu0 0.0
        %2360 = vmatpush1.msra.mxu0 0.0
        %2361 = vmatprep.subr.mxu0 0.0
        %2362 = vmatpush1.msra.mxu0 0.0
        %2363 = vmatprep.subr.mxu0 0.0
        %2364 = vmatpush1.msra.mxu0 0.0
        %2365 = vmatprep.subr.mxu0 0.0
        %2366 = vmatpush1.msra.mxu0 0.0
        %2367 = vmatprep.subr.mxu0 0.0
        %2368 = vmatpush1.msra.mxu0 0.0
        %2369 = vmatprep.subr.mxu0 0.0
        %2370 = vmatpush1.msra.mxu0 0.0
        %2371 = vmatprep.subr.mxu0 0.0
        %2372 = vmatpush1.msra.mxu0 0.0
        %2373 = vmatprep.subr.mxu0 0.0
        %2374 = vmatpush1.msra.mxu0 0.0
        %2375 = vmatprep.subr.mxu0 0.0
        %2376 = vmatpush1.msra.mxu0 0.0
        %2377 = vmatprep.subr.mxu0 0.0
        %2378 = vmatpush1.msra.mxu0 0.0
        %2379 = vmatprep.subr.mxu0 0.0
        %2380 = vmatpush1.msra.mxu0 0.0
        %2381 = vmatprep.subr.mxu0 0.0
        %2382 = vmatpush1.msra.mxu0 %v2272
        %2383 = vmatprep.subr.mxu0 0.0
        %2384 = vmatpush1.msra.mxu0 %v2271
        %2385 = vmatprep.subr.mxu0 0.0
        %2386 = vmatpush2.msra.mxu0 0.0
        %2387 = vmatprep.subr.mxu0 0.0
        %2388 = vmatpush2.msra.mxu0 0.0
        %2389 = vmatprep.subr.mxu0 0.0
        %2390 = vmatpush2.msra.mxu0 0.0
        %2391 = vmatprep.subr.mxu0 0.0
        %2392 = vmatpush2.msra.mxu0 0.0
        %2393 = vmatprep.subr.mxu0 0.0
        %2394 = vmatpush2.msra.mxu0 0.0
        %2395 = vmatprep.subr.mxu0 0.0
        %2396 = vmatpush2.msra.mxu0 0.0
        %2397 = vmatprep.subr.mxu0 0.0
        %2398 = vmatpush2.msra.mxu0 0.0
        %2399 = vmatprep.subr.mxu0 0.0
        %2400 = vmatpush2.msra.mxu0 0.0
        %2401 = vmatprep.subr.mxu0 0.0
        %2402 = vmatpush2.msra.mxu0 0.0
        %2403 = vmatprep.subr.mxu0 0.0
        %2404 = vmatpush2.msra.mxu0 0.0
        %2405 = vmatprep.subr.mxu0 0.0
        %2406 = vmatpush2.msra.mxu0 0.0
        %2407 = vmatprep.subr.mxu0 0.0
        %2408 = vmatpush2.msra.mxu0 0.0
        %2409 = vmatprep.subr.mxu0 0.0
        %2410 = vmatpush2.msra.mxu0 0.0
        %2411 = vmatprep.subr.mxu0 0.0
        %2412 = vmatpush2.msra.mxu0 0.0
        %2413 = vmatprep.subr.mxu0 0.0
        %2414 = vmatpush2.msra.mxu0 0.0
        %2415 = vmatprep.subr.mxu0 0.0
        %2416 = vmatpush2.msra.mxu0 0.0
        %2417 = vmatprep.mubr.f32.mxu0 0.0
        %2418 = vmatmul.mubr.f32.gmra.mxu0 %v2351
        %v2419 = vpop.f32.mrf.mxu0
        %v2420 = vadd.f32 0.0, %v2419
        %v2421 = vpop.f32.mrf.mxu0
        %2422 = vdwg.mxu0
        %v2424 = vsel %vm1623, %v2193, 0
        %2426 = vmatprep.subr.mxu0 0.0
        %2427 = vmatpush1.msra.mxu0 0.0
        %2428 = vmatprep.subr.mxu0 0.0
        %2429 = vmatpush1.msra.mxu0 0.0
        %2430 = vmatprep.subr.mxu0 0.0
        %2431 = vmatpush1.msra.mxu0 0.0
        %2432 = vmatprep.subr.mxu0 0.0
        %2433 = vmatpush1.msra.mxu0 0.0
        %2434 = vmatprep.subr.mxu0 0.0
        %2435 = vmatpush1.msra.mxu0 0.0
        %2436 = vmatprep.subr.mxu0 0.0
        %2437 = vmatpush1.msra.mxu0 0.0
        %2438 = vmatprep.subr.mxu0 0.0
        %2439 = vmatpush1.msra.mxu0 0.0
        %2440 = vmatprep.subr.mxu0 0.0
        %2441 = vmatpush1.msra.mxu0 0.0
        %2442 = vmatprep.subr.mxu0 0.0
        %2443 = vmatpush1.msra.mxu0 0.0
        %2444 = vmatprep.subr.mxu0 0.0
        %2445 = vmatpush1.msra.mxu0 0.0
        %2446 = vmatprep.subr.mxu0 0.0
        %2447 = vmatpush1.msra.mxu0 0.0
        %2448 = vmatprep.subr.mxu0 0.0
        %2449 = vmatpush1.msra.mxu0 0.0
        %2450 = vmatprep.subr.mxu0 0.0
        %2451 = vmatpush1.msra.mxu0 0.0
        %2452 = vmatprep.subr.mxu0 0.0
        %2453 = vmatpush1.msra.mxu0 0.0
        %2454 = vmatprep.subr.mxu0 0.0
        %2455 = vmatpush1.msra.mxu0 %v2274
        %2456 = vmatprep.subr.mxu0 0.0
        %2457 = vmatpush1.msra.mxu0 %v2273
        %2458 = vmatprep.subr.mxu0 0.0
        %2459 = vmatpush2.msra.mxu0 0.0
        %2460 = vmatprep.subr.mxu0 0.0
        %2461 = vmatpush2.msra.mxu0 0.0
        %2462 = vmatprep.subr.mxu0 0.0
        %2463 = vmatpush2.msra.mxu0 0.0
        %2464 = vmatprep.subr.mxu0 0.0
        %2465 = vmatpush2.msra.mxu0 0.0
        %2466 = vmatprep.subr.mxu0 0.0
        %2467 = vmatpush2.msra.mxu0 0.0
        %2468 = vmatprep.subr.mxu0 0.0
        %2469 = vmatpush2.msra.mxu0 0.0
        %2470 = vmatprep.subr.mxu0 0.0
        %2471 = vmatpush2.msra.mxu0 0.0
        %2472 = vmatprep.subr.mxu0 0.0
        %2473 = vmatpush2.msra.mxu0 0.0
        %2474 = vmatprep.subr.mxu0 0.0
        %2475 = vmatpush2.msra.mxu0 0.0
        %2476 = vmatprep.subr.mxu0 0.0
        %2477 = vmatpush2.msra.mxu0 0.0
        %2478 = vmatprep.subr.mxu0 0.0
        %2479 = vmatpush2.msra.mxu0 0.0
        %2480 = vmatprep.subr.mxu0 0.0
        %2481 = vmatpush2.msra.mxu0 0.0
        %2482 = vmatprep.subr.mxu0 0.0
        %2483 = vmatpush2.msra.mxu0 0.0
        %2484 = vmatprep.subr.mxu0 0.0
        %2485 = vmatpush2.msra.mxu0 0.0
        %2486 = vmatprep.subr.mxu0 0.0
        %2487 = vmatpush2.msra.mxu0 0.0
        %2488 = vmatprep.subr.mxu0 0.0
        %2489 = vmatpush2.msra.mxu0 0.0
        %2490 = vmatprep.mubr.f32.mxu0 0.0
        %2491 = vmatmul.mubr.f32.gmra.mxu0 %v2424
        %v2492 = vpop.f32.mrf.mxu0
        %v2493 = vadd.f32 0.0, %v2492
        %v2494 = vpop.f32.mrf.mxu0
        %2495 = vdwg.mxu0
        %v2497 = vsel %vm1623, %v2266, 0
        %2499 = vmatprep.subr.mxu0 0.0
        %2500 = vmatpush1.msra.mxu0 0.0
        %2501 = vmatprep.subr.mxu0 0.0
        %2502 = vmatpush1.msra.mxu0 0.0
        %2503 = vmatprep.subr.mxu0 0.0
        %2504 = vmatpush1.msra.mxu0 0.0
        %2505 = vmatprep.subr.mxu0 0.0
        %2506 = vmatpush1.msra.mxu0 0.0
        %2507 = vmatprep.subr.mxu0 0.0
        %2508 = vmatpush1.msra.mxu0 0.0
        %2509 = vmatprep.subr.mxu0 0.0
        %2510 = vmatpush1.msra.mxu0 0.0
        %2511 = vmatprep.subr.mxu0 0.0
        %2512 = vmatpush1.msra.mxu0 0.0
        %2513 = vmatprep.subr.mxu0 0.0
        %2514 = vmatpush1.msra.mxu0 0.0
        %2515 = vmatprep.subr.mxu0 0.0
        %2516 = vmatpush1.msra.mxu0 0.0
        %2517 = vmatprep.subr.mxu0 0.0
        %2518 = vmatpush1.msra.mxu0 0.0
        %2519 = vmatprep.subr.mxu0 0.0
        %2520 = vmatpush1.msra.mxu0 0.0
        %2521 = vmatprep.subr.mxu0 0.0
        %2522 = vmatpush1.msra.mxu0 0.0
        %2523 = vmatprep.subr.mxu0 0.0
        %2524 = vmatpush1.msra.mxu0 0.0
        %2525 = vmatprep.subr.mxu0 0.0
        %2526 = vmatpush1.msra.mxu0 0.0
        %2527 = vmatprep.subr.mxu0 0.0
        %2528 = vmatpush1.msra.mxu0 %v2276
        %2529 = vmatprep.subr.mxu0 0.0
        %2530 = vmatpush1.msra.mxu0 %v2275
        %2531 = vmatprep.subr.mxu0 0.0
        %2532 = vmatpush2.msra.mxu0 0.0
        %2533 = vmatprep.subr.mxu0 0.0
        %2534 = vmatpush2.msra.mxu0 0.0
        %2535 = vmatprep.subr.mxu0 0.0
        %2536 = vmatpush2.msra.mxu0 0.0
        %2537 = vmatprep.subr.mxu0 0.0
        %2538 = vmatpush2.msra.mxu0 0.0
        %2539 = vmatprep.subr.mxu0 0.0
        %2540 = vmatpush2.msra.mxu0 0.0
        %2541 = vmatprep.subr.mxu0 0.0
        %2542 = vmatpush2.msra.mxu0 0.0
        %2543 = vmatprep.subr.mxu0 0.0
        %2544 = vmatpush2.msra.mxu0 0.0
        %2545 = vmatprep.subr.mxu0 0.0
        %2546 = vmatpush2.msra.mxu0 0.0
        %2547 = vmatprep.subr.mxu0 0.0
        %2548 = vmatpush2.msra.mxu0 0.0
        %2549 = vmatprep.subr.mxu0 0.0
        %2550 = vmatpush2.msra.mxu0 0.0
        %2551 = vmatprep.subr.mxu0 0.0
        %2552 = vmatpush2.msra.mxu0 0.0
        %2553 = vmatprep.subr.mxu0 0.0
        %2554 = vmatpush2.msra.mxu0 0.0
        %2555 = vmatprep.subr.mxu0 0.0
        %2556 = vmatpush2.msra.mxu0 0.0
        %2557 = vmatprep.subr.mxu0 0.0
        %2558 = vmatpush2.msra.mxu0 0.0
        %2559 = vmatprep.subr.mxu0 0.0
        %2560 = vmatpush2.msra.mxu0 0.0
        %2561 = vmatprep.subr.mxu0 0.0
        %2562 = vmatpush2.msra.mxu0 0.0
        %2563 = vmatprep.mubr.f32.mxu0 0.0
        %2564 = vmatmul.mubr.f32.gmra.mxu0 %v2497
        %v2565 = vpop.f32.mrf.mxu0
        %v2566 = vadd.f32 0.0, %v2565
        %v2567 = vpop.f32.mrf.mxu0
        %2568 = vdwg.mxu0
        %v2569 = vsel %vm659, %v2347, 0.0
        %v2570 = vsel %vm659, %v2420, 0.0
        %v2571 = vadd.f32 %v2569, %v2570
        %v2572 = vsel %vm659, %v2493, 0.0
        %v2573 = vadd.f32 %v2571, %v2572
        %v2574 = vsel %vm659, %v2566, 0.0
        %v2575 = vadd.f32 %v2573, %v2574
        %v2576 = vld [vmem:[%s8] sm:$0x1]
        %v2578 = vlaneseq
        %v2579 = vshrl.u32 %v2578, 7
        %v2580 = vsub.s32 0, %v2579
        %v2581 = vrot.slane %v2576, %v2580
        %v2583 = vadd.f32 %v2575, %v2581
        %v2584 = vadd.f32 %v598, %v2583
        %v2585 = vld [vmem:[%s9] sm:$0x1]
        %v2586 = vld [vmem:[%s10] sm:$0x1]
        %v2587 = vsel %vm659, %v2584, 0.0
        %2588 = vadd.xlane.f32.xlu0 %v2587
        %v2589 = vpop.xlane.xlu0 %2588
        %v2590 = vrcp.pop 64.0
        %v2591 = vmul.f32 %v2589, %v2590
        %v2592 = vsub.f32 %v2584, %v2591
        %v2593 = vmul.f32 %v2592, %v2592
        %v2594 = vsel %vm659, %v2593, 0.0
        %2595 = vadd.xlane.f32.xlu0 %v2594
        %v2596 = vpop.xlane.xlu0 %2595
        %v2597 = vmul.f32 %v2596, %v2590
        %v2598 = vadd.f32 %v2597, 1e-05
        %v2599 = vrsqrt.pop %v2598
        %v2600 = vmul.f32 %v2592, %v2599
        %v2602 = vlaneseq
        %v2603 = vshrl.u32 %v2602, 7
        %v2604 = vsub.s32 0, %v2603
        %v2605 = vrot.slane %v2585, %v2604
        %v2607 = vmul.f32 %v2600, %v2605
        %v2609 = vlaneseq
        %v2610 = vshrl.u32 %v2609, 7
        %v2611 = vsub.s32 0, %v2610
        %v2612 = vrot.slane %v2586, %v2611
        %v2614 = vadd.f32 %v2607, %v2612
        %v2615 = vld [vmem:[%s13] sm:$0xff]
        %v2616 = vld [vmem:[%s13 + $0x8] sm:$0xff]
        %v2617 = vld [vmem:[%s13 + $0x10] sm:$0xff]
        %v2618 = vld [vmem:[%s13 + $0x18] sm:$0xff]
        %v2619 = vld [vmem:[%s13 + $0x20] sm:$0xff]
        %v2620 = vld [vmem:[%s13 + $0x28] sm:$0xff]
        %v2621 = vld [vmem:[%s13 + $0x30] sm:$0xff]
        %v2622 = vld [vmem:[%s13 + $0x38] sm:$0xff]
        %v2623 = vld [vmem:[%s14] sm:$0x1]
        %v2625 = vlaneseq
        %v2626 = vshrl.u32 %v2625, 7
        %v2627 = vsub.s32 0, %v2626
        %v2628 = vrot.slane %v2623, %v2627
        %v2631 = vsel %vm659, %v2614, 0
        %2633 = vmatprep.subr.mxu0 0.0
        %2634 = vmatpush1.msra.mxu0 0.0
        %2635 = vmatprep.subr.mxu0 0.0
        %2636 = vmatpush1.msra.mxu0 0.0
        %2637 = vmatprep.subr.mxu0 0.0
        %2638 = vmatpush1.msra.mxu0 0.0
        %2639 = vmatprep.subr.mxu0 0.0
        %2640 = vmatpush1.msra.mxu0 0.0
        %2641 = vmatprep.subr.mxu0 0.0
        %2642 = vmatpush1.msra.mxu0 0.0
        %2643 = vmatprep.subr.mxu0 0.0
        %2644 = vmatpush1.msra.mxu0 0.0
        %2645 = vmatprep.subr.mxu0 0.0
        %2646 = vmatpush1.msra.mxu0 0.0
        %2647 = vmatprep.subr.mxu0 0.0
        %2648 = vmatpush1.msra.mxu0 0.0
        %2649 = vmatprep.subr.mxu0 0.0
        %2650 = vmatpush1.msra.mxu0 %v2622
        %2651 = vmatprep.subr.mxu0 0.0
        %2652 = vmatpush1.msra.mxu0 %v2621
        %2653 = vmatprep.subr.mxu0 0.0
        %2654 = vmatpush1.msra.mxu0 %v2620
        %2655 = vmatprep.subr.mxu0 0.0
        %2656 = vmatpush1.msra.mxu0 %v2619
        %2657 = vmatprep.subr.mxu0 0.0
        %2658 = vmatpush1.msra.mxu0 %v2618
        %2659 = vmatprep.subr.mxu0 0.0
        %2660 = vmatpush1.msra.mxu0 %v2617
        %2661 = vmatprep.subr.mxu0 0.0
        %2662 = vmatpush1.msra.mxu0 %v2616
        %2663 = vmatprep.subr.mxu0 0.0
        %2664 = vmatpush1.msra.mxu0 %v2615
        %2665 = vmatprep.subr.mxu0 0.0
        %2666 = vmatpush2.msra.mxu0 0.0
        %2667 = vmatprep.subr.mxu0 0.0
        %2668 = vmatpush2.msra.mxu0 0.0
        %2669 = vmatprep.subr.mxu0 0.0
        %2670 = vmatpush2.msra.mxu0 0.0
        %2671 = vmatprep.subr.mxu0 0.0
        %2672 = vmatpush2.msra.mxu0 0.0
        %2673 = vmatprep.subr.mxu0 0.0
        %2674 = vmatpush2.msra.mxu0 0.0
        %2675 = vmatprep.subr.mxu0 0.0
        %2676 = vmatpush2.msra.mxu0 0.0
        %2677 = vmatprep.subr.mxu0 0.0
        %2678 = vmatpush2.msra.mxu0 0.0
        %2679 = vmatprep.subr.mxu0 0.0
        %2680 = vmatpush2.msra.mxu0 0.0
        %2681 = vmatprep.subr.mxu0 0.0
        %2682 = vmatpush2.msra.mxu0 0.0
        %2683 = vmatprep.subr.mxu0 0.0
        %2684 = vmatpush2.msra.mxu0 0.0
        %2685 = vmatprep.subr.mxu0 0.0
        %2686 = vmatpush2.msra.mxu0 0.0
        %2687 = vmatprep.subr.mxu0 0.0
        %2688 = vmatpush2.msra.mxu0 0.0
        %2689 = vmatprep.subr.mxu0 0.0
        %2690 = vmatpush2.msra.mxu0 0.0
        %2691 = vmatprep.subr.mxu0 0.0
        %2692 = vmatpush2.msra.mxu0 0.0
        %2693 = vmatprep.subr.mxu0 0.0
        %2694 = vmatpush2.msra.mxu0 0.0
        %2695 = vmatprep.subr.mxu0 0.0
        %2696 = vmatpush2.msra.mxu0 0.0
        %2697 = vmatprep.mubr.f32.mxu0 0.0
        %2698 = vmatmul.mubr.f32.gmra.mxu0 %v2631
        %v2699 = vpop.f32.mrf.mxu0
        %v2700 = vadd.f32 %v2628, %v2699
        %v2701 = vpop.f32.mrf.mxu0
        %2702 = vdwg.mxu0
        %v2703 = vmax.f32 %v2700, 0.0
        %v2704 = vld [vmem:[%s15] sm:$0xff]
        %v2705 = vld [vmem:[%s15 + $0x8] sm:$0xff]
        %v2706 = vld [vmem:[%s15 + $0x10] sm:$0xff]
        %v2707 = vld [vmem:[%s15 + $0x18] sm:$0xff]
        %v2708 = vld [vmem:[%s15 + $0x20] sm:$0xff]
        %v2709 = vld [vmem:[%s15 + $0x28] sm:$0xff]
        %v2710 = vld [vmem:[%s15 + $0x30] sm:$0xff]
        %v2711 = vld [vmem:[%s15 + $0x38] sm:$0xff]
        %v2712 = vld [vmem:[%s15 + $0x40] sm:$0xff]
        %v2713 = vld [vmem:[%s15 + $0x48] sm:$0xff]
        %v2714 = vld [vmem:[%s15 + $0x50] sm:$0xff]
        %v2715 = vld [vmem:[%s15 + $0x58] sm:$0xff]
        %v2716 = vld [vmem:[%s15 + $0x60] sm:$0xff]
        %v2717 = vld [vmem:[%s15 + $0x68] sm:$0xff]
        %v2718 = vld [vmem:[%s15 + $0x70] sm:$0xff]
        %v2719 = vld [vmem:[%s15 + $0x78] sm:$0xff]
        %2720 = vmatprep.subr.mxu0 0.0
        %2721 = vmatpush1.msra.mxu0 %v2719
        %2722 = vmatprep.subr.mxu0 0.0
        %2723 = vmatpush1.msra.mxu0 %v2718
        %2724 = vmatprep.subr.mxu0 0.0
        %2725 = vmatpush1.msra.mxu0 %v2717
        %2726 = vmatprep.subr.mxu0 0.0
        %2727 = vmatpush1.msra.mxu0 %v2716
        %2728 = vmatprep.subr.mxu0 0.0
        %2729 = vmatpush1.msra.mxu0 %v2715
        %2730 = vmatprep.subr.mxu0 0.0
        %2731 = vmatpush1.msra.mxu0 %v2714
        %2732 = vmatprep.subr.mxu0 0.0
        %2733 = vmatpush1.msra.mxu0 %v2713
        %2734 = vmatprep.subr.mxu0 0.0
        %2735 = vmatpush1.msra.mxu0 %v2712
        %2736 = vmatprep.subr.mxu0 0.0
        %2737 = vmatpush1.msra.mxu0 %v2711
        %2738 = vmatprep.subr.mxu0 0.0
        %2739 = vmatpush1.msra.mxu0 %v2710
        %2740 = vmatprep.subr.mxu0 0.0
        %2741 = vmatpush1.msra.mxu0 %v2709
        %2742 = vmatprep.subr.mxu0 0.0
        %2743 = vmatpush1.msra.mxu0 %v2708
        %2744 = vmatprep.subr.mxu0 0.0
        %2745 = vmatpush1.msra.mxu0 %v2707
        %2746 = vmatprep.subr.mxu0 0.0
        %2747 = vmatpush1.msra.mxu0 %v2706
        %2748 = vmatprep.subr.mxu0 0.0
        %2749 = vmatpush1.msra.mxu0 %v2705
        %2750 = vmatprep.subr.mxu0 0.0
        %2751 = vmatpush1.msra.mxu0 %v2704
        %2752 = vmatprep.subr.mxu0 0.0
        %2753 = vmatpush2.msra.mxu0 0.0
        %2754 = vmatprep.subr.mxu0 0.0
        %2755 = vmatpush2.msra.mxu0 0.0
        %2756 = vmatprep.subr.mxu0 0.0
        %2757 = vmatpush2.msra.mxu0 0.0
        %2758 = vmatprep.subr.mxu0 0.0
        %2759 = vmatpush2.msra.mxu0 0.0
        %2760 = vmatprep.subr.mxu0 0.0
        %2761 = vmatpush2.msra.mxu0 0.0
        %2762 = vmatprep.subr.mxu0 0.0
        %2763 = vmatpush2.msra.mxu0 0.0
        %2764 = vmatprep.subr.mxu0 0.0
        %2765 = vmatpush2.msra.mxu0 0.0
        %2766 = vmatprep.subr.mxu0 0.0
        %2767 = vmatpush2.msra.mxu0 0.0
        %2768 = vmatprep.subr.mxu0 0.0
        %2769 = vmatpush2.msra.mxu0 0.0
        %2770 = vmatprep.subr.mxu0 0.0
        %2771 = vmatpush2.msra.mxu0 0.0
        %2772 = vmatprep.subr.mxu0 0.0
        %2773 = vmatpush2.msra.mxu0 0.0
        %2774 = vmatprep.subr.mxu0 0.0
        %2775 = vmatpush2.msra.mxu0 0.0
        %2776 = vmatprep.subr.mxu0 0.0
        %2777 = vmatpush2.msra.mxu0 0.0
        %2778 = vmatprep.subr.mxu0 0.0
        %2779 = vmatpush2.msra.mxu0 0.0
        %2780 = vmatprep.subr.mxu0 0.0
        %2781 = vmatpush2.msra.mxu0 0.0
        %2782 = vmatprep.subr.mxu0 0.0
        %2783 = vmatpush2.msra.mxu0 0.0
        %2784 = vmatprep.mubr.f32.mxu0 0.0
        %2785 = vmatmul.mubr.f32.gmra.mxu0 %v2703
        %v2786 = vpop.f32.mrf.mxu0
        %v2787 = vadd.f32 0.0, %v2786
        %v2788 = vpop.f32.mrf.mxu0
        %2789 = vdwg.mxu0
        %v2790 = vadd.f32 %v2614, %v2787
        %v2791 = vld [vmem:[%s16] sm:$0x1]
        %v2793 = vlaneseq
        %v2794 = vshrl.u32 %v2793, 7
        %v2795 = vsub.s32 0, %v2794
        %v2796 = vrot.slane %v2791, %v2795
        %v2798 = vadd.f32 %v2790, %v2796
        %v2799 = vld [vmem:[%s11] sm:$0x1]
        %v2800 = vld [vmem:[%s12] sm:$0x1]
        %v2801 = vsel %vm659, %v2798, 0.0
        %2802 = vadd.xlane.f32.xlu0 %v2801
        %v2803 = vpop.xlane.xlu0 %2802
        %v2804 = vmul.f32 %v2803, %v2590
        %v2805 = vsub.f32 %v2798, %v2804
        %v2806 = vmul.f32 %v2805, %v2805
        %v2807 = vsel %vm659, %v2806, 0.0
        %2808 = vadd.xlane.f32.xlu0 %v2807
        %v2809 = vpop.xlane.xlu0 %2808
        %v2810 = vmul.f32 %v2809, %v2590
        %v2811 = vadd.f32 %v2810, 1e-05
        %v2812 = vrsqrt.pop %v2811
        %v2813 = vmul.f32 %v2805, %v2812
        %v2815 = vlaneseq
        %v2816 = vshrl.u32 %v2815, 7
        %v2817 = vsub.s32 0, %v2816
        %v2818 = vrot.slane %v2799, %v2817
        %v2820 = vmul.f32 %v2813, %v2818
        %v2822 = vlaneseq
        %v2823 = vshrl.u32 %v2822, 7
        %v2824 = vsub.s32 0, %v2823
        %v2825 = vrot.slane %v2800, %v2824
        %v2827 = vadd.f32 %v2820, %v2825
        %s2828 = scalar_lea.vmem %s1, 256
        %v2829 = vld [vmem:[%s2828] sm:$0xff]
        %v2830 = vld [vmem:[%s2828 + $0x8] sm:$0xff]
        %v2831 = vld [vmem:[%s2828 + $0x10] sm:$0xff]
        %v2832 = vld [vmem:[%s2828 + $0x18] sm:$0xff]
        %v2833 = vld [vmem:[%s2828 + $0x20] sm:$0xff]
        %v2834 = vld [vmem:[%s2828 + $0x28] sm:$0xff]
        %v2835 = vld [vmem:[%s2828 + $0x30] sm:$0xff]
        %v2836 = vld [vmem:[%s2828 + $0x38] sm:$0xff]
        %v2837 = vld [vmem:[%s2828 + $0x40] sm:$0xff]
        %v2838 = vld [vmem:[%s2828 + $0x48] sm:$0xff]
        %v2839 = vld [vmem:[%s2828 + $0x50] sm:$0xff]
        %v2840 = vld [vmem:[%s2828 + $0x58] sm:$0xff]
        %v2841 = vld [vmem:[%s2828 + $0x60] sm:$0xff]
        %v2842 = vld [vmem:[%s2828 + $0x68] sm:$0xff]
        %v2843 = vld [vmem:[%s2828 + $0x70] sm:$0xff]
        %v2844 = vld [vmem:[%s2828 + $0x78] sm:$0xff]
        %v2845 = vld [vmem:[%s2828 + $0x80] sm:$0xff]
        %v2846 = vld [vmem:[%s2828 + $0x88] sm:$0xff]
        %v2847 = vld [vmem:[%s2828 + $0x90] sm:$0xff]
        %v2848 = vld [vmem:[%s2828 + $0x98] sm:$0xff]
        %v2849 = vld [vmem:[%s2828 + $0xa0] sm:$0xff]
        %v2850 = vld [vmem:[%s2828 + $0xa8] sm:$0xff]
        %v2851 = vld [vmem:[%s2828 + $0xb0] sm:$0xff]
        %v2852 = vld [vmem:[%s2828 + $0xb8] sm:$0xff]
        %v2853 = vld [vmem:[%s2828 + $0xc0] sm:$0xff]
        %v2854 = vld [vmem:[%s2828 + $0xc8] sm:$0xff]
        %v2855 = vld [vmem:[%s2828 + $0xd0] sm:$0xff]
        %v2856 = vld [vmem:[%s2828 + $0xd8] sm:$0xff]
        %v2857 = vld [vmem:[%s2828 + $0xe0] sm:$0xff]
        %v2858 = vld [vmem:[%s2828 + $0xe8] sm:$0xff]
        %v2859 = vld [vmem:[%s2828 + $0xf0] sm:$0xff]
        %v2860 = vld [vmem:[%s2828 + $0xf8] sm:$0xff]
        %s2861 = scalar_lea.vmem %s2, 4
        %v2862 = vld [vmem:[%s2861] sm:$0x1]
        %v2863 = vld [vmem:[%s2861 + $0x1] sm:$0x1]
        %v2864 = vld [vmem:[%s2861 + $0x2] sm:$0x1]
        %v2865 = vld [vmem:[%s2861 + $0x3] sm:$0x1]
        %v2870 = vlaneseq
        %v2871 = vshrl.u32 %v2870, 7
        %v2872 = vsub.s32 0, %v2871
        %v2873 = vrot.slane %v2862, %v2872
        %v2874 = vlaneseq
        %v2875 = vshrl.u32 %v2874, 7
        %v2876 = vsub.s32 0, %v2875
        %v2877 = vrot.slane %v2863, %v2876
        %v2878 = vlaneseq
        %v2879 = vshrl.u32 %v2878, 7
        %v2880 = vsub.s32 0, %v2879
        %v2881 = vrot.slane %v2864, %v2880
        %v2882 = vlaneseq
        %v2883 = vshrl.u32 %v2882, 7
        %v2884 = vsub.s32 0, %v2883
        %v2885 = vrot.slane %v2865, %v2884
        %v2891 = vsel %vm659, %v2827, 0
        %2893 = vmatprep.subr.mxu0 0.0
        %2894 = vmatpush1.msra.mxu0 0.0
        %2895 = vmatprep.subr.mxu0 0.0
        %2896 = vmatpush1.msra.mxu0 0.0
        %2897 = vmatprep.subr.mxu0 0.0
        %2898 = vmatpush1.msra.mxu0 0.0
        %2899 = vmatprep.subr.mxu0 0.0
        %2900 = vmatpush1.msra.mxu0 0.0
        %2901 = vmatprep.subr.mxu0 0.0
        %2902 = vmatpush1.msra.mxu0 0.0
        %2903 = vmatprep.subr.mxu0 0.0
        %2904 = vmatpush1.msra.mxu0 0.0
        %2905 = vmatprep.subr.mxu0 0.0
        %2906 = vmatpush1.msra.mxu0 0.0
        %2907 = vmatprep.subr.mxu0 0.0
        %2908 = vmatpush1.msra.mxu0 0.0
        %2909 = vmatprep.subr.mxu0 0.0
        %2910 = vmatpush1.msra.mxu0 %v2836
        %2911 = vmatprep.subr.mxu0 0.0
        %2912 = vmatpush1.msra.mxu0 %v2835
        %2913 = vmatprep.subr.mxu0 0.0
        %2914 = vmatpush1.msra.mxu0 %v2834
        %2915 = vmatprep.subr.mxu0 0.0
        %2916 = vmatpush1.msra.mxu0 %v2833
        %2917 = vmatprep.subr.mxu0 0.0
        %2918 = vmatpush1.msra.mxu0 %v2832
        %2919 = vmatprep.subr.mxu0 0.0
        %2920 = vmatpush1.msra.mxu0 %v2831
        %2921 = vmatprep.subr.mxu0 0.0
        %2922 = vmatpush1.msra.mxu0 %v2830
        %2923 = vmatprep.subr.mxu0 0.0
        %2924 = vmatpush1.msra.mxu0 %v2829
        %2925 = vmatprep.subr.mxu0 0.0
        %2926 = vmatpush2.msra.mxu0 0.0
        %2927 = vmatprep.subr.mxu0 0.0
        %2928 = vmatpush2.msra.mxu0 0.0
        %2929 = vmatprep.subr.mxu0 0.0
        %2930 = vmatpush2.msra.mxu0 0.0
        %2931 = vmatprep.subr.mxu0 0.0
        %2932 = vmatpush2.msra.mxu0 0.0
        %2933 = vmatprep.subr.mxu0 0.0
        %2934 = vmatpush2.msra.mxu0 0.0
        %2935 = vmatprep.subr.mxu0 0.0
        %2936 = vmatpush2.msra.mxu0 0.0
        %2937 = vmatprep.subr.mxu0 0.0
        %2938 = vmatpush2.msra.mxu0 0.0
        %2939 = vmatprep.subr.mxu0 0.0
        %2940 = vmatpush2.msra.mxu0 0.0
        %2941 = vmatprep.subr.mxu0 0.0
        %2942 = vmatpush2.msra.mxu0 0.0
        %2943 = vmatprep.subr.mxu0 0.0
        %2944 = vmatpush2.msra.mxu0 0.0
        %2945 = vmatprep.subr.mxu0 0.0
        %2946 = vmatpush2.msra.mxu0 0.0
        %2947 = vmatprep.subr.mxu0 0.0
        %2948 = vmatpush2.msra.mxu0 0.0
        %2949 = vmatprep.subr.mxu0 0.0
        %2950 = vmatpush2.msra.mxu0 0.0
        %2951 = vmatprep.subr.mxu0 0.0
        %2952 = vmatpush2.msra.mxu0 0.0
        %2953 = vmatprep.subr.mxu0 0.0
        %2954 = vmatpush2.msra.mxu0 0.0
        %2955 = vmatprep.subr.mxu0 0.0
        %2956 = vmatpush2.msra.mxu0 0.0
        %2957 = vmatprep.mubr.f32.mxu0 0.0
        %2958 = vmatmul.mubr.f32.gmra.mxu0 %v2891
        %v2959 = vpop.f32.mrf.mxu0
        %v2960 = vadd.f32 %v2873, %v2959
        %v2961 = vpop.f32.mrf.mxu0
        %2962 = vdwg.mxu0
        %2963 = vmatprep.subr.mxu0 0.0
        %2964 = vmatpush1.msra.mxu0 0.0
        %2965 = vmatprep.subr.mxu0 0.0
        %2966 = vmatpush1.msra.mxu0 0.0
        %2967 = vmatprep.subr.mxu0 0.0
        %2968 = vmatpush1.msra.mxu0 0.0
        %2969 = vmatprep.subr.mxu0 0.0
        %2970 = vmatpush1.msra.mxu0 0.0
        %2971 = vmatprep.subr.mxu0 0.0
        %2972 = vmatpush1.msra.mxu0 0.0
        %2973 = vmatprep.subr.mxu0 0.0
        %2974 = vmatpush1.msra.mxu0 0.0
        %2975 = vmatprep.subr.mxu0 0.0
        %2976 = vmatpush1.msra.mxu0 0.0
        %2977 = vmatprep.subr.mxu0 0.0
        %2978 = vmatpush1.msra.mxu0 0.0
        %2979 = vmatprep.subr.mxu0 0.0
        %2980 = vmatpush1.msra.mxu0 %v2844
        %2981 = vmatprep.subr.mxu0 0.0
        %2982 = vmatpush1.msra.mxu0 %v2843
        %2983 = vmatprep.subr.mxu0 0.0
        %2984 = vmatpush1.msra.mxu0 %v2842
        %2985 = vmatprep.subr.mxu0 0.0
        %2986 = vmatpush1.msra.mxu0 %v2841
        %2987 = vmatprep.subr.mxu0 0.0
        %2988 = vmatpush1.msra.mxu0 %v2840
        %2989 = vmatprep.subr.mxu0 0.0
        %2990 = vmatpush1.msra.mxu0 %v2839
        %2991 = vmatprep.subr.mxu0 0.0
        %2992 = vmatpush1.msra.mxu0 %v2838
        %2993 = vmatprep.subr.mxu0 0.0
        %2994 = vmatpush1.msra.mxu0 %v2837
        %2995 = vmatprep.subr.mxu0 0.0
        %2996 = vmatpush2.msra.mxu0 0.0
        %2997 = vmatprep.subr.mxu0 0.0
        %2998 = vmatpush2.msra.mxu0 0.0
        %2999 = vmatprep.subr.mxu0 0.0
        %3000 = vmatpush2.msra.mxu0 0.0
        %3001 = vmatprep.subr.mxu0 0.0
        %3002 = vmatpush2.msra.mxu0 0.0
        %3003 = vmatprep.subr.mxu0 0.0
        %3004 = vmatpush2.msra.mxu0 0.0
        %3005 = vmatprep.subr.mxu0 0.0
        %3006 = vmatpush2.msra.mxu0 0.0
        %3007 = vmatprep.subr.mxu0 0.0
        %3008 = vmatpush2.msra.mxu0 0.0
        %3009 = vmatprep.subr.mxu0 0.0
        %3010 = vmatpush2.msra.mxu0 0.0
        %3011 = vmatprep.subr.mxu0 0.0
        %3012 = vmatpush2.msra.mxu0 0.0
        %3013 = vmatprep.subr.mxu0 0.0
        %3014 = vmatpush2.msra.mxu0 0.0
        %3015 = vmatprep.subr.mxu0 0.0
        %3016 = vmatpush2.msra.mxu0 0.0
        %3017 = vmatprep.subr.mxu0 0.0
        %3018 = vmatpush2.msra.mxu0 0.0
        %3019 = vmatprep.subr.mxu0 0.0
        %3020 = vmatpush2.msra.mxu0 0.0
        %3021 = vmatprep.subr.mxu0 0.0
        %3022 = vmatpush2.msra.mxu0 0.0
        %3023 = vmatprep.subr.mxu0 0.0
        %3024 = vmatpush2.msra.mxu0 0.0
        %3025 = vmatprep.subr.mxu0 0.0
        %3026 = vmatpush2.msra.mxu0 0.0
        %3027 = vmatprep.mubr.f32.mxu0 0.0
        %3028 = vmatmul.mubr.f32.gmra.mxu0 %v2891
        %v3029 = vpop.f32.mrf.mxu0
        %v3030 = vadd.f32 %v2877, %v3029
        %v3031 = vpop.f32.mrf.mxu0
        %3032 = vdwg.mxu0
        %3033 = vmatprep.subr.mxu0 0.0
        %3034 = vmatpush1.msra.mxu0 0.0
        %3035 = vmatprep.subr.mxu0 0.0
        %3036 = vmatpush1.msra.mxu0 0.0
        %3037 = vmatprep.subr.mxu0 0.0
        %3038 = vmatpush1.msra.mxu0 0.0
        %3039 = vmatprep.subr.mxu0 0.0
        %3040 = vmatpush1.msra.mxu0 0.0
        %3041 = vmatprep.subr.mxu0 0.0
        %3042 = vmatpush1.msra.mxu0 0.0
        %3043 = vmatprep.subr.mxu0 0.0
        %3044 = vmatpush1.msra.mxu0 0.0
        %3045 = vmatprep.subr.mxu0 0.0
        %3046 = vmatpush1.msra.mxu0 0.0
        %3047 = vmatprep.subr.mxu0 0.0
        %3048 = vmatpush1.msra.mxu0 0.0
        %3049 = vmatprep.subr.mxu0 0.0
        %3050 = vmatpush1.msra.mxu0 %v2852
        %3051 = vmatprep.subr.mxu0 0.0
        %3052 = vmatpush1.msra.mxu0 %v2851
        %3053 = vmatprep.subr.mxu0 0.0
        %3054 = vmatpush1.msra.mxu0 %v2850
        %3055 = vmatprep.subr.mxu0 0.0
        %3056 = vmatpush1.msra.mxu0 %v2849
        %3057 = vmatprep.subr.mxu0 0.0
        %3058 = vmatpush1.msra.mxu0 %v2848
        %3059 = vmatprep.subr.mxu0 0.0
        %3060 = vmatpush1.msra.mxu0 %v2847
        %3061 = vmatprep.subr.mxu0 0.0
        %3062 = vmatpush1.msra.mxu0 %v2846
        %3063 = vmatprep.subr.mxu0 0.0
        %3064 = vmatpush1.msra.mxu0 %v2845
        %3065 = vmatprep.subr.mxu0 0.0
        %3066 = vmatpush2.msra.mxu0 0.0
        %3067 = vmatprep.subr.mxu0 0.0
        %3068 = vmatpush2.msra.mxu0 0.0
        %3069 = vmatprep.subr.mxu0 0.0
        %3070 = vmatpush2.msra.mxu0 0.0
        %3071 = vmatprep.subr.mxu0 0.0
        %3072 = vmatpush2.msra.mxu0 0.0
        %3073 = vmatprep.subr.mxu0 0.0
        %3074 = vmatpush2.msra.mxu0 0.0
        %3075 = vmatprep.subr.mxu0 0.0
        %3076 = vmatpush2.msra.mxu0 0.0
        %3077 = vmatprep.subr.mxu0 0.0
        %3078 = vmatpush2.msra.mxu0 0.0
        %3079 = vmatprep.subr.mxu0 0.0
        %3080 = vmatpush2.msra.mxu0 0.0
        %3081 = vmatprep.subr.mxu0 0.0
        %3082 = vmatpush2.msra.mxu0 0.0
        %3083 = vmatprep.subr.mxu0 0.0
        %3084 = vmatpush2.msra.mxu0 0.0
        %3085 = vmatprep.subr.mxu0 0.0
        %3086 = vmatpush2.msra.mxu0 0.0
        %3087 = vmatprep.subr.mxu0 0.0
        %3088 = vmatpush2.msra.mxu0 0.0
        %3089 = vmatprep.subr.mxu0 0.0
        %3090 = vmatpush2.msra.mxu0 0.0
        %3091 = vmatprep.subr.mxu0 0.0
        %3092 = vmatpush2.msra.mxu0 0.0
        %3093 = vmatprep.subr.mxu0 0.0
        %3094 = vmatpush2.msra.mxu0 0.0
        %3095 = vmatprep.subr.mxu0 0.0
        %3096 = vmatpush2.msra.mxu0 0.0
        %3097 = vmatprep.mubr.f32.mxu0 0.0
        %3098 = vmatmul.mubr.f32.gmra.mxu0 %v2891
        %v3099 = vpop.f32.mrf.mxu0
        %v3100 = vadd.f32 %v2881, %v3099
        %v3101 = vpop.f32.mrf.mxu0
        %3102 = vdwg.mxu0
        %3103 = vmatprep.subr.mxu0 0.0
        %3104 = vmatpush1.msra.mxu0 0.0
        %3105 = vmatprep.subr.mxu0 0.0
        %3106 = vmatpush1.msra.mxu0 0.0
        %3107 = vmatprep.subr.mxu0 0.0
        %3108 = vmatpush1.msra.mxu0 0.0
        %3109 = vmatprep.subr.mxu0 0.0
        %3110 = vmatpush1.msra.mxu0 0.0
        %3111 = vmatprep.subr.mxu0 0.0
        %3112 = vmatpush1.msra.mxu0 0.0
        %3113 = vmatprep.subr.mxu0 0.0
        %3114 = vmatpush1.msra.mxu0 0.0
        %3115 = vmatprep.subr.mxu0 0.0
        %3116 = vmatpush1.msra.mxu0 0.0
        %3117 = vmatprep.subr.mxu0 0.0
        %3118 = vmatpush1.msra.mxu0 0.0
        %3119 = vmatprep.subr.mxu0 0.0
        %3120 = vmatpush1.msra.mxu0 %v2860
        %3121 = vmatprep.subr.mxu0 0.0
        %3122 = vmatpush1.msra.mxu0 %v2859
        %3123 = vmatprep.subr.mxu0 0.0
        %3124 = vmatpush1.msra.mxu0 %v2858
        %3125 = vmatprep.subr.mxu0 0.0
        %3126 = vmatpush1.msra.mxu0 %v2857
        %3127 = vmatprep.subr.mxu0 0.0
        %3128 = vmatpush1.msra.mxu0 %v2856
        %3129 = vmatprep.subr.mxu0 0.0
        %3130 = vmatpush1.msra.mxu0 %v2855
        %3131 = vmatprep.subr.mxu0 0.0
        %3132 = vmatpush1.msra.mxu0 %v2854
        %3133 = vmatprep.subr.mxu0 0.0
        %3134 = vmatpush1.msra.mxu0 %v2853
        %3135 = vmatprep.subr.mxu0 0.0
        %3136 = vmatpush2.msra.mxu0 0.0
        %3137 = vmatprep.subr.mxu0 0.0
        %3138 = vmatpush2.msra.mxu0 0.0
        %3139 = vmatprep.subr.mxu0 0.0
        %3140 = vmatpush2.msra.mxu0 0.0
        %3141 = vmatprep.subr.mxu0 0.0
        %3142 = vmatpush2.msra.mxu0 0.0
        %3143 = vmatprep.subr.mxu0 0.0
        %3144 = vmatpush2.msra.mxu0 0.0
        %3145 = vmatprep.subr.mxu0 0.0
        %3146 = vmatpush2.msra.mxu0 0.0
        %3147 = vmatprep.subr.mxu0 0.0
        %3148 = vmatpush2.msra.mxu0 0.0
        %3149 = vmatprep.subr.mxu0 0.0
        %3150 = vmatpush2.msra.mxu0 0.0
        %3151 = vmatprep.subr.mxu0 0.0
        %3152 = vmatpush2.msra.mxu0 0.0
        %3153 = vmatprep.subr.mxu0 0.0
        %3154 = vmatpush2.msra.mxu0 0.0
        %3155 = vmatprep.subr.mxu0 0.0
        %3156 = vmatpush2.msra.mxu0 0.0
        %3157 = vmatprep.subr.mxu0 0.0
        %3158 = vmatpush2.msra.mxu0 0.0
        %3159 = vmatprep.subr.mxu0 0.0
        %3160 = vmatpush2.msra.mxu0 0.0
        %3161 = vmatprep.subr.mxu0 0.0
        %3162 = vmatpush2.msra.mxu0 0.0
        %3163 = vmatprep.subr.mxu0 0.0
        %3164 = vmatpush2.msra.mxu0 0.0
        %3165 = vmatprep.subr.mxu0 0.0
        %3166 = vmatpush2.msra.mxu0 0.0
        %3167 = vmatprep.mubr.f32.mxu0 0.0
        %3168 = vmatmul.mubr.f32.gmra.mxu0 %v2891
        %v3169 = vpop.f32.mrf.mxu0
        %v3170 = vadd.f32 %v2885, %v3169
        %v3171 = vpop.f32.mrf.mxu0
        %3172 = vdwg.mxu0
        %s3173 = scalar_lea.vmem %s3, 256
        %v3174 = vld [vmem:[%s3173] sm:$0xff]
        %v3175 = vld [vmem:[%s3173 + $0x8] sm:$0xff]
        %v3176 = vld [vmem:[%s3173 + $0x10] sm:$0xff]
        %v3177 = vld [vmem:[%s3173 + $0x18] sm:$0xff]
        %v3178 = vld [vmem:[%s3173 + $0x20] sm:$0xff]
        %v3179 = vld [vmem:[%s3173 + $0x28] sm:$0xff]
        %v3180 = vld [vmem:[%s3173 + $0x30] sm:$0xff]
        %v3181 = vld [vmem:[%s3173 + $0x38] sm:$0xff]
        %v3182 = vld [vmem:[%s3173 + $0x40] sm:$0xff]
        %v3183 = vld [vmem:[%s3173 + $0x48] sm:$0xff]
        %v3184 = vld [vmem:[%s3173 + $0x50] sm:$0xff]
        %v3185 = vld [vmem:[%s3173 + $0x58] sm:$0xff]
        %v3186 = vld [vmem:[%s3173 + $0x60] sm:$0xff]
        %v3187 = vld [vmem:[%s3173 + $0x68] sm:$0xff]
        %v3188 = vld [vmem:[%s3173 + $0x70] sm:$0xff]
        %v3189 = vld [vmem:[%s3173 + $0x78] sm:$0xff]
        %v3190 = vld [vmem:[%s3173 + $0x80] sm:$0xff]
        %v3191 = vld [vmem:[%s3173 + $0x88] sm:$0xff]
        %v3192 = vld [vmem:[%s3173 + $0x90] sm:$0xff]
        %v3193 = vld [vmem:[%s3173 + $0x98] sm:$0xff]
        %v3194 = vld [vmem:[%s3173 + $0xa0] sm:$0xff]
        %v3195 = vld [vmem:[%s3173 + $0xa8] sm:$0xff]
        %v3196 = vld [vmem:[%s3173 + $0xb0] sm:$0xff]
        %v3197 = vld [vmem:[%s3173 + $0xb8] sm:$0xff]
        %v3198 = vld [vmem:[%s3173 + $0xc0] sm:$0xff]
        %v3199 = vld [vmem:[%s3173 + $0xc8] sm:$0xff]
        %v3200 = vld [vmem:[%s3173 + $0xd0] sm:$0xff]
        %v3201 = vld [vmem:[%s3173 + $0xd8] sm:$0xff]
        %v3202 = vld [vmem:[%s3173 + $0xe0] sm:$0xff]
        %v3203 = vld [vmem:[%s3173 + $0xe8] sm:$0xff]
        %v3204 = vld [vmem:[%s3173 + $0xf0] sm:$0xff]
        %v3205 = vld [vmem:[%s3173 + $0xf8] sm:$0xff]
        %s3206 = scalar_lea.vmem %s4, 4
        %v3207 = vld [vmem:[%s3206] sm:$0x1]
        %v3208 = vld [vmem:[%s3206 + $0x1] sm:$0x1]
        %v3209 = vld [vmem:[%s3206 + $0x2] sm:$0x1]
        %v3210 = vld [vmem:[%s3206 + $0x3] sm:$0x1]
        %v3215 = vlaneseq
        %v3216 = vshrl.u32 %v3215, 7
        %v3217 = vsub.s32 0, %v3216
        %v3218 = vrot.slane %v3207, %v3217
        %v3219 = vlaneseq
        %v3220 = vshrl.u32 %v3219, 7
        %v3221 = vsub.s32 0, %v3220
        %v3222 = vrot.slane %v3208, %v3221
        %v3223 = vlaneseq
        %v3224 = vshrl.u32 %v3223, 7
        %v3225 = vsub.s32 0, %v3224
        %v3226 = vrot.slane %v3209, %v3225
        %v3227 = vlaneseq
        %v3228 = vshrl.u32 %v3227, 7
        %v3229 = vsub.s32 0, %v3228
        %v3230 = vrot.slane %v3210, %v3229
        %3235 = vmatprep.subr.mxu0 0.0
        %3236 = vmatpush1.msra.mxu0 0.0
        %3237 = vmatprep.subr.mxu0 0.0
        %3238 = vmatpush1.msra.mxu0 0.0
        %3239 = vmatprep.subr.mxu0 0.0
        %3240 = vmatpush1.msra.mxu0 0.0
        %3241 = vmatprep.subr.mxu0 0.0
        %3242 = vmatpush1.msra.mxu0 0.0
        %3243 = vmatprep.subr.mxu0 0.0
        %3244 = vmatpush1.msra.mxu0 0.0
        %3245 = vmatprep.subr.mxu0 0.0
        %3246 = vmatpush1.msra.mxu0 0.0
        %3247 = vmatprep.subr.mxu0 0.0
        %3248 = vmatpush1.msra.mxu0 0.0
        %3249 = vmatprep.subr.mxu0 0.0
        %3250 = vmatpush1.msra.mxu0 0.0
        %3251 = vmatprep.subr.mxu0 0.0
        %3252 = vmatpush1.msra.mxu0 %v3181
        %3253 = vmatprep.subr.mxu0 0.0
        %3254 = vmatpush1.msra.mxu0 %v3180
        %3255 = vmatprep.subr.mxu0 0.0
        %3256 = vmatpush1.msra.mxu0 %v3179
        %3257 = vmatprep.subr.mxu0 0.0
        %3258 = vmatpush1.msra.mxu0 %v3178
        %3259 = vmatprep.subr.mxu0 0.0
        %3260 = vmatpush1.msra.mxu0 %v3177
        %3261 = vmatprep.subr.mxu0 0.0
        %3262 = vmatpush1.msra.mxu0 %v3176
        %3263 = vmatprep.subr.mxu0 0.0
        %3264 = vmatpush1.msra.mxu0 %v3175
        %3265 = vmatprep.subr.mxu0 0.0
        %3266 = vmatpush1.msra.mxu0 %v3174
        %3267 = vmatprep.subr.mxu0 0.0
        %3268 = vmatpush2.msra.mxu0 0.0
        %3269 = vmatprep.subr.mxu0 0.0
        %3270 = vmatpush2.msra.mxu0 0.0
        %3271 = vmatprep.subr.mxu0 0.0
        %3272 = vmatpush2.msra.mxu0 0.0
        %3273 = vmatprep.subr.mxu0 0.0
        %3274 = vmatpush2.msra.mxu0 0.0
        %3275 = vmatprep.subr.mxu0 0.0
        %3276 = vmatpush2.msra.mxu0 0.0
        %3277 = vmatprep.subr.mxu0 0.0
        %3278 = vmatpush2.msra.mxu0 0.0
        %3279 = vmatprep.subr.mxu0 0.0
        %3280 = vmatpush2.msra.mxu0 0.0
        %3281 = vmatprep.subr.mxu0 0.0
        %3282 = vmatpush2.msra.mxu0 0.0
        %3283 = vmatprep.subr.mxu0 0.0
        %3284 = vmatpush2.msra.mxu0 0.0
        %3285 = vmatprep.subr.mxu0 0.0
        %3286 = vmatpush2.msra.mxu0 0.0
        %3287 = vmatprep.subr.mxu0 0.0
        %3288 = vmatpush2.msra.mxu0 0.0
        %3289 = vmatprep.subr.mxu0 0.0
        %3290 = vmatpush2.msra.mxu0 0.0
        %3291 = vmatprep.subr.mxu0 0.0
        %3292 = vmatpush2.msra.mxu0 0.0
        %3293 = vmatprep.subr.mxu0 0.0
        %3294 = vmatpush2.msra.mxu0 0.0
        %3295 = vmatprep.subr.mxu0 0.0
        %3296 = vmatpush2.msra.mxu0 0.0
        %3297 = vmatprep.subr.mxu0 0.0
        %3298 = vmatpush2.msra.mxu0 0.0
        %3299 = vmatprep.mubr.f32.mxu0 0.0
        %3300 = vmatmul.mubr.f32.gmra.mxu0 %v2891
        %v3301 = vpop.f32.mrf.mxu0
        %v3302 = vadd.f32 %v3218, %v3301
        %v3303 = vpop.f32.mrf.mxu0
        %3304 = vdwg.mxu0
        %3305 = vmatprep.subr.mxu0 0.0
        %3306 = vmatpush1.msra.mxu0 0.0
        %3307 = vmatprep.subr.mxu0 0.0
        %3308 = vmatpush1.msra.mxu0 0.0
        %3309 = vmatprep.subr.mxu0 0.0
        %3310 = vmatpush1.msra.mxu0 0.0
        %3311 = vmatprep.subr.mxu0 0.0
        %3312 = vmatpush1.msra.mxu0 0.0
        %3313 = vmatprep.subr.mxu0 0.0
        %3314 = vmatpush1.msra.mxu0 0.0
        %3315 = vmatprep.subr.mxu0 0.0
        %3316 = vmatpush1.msra.mxu0 0.0
        %3317 = vmatprep.subr.mxu0 0.0
        %3318 = vmatpush1.msra.mxu0 0.0
        %3319 = vmatprep.subr.mxu0 0.0
        %3320 = vmatpush1.msra.mxu0 0.0
        %3321 = vmatprep.subr.mxu0 0.0
        %3322 = vmatpush1.msra.mxu0 %v3189
        %3323 = vmatprep.subr.mxu0 0.0
        %3324 = vmatpush1.msra.mxu0 %v3188
        %3325 = vmatprep.subr.mxu0 0.0
        %3326 = vmatpush1.msra.mxu0 %v3187
        %3327 = vmatprep.subr.mxu0 0.0
        %3328 = vmatpush1.msra.mxu0 %v3186
        %3329 = vmatprep.subr.mxu0 0.0
        %3330 = vmatpush1.msra.mxu0 %v3185
        %3331 = vmatprep.subr.mxu0 0.0
        %3332 = vmatpush1.msra.mxu0 %v3184
        %3333 = vmatprep.subr.mxu0 0.0
        %3334 = vmatpush1.msra.mxu0 %v3183
        %3335 = vmatprep.subr.mxu0 0.0
        %3336 = vmatpush1.msra.mxu0 %v3182
        %3337 = vmatprep.subr.mxu0 0.0
        %3338 = vmatpush2.msra.mxu0 0.0
        %3339 = vmatprep.subr.mxu0 0.0
        %3340 = vmatpush2.msra.mxu0 0.0
        %3341 = vmatprep.subr.mxu0 0.0
        %3342 = vmatpush2.msra.mxu0 0.0
        %3343 = vmatprep.subr.mxu0 0.0
        %3344 = vmatpush2.msra.mxu0 0.0
        %3345 = vmatprep.subr.mxu0 0.0
        %3346 = vmatpush2.msra.mxu0 0.0
        %3347 = vmatprep.subr.mxu0 0.0
        %3348 = vmatpush2.msra.mxu0 0.0
        %3349 = vmatprep.subr.mxu0 0.0
        %3350 = vmatpush2.msra.mxu0 0.0
        %3351 = vmatprep.subr.mxu0 0.0
        %3352 = vmatpush2.msra.mxu0 0.0
        %3353 = vmatprep.subr.mxu0 0.0
        %3354 = vmatpush2.msra.mxu0 0.0
        %3355 = vmatprep.subr.mxu0 0.0
        %3356 = vmatpush2.msra.mxu0 0.0
        %3357 = vmatprep.subr.mxu0 0.0
        %3358 = vmatpush2.msra.mxu0 0.0
        %3359 = vmatprep.subr.mxu0 0.0
        %3360 = vmatpush2.msra.mxu0 0.0
        %3361 = vmatprep.subr.mxu0 0.0
        %3362 = vmatpush2.msra.mxu0 0.0
        %3363 = vmatprep.subr.mxu0 0.0
        %3364 = vmatpush2.msra.mxu0 0.0
        %3365 = vmatprep.subr.mxu0 0.0
        %3366 = vmatpush2.msra.mxu0 0.0
        %3367 = vmatprep.subr.mxu0 0.0
        %3368 = vmatpush2.msra.mxu0 0.0
        %3369 = vmatprep.mubr.f32.mxu0 0.0
        %3370 = vmatmul.mubr.f32.gmra.mxu0 %v2891
        %v3371 = vpop.f32.mrf.mxu0
        %v3372 = vadd.f32 %v3222, %v3371
        %v3373 = vpop.f32.mrf.mxu0
        %3374 = vdwg.mxu0
        %3375 = vmatprep.subr.mxu0 0.0
        %3376 = vmatpush1.msra.mxu0 0.0
        %3377 = vmatprep.subr.mxu0 0.0
        %3378 = vmatpush1.msra.mxu0 0.0
        %3379 = vmatprep.subr.mxu0 0.0
        %3380 = vmatpush1.msra.mxu0 0.0
        %3381 = vmatprep.subr.mxu0 0.0
        %3382 = vmatpush1.msra.mxu0 0.0
        %3383 = vmatprep.subr.mxu0 0.0
        %3384 = vmatpush1.msra.mxu0 0.0
        %3385 = vmatprep.subr.mxu0 0.0
        %3386 = vmatpush1.msra.mxu0 0.0
        %3387 = vmatprep.subr.mxu0 0.0
        %3388 = vmatpush1.msra.mxu0 0.0
        %3389 = vmatprep.subr.mxu0 0.0
        %3390 = vmatpush1.msra.mxu0 0.0
        %3391 = vmatprep.subr.mxu0 0.0
        %3392 = vmatpush1.msra.mxu0 %v3197
        %3393 = vmatprep.subr.mxu0 0.0
        %3394 = vmatpush1.msra.mxu0 %v3196
        %3395 = vmatprep.subr.mxu0 0.0
        %3396 = vmatpush1.msra.mxu0 %v3195
        %3397 = vmatprep.subr.mxu0 0.0
        %3398 = vmatpush1.msra.mxu0 %v3194
        %3399 = vmatprep.subr.mxu0 0.0
        %3400 = vmatpush1.msra.mxu0 %v3193
        %3401 = vmatprep.subr.mxu0 0.0
        %3402 = vmatpush1.msra.mxu0 %v3192
        %3403 = vmatprep.subr.mxu0 0.0
        %3404 = vmatpush1.msra.mxu0 %v3191
        %3405 = vmatprep.subr.mxu0 0.0
        %3406 = vmatpush1.msra.mxu0 %v3190
        %3407 = vmatprep.subr.mxu0 0.0
        %3408 = vmatpush2.msra.mxu0 0.0
        %3409 = vmatprep.subr.mxu0 0.0
        %3410 = vmatpush2.msra.mxu0 0.0
        %3411 = vmatprep.subr.mxu0 0.0
        %3412 = vmatpush2.msra.mxu0 0.0
        %3413 = vmatprep.subr.mxu0 0.0
        %3414 = vmatpush2.msra.mxu0 0.0
        %3415 = vmatprep.subr.mxu0 0.0
        %3416 = vmatpush2.msra.mxu0 0.0
        %3417 = vmatprep.subr.mxu0 0.0
        %3418 = vmatpush2.msra.mxu0 0.0
        %3419 = vmatprep.subr.mxu0 0.0
        %3420 = vmatpush2.msra.mxu0 0.0
        %3421 = vmatprep.subr.mxu0 0.0
        %3422 = vmatpush2.msra.mxu0 0.0
        %3423 = vmatprep.subr.mxu0 0.0
        %3424 = vmatpush2.msra.mxu0 0.0
        %3425 = vmatprep.subr.mxu0 0.0
        %3426 = vmatpush2.msra.mxu0 0.0
        %3427 = vmatprep.subr.mxu0 0.0
        %3428 = vmatpush2.msra.mxu0 0.0
        %3429 = vmatprep.subr.mxu0 0.0
        %3430 = vmatpush2.msra.mxu0 0.0
        %3431 = vmatprep.subr.mxu0 0.0
        %3432 = vmatpush2.msra.mxu0 0.0
        %3433 = vmatprep.subr.mxu0 0.0
        %3434 = vmatpush2.msra.mxu0 0.0
        %3435 = vmatprep.subr.mxu0 0.0
        %3436 = vmatpush2.msra.mxu0 0.0
        %3437 = vmatprep.subr.mxu0 0.0
        %3438 = vmatpush2.msra.mxu0 0.0
        %3439 = vmatprep.mubr.f32.mxu0 0.0
        %3440 = vmatmul.mubr.f32.gmra.mxu0 %v2891
        %v3441 = vpop.f32.mrf.mxu0
        %v3442 = vadd.f32 %v3226, %v3441
        %v3443 = vpop.f32.mrf.mxu0
        %3444 = vdwg.mxu0
        %3445 = vmatprep.subr.mxu0 0.0
        %3446 = vmatpush1.msra.mxu0 0.0
        %3447 = vmatprep.subr.mxu0 0.0
        %3448 = vmatpush1.msra.mxu0 0.0
        %3449 = vmatprep.subr.mxu0 0.0
        %3450 = vmatpush1.msra.mxu0 0.0
        %3451 = vmatprep.subr.mxu0 0.0
        %3452 = vmatpush1.msra.mxu0 0.0
        %3453 = vmatprep.subr.mxu0 0.0
        %3454 = vmatpush1.msra.mxu0 0.0
        %3455 = vmatprep.subr.mxu0 0.0
        %3456 = vmatpush1.msra.mxu0 0.0
        %3457 = vmatprep.subr.mxu0 0.0
        %3458 = vmatpush1.msra.mxu0 0.0
        %3459 = vmatprep.subr.mxu0 0.0
        %3460 = vmatpush1.msra.mxu0 0.0
        %3461 = vmatprep.subr.mxu0 0.0
        %3462 = vmatpush1.msra.mxu0 %v3205
        %3463 = vmatprep.subr.mxu0 0.0
        %3464 = vmatpush1.msra.mxu0 %v3204
        %3465 = vmatprep.subr.mxu0 0.0
        %3466 = vmatpush1.msra.mxu0 %v3203
        %3467 = vmatprep.subr.mxu0 0.0
        %3468 = vmatpush1.msra.mxu0 %v3202
        %3469 = vmatprep.subr.mxu0 0.0
        %3470 = vmatpush1.msra.mxu0 %v3201
        %3471 = vmatprep.subr.mxu0 0.0
        %3472 = vmatpush1.msra.mxu0 %v3200
        %3473 = vmatprep.subr.mxu0 0.0
        %3474 = vmatpush1.msra.mxu0 %v3199
        %3475 = vmatprep.subr.mxu0 0.0
        %3476 = vmatpush1.msra.mxu0 %v3198
        %3477 = vmatprep.subr.mxu0 0.0
        %3478 = vmatpush2.msra.mxu0 0.0
        %3479 = vmatprep.subr.mxu0 0.0
        %3480 = vmatpush2.msra.mxu0 0.0
        %3481 = vmatprep.subr.mxu0 0.0
        %3482 = vmatpush2.msra.mxu0 0.0
        %3483 = vmatprep.subr.mxu0 0.0
        %3484 = vmatpush2.msra.mxu0 0.0
        %3485 = vmatprep.subr.mxu0 0.0
        %3486 = vmatpush2.msra.mxu0 0.0
        %3487 = vmatprep.subr.mxu0 0.0
        %3488 = vmatpush2.msra.mxu0 0.0
        %3489 = vmatprep.subr.mxu0 0.0
        %3490 = vmatpush2.msra.mxu0 0.0
        %3491 = vmatprep.subr.mxu0 0.0
        %3492 = vmatpush2.msra.mxu0 0.0
        %3493 = vmatprep.subr.mxu0 0.0
        %3494 = vmatpush2.msra.mxu0 0.0
        %3495 = vmatprep.subr.mxu0 0.0
        %3496 = vmatpush2.msra.mxu0 0.0
        %3497 = vmatprep.subr.mxu0 0.0
        %3498 = vmatpush2.msra.mxu0 0.0
        %3499 = vmatprep.subr.mxu0 0.0
        %3500 = vmatpush2.msra.mxu0 0.0
        %3501 = vmatprep.subr.mxu0 0.0
        %3502 = vmatpush2.msra.mxu0 0.0
        %3503 = vmatprep.subr.mxu0 0.0
        %3504 = vmatpush2.msra.mxu0 0.0
        %3505 = vmatprep.subr.mxu0 0.0
        %3506 = vmatpush2.msra.mxu0 0.0
        %3507 = vmatprep.subr.mxu0 0.0
        %3508 = vmatpush2.msra.mxu0 0.0
        %3509 = vmatprep.mubr.f32.mxu0 0.0
        %3510 = vmatmul.mubr.f32.gmra.mxu0 %v2891
        %v3511 = vpop.f32.mrf.mxu0
        %v3512 = vadd.f32 %v3230, %v3511
        %v3513 = vpop.f32.mrf.mxu0
        %3514 = vdwg.mxu0
        %s3515 = scalar_lea.vmem %s5, 256
        %v3516 = vld [vmem:[%s3515] sm:$0xff]
        %v3517 = vld [vmem:[%s3515 + $0x8] sm:$0xff]
        %v3518 = vld [vmem:[%s3515 + $0x10] sm:$0xff]
        %v3519 = vld [vmem:[%s3515 + $0x18] sm:$0xff]
        %v3520 = vld [vmem:[%s3515 + $0x20] sm:$0xff]
        %v3521 = vld [vmem:[%s3515 + $0x28] sm:$0xff]
        %v3522 = vld [vmem:[%s3515 + $0x30] sm:$0xff]
        %v3523 = vld [vmem:[%s3515 + $0x38] sm:$0xff]
        %v3524 = vld [vmem:[%s3515 + $0x40] sm:$0xff]
        %v3525 = vld [vmem:[%s3515 + $0x48] sm:$0xff]
        %v3526 = vld [vmem:[%s3515 + $0x50] sm:$0xff]
        %v3527 = vld [vmem:[%s3515 + $0x58] sm:$0xff]
        %v3528 = vld [vmem:[%s3515 + $0x60] sm:$0xff]
        %v3529 = vld [vmem:[%s3515 + $0x68] sm:$0xff]
        %v3530 = vld [vmem:[%s3515 + $0x70] sm:$0xff]
        %v3531 = vld [vmem:[%s3515 + $0x78] sm:$0xff]
        %v3532 = vld [vmem:[%s3515 + $0x80] sm:$0xff]
        %v3533 = vld [vmem:[%s3515 + $0x88] sm:$0xff]
        %v3534 = vld [vmem:[%s3515 + $0x90] sm:$0xff]
        %v3535 = vld [vmem:[%s3515 + $0x98] sm:$0xff]
        %v3536 = vld [vmem:[%s3515 + $0xa0] sm:$0xff]
        %v3537 = vld [vmem:[%s3515 + $0xa8] sm:$0xff]
        %v3538 = vld [vmem:[%s3515 + $0xb0] sm:$0xff]
        %v3539 = vld [vmem:[%s3515 + $0xb8] sm:$0xff]
        %v3540 = vld [vmem:[%s3515 + $0xc0] sm:$0xff]
        %v3541 = vld [vmem:[%s3515 + $0xc8] sm:$0xff]
        %v3542 = vld [vmem:[%s3515 + $0xd0] sm:$0xff]
        %v3543 = vld [vmem:[%s3515 + $0xd8] sm:$0xff]
        %v3544 = vld [vmem:[%s3515 + $0xe0] sm:$0xff]
        %v3545 = vld [vmem:[%s3515 + $0xe8] sm:$0xff]
        %v3546 = vld [vmem:[%s3515 + $0xf0] sm:$0xff]
        %v3547 = vld [vmem:[%s3515 + $0xf8] sm:$0xff]
        %s3548 = scalar_lea.vmem %s6, 4
        %v3549 = vld [vmem:[%s3548] sm:$0x1]
        %v3550 = vld [vmem:[%s3548 + $0x1] sm:$0x1]
        %v3551 = vld [vmem:[%s3548 + $0x2] sm:$0x1]
        %v3552 = vld [vmem:[%s3548 + $0x3] sm:$0x1]
        %v3557 = vlaneseq
        %v3558 = vshrl.u32 %v3557, 7
        %v3559 = vsub.s32 0, %v3558
        %v3560 = vrot.slane %v3549, %v3559
        %v3561 = vlaneseq
        %v3562 = vshrl.u32 %v3561, 7
        %v3563 = vsub.s32 0, %v3562
        %v3564 = vrot.slane %v3550, %v3563
        %v3565 = vlaneseq
        %v3566 = vshrl.u32 %v3565, 7
        %v3567 = vsub.s32 0, %v3566
        %v3568 = vrot.slane %v3551, %v3567
        %v3569 = vlaneseq
        %v3570 = vshrl.u32 %v3569, 7
        %v3571 = vsub.s32 0, %v3570
        %v3572 = vrot.slane %v3552, %v3571
        %3577 = vmatprep.subr.mxu0 0.0
        %3578 = vmatpush1.msra.mxu0 0.0
        %3579 = vmatprep.subr.mxu0 0.0
        %3580 = vmatpush1.msra.mxu0 0.0
        %3581 = vmatprep.subr.mxu0 0.0
        %3582 = vmatpush1.msra.mxu0 0.0
        %3583 = vmatprep.subr.mxu0 0.0
        %3584 = vmatpush1.msra.mxu0 0.0
        %3585 = vmatprep.subr.mxu0 0.0
        %3586 = vmatpush1.msra.mxu0 0.0
        %3587 = vmatprep.subr.mxu0 0.0
        %3588 = vmatpush1.msra.mxu0 0.0
        %3589 = vmatprep.subr.mxu0 0.0
        %3590 = vmatpush1.msra.mxu0 0.0
        %3591 = vmatprep.subr.mxu0 0.0
        %3592 = vmatpush1.msra.mxu0 0.0
        %3593 = vmatprep.subr.mxu0 0.0
        %3594 = vmatpush1.msra.mxu0 %v3523
        %3595 = vmatprep.subr.mxu0 0.0
        %3596 = vmatpush1.msra.mxu0 %v3522
        %3597 = vmatprep.subr.mxu0 0.0
        %3598 = vmatpush1.msra.mxu0 %v3521
        %3599 = vmatprep.subr.mxu0 0.0
        %3600 = vmatpush1.msra.mxu0 %v3520
        %3601 = vmatprep.subr.mxu0 0.0
        %3602 = vmatpush1.msra.mxu0 %v3519
        %3603 = vmatprep.subr.mxu0 0.0
        %3604 = vmatpush1.msra.mxu0 %v3518
        %3605 = vmatprep.subr.mxu0 0.0
        %3606 = vmatpush1.msra.mxu0 %v3517
        %3607 = vmatprep.subr.mxu0 0.0
        %3608 = vmatpush1.msra.mxu0 %v3516
        %3609 = vmatprep.subr.mxu0 0.0
        %3610 = vmatpush2.msra.mxu0 0.0
        %3611 = vmatprep.subr.mxu0 0.0
        %3612 = vmatpush2.msra.mxu0 0.0
        %3613 = vmatprep.subr.mxu0 0.0
        %3614 = vmatpush2.msra.mxu0 0.0
        %3615 = vmatprep.subr.mxu0 0.0
        %3616 = vmatpush2.msra.mxu0 0.0
        %3617 = vmatprep.subr.mxu0 0.0
        %3618 = vmatpush2.msra.mxu0 0.0
        %3619 = vmatprep.subr.mxu0 0.0
        %3620 = vmatpush2.msra.mxu0 0.0
        %3621 = vmatprep.subr.mxu0 0.0
        %3622 = vmatpush2.msra.mxu0 0.0
        %3623 = vmatprep.subr.mxu0 0.0
        %3624 = vmatpush2.msra.mxu0 0.0
        %3625 = vmatprep.subr.mxu0 0.0
        %3626 = vmatpush2.msra.mxu0 0.0
        %3627 = vmatprep.subr.mxu0 0.0
        %3628 = vmatpush2.msra.mxu0 0.0
        %3629 = vmatprep.subr.mxu0 0.0
        %3630 = vmatpush2.msra.mxu0 0.0
        %3631 = vmatprep.subr.mxu0 0.0
        %3632 = vmatpush2.msra.mxu0 0.0
        %3633 = vmatprep.subr.mxu0 0.0
        %3634 = vmatpush2.msra.mxu0 0.0
        %3635 = vmatprep.subr.mxu0 0.0
        %3636 = vmatpush2.msra.mxu0 0.0
        %3637 = vmatprep.subr.mxu0 0.0
        %3638 = vmatpush2.msra.mxu0 0.0
        %3639 = vmatprep.subr.mxu0 0.0
        %3640 = vmatpush2.msra.mxu0 0.0
        %3641 = vmatprep.mubr.f32.mxu0 0.0
        %3642 = vmatmul.mubr.f32.gmra.mxu0 %v2891
        %v3643 = vpop.f32.mrf.mxu0
        %v3644 = vadd.f32 %v3560, %v3643
        %v3645 = vpop.f32.mrf.mxu0
        %3646 = vdwg.mxu0
        %3647 = vmatprep.subr.mxu0 0.0
        %3648 = vmatpush1.msra.mxu0 0.0
        %3649 = vmatprep.subr.mxu0 0.0
        %3650 = vmatpush1.msra.mxu0 0.0
        %3651 = vmatprep.subr.mxu0 0.0
        %3652 = vmatpush1.msra.mxu0 0.0
        %3653 = vmatprep.subr.mxu0 0.0
        %3654 = vmatpush1.msra.mxu0 0.0
        %3655 = vmatprep.subr.mxu0 0.0
        %3656 = vmatpush1.msra.mxu0 0.0
        %3657 = vmatprep.subr.mxu0 0.0
        %3658 = vmatpush1.msra.mxu0 0.0
        %3659 = vmatprep.subr.mxu0 0.0
        %3660 = vmatpush1.msra.mxu0 0.0
        %3661 = vmatprep.subr.mxu0 0.0
        %3662 = vmatpush1.msra.mxu0 0.0
        %3663 = vmatprep.subr.mxu0 0.0
        %3664 = vmatpush1.msra.mxu0 %v3531
        %3665 = vmatprep.subr.mxu0 0.0
        %3666 = vmatpush1.msra.mxu0 %v3530
        %3667 = vmatprep.subr.mxu0 0.0
        %3668 = vmatpush1.msra.mxu0 %v3529
        %3669 = vmatprep.subr.mxu0 0.0
        %3670 = vmatpush1.msra.mxu0 %v3528
        %3671 = vmatprep.subr.mxu0 0.0
        %3672 = vmatpush1.msra.mxu0 %v3527
        %3673 = vmatprep.subr.mxu0 0.0
        %3674 = vmatpush1.msra.mxu0 %v3526
        %3675 = vmatprep.subr.mxu0 0.0
        %3676 = vmatpush1.msra.mxu0 %v3525
        %3677 = vmatprep.subr.mxu0 0.0
        %3678 = vmatpush1.msra.mxu0 %v3524
        %3679 = vmatprep.subr.mxu0 0.0
        %3680 = vmatpush2.msra.mxu0 0.0
        %3681 = vmatprep.subr.mxu0 0.0
        %3682 = vmatpush2.msra.mxu0 0.0
        %3683 = vmatprep.subr.mxu0 0.0
        %3684 = vmatpush2.msra.mxu0 0.0
        %3685 = vmatprep.subr.mxu0 0.0
        %3686 = vmatpush2.msra.mxu0 0.0
        %3687 = vmatprep.subr.mxu0 0.0
        %3688 = vmatpush2.msra.mxu0 0.0
        %3689 = vmatprep.subr.mxu0 0.0
        %3690 = vmatpush2.msra.mxu0 0.0
        %3691 = vmatprep.subr.mxu0 0.0
        %3692 = vmatpush2.msra.mxu0 0.0
        %3693 = vmatprep.subr.mxu0 0.0
        %3694 = vmatpush2.msra.mxu0 0.0
        %3695 = vmatprep.subr.mxu0 0.0
        %3696 = vmatpush2.msra.mxu0 0.0
        %3697 = vmatprep.subr.mxu0 0.0
        %3698 = vmatpush2.msra.mxu0 0.0
        %3699 = vmatprep.subr.mxu0 0.0
        %3700 = vmatpush2.msra.mxu0 0.0
        %3701 = vmatprep.subr.mxu0 0.0
        %3702 = vmatpush2.msra.mxu0 0.0
        %3703 = vmatprep.subr.mxu0 0.0
        %3704 = vmatpush2.msra.mxu0 0.0
        %3705 = vmatprep.subr.mxu0 0.0
        %3706 = vmatpush2.msra.mxu0 0.0
        %3707 = vmatprep.subr.mxu0 0.0
        %3708 = vmatpush2.msra.mxu0 0.0
        %3709 = vmatprep.subr.mxu0 0.0
        %3710 = vmatpush2.msra.mxu0 0.0
        %3711 = vmatprep.mubr.f32.mxu0 0.0
        %3712 = vmatmul.mubr.f32.gmra.mxu0 %v2891
        %v3713 = vpop.f32.mrf.mxu0
        %v3714 = vadd.f32 %v3564, %v3713
        %v3715 = vpop.f32.mrf.mxu0
        %3716 = vdwg.mxu0
        %3717 = vmatprep.subr.mxu0 0.0
        %3718 = vmatpush1.msra.mxu0 0.0
        %3719 = vmatprep.subr.mxu0 0.0
        %3720 = vmatpush1.msra.mxu0 0.0
        %3721 = vmatprep.subr.mxu0 0.0
        %3722 = vmatpush1.msra.mxu0 0.0
        %3723 = vmatprep.subr.mxu0 0.0
        %3724 = vmatpush1.msra.mxu0 0.0
        %3725 = vmatprep.subr.mxu0 0.0
        %3726 = vmatpush1.msra.mxu0 0.0
        %3727 = vmatprep.subr.mxu0 0.0
        %3728 = vmatpush1.msra.mxu0 0.0
        %3729 = vmatprep.subr.mxu0 0.0
        %3730 = vmatpush1.msra.mxu0 0.0
        %3731 = vmatprep.subr.mxu0 0.0
        %3732 = vmatpush1.msra.mxu0 0.0
        %3733 = vmatprep.subr.mxu0 0.0
        %3734 = vmatpush1.msra.mxu0 %v3539
        %3735 = vmatprep.subr.mxu0 0.0
        %3736 = vmatpush1.msra.mxu0 %v3538
        %3737 = vmatprep.subr.mxu0 0.0
        %3738 = vmatpush1.msra.mxu0 %v3537
        %3739 = vmatprep.subr.mxu0 0.0
        %3740 = vmatpush1.msra.mxu0 %v3536
        %3741 = vmatprep.subr.mxu0 0.0
        %3742 = vmatpush1.msra.mxu0 %v3535
        %3743 = vmatprep.subr.mxu0 0.0
        %3744 = vmatpush1.msra.mxu0 %v3534
        %3745 = vmatprep.subr.mxu0 0.0
        %3746 = vmatpush1.msra.mxu0 %v3533
        %3747 = vmatprep.subr.mxu0 0.0
        %3748 = vmatpush1.msra.mxu0 %v3532
        %3749 = vmatprep.subr.mxu0 0.0
        %3750 = vmatpush2.msra.mxu0 0.0
        %3751 = vmatprep.subr.mxu0 0.0
        %3752 = vmatpush2.msra.mxu0 0.0
        %3753 = vmatprep.subr.mxu0 0.0
        %3754 = vmatpush2.msra.mxu0 0.0
        %3755 = vmatprep.subr.mxu0 0.0
        %3756 = vmatpush2.msra.mxu0 0.0
        %3757 = vmatprep.subr.mxu0 0.0
        %3758 = vmatpush2.msra.mxu0 0.0
        %3759 = vmatprep.subr.mxu0 0.0
        %3760 = vmatpush2.msra.mxu0 0.0
        %3761 = vmatprep.subr.mxu0 0.0
        %3762 = vmatpush2.msra.mxu0 0.0
        %3763 = vmatprep.subr.mxu0 0.0
        %3764 = vmatpush2.msra.mxu0 0.0
        %3765 = vmatprep.subr.mxu0 0.0
        %3766 = vmatpush2.msra.mxu0 0.0
        %3767 = vmatprep.subr.mxu0 0.0
        %3768 = vmatpush2.msra.mxu0 0.0
        %3769 = vmatprep.subr.mxu0 0.0
        %3770 = vmatpush2.msra.mxu0 0.0
        %3771 = vmatprep.subr.mxu0 0.0
        %3772 = vmatpush2.msra.mxu0 0.0
        %3773 = vmatprep.subr.mxu0 0.0
        %3774 = vmatpush2.msra.mxu0 0.0
        %3775 = vmatprep.subr.mxu0 0.0
        %3776 = vmatpush2.msra.mxu0 0.0
        %3777 = vmatprep.subr.mxu0 0.0
        %3778 = vmatpush2.msra.mxu0 0.0
        %3779 = vmatprep.subr.mxu0 0.0
        %3780 = vmatpush2.msra.mxu0 0.0
        %3781 = vmatprep.mubr.f32.mxu0 0.0
        %3782 = vmatmul.mubr.f32.gmra.mxu0 %v2891
        %v3783 = vpop.f32.mrf.mxu0
        %v3784 = vadd.f32 %v3568, %v3783
        %v3785 = vpop.f32.mrf.mxu0
        %3786 = vdwg.mxu0
        %3787 = vmatprep.subr.mxu0 0.0
        %3788 = vmatpush1.msra.mxu0 0.0
        %3789 = vmatprep.subr.mxu0 0.0
        %3790 = vmatpush1.msra.mxu0 0.0
        %3791 = vmatprep.subr.mxu0 0.0
        %3792 = vmatpush1.msra.mxu0 0.0
        %3793 = vmatprep.subr.mxu0 0.0
        %3794 = vmatpush1.msra.mxu0 0.0
        %3795 = vmatprep.subr.mxu0 0.0
        %3796 = vmatpush1.msra.mxu0 0.0
        %3797 = vmatprep.subr.mxu0 0.0
        %3798 = vmatpush1.msra.mxu0 0.0
        %3799 = vmatprep.subr.mxu0 0.0
        %3800 = vmatpush1.msra.mxu0 0.0
        %3801 = vmatprep.subr.mxu0 0.0
        %3802 = vmatpush1.msra.mxu0 0.0
        %3803 = vmatprep.subr.mxu0 0.0
        %3804 = vmatpush1.msra.mxu0 %v3547
        %3805 = vmatprep.subr.mxu0 0.0
        %3806 = vmatpush1.msra.mxu0 %v3546
        %3807 = vmatprep.subr.mxu0 0.0
        %3808 = vmatpush1.msra.mxu0 %v3545
        %3809 = vmatprep.subr.mxu0 0.0
        %3810 = vmatpush1.msra.mxu0 %v3544
        %3811 = vmatprep.subr.mxu0 0.0
        %3812 = vmatpush1.msra.mxu0 %v3543
        %3813 = vmatprep.subr.mxu0 0.0
        %3814 = vmatpush1.msra.mxu0 %v3542
        %3815 = vmatprep.subr.mxu0 0.0
        %3816 = vmatpush1.msra.mxu0 %v3541
        %3817 = vmatprep.subr.mxu0 0.0
        %3818 = vmatpush1.msra.mxu0 %v3540
        %3819 = vmatprep.subr.mxu0 0.0
        %3820 = vmatpush2.msra.mxu0 0.0
        %3821 = vmatprep.subr.mxu0 0.0
        %3822 = vmatpush2.msra.mxu0 0.0
        %3823 = vmatprep.subr.mxu0 0.0
        %3824 = vmatpush2.msra.mxu0 0.0
        %3825 = vmatprep.subr.mxu0 0.0
        %3826 = vmatpush2.msra.mxu0 0.0
        %3827 = vmatprep.subr.mxu0 0.0
        %3828 = vmatpush2.msra.mxu0 0.0
        %3829 = vmatprep.subr.mxu0 0.0
        %3830 = vmatpush2.msra.mxu0 0.0
        %3831 = vmatprep.subr.mxu0 0.0
        %3832 = vmatpush2.msra.mxu0 0.0
        %3833 = vmatprep.subr.mxu0 0.0
        %3834 = vmatpush2.msra.mxu0 0.0
        %3835 = vmatprep.subr.mxu0 0.0
        %3836 = vmatpush2.msra.mxu0 0.0
        %3837 = vmatprep.subr.mxu0 0.0
        %3838 = vmatpush2.msra.mxu0 0.0
        %3839 = vmatprep.subr.mxu0 0.0
        %3840 = vmatpush2.msra.mxu0 0.0
        %3841 = vmatprep.subr.mxu0 0.0
        %3842 = vmatpush2.msra.mxu0 0.0
        %3843 = vmatprep.subr.mxu0 0.0
        %3844 = vmatpush2.msra.mxu0 0.0
        %3845 = vmatprep.subr.mxu0 0.0
        %3846 = vmatpush2.msra.mxu0 0.0
        %3847 = vmatprep.subr.mxu0 0.0
        %3848 = vmatpush2.msra.mxu0 0.0
        %3849 = vmatprep.subr.mxu0 0.0
        %3850 = vmatpush2.msra.mxu0 0.0
        %3851 = vmatprep.mubr.f32.mxu0 0.0
        %3852 = vmatmul.mubr.f32.gmra.mxu0 %v2891
        %v3853 = vpop.f32.mrf.mxu0
        %v3854 = vadd.f32 %v3572, %v3853
        %v3855 = vpop.f32.mrf.mxu0
        %3856 = vdwg.mxu0
        %v3858 = vsel %vm1623, %v2960, 0
        %v3861 = vsel %vm1623, %v3302, 0
        %3863 = vmatprep.subr.mxu0 0.0
        %3864 = vmatpush1.xpose.msra.mxu0 0.0
        %3865 = vmatprep.subr.mxu0 0.0
        %3866 = vmatpush1.xpose.msra.mxu0 0.0
        %3867 = vmatprep.subr.mxu0 0.0
        %3868 = vmatpush1.xpose.msra.mxu0 0.0
        %3869 = vmatprep.subr.mxu0 0.0
        %3870 = vmatpush1.xpose.msra.mxu0 0.0
        %3871 = vmatprep.subr.mxu0 0.0
        %3872 = vmatpush1.xpose.msra.mxu0 0.0
        %3873 = vmatprep.subr.mxu0 0.0
        %3874 = vmatpush1.xpose.msra.mxu0 0.0
        %3875 = vmatprep.subr.mxu0 0.0
        %3876 = vmatpush1.xpose.msra.mxu0 0.0
        %3877 = vmatprep.subr.mxu0 0.0
        %3878 = vmatpush1.xpose.msra.mxu0 0.0
        %3879 = vmatprep.subr.mxu0 0.0
        %3880 = vmatpush1.xpose.msra.mxu0 0.0
        %3881 = vmatprep.subr.mxu0 0.0
        %3882 = vmatpush1.xpose.msra.mxu0 0.0
        %3883 = vmatprep.subr.mxu0 0.0
        %3884 = vmatpush1.xpose.msra.mxu0 0.0
        %3885 = vmatprep.subr.mxu0 0.0
        %3886 = vmatpush1.xpose.msra.mxu0 0.0
        %3887 = vmatprep.subr.mxu0 0.0
        %3888 = vmatpush1.xpose.msra.mxu0 0.0
        %3889 = vmatprep.subr.mxu0 0.0
        %3890 = vmatpush1.xpose.msra.mxu0 0.0
        %3891 = vmatprep.subr.mxu0 0.0
        %3892 = vmatpush1.xpose.msra.mxu0 0.0
        %3893 = vmatprep.subr.mxu0 0.0
        %3894 = vmatpush1.xpose.msra.mxu0 %v3861
        %3895 = vmatprep.subr.mxu0 0.0
        %3896 = vmatpush2.xpose.msra.mxu0 0.0
        %3897 = vmatprep.subr.mxu0 0.0
        %3898 = vmatpush2.xpose.msra.mxu0 0.0
        %3899 = vmatprep.subr.mxu0 0.0
        %3900 = vmatpush2.xpose.msra.mxu0 0.0
        %3901 = vmatprep.subr.mxu0 0.0
        %3902 = vmatpush2.xpose.msra.mxu0 0.0
        %3903 = vmatprep.subr.mxu0 0.0
        %3904 = vmatpush2.xpose.msra.mxu0 0.0
        %3905 = vmatprep.subr.mxu0 0.0
        %3906 = vmatpush2.xpose.msra.mxu0 0.0
        %3907 = vmatprep.subr.mxu0 0.0
        %3908 = vmatpush2.xpose.msra.mxu0 0.0
        %3909 = vmatprep.subr.mxu0 0.0
        %3910 = vmatpush2.xpose.msra.mxu0 0.0
        %3911 = vmatprep.subr.mxu0 0.0
        %3912 = vmatpush2.xpose.msra.mxu0 0.0
        %3913 = vmatprep.subr.mxu0 0.0
        %3914 = vmatpush2.xpose.msra.mxu0 0.0
        %3915 = vmatprep.subr.mxu0 0.0
        %3916 = vmatpush2.xpose.msra.mxu0 0.0
        %3917 = vmatprep.subr.mxu0 0.0
        %3918 = vmatpush2.xpose.msra.mxu0 0.0
        %3919 = vmatprep.subr.mxu0 0.0
        %3920 = vmatpush2.xpose.msra.mxu0 0.0
        %3921 = vmatprep.subr.mxu0 0.0
        %3922 = vmatpush2.xpose.msra.mxu0 0.0
        %3923 = vmatprep.subr.mxu0 0.0
        %3924 = vmatpush2.xpose.msra.mxu0 0.0
        %3925 = vmatprep.subr.mxu0 0.0
        %3926 = vmatpush2.xpose.msra.mxu0 0.0
        %3927 = vmatprep.mubr.f32.mxu0 0.0
        %3928 = vmatmul.mubr.f32.gmra.mxu0 %v3858
        %v3929 = vpop.f32.mrf.mxu0
        %v3930 = vadd.f32 0.0, %v3929
        %v3931 = vpop.f32.mrf.mxu0
        %3932 = vdwg.mxu0
        %v3934 = vsel %vm1623, %v3030, 0
        %v3937 = vsel %vm1623, %v3372, 0
        %3939 = vmatprep.subr.mxu0 0.0
        %3940 = vmatpush1.xpose.msra.mxu0 0.0
        %3941 = vmatprep.subr.mxu0 0.0
        %3942 = vmatpush1.xpose.msra.mxu0 0.0
        %3943 = vmatprep.subr.mxu0 0.0
        %3944 = vmatpush1.xpose.msra.mxu0 0.0
        %3945 = vmatprep.subr.mxu0 0.0
        %3946 = vmatpush1.xpose.msra.mxu0 0.0
        %3947 = vmatprep.subr.mxu0 0.0
        %3948 = vmatpush1.xpose.msra.mxu0 0.0
        %3949 = vmatprep.subr.mxu0 0.0
        %3950 = vmatpush1.xpose.msra.mxu0 0.0
        %3951 = vmatprep.subr.mxu0 0.0
        %3952 = vmatpush1.xpose.msra.mxu0 0.0
        %3953 = vmatprep.subr.mxu0 0.0
        %3954 = vmatpush1.xpose.msra.mxu0 0.0
        %3955 = vmatprep.subr.mxu0 0.0
        %3956 = vmatpush1.xpose.msra.mxu0 0.0
        %3957 = vmatprep.subr.mxu0 0.0
        %3958 = vmatpush1.xpose.msra.mxu0 0.0
        %3959 = vmatprep.subr.mxu0 0.0
        %3960 = vmatpush1.xpose.msra.mxu0 0.0
        %3961 = vmatprep.subr.mxu0 0.0
        %3962 = vmatpush1.xpose.msra.mxu0 0.0
        %3963 = vmatprep.subr.mxu0 0.0
        %3964 = vmatpush1.xpose.msra.mxu0 0.0
        %3965 = vmatprep.subr.mxu0 0.0
        %3966 = vmatpush1.xpose.msra.mxu0 0.0
        %3967 = vmatprep.subr.mxu0 0.0
        %3968 = vmatpush1.xpose.msra.mxu0 0.0
        %3969 = vmatprep.subr.mxu0 0.0
        %3970 = vmatpush1.xpose.msra.mxu0 %v3937
        %3971 = vmatprep.subr.mxu0 0.0
        %3972 = vmatpush2.xpose.msra.mxu0 0.0
        %3973 = vmatprep.subr.mxu0 0.0
        %3974 = vmatpush2.xpose.msra.mxu0 0.0
        %3975 = vmatprep.subr.mxu0 0.0
        %3976 = vmatpush2.xpose.msra.mxu0 0.0
        %3977 = vmatprep.subr.mxu0 0.0
        %3978 = vmatpush2.xpose.msra.mxu0 0.0
        %3979 = vmatprep.subr.mxu0 0.0
        %3980 = vmatpush2.xpose.msra.mxu0 0.0
        %3981 = vmatprep.subr.mxu0 0.0
        %3982 = vmatpush2.xpose.msra.mxu0 0.0
        %3983 = vmatprep.subr.mxu0 0.0
        %3984 = vmatpush2.xpose.msra.mxu0 0.0
        %3985 = vmatprep.subr.mxu0 0.0
        %3986 = vmatpush2.xpose.msra.mxu0 0.0
        %3987 = vmatprep.subr.mxu0 0.0
        %3988 = vmatpush2.xpose.msra.mxu0 0.0
        %3989 = vmatprep.subr.mxu0 0.0
        %3990 = vmatpush2.xpose.msra.mxu0 0.0
        %3991 = vmatprep.subr.mxu0 0.0
        %3992 = vmatpush2.xpose.msra.mxu0 0.0
        %3993 = vmatprep.subr.mxu0 0.0
        %3994 = vmatpush2.xpose.msra.mxu0 0.0
        %3995 = vmatprep.subr.mxu0 0.0
        %3996 = vmatpush2.xpose.msra.mxu0 0.0
        %3997 = vmatprep.subr.mxu0 0.0
        %3998 = vmatpush2.xpose.msra.mxu0 0.0
        %3999 = vmatprep.subr.mxu0 0.0
        %4000 = vmatpush2.xpose.msra.mxu0 0.0
        %4001 = vmatprep.subr.mxu0 0.0
        %4002 = vmatpush2.xpose.msra.mxu0 0.0
        %4003 = vmatprep.mubr.f32.mxu0 0.0
        %4004 = vmatmul.mubr.f32.gmra.mxu0 %v3934
        %v4005 = vpop.f32.mrf.mxu0
        %v4006 = vadd.f32 0.0, %v4005
        %v4007 = vpop.f32.mrf.mxu0
        %4008 = vdwg.mxu0
        %v4010 = vsel %vm1623, %v3100, 0
        %v4013 = vsel %vm1623, %v3442, 0
        %4015 = vmatprep.subr.mxu0 0.0
        %4016 = vmatpush1.xpose.msra.mxu0 0.0
        %4017 = vmatprep.subr.mxu0 0.0
        %4018 = vmatpush1.xpose.msra.mxu0 0.0
        %4019 = vmatprep.subr.mxu0 0.0
        %4020 = vmatpush1.xpose.msra.mxu0 0.0
        %4021 = vmatprep.subr.mxu0 0.0
        %4022 = vmatpush1.xpose.msra.mxu0 0.0
        %4023 = vmatprep.subr.mxu0 0.0
        %4024 = vmatpush1.xpose.msra.mxu0 0.0
        %4025 = vmatprep.subr.mxu0 0.0
        %4026 = vmatpush1.xpose.msra.mxu0 0.0
        %4027 = vmatprep.subr.mxu0 0.0
        %4028 = vmatpush1.xpose.msra.mxu0 0.0
        %4029 = vmatprep.subr.mxu0 0.0
        %4030 = vmatpush1.xpose.msra.mxu0 0.0
        %4031 = vmatprep.subr.mxu0 0.0
        %4032 = vmatpush1.xpose.msra.mxu0 0.0
        %4033 = vmatprep.subr.mxu0 0.0
        %4034 = vmatpush1.xpose.msra.mxu0 0.0
        %4035 = vmatprep.subr.mxu0 0.0
        %4036 = vmatpush1.xpose.msra.mxu0 0.0
        %4037 = vmatprep.subr.mxu0 0.0
        %4038 = vmatpush1.xpose.msra.mxu0 0.0
        %4039 = vmatprep.subr.mxu0 0.0
        %4040 = vmatpush1.xpose.msra.mxu0 0.0
        %4041 = vmatprep.subr.mxu0 0.0
        %4042 = vmatpush1.xpose.msra.mxu0 0.0
        %4043 = vmatprep.subr.mxu0 0.0
        %4044 = vmatpush1.xpose.msra.mxu0 0.0
        %4045 = vmatprep.subr.mxu0 0.0
        %4046 = vmatpush1.xpose.msra.mxu0 %v4013
        %4047 = vmatprep.subr.mxu0 0.0
        %4048 = vmatpush2.xpose.msra.mxu0 0.0
        %4049 = vmatprep.subr.mxu0 0.0
        %4050 = vmatpush2.xpose.msra.mxu0 0.0
        %4051 = vmatprep.subr.mxu0 0.0
        %4052 = vmatpush2.xpose.msra.mxu0 0.0
        %4053 = vmatprep.subr.mxu0 0.0
        %4054 = vmatpush2.xpose.msra.mxu0 0.0
        %4055 = vmatprep.subr.mxu0 0.0
        %4056 = vmatpush2.xpose.msra.mxu0 0.0
        %4057 = vmatprep.subr.mxu0 0.0
        %4058 = vmatpush2.xpose.msra.mxu0 0.0
        %4059 = vmatprep.subr.mxu0 0.0
        %4060 = vmatpush2.xpose.msra.mxu0 0.0
        %4061 = vmatprep.subr.mxu0 0.0
        %4062 = vmatpush2.xpose.msra.mxu0 0.0
        %4063 = vmatprep.subr.mxu0 0.0
        %4064 = vmatpush2.xpose.msra.mxu0 0.0
        %4065 = vmatprep.subr.mxu0 0.0
        %4066 = vmatpush2.xpose.msra.mxu0 0.0
        %4067 = vmatprep.subr.mxu0 0.0
        %4068 = vmatpush2.xpose.msra.mxu0 0.0
        %4069 = vmatprep.subr.mxu0 0.0
        %4070 = vmatpush2.xpose.msra.mxu0 0.0
        %4071 = vmatprep.subr.mxu0 0.0
        %4072 = vmatpush2.xpose.msra.mxu0 0.0
        %4073 = vmatprep.subr.mxu0 0.0
        %4074 = vmatpush2.xpose.msra.mxu0 0.0
        %4075 = vmatprep.subr.mxu0 0.0
        %4076 = vmatpush2.xpose.msra.mxu0 0.0
        %4077 = vmatprep.subr.mxu0 0.0
        %4078 = vmatpush2.xpose.msra.mxu0 0.0
        %4079 = vmatprep.mubr.f32.mxu0 0.0
        %4080 = vmatmul.mubr.f32.gmra.mxu0 %v4010
        %v4081 = vpop.f32.mrf.mxu0
        %v4082 = vadd.f32 0.0, %v4081
        %v4083 = vpop.f32.mrf.mxu0
        %4084 = vdwg.mxu0
        %v4086 = vsel %vm1623, %v3170, 0
        %v4089 = vsel %vm1623, %v3512, 0
        %4091 = vmatprep.subr.mxu0 0.0
        %4092 = vmatpush1.xpose.msra.mxu0 0.0
        %4093 = vmatprep.subr.mxu0 0.0
        %4094 = vmatpush1.xpose.msra.mxu0 0.0
        %4095 = vmatprep.subr.mxu0 0.0
        %4096 = vmatpush1.xpose.msra.mxu0 0.0
        %4097 = vmatprep.subr.mxu0 0.0
        %4098 = vmatpush1.xpose.msra.mxu0 0.0
        %4099 = vmatprep.subr.mxu0 0.0
        %4100 = vmatpush1.xpose.msra.mxu0 0.0
        %4101 = vmatprep.subr.mxu0 0.0
        %4102 = vmatpush1.xpose.msra.mxu0 0.0
        %4103 = vmatprep.subr.mxu0 0.0
        %4104 = vmatpush1.xpose.msra.mxu0 0.0
        %4105 = vmatprep.subr.mxu0 0.0
        %4106 = vmatpush1.xpose.msra.mxu0 0.0
        %4107 = vmatprep.subr.mxu0 0.0
        %4108 = vmatpush1.xpose.msra.mxu0 0.0
        %4109 = vmatprep.subr.mxu0 0.0
        %4110 = vmatpush1.xpose.msra.mxu0 0.0
        %4111 = vmatprep.subr.mxu0 0.0
        %4112 = vmatpush1.xpose.msra.mxu0 0.0
        %4113 = vmatprep.subr.mxu0 0.0
        %4114 = vmatpush1.xpose.msra.mxu0 0.0
        %4115 = vmatprep.subr.mxu0 0.0
        %4116 = vmatpush1.xpose.msra.mxu0 0.0
        %4117 = vmatprep.subr.mxu0 0.0
        %4118 = vmatpush1.xpose.msra.mxu0 0.0
        %4119 = vmatprep.subr.mxu0 0.0
        %4120 = vmatpush1.xpose.msra.mxu0 0.0
        %4121 = vmatprep.subr.mxu0 0.0
        %4122 = vmatpush1.xpose.msra.mxu0 %v4089
        %4123 = vmatprep.subr.mxu0 0.0
        %4124 = vmatpush2.xpose.msra.mxu0 0.0
        %4125 = vmatprep.subr.mxu0 0.0
        %4126 = vmatpush2.xpose.msra.mxu0 0.0
        %4127 = vmatprep.subr.mxu0 0.0
        %4128 = vmatpush2.xpose.msra.mxu0 0.0
        %4129 = vmatprep.subr.mxu0 0.0
        %4130 = vmatpush2.xpose.msra.mxu0 0.0
        %4131 = vmatprep.subr.mxu0 0.0
        %4132 = vmatpush2.xpose.msra.mxu0 0.0
        %4133 = vmatprep.subr.mxu0 0.0
        %4134 = vmatpush2.xpose.msra.mxu0 0.0
        %4135 = vmatprep.subr.mxu0 0.0
        %4136 = vmatpush2.xpose.msra.mxu0 0.0
        %4137 = vmatprep.subr.mxu0 0.0
        %4138 = vmatpush2.xpose.msra.mxu0 0.0
        %4139 = vmatprep.subr.mxu0 0.0
        %4140 = vmatpush2.xpose.msra.mxu0 0.0
        %4141 = vmatprep.subr.mxu0 0.0
        %4142 = vmatpush2.xpose.msra.mxu0 0.0
        %4143 = vmatprep.subr.mxu0 0.0
        %4144 = vmatpush2.xpose.msra.mxu0 0.0
        %4145 = vmatprep.subr.mxu0 0.0
        %4146 = vmatpush2.xpose.msra.mxu0 0.0
        %4147 = vmatprep.subr.mxu0 0.0
        %4148 = vmatpush2.xpose.msra.mxu0 0.0
        %4149 = vmatprep.subr.mxu0 0.0
        %4150 = vmatpush2.xpose.msra.mxu0 0.0
        %4151 = vmatprep.subr.mxu0 0.0
        %4152 = vmatpush2.xpose.msra.mxu0 0.0
        %4153 = vmatprep.subr.mxu0 0.0
        %4154 = vmatpush2.xpose.msra.mxu0 0.0
        %4155 = vmatprep.mubr.f32.mxu0 0.0
        %4156 = vmatmul.mubr.f32.gmra.mxu0 %v4086
        %v4157 = vpop.f32.mrf.mxu0
        %v4158 = vadd.f32 0.0, %v4157
        %v4159 = vpop.f32.mrf.mxu0
        %4160 = vdwg.mxu0
        %v4161 = vmul.f32 %v3930, 0.25
        %v4162 = vmul.f32 %v4006, 0.25
        %v4163 = vmul.f32 %v4082, 0.25
        %v4164 = vmul.f32 %v4158, 0.25
        %v4165 = vsel %vm1932, %v4161, -inf
        %4166 = vmax.xlane.f32.xlu0 %v4165
        %v4167 = vpop.xlane.xlu0 %4166
        %v4168 = vsel %vm1932, %v4162, -inf
        %4169 = vmax.xlane.f32.xlu0 %v4168
        %v4170 = vpop.xlane.xlu0 %4169
        %v4171 = vsel %vm1932, %v4163, -inf
        %4172 = vmax.xlane.f32.xlu0 %v4171
        %v4173 = vpop.xlane.xlu0 %4172
        %v4174 = vsel %vm1932, %v4164, -inf
        %4175 = vmax.xlane.f32.xlu0 %v4174
        %v4176 = vpop.xlane.xlu0 %4175
        %v4177 = vsub.f32 %v4161, %v4167
        %v4178 = vsub.f32 %v4162, %v4170
        %v4179 = vsub.f32 %v4163, %v4173
        %v4180 = vsub.f32 %v4164, %v4176
        %v4181 = vmul.f32 %v4177, 1.442695
        %v4182 = vpow.pop %v4181
        %v4183 = vmul.f32 %v4178, 1.442695
        %v4184 = vpow.pop %v4183
        %v4185 = vmul.f32 %v4179, 1.442695
        %v4186 = vpow.pop %v4185
        %v4187 = vmul.f32 %v4180, 1.442695
        %v4188 = vpow.pop %v4187
        %v4189 = vsel %vm1932, %v4182, 0.0
        %4190 = vadd.xlane.f32.xlu0 %v4189
        %v4191 = vpop.xlane.xlu0 %4190
        %v4192 = vsel %vm1932, %v4184, 0.0
        %4193 = vadd.xlane.f32.xlu0 %v4192
        %v4194 = vpop.xlane.xlu0 %4193
        %v4195 = vsel %vm1932, %v4186, 0.0
        %4196 = vadd.xlane.f32.xlu0 %v4195
        %v4197 = vpop.xlane.xlu0 %4196
        %v4198 = vsel %vm1932, %v4188, 0.0
        %4199 = vadd.xlane.f32.xlu0 %v4198
        %v4200 = vpop.xlane.xlu0 %4199
        %v4201 = vrcp.pop %v4191
        %v4202 = vrcp.pop %v4194
        %v4203 = vrcp.pop %v4197
        %v4204 = vrcp.pop %v4200
        %v4205 = vmul.f32 %v4182, %v4201
        %v4206 = vmul.f32 %v4184, %v4202
        %v4207 = vmul.f32 %v4186, %v4203
        %v4208 = vmul.f32 %v4188, %v4204
        %v4210 = vsel %vm1932, %v4205, 0
        %4212 = vmatprep.subr.mxu0 0.0
        %4213 = vmatpush1.msra.mxu0 0.0
        %4214 = vmatprep.subr.mxu0 0.0
        %4215 = vmatpush1.msra.mxu0 0.0
        %4216 = vmatprep.subr.mxu0 0.0
        %4217 = vmatpush1.msra.mxu0 0.0
        %4218 = vmatprep.subr.mxu0 0.0
        %4219 = vmatpush1.msra.mxu0 0.0
        %4220 = vmatprep.subr.mxu0 0.0
        %4221 = vmatpush1.msra.mxu0 0.0
        %4222 = vmatprep.subr.mxu0 0.0
        %4223 = vmatpush1.msra.mxu0 0.0
        %4224 = vmatprep.subr.mxu0 0.0
        %4225 = vmatpush1.msra.mxu0 0.0
        %4226 = vmatprep.subr.mxu0 0.0
        %4227 = vmatpush1.msra.mxu0 0.0
        %4228 = vmatprep.subr.mxu0 0.0
        %4229 = vmatpush1.msra.mxu0 0.0
        %4230 = vmatprep.subr.mxu0 0.0
        %4231 = vmatpush1.msra.mxu0 0.0
        %4232 = vmatprep.subr.mxu0 0.0
        %4233 = vmatpush1.msra.mxu0 0.0
        %4234 = vmatprep.subr.mxu0 0.0
        %4235 = vmatpush1.msra.mxu0 0.0
        %4236 = vmatprep.subr.mxu0 0.0
        %4237 = vmatpush1.msra.mxu0 0.0
        %4238 = vmatprep.subr.mxu0 0.0
        %4239 = vmatpush1.msra.mxu0 0.0
        %4240 = vmatprep.subr.mxu0 0.0
        %4241 = vmatpush1.msra.mxu0 0.0
        %4242 = vmatprep.subr.mxu0 0.0
        %4243 = vmatpush1.msra.mxu0 %v3644
        %4244 = vmatprep.subr.mxu0 0.0
        %4245 = vmatpush2.msra.mxu0 0.0
        %4246 = vmatprep.subr.mxu0 0.0
        %4247 = vmatpush2.msra.mxu0 0.0
        %4248 = vmatprep.subr.mxu0 0.0
        %4249 = vmatpush2.msra.mxu0 0.0
        %4250 = vmatprep.subr.mxu0 0.0
        %4251 = vmatpush2.msra.mxu0 0.0
        %4252 = vmatprep.subr.mxu0 0.0
        %4253 = vmatpush2.msra.mxu0 0.0
        %4254 = vmatprep.subr.mxu0 0.0
        %4255 = vmatpush2.msra.mxu0 0.0
        %4256 = vmatprep.subr.mxu0 0.0
        %4257 = vmatpush2.msra.mxu0 0.0
        %4258 = vmatprep.subr.mxu0 0.0
        %4259 = vmatpush2.msra.mxu0 0.0
        %4260 = vmatprep.subr.mxu0 0.0
        %4261 = vmatpush2.msra.mxu0 0.0
        %4262 = vmatprep.subr.mxu0 0.0
        %4263 = vmatpush2.msra.mxu0 0.0
        %4264 = vmatprep.subr.mxu0 0.0
        %4265 = vmatpush2.msra.mxu0 0.0
        %4266 = vmatprep.subr.mxu0 0.0
        %4267 = vmatpush2.msra.mxu0 0.0
        %4268 = vmatprep.subr.mxu0 0.0
        %4269 = vmatpush2.msra.mxu0 0.0
        %4270 = vmatprep.subr.mxu0 0.0
        %4271 = vmatpush2.msra.mxu0 0.0
        %4272 = vmatprep.subr.mxu0 0.0
        %4273 = vmatpush2.msra.mxu0 0.0
        %4274 = vmatprep.subr.mxu0 0.0
        %4275 = vmatpush2.msra.mxu0 0.0
        %4276 = vmatprep.mubr.f32.mxu0 0.0
        %4277 = vmatmul.mubr.f32.gmra.mxu0 %v4210
        %v4278 = vpop.f32.mrf.mxu0
        %v4279 = vadd.f32 0.0, %v4278
        %v4280 = vpop.f32.mrf.mxu0
        %4281 = vdwg.mxu0
        %v4283 = vsel %vm1932, %v4206, 0
        %4285 = vmatprep.subr.mxu0 0.0
        %4286 = vmatpush1.msra.mxu0 0.0
        %4287 = vmatprep.subr.mxu0 0.0
        %4288 = vmatpush1.msra.mxu0 0.0
        %4289 = vmatprep.subr.mxu0 0.0
        %4290 = vmatpush1.msra.mxu0 0.0
        %4291 = vmatprep.subr.mxu0 0.0
        %4292 = vmatpush1.msra.mxu0 0.0
        %4293 = vmatprep.subr.mxu0 0.0
        %4294 = vmatpush1.msra.mxu0 0.0
        %4295 = vmatprep.subr.mxu0 0.0
        %4296 = vmatpush1.msra.mxu0 0.0
        %4297 = vmatprep.subr.mxu0 0.0
        %4298 = vmatpush1.msra.mxu0 0.0
        %4299 = vmatprep.subr.mxu0 0.0
        %4300 = vmatpush1.msra.mxu0 0.0
        %4301 = vmatprep.subr.mxu0 0.0
        %4302 = vmatpush1.msra.mxu0 0.0
        %4303 = vmatprep.subr.mxu0 0.0
        %4304 = vmatpush1.msra.mxu0 0.0
        %4305 = vmatprep.subr.mxu0 0.0
        %4306 = vmatpush1.msra.mxu0 0.0
        %4307 = vmatprep.subr.mxu0 0.0
        %4308 = vmatpush1.msra.mxu0 0.0
        %4309 = vmatprep.subr.mxu0 0.0
        %4310 = vmatpush1.msra.mxu0 0.0
        %4311 = vmatprep.subr.mxu0 0.0
        %4312 = vmatpush1.msra.mxu0 0.0
        %4313 = vmatprep.subr.mxu0 0.0
        %4314 = vmatpush1.msra.mxu0 0.0
        %4315 = vmatprep.subr.mxu0 0.0
        %4316 = vmatpush1.msra.mxu0 %v3714
        %4317 = vmatprep.subr.mxu0 0.0
        %4318 = vmatpush2.msra.mxu0 0.0
        %4319 = vmatprep.subr.mxu0 0.0
        %4320 = vmatpush2.msra.mxu0 0.0
        %4321 = vmatprep.subr.mxu0 0.0
        %4322 = vmatpush2.msra.mxu0 0.0
        %4323 = vmatprep.subr.mxu0 0.0
        %4324 = vmatpush2.msra.mxu0 0.0
        %4325 = vmatprep.subr.mxu0 0.0
        %4326 = vmatpush2.msra.mxu0 0.0
        %4327 = vmatprep.subr.mxu0 0.0
        %4328 = vmatpush2.msra.mxu0 0.0
        %4329 = vmatprep.subr.mxu0 0.0
        %4330 = vmatpush2.msra.mxu0 0.0
        %4331 = vmatprep.subr.mxu0 0.0
        %4332 = vmatpush2.msra.mxu0 0.0
        %4333 = vmatprep.subr.mxu0 0.0
        %4334 = vmatpush2.msra.mxu0 0.0
        %4335 = vmatprep.subr.mxu0 0.0
        %4336 = vmatpush2.msra.mxu0 0.0
        %4337 = vmatprep.subr.mxu0 0.0
        %4338 = vmatpush2.msra.mxu0 0.0
        %4339 = vmatprep.subr.mxu0 0.0
        %4340 = vmatpush2.msra.mxu0 0.0
        %4341 = vmatprep.subr.mxu0 0.0
        %4342 = vmatpush2.msra.mxu0 0.0
        %4343 = vmatprep.subr.mxu0 0.0
        %4344 = vmatpush2.msra.mxu0 0.0
        %4345 = vmatprep.subr.mxu0 0.0
        %4346 = vmatpush2.msra.mxu0 0.0
        %4347 = vmatprep.subr.mxu0 0.0
        %4348 = vmatpush2.msra.mxu0 0.0
        %4349 = vmatprep.mubr.f32.mxu0 0.0
        %4350 = vmatmul.mubr.f32.gmra.mxu0 %v4283
        %v4351 = vpop.f32.mrf.mxu0
        %v4352 = vadd.f32 0.0, %v4351
        %v4353 = vpop.f32.mrf.mxu0
        %4354 = vdwg.mxu0
        %v4356 = vsel %vm1932, %v4207, 0
        %4358 = vmatprep.subr.mxu0 0.0
        %4359 = vmatpush1.msra.mxu0 0.0
        %4360 = vmatprep.subr.mxu0 0.0
        %4361 = vmatpush1.msra.mxu0 0.0
        %4362 = vmatprep.subr.mxu0 0.0
        %4363 = vmatpush1.msra.mxu0 0.0
        %4364 = vmatprep.subr.mxu0 0.0
        %4365 = vmatpush1.msra.mxu0 0.0
        %4366 = vmatprep.subr.mxu0 0.0
        %4367 = vmatpush1.msra.mxu0 0.0
        %4368 = vmatprep.subr.mxu0 0.0
        %4369 = vmatpush1.msra.mxu0 0.0
        %4370 = vmatprep.subr.mxu0 0.0
        %4371 = vmatpush1.msra.mxu0 0.0
        %4372 = vmatprep.subr.mxu0 0.0
        %4373 = vmatpush1.msra.mxu0 0.0
        %4374 = vmatprep.subr.mxu0 0.0
        %4375 = vmatpush1.msra.mxu0 0.0
        %4376 = vmatprep.subr.mxu0 0.0
        %4377 = vmatpush1.msra.mxu0 0.0
        %4378 = vmatprep.subr.mxu0 0.0
        %4379 = vmatpush1.msra.mxu0 0.0
        %4380 = vmatprep.subr.mxu0 0.0
        %4381 = vmatpush1.msra.mxu0 0.0
        %4382 = vmatprep.subr.mxu0 0.0
        %4383 = vmatpush1.msra.mxu0 0.0
        %4384 = vmatprep.subr.mxu0 0.0
        %4385 = vmatpush1.msra.mxu0 0.0
        %4386 = vmatprep.subr.mxu0 0.0
        %4387 = vmatpush1.msra.mxu0 0.0
        %4388 = vmatprep.subr.mxu0 0.0
        %4389 = vmatpush1.msra.mxu0 %v3784
        %4390 = vmatprep.subr.mxu0 0.0
        %4391 = vmatpush2.msra.mxu0 0.0
        %4392 = vmatprep.subr.mxu0 0.0
        %4393 = vmatpush2.msra.mxu0 0.0
        %4394 = vmatprep.subr.mxu0 0.0
        %4395 = vmatpush2.msra.mxu0 0.0
        %4396 = vmatprep.subr.mxu0 0.0
        %4397 = vmatpush2.msra.mxu0 0.0
        %4398 = vmatprep.subr.mxu0 0.0
        %4399 = vmatpush2.msra.mxu0 0.0
        %4400 = vmatprep.subr.mxu0 0.0
        %4401 = vmatpush2.msra.mxu0 0.0
        %4402 = vmatprep.subr.mxu0 0.0
        %4403 = vmatpush2.msra.mxu0 0.0
        %4404 = vmatprep.subr.mxu0 0.0
        %4405 = vmatpush2.msra.mxu0 0.0
        %4406 = vmatprep.subr.mxu0 0.0
        %4407 = vmatpush2.msra.mxu0 0.0
        %4408 = vmatprep.subr.mxu0 0.0
        %4409 = vmatpush2.msra.mxu0 0.0
        %4410 = vmatprep.subr.mxu0 0.0
        %4411 = vmatpush2.msra.mxu0 0.0
        %4412 = vmatprep.subr.mxu0 0.0
        %4413 = vmatpush2.msra.mxu0 0.0
        %4414 = vmatprep.subr.mxu0 0.0
        %4415 = vmatpush2.msra.mxu0 0.0
        %4416 = vmatprep.subr.mxu0 0.0
        %4417 = vmatpush2.msra.mxu0 0.0
        %4418 = vmatprep.subr.mxu0 0.0
        %4419 = vmatpush2.msra.mxu0 0.0
        %4420 = vmatprep.subr.mxu0 0.0
        %4421 = vmatpush2.msra.mxu0 0.0
        %4422 = vmatprep.mubr.f32.mxu0 0.0
        %4423 = vmatmul.mubr.f32.gmra.mxu0 %v4356
        %v4424 = vpop.f32.mrf.mxu0
        %v4425 = vadd.f32 0.0, %v4424
        %v4426 = vpop.f32.mrf.mxu0
        %4427 = vdwg.mxu0
        %v4429 = vsel %vm1932, %v4208, 0
        %4431 = vmatprep.subr.mxu0 0.0
        %4432 = vmatpush1.msra.mxu0 0.0
        %4433 = vmatprep.subr.mxu0 0.0
        %4434 = vmatpush1.msra.mxu0 0.0
        %4435 = vmatprep.subr.mxu0 0.0
        %4436 = vmatpush1.msra.mxu0 0.0
        %4437 = vmatprep.subr.mxu0 0.0
        %4438 = vmatpush1.msra.mxu0 0.0
        %4439 = vmatprep.subr.mxu0 0.0
        %4440 = vmatpush1.msra.mxu0 0.0
        %4441 = vmatprep.subr.mxu0 0.0
        %4442 = vmatpush1.msra.mxu0 0.0
        %4443 = vmatprep.subr.mxu0 0.0
        %4444 = vmatpush1.msra.mxu0 0.0
        %4445 = vmatprep.subr.mxu0 0.0
        %4446 = vmatpush1.msra.mxu0 0.0
        %4447 = vmatprep.subr.mxu0 0.0
        %4448 = vmatpush1.msra.mxu0 0.0
        %4449 = vmatprep.subr.mxu0 0.0
        %4450 = vmatpush1.msra.mxu0 0.0
        %4451 = vmatprep.subr.mxu0 0.0
        %4452 = vmatpush1.msra.mxu0 0.0
        %4453 = vmatprep.subr.mxu0 0.0
        %4454 = vmatpush1.msra.mxu0 0.0
        %4455 = vmatprep.subr.mxu0 0.0
        %4456 = vmatpush1.msra.mxu0 0.0
        %4457 = vmatprep.subr.mxu0 0.0
        %4458 = vmatpush1.msra.mxu0 0.0
        %4459 = vmatprep.subr.mxu0 0.0
        %4460 = vmatpush1.msra.mxu0 0.0
        %4461 = vmatprep.subr.mxu0 0.0
        %4462 = vmatpush1.msra.mxu0 %v3854
        %4463 = vmatprep.subr.mxu0 0.0
        %4464 = vmatpush2.msra.mxu0 0.0
        %4465 = vmatprep.subr.mxu0 0.0
        %4466 = vmatpush2.msra.mxu0 0.0
        %4467 = vmatprep.subr.mxu0 0.0
        %4468 = vmatpush2.msra.mxu0 0.0
        %4469 = vmatprep.subr.mxu0 0.0
        %4470 = vmatpush2.msra.mxu0 0.0
        %4471 = vmatprep.subr.mxu0 0.0
        %4472 = vmatpush2.msra.mxu0 0.0
        %4473 = vmatprep.subr.mxu0 0.0
        %4474 = vmatpush2.msra.mxu0 0.0
        %4475 = vmatprep.subr.mxu0 0.0
        %4476 = vmatpush2.msra.mxu0 0.0
        %4477 = vmatprep.subr.mxu0 0.0
        %4478 = vmatpush2.msra.mxu0 0.0
        %4479 = vmatprep.subr.mxu0 0.0
        %4480 = vmatpush2.msra.mxu0 0.0
        %4481 = vmatprep.subr.mxu0 0.0
        %4482 = vmatpush2.msra.mxu0 0.0
        %4483 = vmatprep.subr.mxu0 0.0
        %4484 = vmatpush2.msra.mxu0 0.0
        %4485 = vmatprep.subr.mxu0 0.0
        %4486 = vmatpush2.msra.mxu0 0.0
        %4487 = vmatprep.subr.mxu0 0.0
        %4488 = vmatpush2.msra.mxu0 0.0
        %4489 = vmatprep.subr.mxu0 0.0
        %4490 = vmatpush2.msra.mxu0 0.0
        %4491 = vmatprep.subr.mxu0 0.0
        %4492 = vmatpush2.msra.mxu0 0.0
        %4493 = vmatprep.subr.mxu0 0.0
        %4494 = vmatpush2.msra.mxu0 0.0
        %4495 = vmatprep.mubr.f32.mxu0 0.0
        %4496 = vmatmul.mubr.f32.gmra.mxu0 %v4429
        %v4497 = vpop.f32.mrf.mxu0
        %v4498 = vadd.f32 0.0, %v4497
        %v4499 = vpop.f32.mrf.mxu0
        %4500 = vdwg.mxu0
        %s4501 = scalar_lea.vmem %s7, 64
        %v4502 = vld [vmem:[%s4501] sm:$0xff]
        %v4503 = vld [vmem:[%s4501 + $0x8] sm:$0xff]
        %v4504 = vld [vmem:[%s4501 + $0x10] sm:$0xff]
        %v4505 = vld [vmem:[%s4501 + $0x18] sm:$0xff]
        %v4506 = vld [vmem:[%s4501 + $0x20] sm:$0xff]
        %v4507 = vld [vmem:[%s4501 + $0x28] sm:$0xff]
        %v4508 = vld [vmem:[%s4501 + $0x30] sm:$0xff]
        %v4509 = vld [vmem:[%s4501 + $0x38] sm:$0xff]
        %v4511 = vsel %vm1623, %v4279, 0
        %4513 = vmatprep.subr.mxu0 0.0
        %4514 = vmatpush1.msra.mxu0 0.0
        %4515 = vmatprep.subr.mxu0 0.0
        %4516 = vmatpush1.msra.mxu0 0.0
        %4517 = vmatprep.subr.mxu0 0.0
        %4518 = vmatpush1.msra.mxu0 0.0
        %4519 = vmatprep.subr.mxu0 0.0
        %4520 = vmatpush1.msra.mxu0 0.0
        %4521 = vmatprep.subr.mxu0 0.0
        %4522 = vmatpush1.msra.mxu0 0.0
        %4523 = vmatprep.subr.mxu0 0.0
        %4524 = vmatpush1.msra.mxu0 0.0
        %4525 = vmatprep.subr.mxu0 0.0
        %4526 = vmatpush1.msra.mxu0 0.0
        %4527 = vmatprep.subr.mxu0 0.0
        %4528 = vmatpush1.msra.mxu0 0.0
        %4529 = vmatprep.subr.mxu0 0.0
        %4530 = vmatpush1.msra.mxu0 0.0
        %4531 = vmatprep.subr.mxu0 0.0
        %4532 = vmatpush1.msra.mxu0 0.0
        %4533 = vmatprep.subr.mxu0 0.0
        %4534 = vmatpush1.msra.mxu0 0.0
        %4535 = vmatprep.subr.mxu0 0.0
        %4536 = vmatpush1.msra.mxu0 0.0
        %4537 = vmatprep.subr.mxu0 0.0
        %4538 = vmatpush1.msra.mxu0 0.0
        %4539 = vmatprep.subr.mxu0 0.0
        %4540 = vmatpush1.msra.mxu0 0.0
        %4541 = vmatprep.subr.mxu0 0.0
        %4542 = vmatpush1.msra.mxu0 %v4503
        %4543 = vmatprep.subr.mxu0 0.0
        %4544 = vmatpush1.msra.mxu0 %v4502
        %4545 = vmatprep.subr.mxu0 0.0
        %4546 = vmatpush2.msra.mxu0 0.0
        %4547 = vmatprep.subr.mxu0 0.0
        %4548 = vmatpush2.msra.mxu0 0.0
        %4549 = vmatprep.subr.mxu0 0.0
        %4550 = vmatpush2.msra.mxu0 0.0
        %4551 = vmatprep.subr.mxu0 0.0
        %4552 = vmatpush2.msra.mxu0 0.0
        %4553 = vmatprep.subr.mxu0 0.0
        %4554 = vmatpush2.msra.mxu0 0.0
        %4555 = vmatprep.subr.mxu0 0.0
        %4556 = vmatpush2.msra.mxu0 0.0
        %4557 = vmatprep.subr.mxu0 0.0
        %4558 = vmatpush2.msra.mxu0 0.0
        %4559 = vmatprep.subr.mxu0 0.0
        %4560 = vmatpush2.msra.mxu0 0.0
        %4561 = vmatprep.subr.mxu0 0.0
        %4562 = vmatpush2.msra.mxu0 0.0
        %4563 = vmatprep.subr.mxu0 0.0
        %4564 = vmatpush2.msra.mxu0 0.0
        %4565 = vmatprep.subr.mxu0 0.0
        %4566 = vmatpush2.msra.mxu0 0.0
        %4567 = vmatprep.subr.mxu0 0.0
        %4568 = vmatpush2.msra.mxu0 0.0
        %4569 = vmatprep.subr.mxu0 0.0
        %4570 = vmatpush2.msra.mxu0 0.0
        %4571 = vmatprep.subr.mxu0 0.0
        %4572 = vmatpush2.msra.mxu0 0.0
        %4573 = vmatprep.subr.mxu0 0.0
        %4574 = vmatpush2.msra.mxu0 0.0
        %4575 = vmatprep.subr.mxu0 0.0
        %4576 = vmatpush2.msra.mxu0 0.0
        %4577 = vmatprep.mubr.f32.mxu0 0.0
        %4578 = vmatmul.mubr.f32.gmra.mxu0 %v4511
        %v4579 = vpop.f32.mrf.mxu0
        %v4580 = vadd.f32 0.0, %v4579
        %v4581 = vpop.f32.mrf.mxu0
        %4582 = vdwg.mxu0
        %v4584 = vsel %vm1623, %v4352, 0
        %4586 = vmatprep.subr.mxu0 0.0
        %4587 = vmatpush1.msra.mxu0 0.0
        %4588 = vmatprep.subr.mxu0 0.0
        %4589 = vmatpush1.msra.mxu0 0.0
        %4590 = vmatprep.subr.mxu0 0.0
        %4591 = vmatpush1.msra.mxu0 0.0
        %4592 = vmatprep.subr.mxu0 0.0
        %4593 = vmatpush1.msra.mxu0 0.0
        %4594 = vmatprep.subr.mxu0 0.0
        %4595 = vmatpush1.msra.mxu0 0.0
        %4596 = vmatprep.subr.mxu0 0.0
        %4597 = vmatpush1.msra.mxu0 0.0
        %4598 = vmatprep.subr.mxu0 0.0
        %4599 = vmatpush1.msra.mxu0 0.0
        %4600 = vmatprep.subr.mxu0 0.0
        %4601 = vmatpush1.msra.mxu0 0.0
        %4602 = vmatprep.subr.mxu0 0.0
        %4603 = vmatpush1.msra.mxu0 0.0
        %4604 = vmatprep.subr.mxu0 0.0
        %4605 = vmatpush1.msra.mxu0 0.0
        %4606 = vmatprep.subr.mxu0 0.0
        %4607 = vmatpush1.msra.mxu0 0.0
        %4608 = vmatprep.subr.mxu0 0.0
        %4609 = vmatpush1.msra.mxu0 0.0
        %4610 = vmatprep.subr.mxu0 0.0
        %4611 = vmatpush1.msra.mxu0 0.0
        %4612 = vmatprep.subr.mxu0 0.0
        %4613 = vmatpush1.msra.mxu0 0.0
        %4614 = vmatprep.subr.mxu0 0.0
        %4615 = vmatpush1.msra.mxu0 %v4505
        %4616 = vmatprep.subr.mxu0 0.0
        %4617 = vmatpush1.msra.mxu0 %v4504
        %4618 = vmatprep.subr.mxu0 0.0
        %4619 = vmatpush2.msra.mxu0 0.0
        %4620 = vmatprep.subr.mxu0 0.0
        %4621 = vmatpush2.msra.mxu0 0.0
        %4622 = vmatprep.subr.mxu0 0.0
        %4623 = vmatpush2.msra.mxu0 0.0
        %4624 = vmatprep.subr.mxu0 0.0
        %4625 = vmatpush2.msra.mxu0 0.0
        %4626 = vmatprep.subr.mxu0 0.0
        %4627 = vmatpush2.msra.mxu0 0.0
        %4628 = vmatprep.subr.mxu0 0.0
        %4629 = vmatpush2.msra.mxu0 0.0
        %4630 = vmatprep.subr.mxu0 0.0
        %4631 = vmatpush2.msra.mxu0 0.0
        %4632 = vmatprep.subr.mxu0 0.0
        %4633 = vmatpush2.msra.mxu0 0.0
        %4634 = vmatprep.subr.mxu0 0.0
        %4635 = vmatpush2.msra.mxu0 0.0
        %4636 = vmatprep.subr.mxu0 0.0
        %4637 = vmatpush2.msra.mxu0 0.0
        %4638 = vmatprep.subr.mxu0 0.0
        %4639 = vmatpush2.msra.mxu0 0.0
        %4640 = vmatprep.subr.mxu0 0.0
        %4641 = vmatpush2.msra.mxu0 0.0
        %4642 = vmatprep.subr.mxu0 0.0
        %4643 = vmatpush2.msra.mxu0 0.0
        %4644 = vmatprep.subr.mxu0 0.0
        %4645 = vmatpush2.msra.mxu0 0.0
        %4646 = vmatprep.subr.mxu0 0.0
        %4647 = vmatpush2.msra.mxu0 0.0
        %4648 = vmatprep.subr.mxu0 0.0
        %4649 = vmatpush2.msra.mxu0 0.0
        %4650 = vmatprep.mubr.f32.mxu0 0.0
        %4651 = vmatmul.mubr.f32.gmra.mxu0 %v4584
        %v4652 = vpop.f32.mrf.mxu0
        %v4653 = vadd.f32 0.0, %v4652
        %v4654 = vpop.f32.mrf.mxu0
        %4655 = vdwg.mxu0
        %v4657 = vsel %vm1623, %v4425, 0
        %4659 = vmatprep.subr.mxu0 0.0
        %4660 = vmatpush1.msra.mxu0 0.0
        %4661 = vmatprep.subr.mxu0 0.0
        %4662 = vmatpush1.msra.mxu0 0.0
        %4663 = vmatprep.subr.mxu0 0.0
        %4664 = vmatpush1.msra.mxu0 0.0
        %4665 = vmatprep.subr.mxu0 0.0
        %4666 = vmatpush1.msra.mxu0 0.0
        %4667 = vmatprep.subr.mxu0 0.0
        %4668 = vmatpush1.msra.mxu0 0.0
        %4669 = vmatprep.subr.mxu0 0.0
        %4670 = vmatpush1.msra.mxu0 0.0
        %4671 = vmatprep.subr.mxu0 0.0
        %4672 = vmatpush1.msra.mxu0 0.0
        %4673 = vmatprep.subr.mxu0 0.0
        %4674 = vmatpush1.msra.mxu0 0.0
        %4675 = vmatprep.subr.mxu0 0.0
        %4676 = vmatpush1.msra.mxu0 0.0
        %4677 = vmatprep.subr.mxu0 0.0
        %4678 = vmatpush1.msra.mxu0 0.0
        %4679 = vmatprep.subr.mxu0 0.0
        %4680 = vmatpush1.msra.mxu0 0.0
        %4681 = vmatprep.subr.mxu0 0.0
        %4682 = vmatpush1.msra.mxu0 0.0
        %4683 = vmatprep.subr.mxu0 0.0
        %4684 = vmatpush1.msra.mxu0 0.0
        %4685 = vmatprep.subr.mxu0 0.0
        %4686 = vmatpush1.msra.mxu0 0.0
        %4687 = vmatprep.subr.mxu0 0.0
        %4688 = vmatpush1.msra.mxu0 %v4507
        %4689 = vmatprep.subr.mxu0 0.0
        %4690 = vmatpush1.msra.mxu0 %v4506
        %4691 = vmatprep.subr.mxu0 0.0
        %4692 = vmatpush2.msra.mxu0 0.0
        %4693 = vmatprep.subr.mxu0 0.0
        %4694 = vmatpush2.msra.mxu0 0.0
        %4695 = vmatprep.subr.mxu0 0.0
        %4696 = vmatpush2.msra.mxu0 0.0
        %4697 = vmatprep.subr.mxu0 0.0
        %4698 = vmatpush2.msra.mxu0 0.0
        %4699 = vmatprep.subr.mxu0 0.0
        %4700 = vmatpush2.msra.mxu0 0.0
        %4701 = vmatprep.subr.mxu0 0.0
        %4702 = vmatpush2.msra.mxu0 0.0
        %4703 = vmatprep.subr.mxu0 0.0
        %4704 = vmatpush2.msra.mxu0 0.0
        %4705 = vmatprep.subr.mxu0 0.0
        %4706 = vmatpush2.msra.mxu0 0.0
        %4707 = vmatprep.subr.mxu0 0.0
        %4708 = vmatpush2.msra.mxu0 0.0
        %4709 = vmatprep.subr.mxu0 0.0
        %4710 = vmatpush2.msra.mxu0 0.0
        %4711 = vmatprep.subr.mxu0 0.0
        %4712 = vmatpush2.msra.mxu0 0.0
        %4713 = vmatprep.subr.mxu0 0.0
        %4714 = vmatpush2.msra.mxu0 0.0
        %4715 = vmatprep.subr.mxu0 0.0
        %4716 = vmatpush2.msra.mxu0 0.0
        %4717 = vmatprep.subr.mxu0 0.0
        %4718 = vmatpush2.msra.mxu0 0.0
        %4719 = vmatprep.subr.mxu0 0.0
        %4720 = vmatpush2.msra.mxu0 0.0
        %4721 = vmatprep.subr.mxu0 0.0
        %4722 = vmatpush2.msra.mxu0 0.0
        %4723 = vmatprep.mubr.f32.mxu0 0.0
        %4724 = vmatmul.mubr.f32.gmra.mxu0 %v4657
        %v4725 = vpop.f32.mrf.mxu0
        %v4726 = vadd.f32 0.0, %v4725
        %v4727 = vpop.f32.mrf.mxu0
        %4728 = vdwg.mxu0
        %v4730 = vsel %vm1623, %v4498, 0
        %4732 = vmatprep.subr.mxu0 0.0
        %4733 = vmatpush1.msra.mxu0 0.0
        %4734 = vmatprep.subr.mxu0 0.0
        %4735 = vmatpush1.msra.mxu0 0.0
        %4736 = vmatprep.subr.mxu0 0.0
        %4737 = vmatpush1.msra.mxu0 0.0
        %4738 = vmatprep.subr.mxu0 0.0
        %4739 = vmatpush1.msra.mxu0 0.0
        %4740 = vmatprep.subr.mxu0 0.0
        %4741 = vmatpush1.msra.mxu0 0.0
        %4742 = vmatprep.subr.mxu0 0.0
        %4743 = vmatpush1.msra.mxu0 0.0
        %4744 = vmatprep.subr.mxu0 0.0
        %4745 = vmatpush1.msra.mxu0 0.0
        %4746 = vmatprep.subr.mxu0 0.0
        %4747 = vmatpush1.msra.mxu0 0.0
        %4748 = vmatprep.subr.mxu0 0.0
        %4749 = vmatpush1.msra.mxu0 0.0
        %4750 = vmatprep.subr.mxu0 0.0
        %4751 = vmatpush1.msra.mxu0 0.0
        %4752 = vmatprep.subr.mxu0 0.0
        %4753 = vmatpush1.msra.mxu0 0.0
        %4754 = vmatprep.subr.mxu0 0.0
        %4755 = vmatpush1.msra.mxu0 0.0
        %4756 = vmatprep.subr.mxu0 0.0
        %4757 = vmatpush1.msra.mxu0 0.0
        %4758 = vmatprep.subr.mxu0 0.0
        %4759 = vmatpush1.msra.mxu0 0.0
        %4760 = vmatprep.subr.mxu0 0.0
        %4761 = vmatpush1.msra.mxu0 %v4509
        %4762 = vmatprep.subr.mxu0 0.0
        %4763 = vmatpush1.msra.mxu0 %v4508
        %4764 = vmatprep.subr.mxu0 0.0
        %4765 = vmatpush2.msra.mxu0 0.0
        %4766 = vmatprep.subr.mxu0 0.0
        %4767 = vmatpush2.msra.mxu0 0.0
        %4768 = vmatprep.subr.mxu0 0.0
        %4769 = vmatpush2.msra.mxu0 0.0
        %4770 = vmatprep.subr.mxu0 0.0
        %4771 = vmatpush2.msra.mxu0 0.0
        %4772 = vmatprep.subr.mxu0 0.0
        %4773 = vmatpush2.msra.mxu0 0.0
        %4774 = vmatprep.subr.mxu0 0.0
        %4775 = vmatpush2.msra.mxu0 0.0
        %4776 = vmatprep.subr.mxu0 0.0
        %4777 = vmatpush2.msra.mxu0 0.0
        %4778 = vmatprep.subr.mxu0 0.0
        %4779 = vmatpush2.msra.mxu0 0.0
        %4780 = vmatprep.subr.mxu0 0.0
        %4781 = vmatpush2.msra.mxu0 0.0
        %4782 = vmatprep.subr.mxu0 0.0
        %4783 = vmatpush2.msra.mxu0 0.0
        %4784 = vmatprep.subr.mxu0 0.0
        %4785 = vmatpush2.msra.mxu0 0.0
        %4786 = vmatprep.subr.mxu0 0.0
        %4787 = vmatpush2.msra.mxu0 0.0
        %4788 = vmatprep.subr.mxu0 0.0
        %4789 = vmatpush2.msra.mxu0 0.0
        %4790 = vmatprep.subr.mxu0 0.0
        %4791 = vmatpush2.msra.mxu0 0.0
        %4792 = vmatprep.subr.mxu0 0.0
        %4793 = vmatpush2.msra.mxu0 0.0
        %4794 = vmatprep.subr.mxu0 0.0
        %4795 = vmatpush2.msra.mxu0 0.0
        %4796 = vmatprep.mubr.f32.mxu0 0.0
        %4797 = vmatmul.mubr.f32.gmra.mxu0 %v4730
        %v4798 = vpop.f32.mrf.mxu0
        %v4799 = vadd.f32 0.0, %v4798
        %v4800 = vpop.f32.mrf.mxu0
        %4801 = vdwg.mxu0
        %v4802 = vsel %vm659, %v4580, 0.0
        %v4803 = vsel %vm659, %v4653, 0.0
        %v4804 = vadd.f32 %v4802, %v4803
        %v4805 = vsel %vm659, %v4726, 0.0
        %v4806 = vadd.f32 %v4804, %v4805
        %v4807 = vsel %vm659, %v4799, 0.0
        %v4808 = vadd.f32 %v4806, %v4807
        %s4809 = scalar_lea.vmem %s8, 1
        %v4810 = vld [vmem:[%s4809] sm:$0x1]
        %v4812 = vlaneseq
        %v4813 = vshrl.u32 %v4812, 7
        %v4814 = vsub.s32 0, %v4813
        %v4815 = vrot.slane %v4810, %v4814
        %v4817 = vadd.f32 %v4808, %v4815
        %v4818 = vadd.f32 %v2827, %v4817
        %s4819 = scalar_lea.vmem %s9, 1
        %v4820 = vld [vmem:[%s4819] sm:$0x1]
        %s4821 = scalar_lea.vmem %s10, 1
        %v4822 = vld [vmem:[%s4821] sm:$0x1]
        %v4823 = vsel %vm659, %v4818, 0.0
        %4824 = vadd.xlane.f32.xlu0 %v4823
        %v4825 = vpop.xlane.xlu0 %4824
        %v4826 = vmul.f32 %v4825, %v2590
        %v4827 = vsub.f32 %v4818, %v4826
        %v4828 = vmul.f32 %v4827, %v4827
        %v4829 = vsel %vm659, %v4828, 0.0
        %4830 = vadd.xlane.f32.xlu0 %v4829
        %v4831 = vpop.xlane.xlu0 %4830
        %v4832 = vmul.f32 %v4831, %v2590
        %v4833 = vadd.f32 %v4832, 1e-05
        %v4834 = vrsqrt.pop %v4833
        %v4835 = vmul.f32 %v4827, %v4834
        %v4837 = vlaneseq
        %v4838 = vshrl.u32 %v4837, 7
        %v4839 = vsub.s32 0, %v4838
        %v4840 = vrot.slane %v4820, %v4839
        %v4842 = vmul.f32 %v4835, %v4840
        %v4844 = vlaneseq
        %v4845 = vshrl.u32 %v4844, 7
        %v4846 = vsub.s32 0, %v4845
        %v4847 = vrot.slane %v4822, %v4846
        %v4849 = vadd.f32 %v4842, %v4847
        %s4850 = scalar_lea.vmem %s13, 64
        %v4851 = vld [vmem:[%s4850] sm:$0xff]
        %v4852 = vld [vmem:[%s4850 + $0x8] sm:$0xff]
        %v4853 = vld [vmem:[%s4850 + $0x10] sm:$0xff]
        %v4854 = vld [vmem:[%s4850 + $0x18] sm:$0xff]
        %v4855 = vld [vmem:[%s4850 + $0x20] sm:$0xff]
        %v4856 = vld [vmem:[%s4850 + $0x28] sm:$0xff]
        %v4857 = vld [vmem:[%s4850 + $0x30] sm:$0xff]
        %v4858 = vld [vmem:[%s4850 + $0x38] sm:$0xff]
        %s4859 = scalar_lea.vmem %s14, 1
        %v4860 = vld [vmem:[%s4859] sm:$0x1]
        %v4862 = vlaneseq
        %v4863 = vshrl.u32 %v4862, 7
        %v4864 = vsub.s32 0, %v4863
        %v4865 = vrot.slane %v4860, %v4864
        %v4868 = vsel %vm659, %v4849, 0
        %4870 = vmatprep.subr.mxu0 0.0
        %4871 = vmatpush1.msra.mxu0 0.0
        %4872 = vmatprep.subr.mxu0 0.0
        %4873 = vmatpush1.msra.mxu0 0.0
        %4874 = vmatprep.subr.mxu0 0.0
        %4875 = vmatpush1.msra.mxu0 0.0
        %4876 = vmatprep.subr.mxu0 0.0
        %4877 = vmatpush1.msra.mxu0 0.0
        %4878 = vmatprep.subr.mxu0 0.0
        %4879 = vmatpush1.msra.mxu0 0.0
        %4880 = vmatprep.subr.mxu0 0.0
        %4881 = vmatpush1.msra.mxu0 0.0
        %4882 = vmatprep.subr.mxu0 0.0
        %4883 = vmatpush1.msra.mxu0 0.0
        %4884 = vmatprep.subr.mxu0 0.0
        %4885 = vmatpush1.msra.mxu0 0.0
        %4886 = vmatprep.subr.mxu0 0.0
        %4887 = vmatpush1.msra.mxu0 %v4858
        %4888 = vmatprep.subr.mxu0 0.0
        %4889 = vmatpush1.msra.mxu0 %v4857
        %4890 = vmatprep.subr.mxu0 0.0
        %4891 = vmatpush1.msra.mxu0 %v4856
        %4892 = vmatprep.subr.mxu0 0.0
        %4893 = vmatpush1.msra.mxu0 %v4855
        %4894 = vmatprep.subr.mxu0 0.0
        %4895 = vmatpush1.msra.mxu0 %v4854
        %4896 = vmatprep.subr.mxu0 0.0
        %4897 = vmatpush1.msra.mxu0 %v4853
        %4898 = vmatprep.subr.mxu0 0.0
        %4899 = vmatpush1.msra.mxu0 %v4852
        %4900 = vmatprep.subr.mxu0 0.0
        %4901 = vmatpush1.msra.mxu0 %v4851
        %4902 = vmatprep.subr.mxu0 0.0
        %4903 = vmatpush2.msra.mxu0 0.0
        %4904 = vmatprep.subr.mxu0 0.0
        %4905 = vmatpush2.msra.mxu0 0.0
        %4906 = vmatprep.subr.mxu0 0.0
        %4907 = vmatpush2.msra.mxu0 0.0
        %4908 = vmatprep.subr.mxu0 0.0
        %4909 = vmatpush2.msra.mxu0 0.0
        %4910 = vmatprep.subr.mxu0 0.0
        %4911 = vmatpush2.msra.mxu0 0.0
        %4912 = vmatprep.subr.mxu0 0.0
        %4913 = vmatpush2.msra.mxu0 0.0
        %4914 = vmatprep.subr.mxu0 0.0
        %4915 = vmatpush2.msra.mxu0 0.0
        %4916 = vmatprep.subr.mxu0 0.0
        %4917 = vmatpush2.msra.mxu0 0.0
        %4918 = vmatprep.subr.mxu0 0.0
        %4919 = vmatpush2.msra.mxu0 0.0
        %4920 = vmatprep.subr.mxu0 0.0
        %4921 = vmatpush2.msra.mxu0 0.0
        %4922 = vmatprep.subr.mxu0 0.0
        %4923 = vmatpush2.msra.mxu0 0.0
        %4924 = vmatprep.subr.mxu0 0.0
        %4925 = vmatpush2.msra.mxu0 0.0
        %4926 = vmatprep.subr.mxu0 0.0
        %4927 = vmatpush2.msra.mxu0 0.0
        %4928 = vmatprep.subr.mxu0 0.0
        %4929 = vmatpush2.msra.mxu0 0.0
        %4930 = vmatprep.subr.mxu0 0.0
        %4931 = vmatpush2.msra.mxu0 0.0
        %4932 = vmatprep.subr.mxu0 0.0
        %4933 = vmatpush2.msra.mxu0 0.0
        %4934 = vmatprep.mubr.f32.mxu0 0.0
        %4935 = vmatmul.mubr.f32.gmra.mxu0 %v4868
        %v4936 = vpop.f32.mrf.mxu0
        %v4937 = vadd.f32 %v4865, %v4936
        %v4938 = vpop.f32.mrf.mxu0
        %4939 = vdwg.mxu0
        %v4940 = vmax.f32 %v4937, 0.0
        %s4941 = scalar_lea.vmem %s15, 128
        %v4942 = vld [vmem:[%s4941] sm:$0xff]
        %v4943 = vld [vmem:[%s4941 + $0x8] sm:$0xff]
        %v4944 = vld [vmem:[%s4941 + $0x10] sm:$0xff]
        %v4945 = vld [vmem:[%s4941 + $0x18] sm:$0xff]
        %v4946 = vld [vmem:[%s4941 + $0x20] sm:$0xff]
        %v4947 = vld [vmem:[%s4941 + $0x28] sm:$0xff]
        %v4948 = vld [vmem:[%s4941 + $0x30] sm:$0xff]
        %v4949 = vld [vmem:[%s4941 + $0x38] sm:$0xff]
        %v4950 = vld [vmem:[%s4941 + $0x40] sm:$0xff]
        %v4951 = vld [vmem:[%s4941 + $0x48] sm:$0xff]
        %v4952 = vld [vmem:[%s4941 + $0x50] sm:$0xff]
        %v4953 = vld [vmem:[%s4941 + $0x58] sm:$0xff]
        %v4954 = vld [vmem:[%s4941 + $0x60] sm:$0xff]
        %v4955 = vld [vmem:[%s4941 + $0x68] sm:$0xff]
        %v4956 = vld [vmem:[%s4941 + $0x70] sm:$0xff]
        %v4957 = vld [vmem:[%s4941 + $0x78] sm:$0xff]
        %4958 = vmatprep.subr.mxu0 0.0
        %4959 = vmatpush1.msra.mxu0 %v4957
        %4960 = vmatprep.subr.mxu0 0.0
        %4961 = vmatpush1.msra.mxu0 %v4956
        %4962 = vmatprep.subr.mxu0 0.0
        %4963 = vmatpush1.msra.mxu0 %v4955
        %4964 = vmatprep.subr.mxu0 0.0
        %4965 = vmatpush1.msra.mxu0 %v4954
        %4966 = vmatprep.subr.mxu0 0.0
        %4967 = vmatpush1.msra.mxu0 %v4953
        %4968 = vmatprep.subr.mxu0 0.0
        %4969 = vmatpush1.msra.mxu0 %v4952
        %4970 = vmatprep.subr.mxu0 0.0
        %4971 = vmatpush1.msra.mxu0 %v4951
        %4972 = vmatprep.subr.mxu0 0.0
        %4973 = vmatpush1.msra.mxu0 %v4950
        %4974 = vmatprep.subr.mxu0 0.0
        %4975 = vmatpush1.msra.mxu0 %v4949
        %4976 = vmatprep.subr.mxu0 0.0
        %4977 = vmatpush1.msra.mxu0 %v4948
        %4978 = vmatprep.subr.mxu0 0.0
        %4979 = vmatpush1.msra.mxu0 %v4947
        %4980 = vmatprep.subr.mxu0 0.0
        %4981 = vmatpush1.msra.mxu0 %v4946
        %4982 = vmatprep.subr.mxu0 0.0
        %4983 = vmatpush1.msra.mxu0 %v4945
        %4984 = vmatprep.subr.mxu0 0.0
        %4985 = vmatpush1.msra.mxu0 %v4944
        %4986 = vmatprep.subr.mxu0 0.0
        %4987 = vmatpush1.msra.mxu0 %v4943
        %4988 = vmatprep.subr.mxu0 0.0
        %4989 = vmatpush1.msra.mxu0 %v4942
        %4990 = vmatprep.subr.mxu0 0.0
        %4991 = vmatpush2.msra.mxu0 0.0
        %4992 = vmatprep.subr.mxu0 0.0
        %4993 = vmatpush2.msra.mxu0 0.0
        %4994 = vmatprep.subr.mxu0 0.0
        %4995 = vmatpush2.msra.mxu0 0.0
        %4996 = vmatprep.subr.mxu0 0.0
        %4997 = vmatpush2.msra.mxu0 0.0
        %4998 = vmatprep.subr.mxu0 0.0
        %4999 = vmatpush2.msra.mxu0 0.0
        %5000 = vmatprep.subr.mxu0 0.0
        %5001 = vmatpush2.msra.mxu0 0.0
        %5002 = vmatprep.subr.mxu0 0.0
        %5003 = vmatpush2.msra.mxu0 0.0
        %5004 = vmatprep.subr.mxu0 0.0
        %5005 = vmatpush2.msra.mxu0 0.0
        %5006 = vmatprep.subr.mxu0 0.0
        %5007 = vmatpush2.msra.mxu0 0.0
        %5008 = vmatprep.subr.mxu0 0.0
        %5009 = vmatpush2.msra.mxu0 0.0
        %5010 = vmatprep.subr.mxu0 0.0
        %5011 = vmatpush2.msra.mxu0 0.0
        %5012 = vmatprep.subr.mxu0 0.0
        %5013 = vmatpush2.msra.mxu0 0.0
        %5014 = vmatprep.subr.mxu0 0.0
        %5015 = vmatpush2.msra.mxu0 0.0
        %5016 = vmatprep.subr.mxu0 0.0
        %5017 = vmatpush2.msra.mxu0 0.0
        %5018 = vmatprep.subr.mxu0 0.0
        %5019 = vmatpush2.msra.mxu0 0.0
        %5020 = vmatprep.subr.mxu0 0.0
        %5021 = vmatpush2.msra.mxu0 0.0
        %5022 = vmatprep.mubr.f32.mxu0 0.0
        %5023 = vmatmul.mubr.f32.gmra.mxu0 %v4940
        %v5024 = vpop.f32.mrf.mxu0
        %v5025 = vadd.f32 0.0, %v5024
        %v5026 = vpop.f32.mrf.mxu0
        %5027 = vdwg.mxu0
        %v5028 = vadd.f32 %v4849, %v5025
        %s5029 = scalar_lea.vmem %s16, 1
        %v5030 = vld [vmem:[%s5029] sm:$0x1]
        %v5032 = vlaneseq
        %v5033 = vshrl.u32 %v5032, 7
        %v5034 = vsub.s32 0, %v5033
        %v5035 = vrot.slane %v5030, %v5034
        %v5037 = vadd.f32 %v5028, %v5035
        %s5038 = scalar_lea.vmem %s11, 1
        %v5039 = vld [vmem:[%s5038] sm:$0x1]
        %s5040 = scalar_lea.vmem %s12, 1
        %v5041 = vld [vmem:[%s5040] sm:$0x1]
        %v5042 = vsel %vm659, %v5037, 0.0
        %5043 = vadd.xlane.f32.xlu0 %v5042
        %v5044 = vpop.xlane.xlu0 %5043
        %v5045 = vmul.f32 %v5044, %v2590
        %v5046 = vsub.f32 %v5037, %v5045
        %v5047 = vmul.f32 %v5046, %v5046
        %v5048 = vsel %vm659, %v5047, 0.0
        %5049 = vadd.xlane.f32.xlu0 %v5048
        %v5050 = vpop.xlane.xlu0 %5049
        %v5051 = vmul.f32 %v5050, %v2590
        %v5052 = vadd.f32 %v5051, 1e-05
        %v5053 = vrsqrt.pop %v5052
        %v5054 = vmul.f32 %v5046, %v5053
        %v5056 = vlaneseq
        %v5057 = vshrl.u32 %v5056, 7
        %v5058 = vsub.s32 0, %v5057
        %v5059 = vrot.slane %v5039, %v5058
        %v5061 = vmul.f32 %v5054, %v5059
        %v5063 = vlaneseq
        %v5064 = vshrl.u32 %v5063, 7
        %v5065 = vsub.s32 0, %v5064
        %v5066 = vrot.slane %v5041, %v5065
        %v5068 = vadd.f32 %v5061, %v5066
        %s5069 = scalar_lea.vmem %s1, 512
        %v5070 = vld [vmem:[%s5069] sm:$0xff]
        %v5071 = vld [vmem:[%s5069 + $0x8] sm:$0xff]
        %v5072 = vld [vmem:[%s5069 + $0x10] sm:$0xff]
        %v5073 = vld [vmem:[%s5069 + $0x18] sm:$0xff]
        %v5074 = vld [vmem:[%s5069 + $0x20] sm:$0xff]
        %v5075 = vld [vmem:[%s5069 + $0x28] sm:$0xff]
        %v5076 = vld [vmem:[%s5069 + $0x30] sm:$0xff]
        %v5077 = vld [vmem:[%s5069 + $0x38] sm:$0xff]
        %v5078 = vld [vmem:[%s5069 + $0x40] sm:$0xff]
        %v5079 = vld [vmem:[%s5069 + $0x48] sm:$0xff]
        %v5080 = vld [vmem:[%s5069 + $0x50] sm:$0xff]
        %v5081 = vld [vmem:[%s5069 + $0x58] sm:$0xff]
        %v5082 = vld [vmem:[%s5069 + $0x60] sm:$0xff]
        %v5083 = vld [vmem:[%s5069 + $0x68] sm:$0xff]
        %v5084 = vld [vmem:[%s5069 + $0x70] sm:$0xff]
        %v5085 = vld [vmem:[%s5069 + $0x78] sm:$0xff]
        %v5086 = vld [vmem:[%s5069 + $0x80] sm:$0xff]
        %v5087 = vld [vmem:[%s5069 + $0x88] sm:$0xff]
        %v5088 = vld [vmem:[%s5069 + $0x90] sm:$0xff]
        %v5089 = vld [vmem:[%s5069 + $0x98] sm:$0xff]
        %v5090 = vld [vmem:[%s5069 + $0xa0] sm:$0xff]
        %v5091 = vld [vmem:[%s5069 + $0xa8] sm:$0xff]
        %v5092 = vld [vmem:[%s5069 + $0xb0] sm:$0xff]
        %v5093 = vld [vmem:[%s5069 + $0xb8] sm:$0xff]
        %v5094 = vld [vmem:[%s5069 + $0xc0] sm:$0xff]
        %v5095 = vld [vmem:[%s5069 + $0xc8] sm:$0xff]
        %v5096 = vld [vmem:[%s5069 + $0xd0] sm:$0xff]
        %v5097 = vld [vmem:[%s5069 + $0xd8] sm:$0xff]
        %v5098 = vld [vmem:[%s5069 + $0xe0] sm:$0xff]
        %v5099 = vld [vmem:[%s5069 + $0xe8] sm:$0xff]
        %v5100 = vld [vmem:[%s5069 + $0xf0] sm:$0xff]
        %v5101 = vld [vmem:[%s5069 + $0xf8] sm:$0xff]
        %s5102 = scalar_lea.vmem %s2, 8
        %v5103 = vld [vmem:[%s5102] sm:$0x1]
        %v5104 = vld [vmem:[%s5102 + $0x1] sm:$0x1]
        %v5105 = vld [vmem:[%s5102 + $0x2] sm:$0x1]
        %v5106 = vld [vmem:[%s5102 + $0x3] sm:$0x1]
        %v5111 = vlaneseq
        %v5112 = vshrl.u32 %v5111, 7
        %v5113 = vsub.s32 0, %v5112
        %v5114 = vrot.slane %v5103, %v5113
        %v5115 = vlaneseq
        %v5116 = vshrl.u32 %v5115, 7
        %v5117 = vsub.s32 0, %v5116
        %v5118 = vrot.slane %v5104, %v5117
        %v5119 = vlaneseq
        %v5120 = vshrl.u32 %v5119, 7
        %v5121 = vsub.s32 0, %v5120
        %v5122 = vrot.slane %v5105, %v5121
        %v5123 = vlaneseq
        %v5124 = vshrl.u32 %v5123, 7
        %v5125 = vsub.s32 0, %v5124
        %v5126 = vrot.slane %v5106, %v5125
        %v5132 = vsel %vm659, %v5068, 0
        %5134 = vmatprep.subr.mxu0 0.0
        %5135 = vmatpush1.msra.mxu0 0.0
        %5136 = vmatprep.subr.mxu0 0.0
        %5137 = vmatpush1.msra.mxu0 0.0
        %5138 = vmatprep.subr.mxu0 0.0
        %5139 = vmatpush1.msra.mxu0 0.0
        %5140 = vmatprep.subr.mxu0 0.0
        %5141 = vmatpush1.msra.mxu0 0.0
        %5142 = vmatprep.subr.mxu0 0.0
        %5143 = vmatpush1.msra.mxu0 0.0
        %5144 = vmatprep.subr.mxu0 0.0
        %5145 = vmatpush1.msra.mxu0 0.0
        %5146 = vmatprep.subr.mxu0 0.0
        %5147 = vmatpush1.msra.mxu0 0.0
        %5148 = vmatprep.subr.mxu0 0.0
        %5149 = vmatpush1.msra.mxu0 0.0
        %5150 = vmatprep.subr.mxu0 0.0
        %5151 = vmatpush1.msra.mxu0 %v5077
        %5152 = vmatprep.subr.mxu0 0.0
        %5153 = vmatpush1.msra.mxu0 %v5076
        %5154 = vmatprep.subr.mxu0 0.0
        %5155 = vmatpush1.msra.mxu0 %v5075
        %5156 = vmatprep.subr.mxu0 0.0
        %5157 = vmatpush1.msra.mxu0 %v5074
        %5158 = vmatprep.subr.mxu0 0.0
        %5159 = vmatpush1.msra.mxu0 %v5073
        %5160 = vmatprep.subr.mxu0 0.0
        %5161 = vmatpush1.msra.mxu0 %v5072
        %5162 = vmatprep.subr.mxu0 0.0
        %5163 = vmatpush1.msra.mxu0 %v5071
        %5164 = vmatprep.subr.mxu0 0.0
        %5165 = vmatpush1.msra.mxu0 %v5070
        %5166 = vmatprep.subr.mxu0 0.0
        %5167 = vmatpush2.msra.mxu0 0.0
        %5168 = vmatprep.subr.mxu0 0.0
        %5169 = vmatpush2.msra.mxu0 0.0
        %5170 = vmatprep.subr.mxu0 0.0
        %5171 = vmatpush2.msra.mxu0 0.0
        %5172 = vmatprep.subr.mxu0 0.0
        %5173 = vmatpush2.msra.mxu0 0.0
        %5174 = vmatprep.subr.mxu0 0.0
        %5175 = vmatpush2.msra.mxu0 0.0
        %5176 = vmatprep.subr.mxu0 0.0
        %5177 = vmatpush2.msra.mxu0 0.0
        %5178 = vmatprep.subr.mxu0 0.0
        %5179 = vmatpush2.msra.mxu0 0.0
        %5180 = vmatprep.subr.mxu0 0.0
        %5181 = vmatpush2.msra.mxu0 0.0
        %5182 = vmatprep.subr.mxu0 0.0
        %5183 = vmatpush2.msra.mxu0 0.0
        %5184 = vmatprep.subr.mxu0 0.0
        %5185 = vmatpush2.msra.mxu0 0.0
        %5186 = vmatprep.subr.mxu0 0.0
        %5187 = vmatpush2.msra.mxu0 0.0
        %5188 = vmatprep.subr.mxu0 0.0
        %5189 = vmatpush2.msra.mxu0 0.0
        %5190 = vmatprep.subr.mxu0 0.0
        %5191 = vmatpush2.msra.mxu0 0.0
        %5192 = vmatprep.subr.mxu0 0.0
        %5193 = vmatpush2.msra.mxu0 0.0
        %5194 = vmatprep.subr.mxu0 0.0
        %5195 = vmatpush2.msra.mxu0 0.0
        %5196 = vmatprep.subr.mxu0 0.0
        %5197 = vmatpush2.msra.mxu0 0.0
        %5198 = vmatprep.mubr.f32.mxu0 0.0
        %5199 = vmatmul.mubr.f32.gmra.mxu0 %v5132
        %v5200 = vpop.f32.mrf.mxu0
        %v5201 = vadd.f32 %v5114, %v5200
        %v5202 = vpop.f32.mrf.mxu0
        %5203 = vdwg.mxu0
        %5204 = vmatprep.subr.mxu0 0.0
        %5205 = vmatpush1.msra.mxu0 0.0
        %5206 = vmatprep.subr.mxu0 0.0
        %5207 = vmatpush1.msra.mxu0 0.0
        %5208 = vmatprep.subr.mxu0 0.0
        %5209 = vmatpush1.msra.mxu0 0.0
        %5210 = vmatprep.subr.mxu0 0.0
        %5211 = vmatpush1.msra.mxu0 0.0
        %5212 = vmatprep.subr.mxu0 0.0
        %5213 = vmatpush1.msra.mxu0 0.0
        %5214 = vmatprep.subr.mxu0 0.0
        %5215 = vmatpush1.msra.mxu0 0.0
        %5216 = vmatprep.subr.mxu0 0.0
        %5217 = vmatpush1.msra.mxu0 0.0
        %5218 = vmatprep.subr.mxu0 0.0
        %5219 = vmatpush1.msra.mxu0 0.0
        %5220 = vmatprep.subr.mxu0 0.0
        %5221 = vmatpush1.msra.mxu0 %v5085
        %5222 = vmatprep.subr.mxu0 0.0
        %5223 = vmatpush1.msra.mxu0 %v5084
        %5224 = vmatprep.subr.mxu0 0.0
        %5225 = vmatpush1.msra.mxu0 %v5083
        %5226 = vmatprep.subr.mxu0 0.0
        %5227 = vmatpush1.msra.mxu0 %v5082
        %5228 = vmatprep.subr.mxu0 0.0
        %5229 = vmatpush1.msra.mxu0 %v5081
        %5230 = vmatprep.subr.mxu0 0.0
        %5231 = vmatpush1.msra.mxu0 %v5080
        %5232 = vmatprep.subr.mxu0 0.0
        %5233 = vmatpush1.msra.mxu0 %v5079
        %5234 = vmatprep.subr.mxu0 0.0
        %5235 = vmatpush1.msra.mxu0 %v5078
        %5236 = vmatprep.subr.mxu0 0.0
        %5237 = vmatpush2.msra.mxu0 0.0
        %5238 = vmatprep.subr.mxu0 0.0
        %5239 = vmatpush2.msra.mxu0 0.0
        %5240 = vmatprep.subr.mxu0 0.0
        %5241 = vmatpush2.msra.mxu0 0.0
        %5242 = vmatprep.subr.mxu0 0.0
        %5243 = vmatpush2.msra.mxu0 0.0
        %5244 = vmatprep.subr.mxu0 0.0
        %5245 = vmatpush2.msra.mxu0 0.0
        %5246 = vmatprep.subr.mxu0 0.0
        %5247 = vmatpush2.msra.mxu0 0.0
        %5248 = vmatprep.subr.mxu0 0.0
        %5249 = vmatpush2.msra.mxu0 0.0
        %5250 = vmatprep.subr.mxu0 0.0
        %5251 = vmatpush2.msra.mxu0 0.0
        %5252 = vmatprep.subr.mxu0 0.0
        %5253 = vmatpush2.msra.mxu0 0.0
        %5254 = vmatprep.subr.mxu0 0.0
        %5255 = vmatpush2.msra.mxu0 0.0
        %5256 = vmatprep.subr.mxu0 0.0
        %5257 = vmatpush2.msra.mxu0 0.0
        %5258 = vmatprep.subr.mxu0 0.0
        %5259 = vmatpush2.msra.mxu0 0.0
        %5260 = vmatprep.subr.mxu0 0.0
        %5261 = vmatpush2.msra.mxu0 0.0
        %5262 = vmatprep.subr.mxu0 0.0
        %5263 = vmatpush2.msra.mxu0 0.0
        %5264 = vmatprep.subr.mxu0 0.0
        %5265 = vmatpush2.msra.mxu0 0.0
        %5266 = vmatprep.subr.mxu0 0.0
        %5267 = vmatpush2.msra.mxu0 0.0
        %5268 = vmatprep.mubr.f32.mxu0 0.0
        %5269 = vmatmul.mubr.f32.gmra.mxu0 %v5132
        %v5270 = vpop.f32.mrf.mxu0
        %v5271 = vadd.f32 %v5118, %v5270
        %v5272 = vpop.f32.mrf.mxu0
        %5273 = vdwg.mxu0
        %5274 = vmatprep.subr.mxu0 0.0
        %5275 = vmatpush1.msra.mxu0 0.0
        %5276 = vmatprep.subr.mxu0 0.0
        %5277 = vmatpush1.msra.mxu0 0.0
        %5278 = vmatprep.subr.mxu0 0.0
        %5279 = vmatpush1.msra.mxu0 0.0
        %5280 = vmatprep.subr.mxu0 0.0
        %5281 = vmatpush1.msra.mxu0 0.0
        %5282 = vmatprep.subr.mxu0 0.0
        %5283 = vmatpush1.msra.mxu0 0.0
        %5284 = vmatprep.subr.mxu0 0.0
        %5285 = vmatpush1.msra.mxu0 0.0
        %5286 = vmatprep.subr.mxu0 0.0
        %5287 = vmatpush1.msra.mxu0 0.0
        %5288 = vmatprep.subr.mxu0 0.0
        %5289 = vmatpush1.msra.mxu0 0.0
        %5290 = vmatprep.subr.mxu0 0.0
        %5291 = vmatpush1.msra.mxu0 %v5093
        %5292 = vmatprep.subr.mxu0 0.0
        %5293 = vmatpush1.msra.mxu0 %v5092
        %5294 = vmatprep.subr.mxu0 0.0
        %5295 = vmatpush1.msra.mxu0 %v5091
        %5296 = vmatprep.subr.mxu0 0.0
        %5297 = vmatpush1.msra.mxu0 %v5090
        %5298 = vmatprep.subr.mxu0 0.0
        %5299 = vmatpush1.msra.mxu0 %v5089
        %5300 = vmatprep.subr.mxu0 0.0
        %5301 = vmatpush1.msra.mxu0 %v5088
        %5302 = vmatprep.subr.mxu0 0.0
        %5303 = vmatpush1.msra.mxu0 %v5087
        %5304 = vmatprep.subr.mxu0 0.0
        %5305 = vmatpush1.msra.mxu0 %v5086
        %5306 = vmatprep.subr.mxu0 0.0
        %5307 = vmatpush2.msra.mxu0 0.0
        %5308 = vmatprep.subr.mxu0 0.0
        %5309 = vmatpush2.msra.mxu0 0.0
        %5310 = vmatprep.subr.mxu0 0.0
        %5311 = vmatpush2.msra.mxu0 0.0
        %5312 = vmatprep.subr.mxu0 0.0
        %5313 = vmatpush2.msra.mxu0 0.0
        %5314 = vmatprep.subr.mxu0 0.0
        %5315 = vmatpush2.msra.mxu0 0.0
        %5316 = vmatprep.subr.mxu0 0.0
        %5317 = vmatpush2.msra.mxu0 0.0
        %5318 = vmatprep.subr.mxu0 0.0
        %5319 = vmatpush2.msra.mxu0 0.0
        %5320 = vmatprep.subr.mxu0 0.0
        %5321 = vmatpush2.msra.mxu0 0.0
        %5322 = vmatprep.subr.mxu0 0.0
        %5323 = vmatpush2.msra.mxu0 0.0
        %5324 = vmatprep.subr.mxu0 0.0
        %5325 = vmatpush2.msra.mxu0 0.0
        %5326 = vmatprep.subr.mxu0 0.0
        %5327 = vmatpush2.msra.mxu0 0.0
        %5328 = vmatprep.subr.mxu0 0.0
        %5329 = vmatpush2.msra.mxu0 0.0
        %5330 = vmatprep.subr.mxu0 0.0
        %5331 = vmatpush2.msra.mxu0 0.0
        %5332 = vmatprep.subr.mxu0 0.0
        %5333 = vmatpush2.msra.mxu0 0.0
        %5334 = vmatprep.subr.mxu0 0.0
        %5335 = vmatpush2.msra.mxu0 0.0
        %5336 = vmatprep.subr.mxu0 0.0
        %5337 = vmatpush2.msra.mxu0 0.0
        %5338 = vmatprep.mubr.f32.mxu0 0.0
        %5339 = vmatmul.mubr.f32.gmra.mxu0 %v5132
        %v5340 = vpop.f32.mrf.mxu0
        %v5341 = vadd.f32 %v5122, %v5340
        %v5342 = vpop.f32.mrf.mxu0
        %5343 = vdwg.mxu0
        %5344 = vmatprep.subr.mxu0 0.0
        %5345 = vmatpush1.msra.mxu0 0.0
        %5346 = vmatprep.subr.mxu0 0.0
        %5347 = vmatpush1.msra.mxu0 0.0
        %5348 = vmatprep.subr.mxu0 0.0
        %5349 = vmatpush1.msra.mxu0 0.0
        %5350 = vmatprep.subr.mxu0 0.0
        %5351 = vmatpush1.msra.mxu0 0.0
        %5352 = vmatprep.subr.mxu0 0.0
        %5353 = vmatpush1.msra.mxu0 0.0
        %5354 = vmatprep.subr.mxu0 0.0
        %5355 = vmatpush1.msra.mxu0 0.0
        %5356 = vmatprep.subr.mxu0 0.0
        %5357 = vmatpush1.msra.mxu0 0.0
        %5358 = vmatprep.subr.mxu0 0.0
        %5359 = vmatpush1.msra.mxu0 0.0
        %5360 = vmatprep.subr.mxu0 0.0
        %5361 = vmatpush1.msra.mxu0 %v5101
        %5362 = vmatprep.subr.mxu0 0.0
        %5363 = vmatpush1.msra.mxu0 %v5100
        %5364 = vmatprep.subr.mxu0 0.0
        %5365 = vmatpush1.msra.mxu0 %v5099
        %5366 = vmatprep.subr.mxu0 0.0
        %5367 = vmatpush1.msra.mxu0 %v5098
        %5368 = vmatprep.subr.mxu0 0.0
        %5369 = vmatpush1.msra.mxu0 %v5097
        %5370 = vmatprep.subr.mxu0 0.0
        %5371 = vmatpush1.msra.mxu0 %v5096
        %5372 = vmatprep.subr.mxu0 0.0
        %5373 = vmatpush1.msra.mxu0 %v5095
        %5374 = vmatprep.subr.mxu0 0.0
        %5375 = vmatpush1.msra.mxu0 %v5094
        %5376 = vmatprep.subr.mxu0 0.0
        %5377 = vmatpush2.msra.mxu0 0.0
        %5378 = vmatprep.subr.mxu0 0.0
        %5379 = vmatpush2.msra.mxu0 0.0
        %5380 = vmatprep.subr.mxu0 0.0
        %5381 = vmatpush2.msra.mxu0 0.0
        %5382 = vmatprep.subr.mxu0 0.0
        %5383 = vmatpush2.msra.mxu0 0.0
        %5384 = vmatprep.subr.mxu0 0.0
        %5385 = vmatpush2.msra.mxu0 0.0
        %5386 = vmatprep.subr.mxu0 0.0
        %5387 = vmatpush2.msra.mxu0 0.0
        %5388 = vmatprep.subr.mxu0 0.0
        %5389 = vmatpush2.msra.mxu0 0.0
        %5390 = vmatprep.subr.mxu0 0.0
        %5391 = vmatpush2.msra.mxu0 0.0
        %5392 = vmatprep.subr.mxu0 0.0
        %5393 = vmatpush2.msra.mxu0 0.0
        %5394 = vmatprep.subr.mxu0 0.0
        %5395 = vmatpush2.msra.mxu0 0.0
        %5396 = vmatprep.subr.mxu0 0.0
        %5397 = vmatpush2.msra.mxu0 0.0
        %5398 = vmatprep.subr.mxu0 0.0
        %5399 = vmatpush2.msra.mxu0 0.0
        %5400 = vmatprep.subr.mxu0 0.0
        %5401 = vmatpush2.msra.mxu0 0.0
        %5402 = vmatprep.subr.mxu0 0.0
        %5403 = vmatpush2.msra.mxu0 0.0
        %5404 = vmatprep.subr.mxu0 0.0
        %5405 = vmatpush2.msra.mxu0 0.0
        %5406 = vmatprep.subr.mxu0 0.0
        %5407 = vmatpush2.msra.mxu0 0.0
        %5408 = vmatprep.mubr.f32.mxu0 0.0
        %5409 = vmatmul.mubr.f32.gmra.mxu0 %v5132
        %v5410 = vpop.f32.mrf.mxu0
        %v5411 = vadd.f32 %v5126, %v5410
        %v5412 = vpop.f32.mrf.mxu0
        %5413 = vdwg.mxu0
        %s5414 = scalar_lea.vmem %s3, 512
        %v5415 = vld [vmem:[%s5414] sm:$0xff]
        %v5416 = vld [vmem:[%s5414 + $0x8] sm:$0xff]
        %v5417 = vld [vmem:[%s5414 + $0x10] sm:$0xff]
        %v5418 = vld [vmem:[%s5414 + $0x18] sm:$0xff]
        %v5419 = vld [vmem:[%s5414 + $0x20] sm:$0xff]
        %v5420 = vld [vmem:[%s5414 + $0x28] sm:$0xff]
        %v5421 = vld [vmem:[%s5414 + $0x30] sm:$0xff]
        %v5422 = vld [vmem:[%s5414 + $0x38] sm:$0xff]
        %v5423 = vld [vmem:[%s5414 + $0x40] sm:$0xff]
        %v5424 = vld [vmem:[%s5414 + $0x48] sm:$0xff]
        %v5425 = vld [vmem:[%s5414 + $0x50] sm:$0xff]
        %v5426 = vld [vmem:[%s5414 + $0x58] sm:$0xff]
        %v5427 = vld [vmem:[%s5414 + $0x60] sm:$0xff]
        %v5428 = vld [vmem:[%s5414 + $0x68] sm:$0xff]
        %v5429 = vld [vmem:[%s5414 + $0x70] sm:$0xff]
        %v5430 = vld [vmem:[%s5414 + $0x78] sm:$0xff]
        %v5431 = vld [vmem:[%s5414 + $0x80] sm:$0xff]
        %v5432 = vld [vmem:[%s5414 + $0x88] sm:$0xff]
        %v5433 = vld [vmem:[%s5414 + $0x90] sm:$0xff]
        %v5434 = vld [vmem:[%s5414 + $0x98] sm:$0xff]
        %v5435 = vld [vmem:[%s5414 + $0xa0] sm:$0xff]
        %v5436 = vld [vmem:[%s5414 + $0xa8] sm:$0xff]
        %v5437 = vld [vmem:[%s5414 + $0xb0] sm:$0xff]
        %v5438 = vld [vmem:[%s5414 + $0xb8] sm:$0xff]
        %v5439 = vld [vmem:[%s5414 + $0xc0] sm:$0xff]
        %v5440 = vld [vmem:[%s5414 + $0xc8] sm:$0xff]
        %v5441 = vld [vmem:[%s5414 + $0xd0] sm:$0xff]
        %v5442 = vld [vmem:[%s5414 + $0xd8] sm:$0xff]
        %v5443 = vld [vmem:[%s5414 + $0xe0] sm:$0xff]
        %v5444 = vld [vmem:[%s5414 + $0xe8] sm:$0xff]
        %v5445 = vld [vmem:[%s5414 + $0xf0] sm:$0xff]
        %v5446 = vld [vmem:[%s5414 + $0xf8] sm:$0xff]
        %s5447 = scalar_lea.vmem %s4, 8
        %v5448 = vld [vmem:[%s5447] sm:$0x1]
        %v5449 = vld [vmem:[%s5447 + $0x1] sm:$0x1]
        %v5450 = vld [vmem:[%s5447 + $0x2] sm:$0x1]
        %v5451 = vld [vmem:[%s5447 + $0x3] sm:$0x1]
        %v5456 = vlaneseq
        %v5457 = vshrl.u32 %v5456, 7
        %v5458 = vsub.s32 0, %v5457
        %v5459 = vrot.slane %v5448, %v5458
        %v5460 = vlaneseq
        %v5461 = vshrl.u32 %v5460, 7
        %v5462 = vsub.s32 0, %v5461
        %v5463 = vrot.slane %v5449, %v5462
        %v5464 = vlaneseq
        %v5465 = vshrl.u32 %v5464, 7
        %v5466 = vsub.s32 0, %v5465
        %v5467 = vrot.slane %v5450, %v5466
        %v5468 = vlaneseq
        %v5469 = vshrl.u32 %v5468, 7
        %v5470 = vsub.s32 0, %v5469
        %v5471 = vrot.slane %v5451, %v5470
        %5476 = vmatprep.subr.mxu0 0.0
        %5477 = vmatpush1.msra.mxu0 0.0
        %5478 = vmatprep.subr.mxu0 0.0
        %5479 = vmatpush1.msra.mxu0 0.0
        %5480 = vmatprep.subr.mxu0 0.0
        %5481 = vmatpush1.msra.mxu0 0.0
        %5482 = vmatprep.subr.mxu0 0.0
        %5483 = vmatpush1.msra.mxu0 0.0
        %5484 = vmatprep.subr.mxu0 0.0
        %5485 = vmatpush1.msra.mxu0 0.0
        %5486 = vmatprep.subr.mxu0 0.0
        %5487 = vmatpush1.msra.mxu0 0.0
        %5488 = vmatprep.subr.mxu0 0.0
        %5489 = vmatpush1.msra.mxu0 0.0
        %5490 = vmatprep.subr.mxu0 0.0
        %5491 = vmatpush1.msra.mxu0 0.0
        %5492 = vmatprep.subr.mxu0 0.0
        %5493 = vmatpush1.msra.mxu0 %v5422
        %5494 = vmatprep.subr.mxu0 0.0
        %5495 = vmatpush1.msra.mxu0 %v5421
        %5496 = vmatprep.subr.mxu0 0.0
        %5497 = vmatpush1.msra.mxu0 %v5420
        %5498 = vmatprep.subr.mxu0 0.0
        %5499 = vmatpush1.msra.mxu0 %v5419
        %5500 = vmatprep.subr.mxu0 0.0
        %5501 = vmatpush1.msra.mxu0 %v5418
        %5502 = vmatprep.subr.mxu0 0.0
        %5503 = vmatpush1.msra.mxu0 %v5417
        %5504 = vmatprep.subr.mxu0 0.0
        %5505 = vmatpush1.msra.mxu0 %v5416
        %5506 = vmatprep.subr.mxu0 0.0
        %5507 = vmatpush1.msra.mxu0 %v5415
        %5508 = vmatprep.subr.mxu0 0.0
        %5509 = vmatpush2.msra.mxu0 0.0
        %5510 = vmatprep.subr.mxu0 0.0
        %5511 = vmatpush2.msra.mxu0 0.0
        %5512 = vmatprep.subr.mxu0 0.0
        %5513 = vmatpush2.msra.mxu0 0.0
        %5514 = vmatprep.subr.mxu0 0.0
        %5515 = vmatpush2.msra.mxu0 0.0
        %5516 = vmatprep.subr.mxu0 0.0
        %5517 = vmatpush2.msra.mxu0 0.0
        %5518 = vmatprep.subr.mxu0 0.0
        %5519 = vmatpush2.msra.mxu0 0.0
        %5520 = vmatprep.subr.mxu0 0.0
        %5521 = vmatpush2.msra.mxu0 0.0
        %5522 = vmatprep.subr.mxu0 0.0
        %5523 = vmatpush2.msra.mxu0 0.0
        %5524 = vmatprep.subr.mxu0 0.0
        %5525 = vmatpush2.msra.mxu0 0.0
        %5526 = vmatprep.subr.mxu0 0.0
        %5527 = vmatpush2.msra.mxu0 0.0
        %5528 = vmatprep.subr.mxu0 0.0
        %5529 = vmatpush2.msra.mxu0 0.0
        %5530 = vmatprep.subr.mxu0 0.0
        %5531 = vmatpush2.msra.mxu0 0.0
        %5532 = vmatprep.subr.mxu0 0.0
        %5533 = vmatpush2.msra.mxu0 0.0
        %5534 = vmatprep.subr.mxu0 0.0
        %5535 = vmatpush2.msra.mxu0 0.0
        %5536 = vmatprep.subr.mxu0 0.0
        %5537 = vmatpush2.msra.mxu0 0.0
        %5538 = vmatprep.subr.mxu0 0.0
        %5539 = vmatpush2.msra.mxu0 0.0
        %5540 = vmatprep.mubr.f32.mxu0 0.0
        %5541 = vmatmul.mubr.f32.gmra.mxu0 %v5132
        %v5542 = vpop.f32.mrf.mxu0
        %v5543 = vadd.f32 %v5459, %v5542
        %v5544 = vpop.f32.mrf.mxu0
        %5545 = vdwg.mxu0
        %5546 = vmatprep.subr.mxu0 0.0
        %5547 = vmatpush1.msra.mxu0 0.0
        %5548 = vmatprep.subr.mxu0 0.0
        %5549 = vmatpush1.msra.mxu0 0.0
        %5550 = vmatprep.subr.mxu0 0.0
        %5551 = vmatpush1.msra.mxu0 0.0
        %5552 = vmatprep.subr.mxu0 0.0
        %5553 = vmatpush1.msra.mxu0 0.0
        %5554 = vmatprep.subr.mxu0 0.0
        %5555 = vmatpush1.msra.mxu0 0.0
        %5556 = vmatprep.subr.mxu0 0.0
        %5557 = vmatpush1.msra.mxu0 0.0
        %5558 = vmatprep.subr.mxu0 0.0
        %5559 = vmatpush1.msra.mxu0 0.0
        %5560 = vmatprep.subr.mxu0 0.0
        %5561 = vmatpush1.msra.mxu0 0.0
        %5562 = vmatprep.subr.mxu0 0.0
        %5563 = vmatpush1.msra.mxu0 %v5430
        %5564 = vmatprep.subr.mxu0 0.0
        %5565 = vmatpush1.msra.mxu0 %v5429
        %5566 = vmatprep.subr.mxu0 0.0
        %5567 = vmatpush1.msra.mxu0 %v5428
        %5568 = vmatprep.subr.mxu0 0.0
        %5569 = vmatpush1.msra.mxu0 %v5427
        %5570 = vmatprep.subr.mxu0 0.0
        %5571 = vmatpush1.msra.mxu0 %v5426
        %5572 = vmatprep.subr.mxu0 0.0
        %5573 = vmatpush1.msra.mxu0 %v5425
        %5574 = vmatprep.subr.mxu0 0.0
        %5575 = vmatpush1.msra.mxu0 %v5424
        %5576 = vmatprep.subr.mxu0 0.0
        %5577 = vmatpush1.msra.mxu0 %v5423
        %5578 = vmatprep.subr.mxu0 0.0
        %5579 = vmatpush2.msra.mxu0 0.0
        %5580 = vmatprep.subr.mxu0 0.0
        %5581 = vmatpush2.msra.mxu0 0.0
        %5582 = vmatprep.subr.mxu0 0.0
        %5583 = vmatpush2.msra.mxu0 0.0
        %5584 = vmatprep.subr.mxu0 0.0
        %5585 = vmatpush2.msra.mxu0 0.0
        %5586 = vmatprep.subr.mxu0 0.0
        %5587 = vmatpush2.msra.mxu0 0.0
        %5588 = vmatprep.subr.mxu0 0.0
        %5589 = vmatpush2.msra.mxu0 0.0
        %5590 = vmatprep.subr.mxu0 0.0
        %5591 = vmatpush2.msra.mxu0 0.0
        %5592 = vmatprep.subr.mxu0 0.0
        %5593 = vmatpush2.msra.mxu0 0.0
        %5594 = vmatprep.subr.mxu0 0.0
        %5595 = vmatpush2.msra.mxu0 0.0
        %5596 = vmatprep.subr.mxu0 0.0
        %5597 = vmatpush2.msra.mxu0 0.0
        %5598 = vmatprep.subr.mxu0 0.0
        %5599 = vmatpush2.msra.mxu0 0.0
        %5600 = vmatprep.subr.mxu0 0.0
        %5601 = vmatpush2.msra.mxu0 0.0
        %5602 = vmatprep.subr.mxu0 0.0
        %5603 = vmatpush2.msra.mxu0 0.0
        %5604 = vmatprep.subr.mxu0 0.0
        %5605 = vmatpush2.msra.mxu0 0.0
        %5606 = vmatprep.subr.mxu0 0.0
        %5607 = vmatpush2.msra.mxu0 0.0
        %5608 = vmatprep.subr.mxu0 0.0
        %5609 = vmatpush2.msra.mxu0 0.0
        %5610 = vmatprep.mubr.f32.mxu0 0.0
        %5611 = vmatmul.mubr.f32.gmra.mxu0 %v5132
        %v5612 = vpop.f32.mrf.mxu0
        %v5613 = vadd.f32 %v5463, %v5612
        %v5614 = vpop.f32.mrf.mxu0
        %5615 = vdwg.mxu0
        %5616 = vmatprep.subr.mxu0 0.0
        %5617 = vmatpush1.msra.mxu0 0.0
        %5618 = vmatprep.subr.mxu0 0.0
        %5619 = vmatpush1.msra.mxu0 0.0
        %5620 = vmatprep.subr.mxu0 0.0
        %5621 = vmatpush1.msra.mxu0 0.0
        %5622 = vmatprep.subr.mxu0 0.0
        %5623 = vmatpush1.msra.mxu0 0.0
        %5624 = vmatprep.subr.mxu0 0.0
        %5625 = vmatpush1.msra.mxu0 0.0
        %5626 = vmatprep.subr.mxu0 0.0
        %5627 = vmatpush1.msra.mxu0 0.0
        %5628 = vmatprep.subr.mxu0 0.0
        %5629 = vmatpush1.msra.mxu0 0.0
        %5630 = vmatprep.subr.mxu0 0.0
        %5631 = vmatpush1.msra.mxu0 0.0
        %5632 = vmatprep.subr.mxu0 0.0
        %5633 = vmatpush1.msra.mxu0 %v5438
        %5634 = vmatprep.subr.mxu0 0.0
        %5635 = vmatpush1.msra.mxu0 %v5437
        %5636 = vmatprep.subr.mxu0 0.0
        %5637 = vmatpush1.msra.mxu0 %v5436
        %5638 = vmatprep.subr.mxu0 0.0
        %5639 = vmatpush1.msra.mxu0 %v5435
        %5640 = vmatprep.subr.mxu0 0.0
        %5641 = vmatpush1.msra.mxu0 %v5434
        %5642 = vmatprep.subr.mxu0 0.0
        %5643 = vmatpush1.msra.mxu0 %v5433
        %5644 = vmatprep.subr.mxu0 0.0
        %5645 = vmatpush1.msra.mxu0 %v5432
        %5646 = vmatprep.subr.mxu0 0.0
        %5647 = vmatpush1.msra.mxu0 %v5431
        %5648 = vmatprep.subr.mxu0 0.0
        %5649 = vmatpush2.msra.mxu0 0.0
        %5650 = vmatprep.subr.mxu0 0.0
        %5651 = vmatpush2.msra.mxu0 0.0
        %5652 = vmatprep.subr.mxu0 0.0
        %5653 = vmatpush2.msra.mxu0 0.0
        %5654 = vmatprep.subr.mxu0 0.0
        %5655 = vmatpush2.msra.mxu0 0.0
        %5656 = vmatprep.subr.mxu0 0.0
        %5657 = vmatpush2.msra.mxu0 0.0
        %5658 = vmatprep.subr.mxu0 0.0
        %5659 = vmatpush2.msra.mxu0 0.0
        %5660 = vmatprep.subr.mxu0 0.0
        %5661 = vmatpush2.msra.mxu0 0.0
        %5662 = vmatprep.subr.mxu0 0.0
        %5663 = vmatpush2.msra.mxu0 0.0
        %5664 = vmatprep.subr.mxu0 0.0
        %5665 = vmatpush2.msra.mxu0 0.0
        %5666 = vmatprep.subr.mxu0 0.0
        %5667 = vmatpush2.msra.mxu0 0.0
        %5668 = vmatprep.subr.mxu0 0.0
        %5669 = vmatpush2.msra.mxu0 0.0
        %5670 = vmatprep.subr.mxu0 0.0
        %5671 = vmatpush2.msra.mxu0 0.0
        %5672 = vmatprep.subr.mxu0 0.0
        %5673 = vmatpush2.msra.mxu0 0.0
        %5674 = vmatprep.subr.mxu0 0.0
        %5675 = vmatpush2.msra.mxu0 0.0
        %5676 = vmatprep.subr.mxu0 0.0
        %5677 = vmatpush2.msra.mxu0 0.0
        %5678 = vmatprep.subr.mxu0 0.0
        %5679 = vmatpush2.msra.mxu0 0.0
        %5680 = vmatprep.mubr.f32.mxu0 0.0
        %5681 = vmatmul.mubr.f32.gmra.mxu0 %v5132
        %v5682 = vpop.f32.mrf.mxu0
        %v5683 = vadd.f32 %v5467, %v5682
        %v5684 = vpop.f32.mrf.mxu0
        %5685 = vdwg.mxu0
        %5686 = vmatprep.subr.mxu0 0.0
        %5687 = vmatpush1.msra.mxu0 0.0
        %5688 = vmatprep.subr.mxu0 0.0
        %5689 = vmatpush1.msra.mxu0 0.0
        %5690 = vmatprep.subr.mxu0 0.0
        %5691 = vmatpush1.msra.mxu0 0.0
        %5692 = vmatprep.subr.mxu0 0.0
        %5693 = vmatpush1.msra.mxu0 0.0
        %5694 = vmatprep.subr.mxu0 0.0
        %5695 = vmatpush1.msra.mxu0 0.0
        %5696 = vmatprep.subr.mxu0 0.0
        %5697 = vmatpush1.msra.mxu0 0.0
        %5698 = vmatprep.subr.mxu0 0.0
        %5699 = vmatpush1.msra.mxu0 0.0
        %5700 = vmatprep.subr.mxu0 0.0
        %5701 = vmatpush1.msra.mxu0 0.0
        %5702 = vmatprep.subr.mxu0 0.0
        %5703 = vmatpush1.msra.mxu0 %v5446
        %5704 = vmatprep.subr.mxu0 0.0
        %5705 = vmatpush1.msra.mxu0 %v5445
        %5706 = vmatprep.subr.mxu0 0.0
        %5707 = vmatpush1.msra.mxu0 %v5444
        %5708 = vmatprep.subr.mxu0 0.0
        %5709 = vmatpush1.msra.mxu0 %v5443
        %5710 = vmatprep.subr.mxu0 0.0
        %5711 = vmatpush1.msra.mxu0 %v5442
        %5712 = vmatprep.subr.mxu0 0.0
        %5713 = vmatpush1.msra.mxu0 %v5441
        %5714 = vmatprep.subr.mxu0 0.0
        %5715 = vmatpush1.msra.mxu0 %v5440
        %5716 = vmatprep.subr.mxu0 0.0
        %5717 = vmatpush1.msra.mxu0 %v5439
        %5718 = vmatprep.subr.mxu0 0.0
        %5719 = vmatpush2.msra.mxu0 0.0
        %5720 = vmatprep.subr.mxu0 0.0
        %5721 = vmatpush2.msra.mxu0 0.0
        %5722 = vmatprep.subr.mxu0 0.0
        %5723 = vmatpush2.msra.mxu0 0.0
        %5724 = vmatprep.subr.mxu0 0.0
        %5725 = vmatpush2.msra.mxu0 0.0
        %5726 = vmatprep.subr.mxu0 0.0
        %5727 = vmatpush2.msra.mxu0 0.0
        %5728 = vmatprep.subr.mxu0 0.0
        %5729 = vmatpush2.msra.mxu0 0.0
        %5730 = vmatprep.subr.mxu0 0.0
        %5731 = vmatpush2.msra.mxu0 0.0
        %5732 = vmatprep.subr.mxu0 0.0
        %5733 = vmatpush2.msra.mxu0 0.0
        %5734 = vmatprep.subr.mxu0 0.0
        %5735 = vmatpush2.msra.mxu0 0.0
        %5736 = vmatprep.subr.mxu0 0.0
        %5737 = vmatpush2.msra.mxu0 0.0
        %5738 = vmatprep.subr.mxu0 0.0
        %5739 = vmatpush2.msra.mxu0 0.0
        %5740 = vmatprep.subr.mxu0 0.0
        %5741 = vmatpush2.msra.mxu0 0.0
        %5742 = vmatprep.subr.mxu0 0.0
        %5743 = vmatpush2.msra.mxu0 0.0
        %5744 = vmatprep.subr.mxu0 0.0
        %5745 = vmatpush2.msra.mxu0 0.0
        %5746 = vmatprep.subr.mxu0 0.0
        %5747 = vmatpush2.msra.mxu0 0.0
        %5748 = vmatprep.subr.mxu0 0.0
        %5749 = vmatpush2.msra.mxu0 0.0
        %5750 = vmatprep.mubr.f32.mxu0 0.0
        %5751 = vmatmul.mubr.f32.gmra.mxu0 %v5132
        %v5752 = vpop.f32.mrf.mxu0
        %v5753 = vadd.f32 %v5471, %v5752
        %v5754 = vpop.f32.mrf.mxu0
        %5755 = vdwg.mxu0
        %s5756 = scalar_lea.vmem %s5, 512
        %v5757 = vld [vmem:[%s5756] sm:$0xff]
        %v5758 = vld [vmem:[%s5756 + $0x8] sm:$0xff]
        %v5759 = vld [vmem:[%s5756 + $0x10] sm:$0xff]
        %v5760 = vld [vmem:[%s5756 + $0x18] sm:$0xff]
        %v5761 = vld [vmem:[%s5756 + $0x20] sm:$0xff]
        %v5762 = vld [vmem:[%s5756 + $0x28] sm:$0xff]
        %v5763 = vld [vmem:[%s5756 + $0x30] sm:$0xff]
        %v5764 = vld [vmem:[%s5756 + $0x38] sm:$0xff]
        %v5765 = vld [vmem:[%s5756 + $0x40] sm:$0xff]
        %v5766 = vld [vmem:[%s5756 + $0x48] sm:$0xff]
        %v5767 = vld [vmem:[%s5756 + $0x50] sm:$0xff]
        %v5768 = vld [vmem:[%s5756 + $0x58] sm:$0xff]
        %v5769 = vld [vmem:[%s5756 + $0x60] sm:$0xff]
        %v5770 = vld [vmem:[%s5756 + $0x68] sm:$0xff]
        %v5771 = vld [vmem:[%s5756 + $0x70] sm:$0xff]
        %v5772 = vld [vmem:[%s5756 + $0x78] sm:$0xff]
        %v5773 = vld [vmem:[%s5756 + $0x80] sm:$0xff]
        %v5774 = vld [vmem:[%s5756 + $0x88] sm:$0xff]
        %v5775 = vld [vmem:[%s5756 + $0x90] sm:$0xff]
        %v5776 = vld [vmem:[%s5756 + $0x98] sm:$0xff]
        %v5777 = vld [vmem:[%s5756 + $0xa0] sm:$0xff]
        %v5778 = vld [vmem:[%s5756 + $0xa8] sm:$0xff]
        %v5779 = vld [vmem:[%s5756 + $0xb0] sm:$0xff]
        %v5780 = vld [vmem:[%s5756 + $0xb8] sm:$0xff]
        %v5781 = vld [vmem:[%s5756 + $0xc0] sm:$0xff]
        %v5782 = vld [vmem:[%s5756 + $0xc8] sm:$0xff]
        %v5783 = vld [vmem:[%s5756 + $0xd0] sm:$0xff]
        %v5784 = vld [vmem:[%s5756 + $0xd8] sm:$0xff]
        %v5785 = vld [vmem:[%s5756 + $0xe0] sm:$0xff]
        %v5786 = vld [vmem:[%s5756 + $0xe8] sm:$0xff]
        %v5787 = vld [vmem:[%s5756 + $0xf0] sm:$0xff]
        %v5788 = vld [vmem:[%s5756 + $0xf8] sm:$0xff]
        %s5789 = scalar_lea.vmem %s6, 8
        %v5790 = vld [vmem:[%s5789] sm:$0x1]
        %v5791 = vld [vmem:[%s5789 + $0x1] sm:$0x1]
        %v5792 = vld [vmem:[%s5789 + $0x2] sm:$0x1]
        %v5793 = vld [vmem:[%s5789 + $0x3] sm:$0x1]
        %v5798 = vlaneseq
        %v5799 = vshrl.u32 %v5798, 7
        %v5800 = vsub.s32 0, %v5799
        %v5801 = vrot.slane %v5790, %v5800
        %v5802 = vlaneseq
        %v5803 = vshrl.u32 %v5802, 7
        %v5804 = vsub.s32 0, %v5803
        %v5805 = vrot.slane %v5791, %v5804
        %v5806 = vlaneseq
        %v5807 = vshrl.u32 %v5806, 7
        %v5808 = vsub.s32 0, %v5807
        %v5809 = vrot.slane %v5792, %v5808
        %v5810 = vlaneseq
        %v5811 = vshrl.u32 %v5810, 7
        %v5812 = vsub.s32 0, %v5811
        %v5813 = vrot.slane %v5793, %v5812
        %5818 = vmatprep.subr.mxu0 0.0
        %5819 = vmatpush1.msra.mxu0 0.0
        %5820 = vmatprep.subr.mxu0 0.0
        %5821 = vmatpush1.msra.mxu0 0.0
        %5822 = vmatprep.subr.mxu0 0.0
        %5823 = vmatpush1.msra.mxu0 0.0
        %5824 = vmatprep.subr.mxu0 0.0
        %5825 = vmatpush1.msra.mxu0 0.0
        %5826 = vmatprep.subr.mxu0 0.0
        %5827 = vmatpush1.msra.mxu0 0.0
        %5828 = vmatprep.subr.mxu0 0.0
        %5829 = vmatpush1.msra.mxu0 0.0
        %5830 = vmatprep.subr.mxu0 0.0
        %5831 = vmatpush1.msra.mxu0 0.0
        %5832 = vmatprep.subr.mxu0 0.0
        %5833 = vmatpush1.msra.mxu0 0.0
        %5834 = vmatprep.subr.mxu0 0.0
        %5835 = vmatpush1.msra.mxu0 %v5764
        %5836 = vmatprep.subr.mxu0 0.0
        %5837 = vmatpush1.msra.mxu0 %v5763
        %5838 = vmatprep.subr.mxu0 0.0
        %5839 = vmatpush1.msra.mxu0 %v5762
        %5840 = vmatprep.subr.mxu0 0.0
        %5841 = vmatpush1.msra.mxu0 %v5761
        %5842 = vmatprep.subr.mxu0 0.0
        %5843 = vmatpush1.msra.mxu0 %v5760
        %5844 = vmatprep.subr.mxu0 0.0
        %5845 = vmatpush1.msra.mxu0 %v5759
        %5846 = vmatprep.subr.mxu0 0.0
        %5847 = vmatpush1.msra.mxu0 %v5758
        %5848 = vmatprep.subr.mxu0 0.0
        %5849 = vmatpush1.msra.mxu0 %v5757
        %5850 = vmatprep.subr.mxu0 0.0
        %5851 = vmatpush2.msra.mxu0 0.0
        %5852 = vmatprep.subr.mxu0 0.0
        %5853 = vmatpush2.msra.mxu0 0.0
        %5854 = vmatprep.subr.mxu0 0.0
        %5855 = vmatpush2.msra.mxu0 0.0
        %5856 = vmatprep.subr.mxu0 0.0
        %5857 = vmatpush2.msra.mxu0 0.0
        %5858 = vmatprep.subr.mxu0 0.0
        %5859 = vmatpush2.msra.mxu0 0.0
        %5860 = vmatprep.subr.mxu0 0.0
        %5861 = vmatpush2.msra.mxu0 0.0
        %5862 = vmatprep.subr.mxu0 0.0
        %5863 = vmatpush2.msra.mxu0 0.0
        %5864 = vmatprep.subr.mxu0 0.0
        %5865 = vmatpush2.msra.mxu0 0.0
        %5866 = vmatprep.subr.mxu0 0.0
        %5867 = vmatpush2.msra.mxu0 0.0
        %5868 = vmatprep.subr.mxu0 0.0
        %5869 = vmatpush2.msra.mxu0 0.0
        %5870 = vmatprep.subr.mxu0 0.0
        %5871 = vmatpush2.msra.mxu0 0.0
        %5872 = vmatprep.subr.mxu0 0.0
        %5873 = vmatpush2.msra.mxu0 0.0
        %5874 = vmatprep.subr.mxu0 0.0
        %5875 = vmatpush2.msra.mxu0 0.0
        %5876 = vmatprep.subr.mxu0 0.0
        %5877 = vmatpush2.msra.mxu0 0.0
        %5878 = vmatprep.subr.mxu0 0.0
        %5879 = vmatpush2.msra.mxu0 0.0
        %5880 = vmatprep.subr.mxu0 0.0
        %5881 = vmatpush2.msra.mxu0 0.0
        %5882 = vmatprep.mubr.f32.mxu0 0.0
        %5883 = vmatmul.mubr.f32.gmra.mxu0 %v5132
        %v5884 = vpop.f32.mrf.mxu0
        %v5885 = vadd.f32 %v5801, %v5884
        %v5886 = vpop.f32.mrf.mxu0
        %5887 = vdwg.mxu0
        %5888 = vmatprep.subr.mxu0 0.0
        %5889 = vmatpush1.msra.mxu0 0.0
        %5890 = vmatprep.subr.mxu0 0.0
        %5891 = vmatpush1.msra.mxu0 0.0
        %5892 = vmatprep.subr.mxu0 0.0
        %5893 = vmatpush1.msra.mxu0 0.0
        %5894 = vmatprep.subr.mxu0 0.0
        %5895 = vmatpush1.msra.mxu0 0.0
        %5896 = vmatprep.subr.mxu0 0.0
        %5897 = vmatpush1.msra.mxu0 0.0
        %5898 = vmatprep.subr.mxu0 0.0
        %5899 = vmatpush1.msra.mxu0 0.0
        %5900 = vmatprep.subr.mxu0 0.0
        %5901 = vmatpush1.msra.mxu0 0.0
        %5902 = vmatprep.subr.mxu0 0.0
        %5903 = vmatpush1.msra.mxu0 0.0
        %5904 = vmatprep.subr.mxu0 0.0
        %5905 = vmatpush1.msra.mxu0 %v5772
        %5906 = vmatprep.subr.mxu0 0.0
        %5907 = vmatpush1.msra.mxu0 %v5771
        %5908 = vmatprep.subr.mxu0 0.0
        %5909 = vmatpush1.msra.mxu0 %v5770
        %5910 = vmatprep.subr.mxu0 0.0
        %5911 = vmatpush1.msra.mxu0 %v5769
        %5912 = vmatprep.subr.mxu0 0.0
        %5913 = vmatpush1.msra.mxu0 %v5768
        %5914 = vmatprep.subr.mxu0 0.0
        %5915 = vmatpush1.msra.mxu0 %v5767
        %5916 = vmatprep.subr.mxu0 0.0
        %5917 = vmatpush1.msra.mxu0 %v5766
        %5918 = vmatprep.subr.mxu0 0.0
        %5919 = vmatpush1.msra.mxu0 %v5765
        %5920 = vmatprep.subr.mxu0 0.0
        %5921 = vmatpush2.msra.mxu0 0.0
        %5922 = vmatprep.subr.mxu0 0.0
        %5923 = vmatpush2.msra.mxu0 0.0
        %5924 = vmatprep.subr.mxu0 0.0
        %5925 = vmatpush2.msra.mxu0 0.0
        %5926 = vmatprep.subr.mxu0 0.0
        %5927 = vmatpush2.msra.mxu0 0.0
        %5928 = vmatprep.subr.mxu0 0.0
        %5929 = vmatpush2.msra.mxu0 0.0
        %5930 = vmatprep.subr.mxu0 0.0
        %5931 = vmatpush2.msra.mxu0 0.0
        %5932 = vmatprep.subr.mxu0 0.0
        %5933 = vmatpush2.msra.mxu0 0.0
        %5934 = vmatprep.subr.mxu0 0.0
        %5935 = vmatpush2.msra.mxu0 0.0
        %5936 = vmatprep.subr.mxu0 0.0
        %5937 = vmatpush2.msra.mxu0 0.0
        %5938 = vmatprep.subr.mxu0 0.0
        %5939 = vmatpush2.msra.mxu0 0.0
        %5940 = vmatprep.subr.mxu0 0.0
        %5941 = vmatpush2.msra.mxu0 0.0
        %5942 = vmatprep.subr.mxu0 0.0
        %5943 = vmatpush2.msra.mxu0 0.0
        %5944 = vmatprep.subr.mxu0 0.0
        %5945 = vmatpush2.msra.mxu0 0.0
        %5946 = vmatprep.subr.mxu0 0.0
        %5947 = vmatpush2.msra.mxu0 0.0
        %5948 = vmatprep.subr.mxu0 0.0
        %5949 = vmatpush2.msra.mxu0 0.0
        %5950 = vmatprep.subr.mxu0 0.0
        %5951 = vmatpush2.msra.mxu0 0.0
        %5952 = vmatprep.mubr.f32.mxu0 0.0
        %5953 = vmatmul.mubr.f32.gmra.mxu0 %v5132
        %v5954 = vpop.f32.mrf.mxu0
        %v5955 = vadd.f32 %v5805, %v5954
        %v5956 = vpop.f32.mrf.mxu0
        %5957 = vdwg.mxu0
        %5958 = vmatprep.subr.mxu0 0.0
        %5959 = vmatpush1.msra.mxu0 0.0
        %5960 = vmatprep.subr.mxu0 0.0
        %5961 = vmatpush1.msra.mxu0 0.0
        %5962 = vmatprep.subr.mxu0 0.0
        %5963 = vmatpush1.msra.mxu0 0.0
        %5964 = vmatprep.subr.mxu0 0.0
        %5965 = vmatpush1.msra.mxu0 0.0
        %5966 = vmatprep.subr.mxu0 0.0
        %5967 = vmatpush1.msra.mxu0 0.0
        %5968 = vmatprep.subr.mxu0 0.0
        %5969 = vmatpush1.msra.mxu0 0.0
        %5970 = vmatprep.subr.mxu0 0.0
        %5971 = vmatpush1.msra.mxu0 0.0
        %5972 = vmatprep.subr.mxu0 0.0
        %5973 = vmatpush1.msra.mxu0 0.0
        %5974 = vmatprep.subr.mxu0 0.0
        %5975 = vmatpush1.msra.mxu0 %v5780
        %5976 = vmatprep.subr.mxu0 0.0
        %5977 = vmatpush1.msra.mxu0 %v5779
        %5978 = vmatprep.subr.mxu0 0.0
        %5979 = vmatpush1.msra.mxu0 %v5778
        %5980 = vmatprep.subr.mxu0 0.0
        %5981 = vmatpush1.msra.mxu0 %v5777
        %5982 = vmatprep.subr.mxu0 0.0
        %5983 = vmatpush1.msra.mxu0 %v5776
        %5984 = vmatprep.subr.mxu0 0.0
        %5985 = vmatpush1.msra.mxu0 %v5775
        %5986 = vmatprep.subr.mxu0 0.0
        %5987 = vmatpush1.msra.mxu0 %v5774
        %5988 = vmatprep.subr.mxu0 0.0
        %5989 = vmatpush1.msra.mxu0 %v5773
        %5990 = vmatprep.subr.mxu0 0.0
        %5991 = vmatpush2.msra.mxu0 0.0
        %5992 = vmatprep.subr.mxu0 0.0
        %5993 = vmatpush2.msra.mxu0 0.0
        %5994 = vmatprep.subr.mxu0 0.0
        %5995 = vmatpush2.msra.mxu0 0.0
        %5996 = vmatprep.subr.mxu0 0.0
        %5997 = vmatpush2.msra.mxu0 0.0
        %5998 = vmatprep.subr.mxu0 0.0
        %5999 = vmatpush2.msra.mxu0 0.0
        %6000 = vmatprep.subr.mxu0 0.0
        %6001 = vmatpush2.msra.mxu0 0.0
        %6002 = vmatprep.subr.mxu0 0.0
        %6003 = vmatpush2.msra.mxu0 0.0
        %6004 = vmatprep.subr.mxu0 0.0
        %6005 = vmatpush2.msra.mxu0 0.0
        %6006 = vmatprep.subr.mxu0 0.0
        %6007 = vmatpush2.msra.mxu0 0.0
        %6008 = vmatprep.subr.mxu0 0.0
        %6009 = vmatpush2.msra.mxu0 0.0
        %6010 = vmatprep.subr.mxu0 0.0
        %6011 = vmatpush2.msra.mxu0 0.0
        %6012 = vmatprep.subr.mxu0 0.0
        %6013 = vmatpush2.msra.mxu0 0.0
        %6014 = vmatprep.subr.mxu0 0.0
        %6015 = vmatpush2.msra.mxu0 0.0
        %6016 = vmatprep.subr.mxu0 0.0
        %6017 = vmatpush2.msra.mxu0 0.0
        %6018 = vmatprep.subr.mxu0 0.0
        %6019 = vmatpush2.msra.mxu0 0.0
        %6020 = vmatprep.subr.mxu0 0.0
        %6021 = vmatpush2.msra.mxu0 0.0
        %6022 = vmatprep.mubr.f32.mxu0 0.0
        %6023 = vmatmul.mubr.f32.gmra.mxu0 %v5132
        %v6024 = vpop.f32.mrf.mxu0
        %v6025 = vadd.f32 %v5809, %v6024
        %v6026 = vpop.f32.mrf.mxu0
        %6027 = vdwg.mxu0
        %6028 = vmatprep.subr.mxu0 0.0
        %6029 = vmatpush1.msra.mxu0 0.0
        %6030 = vmatprep.subr.mxu0 0.0
        %6031 = vmatpush1.msra.mxu0 0.0
        %6032 = vmatprep.subr.mxu0 0.0
        %6033 = vmatpush1.msra.mxu0 0.0
        %6034 = vmatprep.subr.mxu0 0.0
        %6035 = vmatpush1.msra.mxu0 0.0
        %6036 = vmatprep.subr.mxu0 0.0
        %6037 = vmatpush1.msra.mxu0 0.0
        %6038 = vmatprep.subr.mxu0 0.0
        %6039 = vmatpush1.msra.mxu0 0.0
        %6040 = vmatprep.subr.mxu0 0.0
        %6041 = vmatpush1.msra.mxu0 0.0
        %6042 = vmatprep.subr.mxu0 0.0
        %6043 = vmatpush1.msra.mxu0 0.0
        %6044 = vmatprep.subr.mxu0 0.0
        %6045 = vmatpush1.msra.mxu0 %v5788
        %6046 = vmatprep.subr.mxu0 0.0
        %6047 = vmatpush1.msra.mxu0 %v5787
        %6048 = vmatprep.subr.mxu0 0.0
        %6049 = vmatpush1.msra.mxu0 %v5786
        %6050 = vmatprep.subr.mxu0 0.0
        %6051 = vmatpush1.msra.mxu0 %v5785
        %6052 = vmatprep.subr.mxu0 0.0
        %6053 = vmatpush1.msra.mxu0 %v5784
        %6054 = vmatprep.subr.mxu0 0.0
        %6055 = vmatpush1.msra.mxu0 %v5783
        %6056 = vmatprep.subr.mxu0 0.0
        %6057 = vmatpush1.msra.mxu0 %v5782
        %6058 = vmatprep.subr.mxu0 0.0
        %6059 = vmatpush1.msra.mxu0 %v5781
        %6060 = vmatprep.subr.mxu0 0.0
        %6061 = vmatpush2.msra.mxu0 0.0
        %6062 = vmatprep.subr.mxu0 0.0
        %6063 = vmatpush2.msra.mxu0 0.0
        %6064 = vmatprep.subr.mxu0 0.0
        %6065 = vmatpush2.msra.mxu0 0.0
        %6066 = vmatprep.subr.mxu0 0.0
        %6067 = vmatpush2.msra.mxu0 0.0
        %6068 = vmatprep.subr.mxu0 0.0
        %6069 = vmatpush2.msra.mxu0 0.0
        %6070 = vmatprep.subr.mxu0 0.0
        %6071 = vmatpush2.msra.mxu0 0.0
        %6072 = vmatprep.subr.mxu0 0.0
        %6073 = vmatpush2.msra.mxu0 0.0
        %6074 = vmatprep.subr.mxu0 0.0
        %6075 = vmatpush2.msra.mxu0 0.0
        %6076 = vmatprep.subr.mxu0 0.0
        %6077 = vmatpush2.msra.mxu0 0.0
        %6078 = vmatprep.subr.mxu0 0.0
        %6079 = vmatpush2.msra.mxu0 0.0
        %6080 = vmatprep.subr.mxu0 0.0
        %6081 = vmatpush2.msra.mxu0 0.0
        %6082 = vmatprep.subr.mxu0 0.0
        %6083 = vmatpush2.msra.mxu0 0.0
        %6084 = vmatprep.subr.mxu0 0.0
        %6085 = vmatpush2.msra.mxu0 0.0
        %6086 = vmatprep.subr.mxu0 0.0
        %6087 = vmatpush2.msra.mxu0 0.0
        %6088 = vmatprep.subr.mxu0 0.0
        %6089 = vmatpush2.msra.mxu0 0.0
        %6090 = vmatprep.subr.mxu0 0.0
        %6091 = vmatpush2.msra.mxu0 0.0
        %6092 = vmatprep.mubr.f32.mxu0 0.0
        %6093 = vmatmul.mubr.f32.gmra.mxu0 %v5132
        %v6094 = vpop.f32.mrf.mxu0
        %v6095 = vadd.f32 %v5813, %v6094
        %v6096 = vpop.f32.mrf.mxu0
        %6097 = vdwg.mxu0
        %v6099 = vsel %vm1623, %v5201, 0
        %v6102 = vsel %vm1623, %v5543, 0
        %6104 = vmatprep.subr.mxu0 0.0
        %6105 = vmatpush1.xpose.msra.mxu0 0.0
        %6106 = vmatprep.subr.mxu0 0.0
        %6107 = vmatpush1.xpose.msra.mxu0 0.0
        %6108 = vmatprep.subr.mxu0 0.0
        %6109 = vmatpush1.xpose.msra.mxu0 0.0
        %6110 = vmatprep.subr.mxu0 0.0
        %6111 = vmatpush1.xpose.msra.mxu0 0.0
        %6112 = vmatprep.subr.mxu0 0.0
        %6113 = vmatpush1.xpose.msra.mxu0 0.0
        %6114 = vmatprep.subr.mxu0 0.0
        %6115 = vmatpush1.xpose.msra.mxu0 0.0
        %6116 = vmatprep.subr.mxu0 0.0
        %6117 = vmatpush1.xpose.msra.mxu0 0.0
        %6118 = vmatprep.subr.mxu0 0.0
        %6119 = vmatpush1.xpose.msra.mxu0 0.0
        %6120 = vmatprep.subr.mxu0 0.0
        %6121 = vmatpush1.xpose.msra.mxu0 0.0
        %6122 = vmatprep.subr.mxu0 0.0
        %6123 = vmatpush1.xpose.msra.mxu0 0.0
        %6124 = vmatprep.subr.mxu0 0.0
        %6125 = vmatpush1.xpose.msra.mxu0 0.0
        %6126 = vmatprep.subr.mxu0 0.0
        %6127 = vmatpush1.xpose.msra.mxu0 0.0
        %6128 = vmatprep.subr.mxu0 0.0
        %6129 = vmatpush1.xpose.msra.mxu0 0.0
        %6130 = vmatprep.subr.mxu0 0.0
        %6131 = vmatpush1.xpose.msra.mxu0 0.0
        %6132 = vmatprep.subr.mxu0 0.0
        %6133 = vmatpush1.xpose.msra.mxu0 0.0
        %6134 = vmatprep.subr.mxu0 0.0
        %6135 = vmatpush1.xpose.msra.mxu0 %v6102
        %6136 = vmatprep.subr.mxu0 0.0
        %6137 = vmatpush2.xpose.msra.mxu0 0.0
        %6138 = vmatprep.subr.mxu0 0.0
        %6139 = vmatpush2.xpose.msra.mxu0 0.0
        %6140 = vmatprep.subr.mxu0 0.0
        %6141 = vmatpush2.xpose.msra.mxu0 0.0
        %6142 = vmatprep.subr.mxu0 0.0
        %6143 = vmatpush2.xpose.msra.mxu0 0.0
        %6144 = vmatprep.subr.mxu0 0.0
        %6145 = vmatpush2.xpose.msra.mxu0 0.0
        %6146 = vmatprep.subr.mxu0 0.0
        %6147 = vmatpush2.xpose.msra.mxu0 0.0
        %6148 = vmatprep.subr.mxu0 0.0
        %6149 = vmatpush2.xpose.msra.mxu0 0.0
        %6150 = vmatprep.subr.mxu0 0.0
        %6151 = vmatpush2.xpose.msra.mxu0 0.0
        %6152 = vmatprep.subr.mxu0 0.0
        %6153 = vmatpush2.xpose.msra.mxu0 0.0
        %6154 = vmatprep.subr.mxu0 0.0
        %6155 = vmatpush2.xpose.msra.mxu0 0.0
        %6156 = vmatprep.subr.mxu0 0.0
        %6157 = vmatpush2.xpose.msra.mxu0 0.0
        %6158 = vmatprep.subr.mxu0 0.0
        %6159 = vmatpush2.xpose.msra.mxu0 0.0
        %6160 = vmatprep.subr.mxu0 0.0
        %6161 = vmatpush2.xpose.msra.mxu0 0.0
        %6162 = vmatprep.subr.mxu0 0.0
        %6163 = vmatpush2.xpose.msra.mxu0 0.0
        %6164 = vmatprep.subr.mxu0 0.0
        %6165 = vmatpush2.xpose.msra.mxu0 0.0
        %6166 = vmatprep.subr.mxu0 0.0
        %6167 = vmatpush2.xpose.msra.mxu0 0.0
        %6168 = vmatprep.mubr.f32.mxu0 0.0
        %6169 = vmatmul.mubr.f32.gmra.mxu0 %v6099
        %v6170 = vpop.f32.mrf.mxu0
        %v6171 = vadd.f32 0.0, %v6170
        %v6172 = vpop.f32.mrf.mxu0
        %6173 = vdwg.mxu0
        %v6175 = vsel %vm1623, %v5271, 0
        %v6178 = vsel %vm1623, %v5613, 0
        %6180 = vmatprep.subr.mxu0 0.0
        %6181 = vmatpush1.xpose.msra.mxu0 0.0
        %6182 = vmatprep.subr.mxu0 0.0
        %6183 = vmatpush1.xpose.msra.mxu0 0.0
        %6184 = vmatprep.subr.mxu0 0.0
        %6185 = vmatpush1.xpose.msra.mxu0 0.0
        %6186 = vmatprep.subr.mxu0 0.0
        %6187 = vmatpush1.xpose.msra.mxu0 0.0
        %6188 = vmatprep.subr.mxu0 0.0
        %6189 = vmatpush1.xpose.msra.mxu0 0.0
        %6190 = vmatprep.subr.mxu0 0.0
        %6191 = vmatpush1.xpose.msra.mxu0 0.0
        %6192 = vmatprep.subr.mxu0 0.0
        %6193 = vmatpush1.xpose.msra.mxu0 0.0
        %6194 = vmatprep.subr.mxu0 0.0
        %6195 = vmatpush1.xpose.msra.mxu0 0.0
        %6196 = vmatprep.subr.mxu0 0.0
        %6197 = vmatpush1.xpose.msra.mxu0 0.0
        %6198 = vmatprep.subr.mxu0 0.0
        %6199 = vmatpush1.xpose.msra.mxu0 0.0
        %6200 = vmatprep.subr.mxu0 0.0
        %6201 = vmatpush1.xpose.msra.mxu0 0.0
        %6202 = vmatprep.subr.mxu0 0.0
        %6203 = vmatpush1.xpose.msra.mxu0 0.0
        %6204 = vmatprep.subr.mxu0 0.0
        %6205 = vmatpush1.xpose.msra.mxu0 0.0
        %6206 = vmatprep.subr.mxu0 0.0
        %6207 = vmatpush1.xpose.msra.mxu0 0.0
        %6208 = vmatprep.subr.mxu0 0.0
        %6209 = vmatpush1.xpose.msra.mxu0 0.0
        %6210 = vmatprep.subr.mxu0 0.0
        %6211 = vmatpush1.xpose.msra.mxu0 %v6178
        %6212 = vmatprep.subr.mxu0 0.0
        %6213 = vmatpush2.xpose.msra.mxu0 0.0
        %6214 = vmatprep.subr.mxu0 0.0
        %6215 = vmatpush2.xpose.msra.mxu0 0.0
        %6216 = vmatprep.subr.mxu0 0.0
        %6217 = vmatpush2.xpose.msra.mxu0 0.0
        %6218 = vmatprep.subr.mxu0 0.0
        %6219 = vmatpush2.xpose.msra.mxu0 0.0
        %6220 = vmatprep.subr.mxu0 0.0
        %6221 = vmatpush2.xpose.msra.mxu0 0.0
        %6222 = vmatprep.subr.mxu0 0.0
        %6223 = vmatpush2.xpose.msra.mxu0 0.0
        %6224 = vmatprep.subr.mxu0 0.0
        %6225 = vmatpush2.xpose.msra.mxu0 0.0
        %6226 = vmatprep.subr.mxu0 0.0
        %6227 = vmatpush2.xpose.msra.mxu0 0.0
        %6228 = vmatprep.subr.mxu0 0.0
        %6229 = vmatpush2.xpose.msra.mxu0 0.0
        %6230 = vmatprep.subr.mxu0 0.0
        %6231 = vmatpush2.xpose.msra.mxu0 0.0
        %6232 = vmatprep.subr.mxu0 0.0
        %6233 = vmatpush2.xpose.msra.mxu0 0.0
        %6234 = vmatprep.subr.mxu0 0.0
        %6235 = vmatpush2.xpose.msra.mxu0 0.0
        %6236 = vmatprep.subr.mxu0 0.0
        %6237 = vmatpush2.xpose.msra.mxu0 0.0
        %6238 = vmatprep.subr.mxu0 0.0
        %6239 = vmatpush2.xpose.msra.mxu0 0.0
        %6240 = vmatprep.subr.mxu0 0.0
        %6241 = vmatpush2.xpose.msra.mxu0 0.0
        %6242 = vmatprep.subr.mxu0 0.0
        %6243 = vmatpush2.xpose.msra.mxu0 0.0
        %6244 = vmatprep.mubr.f32.mxu0 0.0
        %6245 = vmatmul.mubr.f32.gmra.mxu0 %v6175
        %v6246 = vpop.f32.mrf.mxu0
        %v6247 = vadd.f32 0.0, %v6246
        %v6248 = vpop.f32.mrf.mxu0
        %6249 = vdwg.mxu0
        %v6251 = vsel %vm1623, %v5341, 0
        %v6254 = vsel %vm1623, %v5683, 0
        %6256 = vmatprep.subr.mxu0 0.0
        %6257 = vmatpush1.xpose.msra.mxu0 0.0
        %6258 = vmatprep.subr.mxu0 0.0
        %6259 = vmatpush1.xpose.msra.mxu0 0.0
        %6260 = vmatprep.subr.mxu0 0.0
        %6261 = vmatpush1.xpose.msra.mxu0 0.0
        %6262 = vmatprep.subr.mxu0 0.0
        %6263 = vmatpush1.xpose.msra.mxu0 0.0
        %6264 = vmatprep.subr.mxu0 0.0
        %6265 = vmatpush1.xpose.msra.mxu0 0.0
        %6266 = vmatprep.subr.mxu0 0.0
        %6267 = vmatpush1.xpose.msra.mxu0 0.0
        %6268 = vmatprep.subr.mxu0 0.0
        %6269 = vmatpush1.xpose.msra.mxu0 0.0
        %6270 = vmatprep.subr.mxu0 0.0
        %6271 = vmatpush1.xpose.msra.mxu0 0.0
        %6272 = vmatprep.subr.mxu0 0.0
        %6273 = vmatpush1.xpose.msra.mxu0 0.0
        %6274 = vmatprep.subr.mxu0 0.0
        %6275 = vmatpush1.xpose.msra.mxu0 0.0
        %6276 = vmatprep.subr.mxu0 0.0
        %6277 = vmatpush1.xpose.msra.mxu0 0.0
        %6278 = vmatprep.subr.mxu0 0.0
        %6279 = vmatpush1.xpose.msra.mxu0 0.0
        %6280 = vmatprep.subr.mxu0 0.0
        %6281 = vmatpush1.xpose.msra.mxu0 0.0
        %6282 = vmatprep.subr.mxu0 0.0
        %6283 = vmatpush1.xpose.msra.mxu0 0.0
        %6284 = vmatprep.subr.mxu0 0.0
        %6285 = vmatpush1.xpose.msra.mxu0 0.0
        %6286 = vmatprep.subr.mxu0 0.0
        %6287 = vmatpush1.xpose.msra.mxu0 %v6254
        %6288 = vmatprep.subr.mxu0 0.0
        %6289 = vmatpush2.xpose.msra.mxu0 0.0
        %6290 = vmatprep.subr.mxu0 0.0
        %6291 = vmatpush2.xpose.msra.mxu0 0.0
        %6292 = vmatprep.subr.mxu0 0.0
        %6293 = vmatpush2.xpose.msra.mxu0 0.0
        %6294 = vmatprep.subr.mxu0 0.0
        %6295 = vmatpush2.xpose.msra.mxu0 0.0
        %6296 = vmatprep.subr.mxu0 0.0
        %6297 = vmatpush2.xpose.msra.mxu0 0.0
        %6298 = vmatprep.subr.mxu0 0.0
        %6299 = vmatpush2.xpose.msra.mxu0 0.0
        %6300 = vmatprep.subr.mxu0 0.0
        %6301 = vmatpush2.xpose.msra.mxu0 0.0
        %6302 = vmatprep.subr.mxu0 0.0
        %6303 = vmatpush2.xpose.msra.mxu0 0.0
        %6304 = vmatprep.subr.mxu0 0.0
        %6305 = vmatpush2.xpose.msra.mxu0 0.0
        %6306 = vmatprep.subr.mxu0 0.0
        %6307 = vmatpush2.xpose.msra.mxu0 0.0
        %6308 = vmatprep.subr.mxu0 0.0
        %6309 = vmatpush2.xpose.msra.mxu0 0.0
        %6310 = vmatprep.subr.mxu0 0.0
        %6311 = vmatpush2.xpose.msra.mxu0 0.0
        %6312 = vmatprep.subr.mxu0 0.0
        %6313 = vmatpush2.xpose.msra.mxu0 0.0
        %6314 = vmatprep.subr.mxu0 0.0
        %6315 = vmatpush2.xpose.msra.mxu0 0.0
        %6316 = vmatprep.subr.mxu0 0.0
        %6317 = vmatpush2.xpose.msra.mxu0 0.0
        %6318 = vmatprep.subr.mxu0 0.0
        %6319 = vmatpush2.xpose.msra.mxu0 0.0
        %6320 = vmatprep.mubr.f32.mxu0 0.0
        %6321 = vmatmul.mubr.f32.gmra.mxu0 %v6251
        %v6322 = vpop.f32.mrf.mxu0
        %v6323 = vadd.f32 0.0, %v6322
        %v6324 = vpop.f32.mrf.mxu0
        %6325 = vdwg.mxu0
        %v6327 = vsel %vm1623, %v5411, 0
        %v6330 = vsel %vm1623, %v5753, 0
        %6332 = vmatprep.subr.mxu0 0.0
        %6333 = vmatpush1.xpose.msra.mxu0 0.0
        %6334 = vmatprep.subr.mxu0 0.0
        %6335 = vmatpush1.xpose.msra.mxu0 0.0
        %6336 = vmatprep.subr.mxu0 0.0
        %6337 = vmatpush1.xpose.msra.mxu0 0.0
        %6338 = vmatprep.subr.mxu0 0.0
        %6339 = vmatpush1.xpose.msra.mxu0 0.0
        %6340 = vmatprep.subr.mxu0 0.0
        %6341 = vmatpush1.xpose.msra.mxu0 0.0
        %6342 = vmatprep.subr.mxu0 0.0
        %6343 = vmatpush1.xpose.msra.mxu0 0.0
        %6344 = vmatprep.subr.mxu0 0.0
        %6345 = vmatpush1.xpose.msra.mxu0 0.0
        %6346 = vmatprep.subr.mxu0 0.0
        %6347 = vmatpush1.xpose.msra.mxu0 0.0
        %6348 = vmatprep.subr.mxu0 0.0
        %6349 = vmatpush1.xpose.msra.mxu0 0.0
        %6350 = vmatprep.subr.mxu0 0.0
        %6351 = vmatpush1.xpose.msra.mxu0 0.0
        %6352 = vmatprep.subr.mxu0 0.0
        %6353 = vmatpush1.xpose.msra.mxu0 0.0
        %6354 = vmatprep.subr.mxu0 0.0
        %6355 = vmatpush1.xpose.msra.mxu0 0.0
        %6356 = vmatprep.subr.mxu0 0.0
        %6357 = vmatpush1.xpose.msra.mxu0 0.0
        %6358 = vmatprep.subr.mxu0 0.0
        %6359 = vmatpush1.xpose.msra.mxu0 0.0
        %6360 = vmatprep.subr.mxu0 0.0
        %6361 = vmatpush1.xpose.msra.mxu0 0.0
        %6362 = vmatprep.subr.mxu0 0.0
        %6363 = vmatpush1.xpose.msra.mxu0 %v6330
        %6364 = vmatprep.subr.mxu0 0.0
        %6365 = vmatpush2.xpose.msra.mxu0 0.0
        %6366 = vmatprep.subr.mxu0 0.0
        %6367 = vmatpush2.xpose.msra.mxu0 0.0
        %6368 = vmatprep.subr.mxu0 0.0
        %6369 = vmatpush2.xpose.msra.mxu0 0.0
        %6370 = vmatprep.subr.mxu0 0.0
        %6371 = vmatpush2.xpose.msra.mxu0 0.0
        %6372 = vmatprep.subr.mxu0 0.0
        %6373 = vmatpush2.xpose.msra.mxu0 0.0
        %6374 = vmatprep.subr.mxu0 0.0
        %6375 = vmatpush2.xpose.msra.mxu0 0.0
        %6376 = vmatprep.subr.mxu0 0.0
        %6377 = vmatpush2.xpose.msra.mxu0 0.0
        %6378 = vmatprep.subr.mxu0 0.0
        %6379 = vmatpush2.xpose.msra.mxu0 0.0
        %6380 = vmatprep.subr.mxu0 0.0
        %6381 = vmatpush2.xpose.msra.mxu0 0.0
        %6382 = vmatprep.subr.mxu0 0.0
        %6383 = vmatpush2.xpose.msra.mxu0 0.0
        %6384 = vmatprep.subr.mxu0 0.0
        %6385 = vmatpush2.xpose.msra.mxu0 0.0
        %6386 = vmatprep.subr.mxu0 0.0
        %6387 = vmatpush2.xpose.msra.mxu0 0.0
        %6388 = vmatprep.subr.mxu0 0.0
        %6389 = vmatpush2.xpose.msra.mxu0 0.0
        %6390 = vmatprep.subr.mxu0 0.0
        %6391 = vmatpush2.xpose.msra.mxu0 0.0
        %6392 = vmatprep.subr.mxu0 0.0
        %6393 = vmatpush2.xpose.msra.mxu0 0.0
        %6394 = vmatprep.subr.mxu0 0.0
        %6395 = vmatpush2.xpose.msra.mxu0 0.0
        %6396 = vmatprep.mubr.f32.mxu0 0.0
        %6397 = vmatmul.mubr.f32.gmra.mxu0 %v6327
        %v6398 = vpop.f32.mrf.mxu0
        %v6399 = vadd.f32 0.0, %v6398
        %v6400 = vpop.f32.mrf.mxu0
        %6401 = vdwg.mxu0
        %v6402 = vmul.f32 %v6171, 0.25
        %v6403 = vmul.f32 %v6247, 0.25
        %v6404 = vmul.f32 %v6323, 0.25
        %v6405 = vmul.f32 %v6399, 0.25
        %v6406 = vsel %vm1932, %v6402, -inf
        %6407 = vmax.xlane.f32.xlu0 %v6406
        %v6408 = vpop.xlane.xlu0 %6407
        %v6409 = vsel %vm1932, %v6403, -inf
        %6410 = vmax.xlane.f32.xlu0 %v6409
        %v6411 = vpop.xlane.xlu0 %6410
        %v6412 = vsel %vm1932, %v6404, -inf
        %6413 = vmax.xlane.f32.xlu0 %v6412
        %v6414 = vpop.xlane.xlu0 %6413
        %v6415 = vsel %vm1932, %v6405, -inf
        %6416 = vmax.xlane.f32.xlu0 %v6415
        %v6417 = vpop.xlane.xlu0 %6416
        %v6418 = vsub.f32 %v6402, %v6408
        %v6419 = vsub.f32 %v6403, %v6411
        %v6420 = vsub.f32 %v6404, %v6414
        %v6421 = vsub.f32 %v6405, %v6417
        %v6422 = vmul.f32 %v6418, 1.442695
        %v6423 = vpow.pop %v6422
        %v6424 = vmul.f32 %v6419, 1.442695
        %v6425 = vpow.pop %v6424
        %v6426 = vmul.f32 %v6420, 1.442695
        %v6427 = vpow.pop %v6426
        %v6428 = vmul.f32 %v6421, 1.442695
        %v6429 = vpow.pop %v6428
        %v6430 = vsel %vm1932, %v6423, 0.0
        %6431 = vadd.xlane.f32.xlu0 %v6430
        %v6432 = vpop.xlane.xlu0 %6431
        %v6433 = vsel %vm1932, %v6425, 0.0
        %6434 = vadd.xlane.f32.xlu0 %v6433
        %v6435 = vpop.xlane.xlu0 %6434
        %v6436 = vsel %vm1932, %v6427, 0.0
        %6437 = vadd.xlane.f32.xlu0 %v6436
        %v6438 = vpop.xlane.xlu0 %6437
        %v6439 = vsel %vm1932, %v6429, 0.0
        %6440 = vadd.xlane.f32.xlu0 %v6439
        %v6441 = vpop.xlane.xlu0 %6440
        %v6442 = vrcp.pop %v6432
        %v6443 = vrcp.pop %v6435
        %v6444 = vrcp.pop %v6438
        %v6445 = vrcp.pop %v6441
        %v6446 = vmul.f32 %v6423, %v6442
        %v6447 = vmul.f32 %v6425, %v6443
        %v6448 = vmul.f32 %v6427, %v6444
        %v6449 = vmul.f32 %v6429, %v6445
        %v6451 = vsel %vm1932, %v6446, 0
        %6453 = vmatprep.subr.mxu0 0.0
        %6454 = vmatpush1.msra.mxu0 0.0
        %6455 = vmatprep.subr.mxu0 0.0
        %6456 = vmatpush1.msra.mxu0 0.0
        %6457 = vmatprep.subr.mxu0 0.0
        %6458 = vmatpush1.msra.mxu0 0.0
        %6459 = vmatprep.subr.mxu0 0.0
        %6460 = vmatpush1.msra.mxu0 0.0
        %6461 = vmatprep.subr.mxu0 0.0
        %6462 = vmatpush1.msra.mxu0 0.0
        %6463 = vmatprep.subr.mxu0 0.0
        %6464 = vmatpush1.msra.mxu0 0.0
        %6465 = vmatprep.subr.mxu0 0.0
        %6466 = vmatpush1.msra.mxu0 0.0
        %6467 = vmatprep.subr.mxu0 0.0
        %6468 = vmatpush1.msra.mxu0 0.0
        %6469 = vmatprep.subr.mxu0 0.0
        %6470 = vmatpush1.msra.mxu0 0.0
        %6471 = vmatprep.subr.mxu0 0.0
        %6472 = vmatpush1.msra.mxu0 0.0
        %6473 = vmatprep.subr.mxu0 0.0
        %6474 = vmatpush1.msra.mxu0 0.0
        %6475 = vmatprep.subr.mxu0 0.0
        %6476 = vmatpush1.msra.mxu0 0.0
        %6477 = vmatprep.subr.mxu0 0.0
        %6478 = vmatpush1.msra.mxu0 0.0
        %6479 = vmatprep.subr.mxu0 0.0
        %6480 = vmatpush1.msra.mxu0 0.0
        %6481 = vmatprep.subr.mxu0 0.0
        %6482 = vmatpush1.msra.mxu0 0.0
        %6483 = vmatprep.subr.mxu0 0.0
        %6484 = vmatpush1.msra.mxu0 %v5885
        %6485 = vmatprep.subr.mxu0 0.0
        %6486 = vmatpush2.msra.mxu0 0.0
        %6487 = vmatprep.subr.mxu0 0.0
        %6488 = vmatpush2.msra.mxu0 0.0
        %6489 = vmatprep.subr.mxu0 0.0
        %6490 = vmatpush2.msra.mxu0 0.0
        %6491 = vmatprep.subr.mxu0 0.0
        %6492 = vmatpush2.msra.mxu0 0.0
        %6493 = vmatprep.subr.mxu0 0.0
        %6494 = vmatpush2.msra.mxu0 0.0
        %6495 = vmatprep.subr.mxu0 0.0
        %6496 = vmatpush2.msra.mxu0 0.0
        %6497 = vmatprep.subr.mxu0 0.0
        %6498 = vmatpush2.msra.mxu0 0.0
        %6499 = vmatprep.subr.mxu0 0.0
        %6500 = vmatpush2.msra.mxu0 0.0
        %6501 = vmatprep.subr.mxu0 0.0
        %6502 = vmatpush2.msra.mxu0 0.0
        %6503 = vmatprep.subr.mxu0 0.0
        %6504 = vmatpush2.msra.mxu0 0.0
        %6505 = vmatprep.subr.mxu0 0.0
        %6506 = vmatpush2.msra.mxu0 0.0
        %6507 = vmatprep.subr.mxu0 0.0
        %6508 = vmatpush2.msra.mxu0 0.0
        %6509 = vmatprep.subr.mxu0 0.0
        %6510 = vmatpush2.msra.mxu0 0.0
        %6511 = vmatprep.subr.mxu0 0.0
        %6512 = vmatpush2.msra.mxu0 0.0
        %6513 = vmatprep.subr.mxu0 0.0
        %6514 = vmatpush2.msra.mxu0 0.0
        %6515 = vmatprep.subr.mxu0 0.0
        %6516 = vmatpush2.msra.mxu0 0.0
        %6517 = vmatprep.mubr.f32.mxu0 0.0
        %6518 = vmatmul.mubr.f32.gmra.mxu0 %v6451
        %v6519 = vpop.f32.mrf.mxu0
        %v6520 = vadd.f32 0.0, %v6519
        %v6521 = vpop.f32.mrf.mxu0
        %6522 = vdwg.mxu0
        %v6524 = vsel %vm1932, %v6447, 0
        %6526 = vmatprep.subr.mxu0 0.0
        %6527 = vmatpush1.msra.mxu0 0.0
        %6528 = vmatprep.subr.mxu0 0.0
        %6529 = vmatpush1.msra.mxu0 0.0
        %6530 = vmatprep.subr.mxu0 0.0
        %6531 = vmatpush1.msra.mxu0 0.0
        %6532 = vmatprep.subr.mxu0 0.0
        %6533 = vmatpush1.msra.mxu0 0.0
        %6534 = vmatprep.subr.mxu0 0.0
        %6535 = vmatpush1.msra.mxu0 0.0
        %6536 = vmatprep.subr.mxu0 0.0
        %6537 = vmatpush1.msra.mxu0 0.0
        %6538 = vmatprep.subr.mxu0 0.0
        %6539 = vmatpush1.msra.mxu0 0.0
        %6540 = vmatprep.subr.mxu0 0.0
        %6541 = vmatpush1.msra.mxu0 0.0
        %6542 = vmatprep.subr.mxu0 0.0
        %6543 = vmatpush1.msra.mxu0 0.0
        %6544 = vmatprep.subr.mxu0 0.0
        %6545 = vmatpush1.msra.mxu0 0.0
        %6546 = vmatprep.subr.mxu0 0.0
        %6547 = vmatpush1.msra.mxu0 0.0
        %6548 = vmatprep.subr.mxu0 0.0
        %6549 = vmatpush1.msra.mxu0 0.0
        %6550 = vmatprep.subr.mxu0 0.0
        %6551 = vmatpush1.msra.mxu0 0.0
        %6552 = vmatprep.subr.mxu0 0.0
        %6553 = vmatpush1.msra.mxu0 0.0
        %6554 = vmatprep.subr.mxu0 0.0
        %6555 = vmatpush1.msra.mxu0 0.0
        %6556 = vmatprep.subr.mxu0 0.0
        %6557 = vmatpush1.msra.mxu0 %v5955
        %6558 = vmatprep.subr.mxu0 0.0
        %6559 = vmatpush2.msra.mxu0 0.0
        %6560 = vmatprep.subr.mxu0 0.0
        %6561 = vmatpush2.msra.mxu0 0.0
        %6562 = vmatprep.subr.mxu0 0.0
        %6563 = vmatpush2.msra.mxu0 0.0
        %6564 = vmatprep.subr.mxu0 0.0
        %6565 = vmatpush2.msra.mxu0 0.0
        %6566 = vmatprep.subr.mxu0 0.0
        %6567 = vmatpush2.msra.mxu0 0.0
        %6568 = vmatprep.subr.mxu0 0.0
        %6569 = vmatpush2.msra.mxu0 0.0
        %6570 = vmatprep.subr.mxu0 0.0
        %6571 = vmatpush2.msra.mxu0 0.0
        %6572 = vmatprep.subr.mxu0 0.0
        %6573 = vmatpush2.msra.mxu0 0.0
        %6574 = vmatprep.subr.mxu0 0.0
        %6575 = vmatpush2.msra.mxu0 0.0
        %6576 = vmatprep.subr.mxu0 0.0
        %6577 = vmatpush2.msra.mxu0 0.0
        %6578 = vmatprep.subr.mxu0 0.0
        %6579 = vmatpush2.msra.mxu0 0.0
        %6580 = vmatprep.subr.mxu0 0.0
        %6581 = vmatpush2.msra.mxu0 0.0
        %6582 = vmatprep.subr.mxu0 0.0
        %6583 = vmatpush2.msra.mxu0 0.0
        %6584 = vmatprep.subr.mxu0 0.0
        %6585 = vmatpush2.msra.mxu0 0.0
        %6586 = vmatprep.subr.mxu0 0.0
        %6587 = vmatpush2.msra.mxu0 0.0
        %6588 = vmatprep.subr.mxu0 0.0
        %6589 = vmatpush2.msra.mxu0 0.0
        %6590 = vmatprep.mubr.f32.mxu0 0.0
        %6591 = vmatmul.mubr.f32.gmra.mxu0 %v6524
        %v6592 = vpop.f32.mrf.mxu0
        %v6593 = vadd.f32 0.0, %v6592
        %v6594 = vpop.f32.mrf.mxu0
        %6595 = vdwg.mxu0
        %v6597 = vsel %vm1932, %v6448, 0
        %6599 = vmatprep.subr.mxu0 0.0
        %6600 = vmatpush1.msra.mxu0 0.0
        %6601 = vmatprep.subr.mxu0 0.0
        %6602 = vmatpush1.msra.mxu0 0.0
        %6603 = vmatprep.subr.mxu0 0.0
        %6604 = vmatpush1.msra.mxu0 0.0
        %6605 = vmatprep.subr.mxu0 0.0
        %6606 = vmatpush1.msra.mxu0 0.0
        %6607 = vmatprep.subr.mxu0 0.0
        %6608 = vmatpush1.msra.mxu0 0.0
        %6609 = vmatprep.subr.mxu0 0.0
        %6610 = vmatpush1.msra.mxu0 0.0
        %6611 = vmatprep.subr.mxu0 0.0
        %6612 = vmatpush1.msra.mxu0 0.0
        %6613 = vmatprep.subr.mxu0 0.0
        %6614 = vmatpush1.msra.mxu0 0.0
        %6615 = vmatprep.subr.mxu0 0.0
        %6616 = vmatpush1.msra.mxu0 0.0
        %6617 = vmatprep.subr.mxu0 0.0
        %6618 = vmatpush1.msra.mxu0 0.0
        %6619 = vmatprep.subr.mxu0 0.0
        %6620 = vmatpush1.msra.mxu0 0.0
        %6621 = vmatprep.subr.mxu0 0.0
        %6622 = vmatpush1.msra.mxu0 0.0
        %6623 = vmatprep.subr.mxu0 0.0
        %6624 = vmatpush1.msra.mxu0 0.0
        %6625 = vmatprep.subr.mxu0 0.0
        %6626 = vmatpush1.msra.mxu0 0.0
        %6627 = vmatprep.subr.mxu0 0.0
        %6628 = vmatpush1.msra.mxu0 0.0
        %6629 = vmatprep.subr.mxu0 0.0
        %6630 = vmatpush1.msra.mxu0 %v6025
        %6631 = vmatprep.subr.mxu0 0.0
        %6632 = vmatpush2.msra.mxu0 0.0
        %6633 = vmatprep.subr.mxu0 0.0
        %6634 = vmatpush2.msra.mxu0 0.0
        %6635 = vmatprep.subr.mxu0 0.0
        %6636 = vmatpush2.msra.mxu0 0.0
        %6637 = vmatprep.subr.mxu0 0.0
        %6638 = vmatpush2.msra.mxu0 0.0
        %6639 = vmatprep.subr.mxu0 0.0
        %6640 = vmatpush2.msra.mxu0 0.0
        %6641 = vmatprep.subr.mxu0 0.0
        %6642 = vmatpush2.msra.mxu0 0.0
        %6643 = vmatprep.subr.mxu0 0.0
        %6644 = vmatpush2.msra.mxu0 0.0
        %6645 = vmatprep.subr.mxu0 0.0
        %6646 = vmatpush2.msra.mxu0 0.0
        %6647 = vmatprep.subr.mxu0 0.0
        %6648 = vmatpush2.msra.mxu0 0.0
        %6649 = vmatprep.subr.mxu0 0.0
        %6650 = vmatpush2.msra.mxu0 0.0
        %6651 = vmatprep.subr.mxu0 0.0
        %6652 = vmatpush2.msra.mxu0 0.0
        %6653 = vmatprep.subr.mxu0 0.0
        %6654 = vmatpush2.msra.mxu0 0.0
        %6655 = vmatprep.subr.mxu0 0.0
        %6656 = vmatpush2.msra.mxu0 0.0
        %6657 = vmatprep.subr.mxu0 0.0
        %6658 = vmatpush2.msra.mxu0 0.0
        %6659 = vmatprep.subr.mxu0 0.0
        %6660 = vmatpush2.msra.mxu0 0.0
        %6661 = vmatprep.subr.mxu0 0.0
        %6662 = vmatpush2.msra.mxu0 0.0
        %6663 = vmatprep.mubr.f32.mxu0 0.0
        %6664 = vmatmul.mubr.f32.gmra.mxu0 %v6597
        %v6665 = vpop.f32.mrf.mxu0
        %v6666 = vadd.f32 0.0, %v6665
        %v6667 = vpop.f32.mrf.mxu0
        %6668 = vdwg.mxu0
        %v6670 = vsel %vm1932, %v6449, 0
        %6672 = vmatprep.subr.mxu0 0.0
        %6673 = vmatpush1.msra.mxu0 0.0
        %6674 = vmatprep.subr.mxu0 0.0
        %6675 = vmatpush1.msra.mxu0 0.0
        %6676 = vmatprep.subr.mxu0 0.0
        %6677 = vmatpush1.msra.mxu0 0.0
        %6678 = vmatprep.subr.mxu0 0.0
        %6679 = vmatpush1.msra.mxu0 0.0
        %6680 = vmatprep.subr.mxu0 0.0
        %6681 = vmatpush1.msra.mxu0 0.0
        %6682 = vmatprep.subr.mxu0 0.0
        %6683 = vmatpush1.msra.mxu0 0.0
        %6684 = vmatprep.subr.mxu0 0.0
        %6685 = vmatpush1.msra.mxu0 0.0
        %6686 = vmatprep.subr.mxu0 0.0
        %6687 = vmatpush1.msra.mxu0 0.0
        %6688 = vmatprep.subr.mxu0 0.0
        %6689 = vmatpush1.msra.mxu0 0.0
        %6690 = vmatprep.subr.mxu0 0.0
        %6691 = vmatpush1.msra.mxu0 0.0
        %6692 = vmatprep.subr.mxu0 0.0
        %6693 = vmatpush1.msra.mxu0 0.0
        %6694 = vmatprep.subr.mxu0 0.0
        %6695 = vmatpush1.msra.mxu0 0.0
        %6696 = vmatprep.subr.mxu0 0.0
        %6697 = vmatpush1.msra.mxu0 0.0
        %6698 = vmatprep.subr.mxu0 0.0
        %6699 = vmatpush1.msra.mxu0 0.0
        %6700 = vmatprep.subr.mxu0 0.0
        %6701 = vmatpush1.msra.mxu0 0.0
        %6702 = vmatprep.subr.mxu0 0.0
        %6703 = vmatpush1.msra.mxu0 %v6095
        %6704 = vmatprep.subr.mxu0 0.0
        %6705 = vmatpush2.msra.mxu0 0.0
        %6706 = vmatprep.subr.mxu0 0.0
        %6707 = vmatpush2.msra.mxu0 0.0
        %6708 = vmatprep.subr.mxu0 0.0
        %6709 = vmatpush2.msra.mxu0 0.0
        %6710 = vmatprep.subr.mxu0 0.0
        %6711 = vmatpush2.msra.mxu0 0.0
        %6712 = vmatprep.subr.mxu0 0.0
        %6713 = vmatpush2.msra.mxu0 0.0
        %6714 = vmatprep.subr.mxu0 0.0
        %6715 = vmatpush2.msra.mxu0 0.0
        %6716 = vmatprep.subr.mxu0 0.0
        %6717 = vmatpush2.msra.mxu0 0.0
        %6718 = vmatprep.subr.mxu0 0.0
        %6719 = vmatpush2.msra.mxu0 0.0
        %6720 = vmatprep.subr.mxu0 0.0
        %6721 = vmatpush2.msra.mxu0 0.0
        %6722 = vmatprep.subr.mxu0 0.0
        %6723 = vmatpush2.msra.mxu0 0.0
        %6724 = vmatprep.subr.mxu0 0.0
        %6725 = vmatpush2.msra.mxu0 0.0
        %6726 = vmatprep.subr.mxu0 0.0
        %6727 = vmatpush2.msra.mxu0 0.0
        %6728 = vmatprep.subr.mxu0 0.0
        %6729 = vmatpush2.msra.mxu0 0.0
        %6730 = vmatprep.subr.mxu0 0.0
        %6731 = vmatpush2.msra.mxu0 0.0
        %6732 = vmatprep.subr.mxu0 0.0
        %6733 = vmatpush2.msra.mxu0 0.0
        %6734 = vmatprep.subr.mxu0 0.0
        %6735 = vmatpush2.msra.mxu0 0.0
        %6736 = vmatprep.mubr.f32.mxu0 0.0
        %6737 = vmatmul.mubr.f32.gmra.mxu0 %v6670
        %v6738 = vpop.f32.mrf.mxu0
        %v6739 = vadd.f32 0.0, %v6738
        %v6740 = vpop.f32.mrf.mxu0
        %6741 = vdwg.mxu0
        %s6742 = scalar_lea.vmem %s7, 128
        %v6743 = vld [vmem:[%s6742] sm:$0xff]
        %v6744 = vld [vmem:[%s6742 + $0x8] sm:$0xff]
        %v6745 = vld [vmem:[%s6742 + $0x10] sm:$0xff]
        %v6746 = vld [vmem:[%s6742 + $0x18] sm:$0xff]
        %v6747 = vld [vmem:[%s6742 + $0x20] sm:$0xff]
        %v6748 = vld [vmem:[%s6742 + $0x28] sm:$0xff]
        %v6749 = vld [vmem:[%s6742 + $0x30] sm:$0xff]
        %v6750 = vld [vmem:[%s6742 + $0x38] sm:$0xff]
        %v6752 = vsel %vm1623, %v6520, 0
        %6754 = vmatprep.subr.mxu0 0.0
        %6755 = vmatpush1.msra.mxu0 0.0
        %6756 = vmatprep.subr.mxu0 0.0
        %6757 = vmatpush1.msra.mxu0 0.0
        %6758 = vmatprep.subr.mxu0 0.0
        %6759 = vmatpush1.msra.mxu0 0.0
        %6760 = vmatprep.subr.mxu0 0.0
        %6761 = vmatpush1.msra.mxu0 0.0
        %6762 = vmatprep.subr.mxu0 0.0
        %6763 = vmatpush1.msra.mxu0 0.0
        %6764 = vmatprep.subr.mxu0 0.0
        %6765 = vmatpush1.msra.mxu0 0.0
        %6766 = vmatprep.subr.mxu0 0.0
        %6767 = vmatpush1.msra.mxu0 0.0
        %6768 = vmatprep.subr.mxu0 0.0
        %6769 = vmatpush1.msra.mxu0 0.0
        %6770 = vmatprep.subr.mxu0 0.0
        %6771 = vmatpush1.msra.mxu0 0.0
        %6772 = vmatprep.subr.mxu0 0.0
        %6773 = vmatpush1.msra.mxu0 0.0
        %6774 = vmatprep.subr.mxu0 0.0
        %6775 = vmatpush1.msra.mxu0 0.0
        %6776 = vmatprep.subr.mxu0 0.0
        %6777 = vmatpush1.msra.mxu0 0.0
        %6778 = vmatprep.subr.mxu0 0.0
        %6779 = vmatpush1.msra.mxu0 0.0
        %6780 = vmatprep.subr.mxu0 0.0
        %6781 = vmatpush1.msra.mxu0 0.0
        %6782 = vmatprep.subr.mxu0 0.0
        %6783 = vmatpush1.msra.mxu0 %v6744
        %6784 = vmatprep.subr.mxu0 0.0
        %6785 = vmatpush1.msra.mxu0 %v6743
        %6786 = vmatprep.subr.mxu0 0.0
        %6787 = vmatpush2.msra.mxu0 0.0
        %6788 = vmatprep.subr.mxu0 0.0
        %6789 = vmatpush2.msra.mxu0 0.0
        %6790 = vmatprep.subr.mxu0 0.0
        %6791 = vmatpush2.msra.mxu0 0.0
        %6792 = vmatprep.subr.mxu0 0.0
        %6793 = vmatpush2.msra.mxu0 0.0
        %6794 = vmatprep.subr.mxu0 0.0
        %6795 = vmatpush2.msra.mxu0 0.0
        %6796 = vmatprep.subr.mxu0 0.0
        %6797 = vmatpush2.msra.mxu0 0.0
        %6798 = vmatprep.subr.mxu0 0.0
        %6799 = vmatpush2.msra.mxu0 0.0
        %6800 = vmatprep.subr.mxu0 0.0
        %6801 = vmatpush2.msra.mxu0 0.0
        %6802 = vmatprep.subr.mxu0 0.0
        %6803 = vmatpush2.msra.mxu0 0.0
        %6804 = vmatprep.subr.mxu0 0.0
        %6805 = vmatpush2.msra.mxu0 0.0
        %6806 = vmatprep.subr.mxu0 0.0
        %6807 = vmatpush2.msra.mxu0 0.0
        %6808 = vmatprep.subr.mxu0 0.0
        %6809 = vmatpush2.msra.mxu0 0.0
        %6810 = vmatprep.subr.mxu0 0.0
        %6811 = vmatpush2.msra.mxu0 0.0
        %6812 = vmatprep.subr.mxu0 0.0
        %6813 = vmatpush2.msra.mxu0 0.0
        %6814 = vmatprep.subr.mxu0 0.0
        %6815 = vmatpush2.msra.mxu0 0.0
        %6816 = vmatprep.subr.mxu0 0.0
        %6817 = vmatpush2.msra.mxu0 0.0
        %6818 = vmatprep.mubr.f32.mxu0 0.0
        %6819 = vmatmul.mubr.f32.gmra.mxu0 %v6752
        %v6820 = vpop.f32.mrf.mxu0
        %v6821 = vadd.f32 0.0, %v6820
        %v6822 = vpop.f32.mrf.mxu0
        %6823 = vdwg.mxu0
        %v6825 = vsel %vm1623, %v6593, 0
        %6827 = vmatprep.subr.mxu0 0.0
        %6828 = vmatpush1.msra.mxu0 0.0
        %6829 = vmatprep.subr.mxu0 0.0
        %6830 = vmatpush1.msra.mxu0 0.0
        %6831 = vmatprep.subr.mxu0 0.0
        %6832 = vmatpush1.msra.mxu0 0.0
        %6833 = vmatprep.subr.mxu0 0.0
        %6834 = vmatpush1.msra.mxu0 0.0
        %6835 = vmatprep.subr.mxu0 0.0
        %6836 = vmatpush1.msra.mxu0 0.0
        %6837 = vmatprep.subr.mxu0 0.0
        %6838 = vmatpush1.msra.mxu0 0.0
        %6839 = vmatprep.subr.mxu0 0.0
        %6840 = vmatpush1.msra.mxu0 0.0
        %6841 = vmatprep.subr.mxu0 0.0
        %6842 = vmatpush1.msra.mxu0 0.0
        %6843 = vmatprep.subr.mxu0 0.0
        %6844 = vmatpush1.msra.mxu0 0.0
        %6845 = vmatprep.subr.mxu0 0.0
        %6846 = vmatpush1.msra.mxu0 0.0
        %6847 = vmatprep.subr.mxu0 0.0
        %6848 = vmatpush1.msra.mxu0 0.0
        %6849 = vmatprep.subr.mxu0 0.0
        %6850 = vmatpush1.msra.mxu0 0.0
        %6851 = vmatprep.subr.mxu0 0.0
        %6852 = vmatpush1.msra.mxu0 0.0
        %6853 = vmatprep.subr.mxu0 0.0
        %6854 = vmatpush1.msra.mxu0 0.0
        %6855 = vmatprep.subr.mxu0 0.0
        %6856 = vmatpush1.msra.mxu0 %v6746
        %6857 = vmatprep.subr.mxu0 0.0
        %6858 = vmatpush1.msra.mxu0 %v6745
        %6859 = vmatprep.subr.mxu0 0.0
        %6860 = vmatpush2.msra.mxu0 0.0
        %6861 = vmatprep.subr.mxu0 0.0
        %6862 = vmatpush2.msra.mxu0 0.0
        %6863 = vmatprep.subr.mxu0 0.0
        %6864 = vmatpush2.msra.mxu0 0.0
        %6865 = vmatprep.subr.mxu0 0.0
        %6866 = vmatpush2.msra.mxu0 0.0
        %6867 = vmatprep.subr.mxu0 0.0
        %6868 = vmatpush2.msra.mxu0 0.0
        %6869 = vmatprep.subr.mxu0 0.0
        %6870 = vmatpush2.msra.mxu0 0.0
        %6871 = vmatprep.subr.mxu0 0.0
        %6872 = vmatpush2.msra.mxu0 0.0
        %6873 = vmatprep.subr.mxu0 0.0
        %6874 = vmatpush2.msra.mxu0 0.0
        %6875 = vmatprep.subr.mxu0 0.0
        %6876 = vmatpush2.msra.mxu0 0.0
        %6877 = vmatprep.subr.mxu0 0.0
        %6878 = vmatpush2.msra.mxu0 0.0
        %6879 = vmatprep.subr.mxu0 0.0
        %6880 = vmatpush2.msra.mxu0 0.0
        %6881 = vmatprep.subr.mxu0 0.0
        %6882 = vmatpush2.msra.mxu0 0.0
        %6883 = vmatprep.subr.mxu0 0.0
        %6884 = vmatpush2.msra.mxu0 0.0
        %6885 = vmatprep.subr.mxu0 0.0
        %6886 = vmatpush2.msra.mxu0 0.0
        %6887 = vmatprep.subr.mxu0 0.0
        %6888 = vmatpush2.msra.mxu0 0.0
        %6889 = vmatprep.subr.mxu0 0.0
        %6890 = vmatpush2.msra.mxu0 0.0
        %6891 = vmatprep.mubr.f32.mxu0 0.0
        %6892 = vmatmul.mubr.f32.gmra.mxu0 %v6825
        %v6893 = vpop.f32.mrf.mxu0
        %v6894 = vadd.f32 0.0, %v6893
        %v6895 = vpop.f32.mrf.mxu0
        %6896 = vdwg.mxu0
        %v6898 = vsel %vm1623, %v6666, 0
        %6900 = vmatprep.subr.mxu0 0.0
        %6901 = vmatpush1.msra.mxu0 0.0
        %6902 = vmatprep.subr.mxu0 0.0
        %6903 = vmatpush1.msra.mxu0 0.0
        %6904 = vmatprep.subr.mxu0 0.0
        %6905 = vmatpush1.msra.mxu0 0.0
        %6906 = vmatprep.subr.mxu0 0.0
        %6907 = vmatpush1.msra.mxu0 0.0
        %6908 = vmatprep.subr.mxu0 0.0
        %6909 = vmatpush1.msra.mxu0 0.0
        %6910 = vmatprep.subr.mxu0 0.0
        %6911 = vmatpush1.msra.mxu0 0.0
        %6912 = vmatprep.subr.mxu0 0.0
        %6913 = vmatpush1.msra.mxu0 0.0
        %6914 = vmatprep.subr.mxu0 0.0
        %6915 = vmatpush1.msra.mxu0 0.0
        %6916 = vmatprep.subr.mxu0 0.0
        %6917 = vmatpush1.msra.mxu0 0.0
        %6918 = vmatprep.subr.mxu0 0.0
        %6919 = vmatpush1.msra.mxu0 0.0
        %6920 = vmatprep.subr.mxu0 0.0
        %6921 = vmatpush1.msra.mxu0 0.0
        %6922 = vmatprep.subr.mxu0 0.0
        %6923 = vmatpush1.msra.mxu0 0.0
        %6924 = vmatprep.subr.mxu0 0.0
        %6925 = vmatpush1.msra.mxu0 0.0
        %6926 = vmatprep.subr.mxu0 0.0
        %6927 = vmatpush1.msra.mxu0 0.0
        %6928 = vmatprep.subr.mxu0 0.0
        %6929 = vmatpush1.msra.mxu0 %v6748
        %6930 = vmatprep.subr.mxu0 0.0
        %6931 = vmatpush1.msra.mxu0 %v6747
        %6932 = vmatprep.subr.mxu0 0.0
        %6933 = vmatpush2.msra.mxu0 0.0
        %6934 = vmatprep.subr.mxu0 0.0
        %6935 = vmatpush2.msra.mxu0 0.0
        %6936 = vmatprep.subr.mxu0 0.0
        %6937 = vmatpush2.msra.mxu0 0.0
        %6938 = vmatprep.subr.mxu0 0.0
        %6939 = vmatpush2.msra.mxu0 0.0
        %6940 = vmatprep.subr.mxu0 0.0
        %6941 = vmatpush2.msra.mxu0 0.0
        %6942 = vmatprep.subr.mxu0 0.0
        %6943 = vmatpush2.msra.mxu0 0.0
        %6944 = vmatprep.subr.mxu0 0.0
        %6945 = vmatpush2.msra.mxu0 0.0
        %6946 = vmatprep.subr.mxu0 0.0
        %6947 = vmatpush2.msra.mxu0 0.0
        %6948 = vmatprep.subr.mxu0 0.0
        %6949 = vmatpush2.msra.mxu0 0.0
        %6950 = vmatprep.subr.mxu0 0.0
        %6951 = vmatpush2.msra.mxu0 0.0
        %6952 = vmatprep.subr.mxu0 0.0
        %6953 = vmatpush2.msra.mxu0 0.0
        %6954 = vmatprep.subr.mxu0 0.0
        %6955 = vmatpush2.msra.mxu0 0.0
        %6956 = vmatprep.subr.mxu0 0.0
        %6957 = vmatpush2.msra.mxu0 0.0
        %6958 = vmatprep.subr.mxu0 0.0
        %6959 = vmatpush2.msra.mxu0 0.0
        %6960 = vmatprep.subr.mxu0 0.0
        %6961 = vmatpush2.msra.mxu0 0.0
        %6962 = vmatprep.subr.mxu0 0.0
        %6963 = vmatpush2.msra.mxu0 0.0
        %6964 = vmatprep.mubr.f32.mxu0 0.0
        %6965 = vmatmul.mubr.f32.gmra.mxu0 %v6898
        %v6966 = vpop.f32.mrf.mxu0
        %v6967 = vadd.f32 0.0, %v6966
        %v6968 = vpop.f32.mrf.mxu0
        %6969 = vdwg.mxu0
        %v6971 = vsel %vm1623, %v6739, 0
        %6973 = vmatprep.subr.mxu0 0.0
        %6974 = vmatpush1.msra.mxu0 0.0
        %6975 = vmatprep.subr.mxu0 0.0
        %6976 = vmatpush1.msra.mxu0 0.0
        %6977 = vmatprep.subr.mxu0 0.0
        %6978 = vmatpush1.msra.mxu0 0.0
        %6979 = vmatprep.subr.mxu0 0.0
        %6980 = vmatpush1.msra.mxu0 0.0
        %6981 = vmatprep.subr.mxu0 0.0
        %6982 = vmatpush1.msra.mxu0 0.0
        %6983 = vmatprep.subr.mxu0 0.0
        %6984 = vmatpush1.msra.mxu0 0.0
        %6985 = vmatprep.subr.mxu0 0.0
        %6986 = vmatpush1.msra.mxu0 0.0
        %6987 = vmatprep.subr.mxu0 0.0
        %6988 = vmatpush1.msra.mxu0 0.0
        %6989 = vmatprep.subr.mxu0 0.0
        %6990 = vmatpush1.msra.mxu0 0.0
        %6991 = vmatprep.subr.mxu0 0.0
        %6992 = vmatpush1.msra.mxu0 0.0
        %6993 = vmatprep.subr.mxu0 0.0
        %6994 = vmatpush1.msra.mxu0 0.0
        %6995 = vmatprep.subr.mxu0 0.0
        %6996 = vmatpush1.msra.mxu0 0.0
        %6997 = vmatprep.subr.mxu0 0.0
        %6998 = vmatpush1.msra.mxu0 0.0
        %6999 = vmatprep.subr.mxu0 0.0
        %7000 = vmatpush1.msra.mxu0 0.0
        %7001 = vmatprep.subr.mxu0 0.0
        %7002 = vmatpush1.msra.mxu0 %v6750
        %7003 = vmatprep.subr.mxu0 0.0
        %7004 = vmatpush1.msra.mxu0 %v6749
        %7005 = vmatprep.subr.mxu0 0.0
        %7006 = vmatpush2.msra.mxu0 0.0
        %7007 = vmatprep.subr.mxu0 0.0
        %7008 = vmatpush2.msra.mxu0 0.0
        %7009 = vmatprep.subr.mxu0 0.0
        %7010 = vmatpush2.msra.mxu0 0.0
        %7011 = vmatprep.subr.mxu0 0.0
        %7012 = vmatpush2.msra.mxu0 0.0
        %7013 = vmatprep.subr.mxu0 0.0
        %7014 = vmatpush2.msra.mxu0 0.0
        %7015 = vmatprep.subr.mxu0 0.0
        %7016 = vmatpush2.msra.mxu0 0.0
        %7017 = vmatprep.subr.mxu0 0.0
        %7018 = vmatpush2.msra.mxu0 0.0
        %7019 = vmatprep.subr.mxu0 0.0
        %7020 = vmatpush2.msra.mxu0 0.0
        %7021 = vmatprep.subr.mxu0 0.0
        %7022 = vmatpush2.msra.mxu0 0.0
        %7023 = vmatprep.subr.mxu0 0.0
        %7024 = vmatpush2.msra.mxu0 0.0
        %7025 = vmatprep.subr.mxu0 0.0
        %7026 = vmatpush2.msra.mxu0 0.0
        %7027 = vmatprep.subr.mxu0 0.0
        %7028 = vmatpush2.msra.mxu0 0.0
        %7029 = vmatprep.subr.mxu0 0.0
        %7030 = vmatpush2.msra.mxu0 0.0
        %7031 = vmatprep.subr.mxu0 0.0
        %7032 = vmatpush2.msra.mxu0 0.0
        %7033 = vmatprep.subr.mxu0 0.0
        %7034 = vmatpush2.msra.mxu0 0.0
        %7035 = vmatprep.subr.mxu0 0.0
        %7036 = vmatpush2.msra.mxu0 0.0
        %7037 = vmatprep.mubr.f32.mxu0 0.0
        %7038 = vmatmul.mubr.f32.gmra.mxu0 %v6971
        %v7039 = vpop.f32.mrf.mxu0
        %v7040 = vadd.f32 0.0, %v7039
        %v7041 = vpop.f32.mrf.mxu0
        %7042 = vdwg.mxu0
        %v7043 = vsel %vm659, %v6821, 0.0
        %v7044 = vsel %vm659, %v6894, 0.0
        %v7045 = vadd.f32 %v7043, %v7044
        %v7046 = vsel %vm659, %v6967, 0.0
        %v7047 = vadd.f32 %v7045, %v7046
        %v7048 = vsel %vm659, %v7040, 0.0
        %v7049 = vadd.f32 %v7047, %v7048
        %s7050 = scalar_lea.vmem %s8, 2
        %v7051 = vld [vmem:[%s7050] sm:$0x1]
        %v7053 = vlaneseq
        %v7054 = vshrl.u32 %v7053, 7
        %v7055 = vsub.s32 0, %v7054
        %v7056 = vrot.slane %v7051, %v7055
        %v7058 = vadd.f32 %v7049, %v7056
        %v7059 = vadd.f32 %v5068, %v7058
        %s7060 = scalar_lea.vmem %s9, 2
        %v7061 = vld [vmem:[%s7060] sm:$0x1]
        %s7062 = scalar_lea.vmem %s10, 2
        %v7063 = vld [vmem:[%s7062] sm:$0x1]
        %v7064 = vsel %vm659, %v7059, 0.0
        %7065 = vadd.xlane.f32.xlu0 %v7064
        %v7066 = vpop.xlane.xlu0 %7065
        %v7067 = vmul.f32 %v7066, %v2590
        %v7068 = vsub.f32 %v7059, %v7067
        %v7069 = vmul.f32 %v7068, %v7068
        %v7070 = vsel %vm659, %v7069, 0.0
        %7071 = vadd.xlane.f32.xlu0 %v7070
        %v7072 = vpop.xlane.xlu0 %7071
        %v7073 = vmul.f32 %v7072, %v2590
        %v7074 = vadd.f32 %v7073, 1e-05
        %v7075 = vrsqrt.pop %v7074
        %v7076 = vmul.f32 %v7068, %v7075
        %v7078 = vlaneseq
        %v7079 = vshrl.u32 %v7078, 7
        %v7080 = vsub.s32 0, %v7079
        %v7081 = vrot.slane %v7061, %v7080
        %v7083 = vmul.f32 %v7076, %v7081
        %v7085 = vlaneseq
        %v7086 = vshrl.u32 %v7085, 7
        %v7087 = vsub.s32 0, %v7086
        %v7088 = vrot.slane %v7063, %v7087
        %v7090 = vadd.f32 %v7083, %v7088
        %s7091 = scalar_lea.vmem %s13, 128
        %v7092 = vld [vmem:[%s7091] sm:$0xff]
        %v7093 = vld [vmem:[%s7091 + $0x8] sm:$0xff]
        %v7094 = vld [vmem:[%s7091 + $0x10] sm:$0xff]
        %v7095 = vld [vmem:[%s7091 + $0x18] sm:$0xff]
        %v7096 = vld [vmem:[%s7091 + $0x20] sm:$0xff]
        %v7097 = vld [vmem:[%s7091 + $0x28] sm:$0xff]
        %v7098 = vld [vmem:[%s7091 + $0x30] sm:$0xff]
        %v7099 = vld [vmem:[%s7091 + $0x38] sm:$0xff]
        %s7100 = scalar_lea.vmem %s14, 2
        %v7101 = vld [vmem:[%s7100] sm:$0x1]
        %v7103 = vlaneseq
        %v7104 = vshrl.u32 %v7103, 7
        %v7105 = vsub.s32 0, %v7104
        %v7106 = vrot.slane %v7101, %v7105
        %v7109 = vsel %vm659, %v7090, 0
        %7111 = vmatprep.subr.mxu0 0.0
        %7112 = vmatpush1.msra.mxu0 0.0
        %7113 = vmatprep.subr.mxu0 0.0
        %7114 = vmatpush1.msra.mxu0 0.0
        %7115 = vmatprep.subr.mxu0 0.0
        %7116 = vmatpush1.msra.mxu0 0.0
        %7117 = vmatprep.subr.mxu0 0.0
        %7118 = vmatpush1.msra.mxu0 0.0
        %7119 = vmatprep.subr.mxu0 0.0
        %7120 = vmatpush1.msra.mxu0 0.0
        %7121 = vmatprep.subr.mxu0 0.0
        %7122 = vmatpush1.msra.mxu0 0.0
        %7123 = vmatprep.subr.mxu0 0.0
        %7124 = vmatpush1.msra.mxu0 0.0
        %7125 = vmatprep.subr.mxu0 0.0
        %7126 = vmatpush1.msra.mxu0 0.0
        %7127 = vmatprep.subr.mxu0 0.0
        %7128 = vmatpush1.msra.mxu0 %v7099
        %7129 = vmatprep.subr.mxu0 0.0
        %7130 = vmatpush1.msra.mxu0 %v7098
        %7131 = vmatprep.subr.mxu0 0.0
        %7132 = vmatpush1.msra.mxu0 %v7097
        %7133 = vmatprep.subr.mxu0 0.0
        %7134 = vmatpush1.msra.mxu0 %v7096
        %7135 = vmatprep.subr.mxu0 0.0
        %7136 = vmatpush1.msra.mxu0 %v7095
        %7137 = vmatprep.subr.mxu0 0.0
        %7138 = vmatpush1.msra.mxu0 %v7094
        %7139 = vmatprep.subr.mxu0 0.0
        %7140 = vmatpush1.msra.mxu0 %v7093
        %7141 = vmatprep.subr.mxu0 0.0
        %7142 = vmatpush1.msra.mxu0 %v7092
        %7143 = vmatprep.subr.mxu0 0.0
        %7144 = vmatpush2.msra.mxu0 0.0
        %7145 = vmatprep.subr.mxu0 0.0
        %7146 = vmatpush2.msra.mxu0 0.0
        %7147 = vmatprep.subr.mxu0 0.0
        %7148 = vmatpush2.msra.mxu0 0.0
        %7149 = vmatprep.subr.mxu0 0.0
        %7150 = vmatpush2.msra.mxu0 0.0
        %7151 = vmatprep.subr.mxu0 0.0
        %7152 = vmatpush2.msra.mxu0 0.0
        %7153 = vmatprep.subr.mxu0 0.0
        %7154 = vmatpush2.msra.mxu0 0.0
        %7155 = vmatprep.subr.mxu0 0.0
        %7156 = vmatpush2.msra.mxu0 0.0
        %7157 = vmatprep.subr.mxu0 0.0
        %7158 = vmatpush2.msra.mxu0 0.0
        %7159 = vmatprep.subr.mxu0 0.0
        %7160 = vmatpush2.msra.mxu0 0.0
        %7161 = vmatprep.subr.mxu0 0.0
        %7162 = vmatpush2.msra.mxu0 0.0
        %7163 = vmatprep.subr.mxu0 0.0
        %7164 = vmatpush2.msra.mxu0 0.0
        %7165 = vmatprep.subr.mxu0 0.0
        %7166 = vmatpush2.msra.mxu0 0.0
        %7167 = vmatprep.subr.mxu0 0.0
        %7168 = vmatpush2.msra.mxu0 0.0
        %7169 = vmatprep.subr.mxu0 0.0
        %7170 = vmatpush2.msra.mxu0 0.0
        %7171 = vmatprep.subr.mxu0 0.0
        %7172 = vmatpush2.msra.mxu0 0.0
        %7173 = vmatprep.subr.mxu0 0.0
        %7174 = vmatpush2.msra.mxu0 0.0
        %7175 = vmatprep.mubr.f32.mxu0 0.0
        %7176 = vmatmul.mubr.f32.gmra.mxu0 %v7109
        %v7177 = vpop.f32.mrf.mxu0
        %v7178 = vadd.f32 %v7106, %v7177
        %v7179 = vpop.f32.mrf.mxu0
        %7180 = vdwg.mxu0
        %v7181 = vmax.f32 %v7178, 0.0
        %s7182 = scalar_lea.vmem %s15, 256
        %v7183 = vld [vmem:[%s7182] sm:$0xff]
        %v7184 = vld [vmem:[%s7182 + $0x8] sm:$0xff]
        %v7185 = vld [vmem:[%s7182 + $0x10] sm:$0xff]
        %v7186 = vld [vmem:[%s7182 + $0x18] sm:$0xff]
        %v7187 = vld [vmem:[%s7182 + $0x20] sm:$0xff]
        %v7188 = vld [vmem:[%s7182 + $0x28] sm:$0xff]
        %v7189 = vld [vmem:[%s7182 + $0x30] sm:$0xff]
        %v7190 = vld [vmem:[%s7182 + $0x38] sm:$0xff]
        %v7191 = vld [vmem:[%s7182 + $0x40] sm:$0xff]
        %v7192 = vld [vmem:[%s7182 + $0x48] sm:$0xff]
        %v7193 = vld [vmem:[%s7182 + $0x50] sm:$0xff]
        %v7194 = vld [vmem:[%s7182 + $0x58] sm:$0xff]
        %v7195 = vld [vmem:[%s7182 + $0x60] sm:$0xff]
        %v7196 = vld [vmem:[%s7182 + $0x68] sm:$0xff]
        %v7197 = vld [vmem:[%s7182 + $0x70] sm:$0xff]
        %v7198 = vld [vmem:[%s7182 + $0x78] sm:$0xff]
        %7199 = vmatprep.subr.mxu0 0.0
        %7200 = vmatpush1.msra.mxu0 %v7198
        %7201 = vmatprep.subr.mxu0 0.0
        %7202 = vmatpush1.msra.mxu0 %v7197
        %7203 = vmatprep.subr.mxu0 0.0
        %7204 = vmatpush1.msra.mxu0 %v7196
        %7205 = vmatprep.subr.mxu0 0.0
        %7206 = vmatpush1.msra.mxu0 %v7195
        %7207 = vmatprep.subr.mxu0 0.0
        %7208 = vmatpush1.msra.mxu0 %v7194
        %7209 = vmatprep.subr.mxu0 0.0
        %7210 = vmatpush1.msra.mxu0 %v7193
        %7211 = vmatprep.subr.mxu0 0.0
        %7212 = vmatpush1.msra.mxu0 %v7192
        %7213 = vmatprep.subr.mxu0 0.0
        %7214 = vmatpush1.msra.mxu0 %v7191
        %7215 = vmatprep.subr.mxu0 0.0
        %7216 = vmatpush1.msra.mxu0 %v7190
        %7217 = vmatprep.subr.mxu0 0.0
        %7218 = vmatpush1.msra.mxu0 %v7189
        %7219 = vmatprep.subr.mxu0 0.0
        %7220 = vmatpush1.msra.mxu0 %v7188
        %7221 = vmatprep.subr.mxu0 0.0
        %7222 = vmatpush1.msra.mxu0 %v7187
        %7223 = vmatprep.subr.mxu0 0.0
        %7224 = vmatpush1.msra.mxu0 %v7186
        %7225 = vmatprep.subr.mxu0 0.0
        %7226 = vmatpush1.msra.mxu0 %v7185
        %7227 = vmatprep.subr.mxu0 0.0
        %7228 = vmatpush1.msra.mxu0 %v7184
        %7229 = vmatprep.subr.mxu0 0.0
        %7230 = vmatpush1.msra.mxu0 %v7183
        %7231 = vmatprep.subr.mxu0 0.0
        %7232 = vmatpush2.msra.mxu0 0.0
        %7233 = vmatprep.subr.mxu0 0.0
        %7234 = vmatpush2.msra.mxu0 0.0
        %7235 = vmatprep.subr.mxu0 0.0
        %7236 = vmatpush2.msra.mxu0 0.0
        %7237 = vmatprep.subr.mxu0 0.0
        %7238 = vmatpush2.msra.mxu0 0.0
        %7239 = vmatprep.subr.mxu0 0.0
        %7240 = vmatpush2.msra.mxu0 0.0
        %7241 = vmatprep.subr.mxu0 0.0
        %7242 = vmatpush2.msra.mxu0 0.0
        %7243 = vmatprep.subr.mxu0 0.0
        %7244 = vmatpush2.msra.mxu0 0.0
        %7245 = vmatprep.subr.mxu0 0.0
        %7246 = vmatpush2.msra.mxu0 0.0
        %7247 = vmatprep.subr.mxu0 0.0
        %7248 = vmatpush2.msra.mxu0 0.0
        %7249 = vmatprep.subr.mxu0 0.0
        %7250 = vmatpush2.msra.mxu0 0.0
        %7251 = vmatprep.subr.mxu0 0.0
        %7252 = vmatpush2.msra.mxu0 0.0
        %7253 = vmatprep.subr.mxu0 0.0
        %7254 = vmatpush2.msra.mxu0 0.0
        %7255 = vmatprep.subr.mxu0 0.0
        %7256 = vmatpush2.msra.mxu0 0.0
        %7257 = vmatprep.subr.mxu0 0.0
        %7258 = vmatpush2.msra.mxu0 0.0
        %7259 = vmatprep.subr.mxu0 0.0
        %7260 = vmatpush2.msra.mxu0 0.0
        %7261 = vmatprep.subr.mxu0 0.0
        %7262 = vmatpush2.msra.mxu0 0.0
        %7263 = vmatprep.mubr.f32.mxu0 0.0
        %7264 = vmatmul.mubr.f32.gmra.mxu0 %v7181
        %v7265 = vpop.f32.mrf.mxu0
        %v7266 = vadd.f32 0.0, %v7265
        %v7267 = vpop.f32.mrf.mxu0
        %7268 = vdwg.mxu0
        %v7269 = vadd.f32 %v7090, %v7266
        %s7270 = scalar_lea.vmem %s16, 2
        %v7271 = vld [vmem:[%s7270] sm:$0x1]
        %v7273 = vlaneseq
        %v7274 = vshrl.u32 %v7273, 7
        %v7275 = vsub.s32 0, %v7274
        %v7276 = vrot.slane %v7271, %v7275
        %v7278 = vadd.f32 %v7269, %v7276
        %s7279 = scalar_lea.vmem %s11, 2
        %v7280 = vld [vmem:[%s7279] sm:$0x1]
        %s7281 = scalar_lea.vmem %s12, 2
        %v7282 = vld [vmem:[%s7281] sm:$0x1]
        %v7283 = vsel %vm659, %v7278, 0.0
        %7284 = vadd.xlane.f32.xlu0 %v7283
        %v7285 = vpop.xlane.xlu0 %7284
        %v7286 = vmul.f32 %v7285, %v2590
        %v7287 = vsub.f32 %v7278, %v7286
        %v7288 = vmul.f32 %v7287, %v7287
        %v7289 = vsel %vm659, %v7288, 0.0
        %7290 = vadd.xlane.f32.xlu0 %v7289
        %v7291 = vpop.xlane.xlu0 %7290
        %v7292 = vmul.f32 %v7291, %v2590
        %v7293 = vadd.f32 %v7292, 1e-05
        %v7294 = vrsqrt.pop %v7293
        %v7295 = vmul.f32 %v7287, %v7294
        %v7297 = vlaneseq
        %v7298 = vshrl.u32 %v7297, 7
        %v7299 = vsub.s32 0, %v7298
        %v7300 = vrot.slane %v7280, %v7299
        %v7302 = vmul.f32 %v7295, %v7300
        %v7304 = vlaneseq
        %v7305 = vshrl.u32 %v7304, 7
        %v7306 = vsub.s32 0, %v7305
        %v7307 = vrot.slane %v7282, %v7306
        %v7309 = vadd.f32 %v7302, %v7307
        %v7310 = vld [vmem:[%s17] sm:$0xff]
        %v7311 = vld [vmem:[%s17 + $0x8] sm:$0xff]
        %v7312 = vld [vmem:[%s17 + $0x10] sm:$0xff]
        %v7313 = vld [vmem:[%s17 + $0x18] sm:$0xff]
        %v7314 = vld [vmem:[%s17 + $0x20] sm:$0xff]
        %v7315 = vld [vmem:[%s17 + $0x28] sm:$0xff]
        %v7316 = vld [vmem:[%s17 + $0x30] sm:$0xff]
        %v7317 = vld [vmem:[%s17 + $0x38] sm:$0xff]
        %v7318 = vld [vmem:[%s18] sm:$0x1]
        %v7320 = vlaneseq
        %v7321 = vshrl.u32 %v7320, 7
        %v7322 = vsub.s32 0, %v7321
        %v7323 = vrot.slane %v7318, %v7322
        %v7326 = vsel %vm659, %v7309, 0
        %7328 = vmatprep.subr.mxu0 0.0
        %7329 = vmatpush1.msra.mxu0 0.0
        %7330 = vmatprep.subr.mxu0 0.0
        %7331 = vmatpush1.msra.mxu0 0.0
        %7332 = vmatprep.subr.mxu0 0.0
        %7333 = vmatpush1.msra.mxu0 0.0
        %7334 = vmatprep.subr.mxu0 0.0
        %7335 = vmatpush1.msra.mxu0 0.0
        %7336 = vmatprep.subr.mxu0 0.0
        %7337 = vmatpush1.msra.mxu0 0.0
        %7338 = vmatprep.subr.mxu0 0.0
        %7339 = vmatpush1.msra.mxu0 0.0
        %7340 = vmatprep.subr.mxu0 0.0
        %7341 = vmatpush1.msra.mxu0 0.0
        %7342 = vmatprep.subr.mxu0 0.0
        %7343 = vmatpush1.msra.mxu0 0.0
        %7344 = vmatprep.subr.mxu0 0.0
        %7345 = vmatpush1.msra.mxu0 %v7317
        %7346 = vmatprep.subr.mxu0 0.0
        %7347 = vmatpush1.msra.mxu0 %v7316
        %7348 = vmatprep.subr.mxu0 0.0
        %7349 = vmatpush1.msra.mxu0 %v7315
        %7350 = vmatprep.subr.mxu0 0.0
        %7351 = vmatpush1.msra.mxu0 %v7314
        %7352 = vmatprep.subr.mxu0 0.0
        %7353 = vmatpush1.msra.mxu0 %v7313
        %7354 = vmatprep.subr.mxu0 0.0
        %7355 = vmatpush1.msra.mxu0 %v7312
        %7356 = vmatprep.subr.mxu0 0.0
        %7357 = vmatpush1.msra.mxu0 %v7311
        %7358 = vmatprep.subr.mxu0 0.0
        %7359 = vmatpush1.msra.mxu0 %v7310
        %7360 = vmatprep.subr.mxu0 0.0
        %7361 = vmatpush2.msra.mxu0 0.0
        %7362 = vmatprep.subr.mxu0 0.0
        %7363 = vmatpush2.msra.mxu0 0.0
        %7364 = vmatprep.subr.mxu0 0.0
        %7365 = vmatpush2.msra.mxu0 0.0
        %7366 = vmatprep.subr.mxu0 0.0
        %7367 = vmatpush2.msra.mxu0 0.0
        %7368 = vmatprep.subr.mxu0 0.0
        %7369 = vmatpush2.msra.mxu0 0.0
        %7370 = vmatprep.subr.mxu0 0.0
        %7371 = vmatpush2.msra.mxu0 0.0
        %7372 = vmatprep.subr.mxu0 0.0
        %7373 = vmatpush2.msra.mxu0 0.0
        %7374 = vmatprep.subr.mxu0 0.0
        %7375 = vmatpush2.msra.mxu0 0.0
        %7376 = vmatprep.subr.mxu0 0.0
        %7377 = vmatpush2.msra.mxu0 0.0
        %7378 = vmatprep.subr.mxu0 0.0
        %7379 = vmatpush2.msra.mxu0 0.0
        %7380 = vmatprep.subr.mxu0 0.0
        %7381 = vmatpush2.msra.mxu0 0.0
        %7382 = vmatprep.subr.mxu0 0.0
        %7383 = vmatpush2.msra.mxu0 0.0
        %7384 = vmatprep.subr.mxu0 0.0
        %7385 = vmatpush2.msra.mxu0 0.0
        %7386 = vmatprep.subr.mxu0 0.0
        %7387 = vmatpush2.msra.mxu0 0.0
        %7388 = vmatprep.subr.mxu0 0.0
        %7389 = vmatpush2.msra.mxu0 0.0
        %7390 = vmatprep.subr.mxu0 0.0
        %7391 = vmatpush2.msra.mxu0 0.0
        %7392 = vmatprep.mubr.f32.mxu0 0.0
        %7393 = vmatmul.mubr.f32.gmra.mxu0 %v7326
        %v7394 = vpop.f32.mrf.mxu0
        %v7395 = vadd.f32 %v7323, %v7394
        %v7396 = vpop.f32.mrf.mxu0
        %7397 = vdwg.mxu0
        %7398 = vst [vmem:[%s593] sm:$0xff] %v7395
        %s7399 = sand.u32 %s445, 1
        %s7400 = scalar_lea.sflag [#allocation3], %s7399
        %s7401 = sand.u32 %s445, 1
        %s7402 = smul.addr %s7401, 8
        %s7403 = scalar_lea.vmem [#allocation2], %s7402
        // Predicated region
        $region97: #{tpu_custom_call.1} parent=95 // pred_check
          %p7404 = pneg %p455
        $region98: #{tpu_custom_call.1} parent=95 // pred_check_branch
          %7406 = sbr.rel (%p7404) target = $region100
        $region99: #{tpu_custom_call.1} parent=95 // pred_region
          %s7408 = ssub.s32 128, 128
          %7409 = vsyncadd %s7400, %s7408
          %s7410 = smul.addr %s33, 128
          %s7411 = scalar_lea.hbm %s19, %s7410
          %s7413 = sshll.u32 %s7403, 4
          %s7414 = int_to_ptr.vmem [resolvable:$true] %s7413
          %7416 = dma.vmem_to_hbm [thread:$0]  %s7414, 128, %s7411, %s7400
        $region100: #{tpu_custom_call.1} parent=95 // pred_fallthru
          _
      $region96: #{tpu_custom_call.1} parent=5 // pred_fallthru
        _
      %p7417 = scmp.le.s32.totalorder 2, %s28
      // Predicated region
      $region101: #{tpu_custom_call.1} parent=5 // pred_check
        %p7418 = pneg %p7417
      $region102: #{tpu_custom_call.1} parent=5 // pred_check_branch
        %7420 = sbr.rel (%p7418) target = $region104
      $region103: #{tpu_custom_call.1} parent=5 // pred_region
        %s7421 = ssub.s32 %s28, 2
        // Predicated region
        $region105: #{tpu_custom_call.1} parent=103 // pred_check
          %p7422 = pneg %p461
        $region106: #{tpu_custom_call.1} parent=103 // pred_check_branch
          %7424 = sbr.rel (%p7422) target = $region108
        $region107: #{tpu_custom_call.1} parent=103 // pred_region
          %s7425 = sand.u32 %s446, 1
          %s7426 = scalar_lea.sflag [#allocation3], %s7425
          %s7427 = sand.u32 %s446, 1
          %s7428 = smul.addr %s7427, 8
          %s7429 = scalar_lea.vmem [#allocation2], %s7428
          %7430 = dma.done %s7426, 128
        $region108: #{tpu_custom_call.1} parent=103 // pred_fallthru
          _
      $region104: #{tpu_custom_call.1} parent=5 // pred_fallthru
        _
    $region6: #{tpu_custom_call.1} parent=1 // loop_footer
      %s32 = sadd.s32 1, %s28
    $region7: #{tpu_custom_call.1} parent=1 // loop_footer_branch
      %27 = sbr.rel target = $region3
    $region8: #{tpu_custom_call.1} parent=1 // loop_exit
      _
    %7431 = vsyncpa [#allocation3], 1
    %s7432 = scalar_lea.sflag [#allocation3], 1
    %7433 = vsyncpa %s7432, 1

</llo_original>
